<compile_context>
chip_gen: v7x
topology: tpu7x:2x2x1
jax: 0.10.0
libtpu: 0.0.40
codegen_flags: <defaults>
</compile_context>

<pallas_src>
import math
from functools import partial

import jax
import jax.numpy as jnp
from jax.experimental import pallas as pl
from jax.experimental.pallas import tpu as pltpu


# Matmul-operand dtype (MXU-native).  Set to jnp.float32 for bit-exact f32 math.
MXU_DTYPE = jnp.bfloat16


# ----------------------------- kernel helpers -----------------------------

def _mm(a, w):
    """Matmul with operands in the weight's (bf16) dtype, f32 accumulation."""
    return jnp.dot(a.astype(w.dtype), w, preferred_element_type=jnp.float32)


def _layer_norm(z, gamma, beta):
    """PyTorch LayerNorm semantics: biased variance, eps=1e-5, f32 math."""
    mu = jnp.mean(z, axis=-1, keepdims=True)
    var = jnp.mean(jnp.square(z - mu), axis=-1, keepdims=True)
    return (z - mu) * jax.lax.rsqrt(var + 1e-5) * gamma + beta


def _encoder_block_body(x, vl_ref, w, attn_buf, *, num_heads, batch, seq):
    """One transformer encoder block on the folded (B*S, H) slab."""
    (wqkv, bqkv, wo, bo, ln1g, ln1b, w1, b1, w2, b2, ln2g, ln2b) = w
    H = x.shape[1]
    Dh = H // num_heads
    scale = 1.0 / math.sqrt(Dh)

    # Fused Q|K|V projection on the whole (B*S, H) slab (lane-dense N=3H).
    qkv = _mm(x, wqkv[...]) + bqkv[...]                    # (B*S, 3H) f32
    q = qkv[:, 0 * H:1 * H] * scale                        # pre-scale Q once
    k = qkv[:, 1 * H:2 * H]
    v = qkv[:, 2 * H:3 * H]

    wo_w = wo[...]                                         # (H, H) bf16
    mm_dt = wo_w.dtype
    col = jax.lax.broadcasted_iota(jnp.int32, (seq, seq), 1)

    # Masked multi-head attention: batch & head loops are static (B*heads=8).
    # Each head's context is projected through its Wo row-slice and summed
    # (no lane concat); per-batch rows go into an aligned VMEM scratch slab.
    for b in range(batch):
        vl = vl_ref[b]                                     # scalar from SMEM
        mask = col < vl                                    # d2l masked_softmax
        r0 = b * seq
        acc = None
        for h in range(num_heads):
            c0 = h * Dh
            q_bh = q[r0:r0 + seq, c0:c0 + Dh]
            k_bh = k[r0:r0 + seq, c0:c0 + Dh]
            v_bh = v[r0:r0 + seq, c0:c0 + Dh]
            # q @ k^T contracting last axes (no explicit transpose), f32 scores
            s = jax.lax.dot_general(
                q_bh.astype(mm_dt), k_bh.astype(mm_dt),
                (((1,), (1,)), ((), ())),
                preferred_element_type=jnp.float32)
            s = jnp.where(mask, s, -1e6)                   # mask in f32
            s = s - jnp.max(s, axis=-1, keepdims=True)
            p = jnp.exp(s)
            p = p * pl.reciprocal(jnp.sum(p, axis=-1, keepdims=True),
                                  approx=True)
            ctx = jnp.dot(p.astype(mm_dt), v_bh.astype(mm_dt),
                          preferred_element_type=jnp.float32)
            contrib = jnp.dot(ctx.astype(mm_dt), wo_w[c0:c0 + Dh, :],
                              preferred_element_type=jnp.float32)
            acc = contrib if acc is None else acc + contrib
        attn_buf[r0:r0 + seq, :] = acc                     # aligned 8-row store

    # Add & LayerNorm 1.
    z = x + attn_buf[...] + bo[...]
    y = _layer_norm(z, ln1g[...], ln1b[...])

    # Position-wise FFN (ReLU) on the folded slab.
    h1 = jnp.maximum(_mm(y, w1[...]) + b1[...], 0.0)
    h2 = _mm(h1, w2[...]) + b2[...]

    # Add & LayerNorm 2.
    return _layer_norm(y + h2, ln2g[...], ln2b[...])


def _bert_fused_kernel(vl_ref, x_ref, *rest, num_heads, num_layers, batch, seq):
    """Full forward: both encoder blocks + classifier head in one kernel."""
    attn_buf = rest[-1]          # VMEM scratch (B*S, H) f32, reused per layer
    o_ref = rest[-2]             # (B, 128) padded logits
    w_refs = rest[:-2]

    x = x_ref[...]               # (B*S, H) f32, batch folded into M
    for l in range(num_layers):
        x = _encoder_block_body(x, vl_ref, w_refs[l * 12:(l + 1) * 12],
                                attn_buf, num_heads=num_heads,
                                batch=batch, seq=seq)

    # Classifier head on the CLS rows (row b*S of the folded slab).
    wh, bh, wout, bout = w_refs[num_layers * 12:num_layers * 12 + 4]
    wh_w, bh_b = wh[...], bh[...]
    wout_w, bout_b = wout[...], bout[...]
    for b in range(batch):
        cls_b = x[b * seq:b * seq + 1, :]                  # (1, H)
        hdn_b = jnp.tanh(_mm(cls_b, wh_w) + bh_b)
        o_ref[b:b + 1, :] = (_mm(hdn_b, wout_w) + bout_b).astype(o_ref.dtype)


# ----------------------------- model (glue) -----------------------------

def bert_classifier_forward(params, tokens, segments, valid_lens, *, num_heads):
    B, S = tokens.shape
    H = params["token_emb"].shape[1]

    # Embedding gathers kept in plain JAX (glue, not the matmul hot path).
    X = (params["token_emb"][tokens]
         + params["seg_emb"][segments]
         + params["pos_emb"][:, :S, :]).astype(jnp.float32)
    x_flat = X.reshape(B * S, H)                           # fold batch into M

    block_args = []
    for blk in params["blocks"]:
        block_args += [blk["wqkv"], blk["bqkv"], blk["wo"], blk["bo"],
                       blk["ln1_g"], blk["ln1_b"],
                       blk["ffn_w1"], blk["ffn_b1"],
                       blk["ffn_w2"], blk["ffn_b2"],
                       blk["ln2_g"], blk["ln2_b"]]

    # Pad classifier output weight/bias to 128 lanes -> lane-dense logit store.
    C = params["out_w"].shape[1]
    CP = 128
    out_w = jnp.zeros((H, CP), params["out_w"].dtype).at[:, :C].set(params["out_w"])
    out_b = jnp.zeros((1, CP), jnp.float32).at[:, :C].set(params["out_b"])
    head_args = [params["hidden_w"], params["hidden_b"], out_w, out_b]

    vmem = pl.BlockSpec(memory_space=pltpu.MemorySpace.VMEM)
    smem = pl.BlockSpec(memory_space=pltpu.MemorySpace.SMEM)

    logits_pad = pl.pallas_call(
        partial(_bert_fused_kernel, num_heads=num_heads,
                num_layers=len(params["blocks"]), batch=B, seq=S),
        out_shape=jax.ShapeDtypeStruct((B, CP), jnp.float32),
        in_specs=[smem, vmem] + [vmem] * (len(block_args) + len(head_args)),
        out_specs=vmem,
        scratch_shapes=[pltpu.VMEM((B * S, H), jnp.float32)],
    )(valid_lens.astype(jnp.int32), x_flat, *block_args, *head_args)

    return logits_pad[:, :C]                               # (B, 3)


# ----------------------------- parameters -----------------------------

def init_params(key, *, vocab, H, ffn_h, num_layers, max_len, num_classes):
    n_keys = 5 + num_layers * 4
    keys = jax.random.split(key, n_keys)
    ki = iter(range(n_keys))

    def dense(fan_in, fan_out):
        w = 0.02 * jax.random.normal(keys[next(ki)], (fan_in, fan_out), jnp.float32)
        # Matmul weights stored in MXU_DTYPE (bf16): native MXU path, half the
        # weight bytes.  Biases / LN params stay f32 (elementwise path).
        return w.astype(MXU_DTYPE), jnp.zeros((1, fan_out), jnp.float32)

    params = {
        "token_emb": 0.02 * jax.random.normal(keys[next(ki)], (vocab, H), jnp.float32),
        "seg_emb":   0.02 * jax.random.normal(keys[next(ki)], (2, H), jnp.float32),
        "pos_emb":   0.02 * jax.random.normal(keys[next(ki)], (1, max_len, H), jnp.float32),
        "blocks": [],
    }
    for _ in range(num_layers):
        blk = {}
        blk["wqkv"], blk["bqkv"] = dense(H, 3 * H)         # fused Wq | Wk | Wv
        blk["wo"], blk["bo"] = dense(H, H)
        blk["ffn_w1"], blk["ffn_b1"] = dense(H, ffn_h)
        blk["ffn_w2"], blk["ffn_b2"] = dense(ffn_h, H)
        blk["ln1_g"] = jnp.ones((1, H), jnp.float32)
        blk["ln1_b"] = jnp.zeros((1, H), jnp.float32)
        blk["ln2_g"] = jnp.ones((1, H), jnp.float32)
        blk["ln2_b"] = jnp.zeros((1, H), jnp.float32)
        params["blocks"].append(blk)
    params["hidden_w"], params["hidden_b"] = dense(H, H)       # bert.hidden (Linear+Tanh)
    params["out_w"], params["out_b"] = dense(H, num_classes)   # nn.Linear(256, 3)
    return params


# ----------------------------- main -----------------------------

if __name__ == "__main__":
    B, S, H = 2, 8, 256
    VOCAB, NUM_HEADS, NUM_LAYERS, FFN_H, MAX_LEN, NUM_CLASSES = 100, 4, 2, 512, 64, 3

    key = jax.random.PRNGKey(0)
    kp, kt, ks = jax.random.split(key, 3)

    params = init_params(kp, vocab=VOCAB, H=H, ffn_h=FFN_H,
                         num_layers=NUM_LAYERS, max_len=MAX_LEN,
                         num_classes=NUM_CLASSES)

    tokens = jax.random.randint(kt, (B, S), 0, VOCAB, dtype=jnp.int32)
    segments = jax.random.randint(ks, (B, S), 0, 2, dtype=jnp.int32)
    valid_lens = jnp.array([S, 5], dtype=jnp.int32)

    fwd = jax.jit(partial(bert_classifier_forward, num_heads=NUM_HEADS))
    logits = fwd(params, tokens, segments, valid_lens)
    jax.block_until_ready(logits)

    assert logits.shape == (B, NUM_CLASSES), logits.shape
    assert bool(jnp.all(jnp.isfinite(logits)))
    print("KERNEL_OK")
</pallas_src>

<mosaic_0001>
module attributes {stable_mosaic.version = 11 : i64} {
  func.func @_bert_fused_kernel(%arg0: memref<2xi32, #tpu.memory_space<smem>>, %arg1: memref<16x256xf32, #tpu.memory_space<vmem>>, %arg2: memref<256x768xbf16, #tpu.memory_space<vmem>>, %arg3: memref<1x768xf32, #tpu.memory_space<vmem>>, %arg4: memref<256x256xbf16, #tpu.memory_space<vmem>>, %arg5: memref<1x256xf32, #tpu.memory_space<vmem>>, %arg6: memref<1x256xf32, #tpu.memory_space<vmem>>, %arg7: memref<1x256xf32, #tpu.memory_space<vmem>>, %arg8: memref<256x512xbf16, #tpu.memory_space<vmem>>, %arg9: memref<1x512xf32, #tpu.memory_space<vmem>>, %arg10: memref<512x256xbf16, #tpu.memory_space<vmem>>, %arg11: memref<1x256xf32, #tpu.memory_space<vmem>>, %arg12: memref<1x256xf32, #tpu.memory_space<vmem>>, %arg13: memref<1x256xf32, #tpu.memory_space<vmem>>, %arg14: memref<256x768xbf16, #tpu.memory_space<vmem>>, %arg15: memref<1x768xf32, #tpu.memory_space<vmem>>, %arg16: memref<256x256xbf16, #tpu.memory_space<vmem>>, %arg17: memref<1x256xf32, #tpu.memory_space<vmem>>, %arg18: memref<1x256xf32, #tpu.memory_space<vmem>>, %arg19: memref<1x256xf32, #tpu.memory_space<vmem>>, %arg20: memref<256x512xbf16, #tpu.memory_space<vmem>>, %arg21: memref<1x512xf32, #tpu.memory_space<vmem>>, %arg22: memref<512x256xbf16, #tpu.memory_space<vmem>>, %arg23: memref<1x256xf32, #tpu.memory_space<vmem>>, %arg24: memref<1x256xf32, #tpu.memory_space<vmem>>, %arg25: memref<1x256xf32, #tpu.memory_space<vmem>>, %arg26: memref<256x256xbf16, #tpu.memory_space<vmem>>, %arg27: memref<1x256xf32, #tpu.memory_space<vmem>>, %arg28: memref<256x128xbf16, #tpu.memory_space<vmem>>, %arg29: memref<1x128xf32, #tpu.memory_space<vmem>>, %arg30: memref<2x128xf32, #tpu.memory_space<vmem>>, %arg31: memref<16x256xf32, #tpu.memory_space<vmem>>) attributes {dimension_semantics = [], scalar_prefetch = 0 : i64, scratch_operands = 1 : i64, tpu.core_type = #tpu.core_type<tc>} {
    %c0 = arith.constant 0 : index
    %c0_0 = arith.constant 0 : index
    %0 = vector.load %arg1[%c0, %c0_0] : memref<16x256xf32, #tpu.memory_space<vmem>>, vector<16x256xf32>
    %c0_1 = arith.constant 0 : index
    %c0_2 = arith.constant 0 : index
    %1 = vector.load %arg2[%c0_1, %c0_2] : memref<256x768xbf16, #tpu.memory_space<vmem>>, vector<256x768xbf16>
    %2 = arith.truncf %0 : vector<16x256xf32> to vector<16x256xbf16>
    %cst = arith.constant dense<0.000000e+00> : vector<16x768xf32>
    %3 = tpu.matmul %2, %1, %cst {dimension_numbers = #tpu.dot_dimension_numbers<[1], [0], [0], [1], [0, 0, 1, 1], [], []>} : vector<16x256xbf16>, vector<256x768xbf16>, vector<16x768xf32> -> vector<16x768xf32>
    %c0_3 = arith.constant 0 : index
    %c0_4 = arith.constant 0 : index
    %4 = vector.load %arg3[%c0_3, %c0_4] : memref<1x768xf32, #tpu.memory_space<vmem>>, vector<1x768xf32>
    %5 = vector.broadcast %4 : vector<1x768xf32> to vector<16x768xf32>
    %6 = arith.addf %3, %5 : vector<16x768xf32>
    %7 = vector.extract_strided_slice %6 {offsets = [0, 0], sizes = [16, 256], strides = [1, 1]} : vector<16x768xf32> to vector<16x256xf32>
    %cst_5 = arith.constant 1.250000e-01 : f32
    %8 = vector.broadcast %cst_5 : f32 to vector<16x256xf32>
    %9 = arith.mulf %7, %8 : vector<16x256xf32>
    %10 = vector.extract_strided_slice %6 {offsets = [0, 256], sizes = [16, 256], strides = [1, 1]} : vector<16x768xf32> to vector<16x256xf32>
    %11 = vector.extract_strided_slice %6 {offsets = [0, 512], sizes = [16, 256], strides = [1, 1]} : vector<16x768xf32> to vector<16x256xf32>
    %c0_6 = arith.constant 0 : index
    %c0_7 = arith.constant 0 : index
    %12 = vector.load %arg4[%c0_6, %c0_7] : memref<256x256xbf16, #tpu.memory_space<vmem>>, vector<256x256xbf16>
    %13 = tpu.iota {dimensions = array<i32: 1>} : vector<8x8xi32>
    %c0_8 = arith.constant 0 : index
    %14 = memref.load %arg0[%c0_8] : memref<2xi32, #tpu.memory_space<smem>>
    %15 = vector.broadcast %14 : i32 to vector<8x8xi32>
    %16 = arith.cmpi slt, %13, %15 : vector<8x8xi32>
    %17 = vector.extract_strided_slice %9 {offsets = [0, 0], sizes = [8, 64], strides = [1, 1]} : vector<16x256xf32> to vector<8x64xf32>
    %18 = vector.extract_strided_slice %10 {offsets = [0, 0], sizes = [8, 64], strides = [1, 1]} : vector<16x256xf32> to vector<8x64xf32>
    %19 = vector.extract_strided_slice %11 {offsets = [0, 0], sizes = [8, 64], strides = [1, 1]} : vector<16x256xf32> to vector<8x64xf32>
    %20 = arith.truncf %17 : vector<8x64xf32> to vector<8x64xbf16>
    %21 = arith.truncf %18 : vector<8x64xf32> to vector<8x64xbf16>
    %cst_9 = arith.constant dense<0.000000e+00> : vector<8x8xf32>
    %22 = tpu.matmul %20, %21, %cst_9 {dimension_numbers = #tpu.dot_dimension_numbers<[1], [1], [0], [0], [0, 0, 1, 0], [], []>} : vector<8x64xbf16>, vector<8x64xbf16>, vector<8x8xf32> -> vector<8x8xf32>
    %cst_10 = arith.constant -1.000000e+06 : f32
    %23 = vector.broadcast %cst_10 : f32 to vector<8x8xf32>
    %24 = arith.select %16, %22, %23 : vector<8x8xi1>, vector<8x8xf32>
    %cst_11 = arith.constant dense<0xFF800000> : vector<8xf32>
    %25 = vector.multi_reduction <maximumf>, %24, %cst_11 [1] : vector<8x8xf32> to vector<8xf32>
    %26 = vector.shape_cast %25 : vector<8xf32> to vector<8x1xf32>
    %27 = vector.broadcast %26 : vector<8x1xf32> to vector<8x8xf32>
    %28 = arith.subf %24, %27 : vector<8x8xf32>
    %29 = math.exp %28 : vector<8x8xf32>
    %cst_12 = arith.constant dense<0.000000e+00> : vector<8xf32>
    %30 = vector.multi_reduction <add>, %29, %cst_12 [1] : vector<8x8xf32> to vector<8xf32>
    %31 = vector.shape_cast %30 : vector<8xf32> to vector<8x1xf32>
    %32 = tpu.reciprocal %31 {approx = true} : vector<8x1xf32> -> vector<8x1xf32>
    %33 = vector.broadcast %32 : vector<8x1xf32> to vector<8x8xf32>
    %34 = arith.mulf %29, %33 : vector<8x8xf32>
    %35 = arith.truncf %34 : vector<8x8xf32> to vector<8x8xbf16>
    %36 = arith.truncf %19 : vector<8x64xf32> to vector<8x64xbf16>
    %cst_13 = arith.constant dense<0.000000e+00> : vector<8x64xf32>
    %37 = tpu.matmul %35, %36, %cst_13 {dimension_numbers = #tpu.dot_dimension_numbers<[1], [0], [0], [1], [0, 0, 1, 1], [], []>} : vector<8x8xbf16>, vector<8x64xbf16>, vector<8x64xf32> -> vector<8x64xf32>
    %38 = arith.truncf %37 : vector<8x64xf32> to vector<8x64xbf16>
    %39 = vector.extract_strided_slice %12 {offsets = [0, 0], sizes = [64, 256], strides = [1, 1]} : vector<256x256xbf16> to vector<64x256xbf16>
    %cst_14 = arith.constant dense<0.000000e+00> : vector<8x256xf32>
    %40 = tpu.matmul %38, %39, %cst_14 {dimension_numbers = #tpu.dot_dimension_numbers<[1], [0], [0], [1], [0, 0, 1, 1], [], []>} : vector<8x64xbf16>, vector<64x256xbf16>, vector<8x256xf32> -> vector<8x256xf32>
    %41 = vector.extract_strided_slice %9 {offsets = [0, 64], sizes = [8, 64], strides = [1, 1]} : vector<16x256xf32> to vector<8x64xf32>
    %42 = vector.extract_strided_slice %10 {offsets = [0, 64], sizes = [8, 64], strides = [1, 1]} : vector<16x256xf32> to vector<8x64xf32>
    %43 = vector.extract_strided_slice %11 {offsets = [0, 64], sizes = [8, 64], strides = [1, 1]} : vector<16x256xf32> to vector<8x64xf32>
    %44 = arith.truncf %41 : vector<8x64xf32> to vector<8x64xbf16>
    %45 = arith.truncf %42 : vector<8x64xf32> to vector<8x64xbf16>
    %cst_15 = arith.constant dense<0.000000e+00> : vector<8x8xf32>
    %46 = tpu.matmul %44, %45, %cst_15 {dimension_numbers = #tpu.dot_dimension_numbers<[1], [1], [0], [0], [0, 0, 1, 0], [], []>} : vector<8x64xbf16>, vector<8x64xbf16>, vector<8x8xf32> -> vector<8x8xf32>
    %cst_16 = arith.constant -1.000000e+06 : f32
    %47 = vector.broadcast %cst_16 : f32 to vector<8x8xf32>
    %48 = arith.select %16, %46, %47 : vector<8x8xi1>, vector<8x8xf32>
    %cst_17 = arith.constant dense<0xFF800000> : vector<8xf32>
    %49 = vector.multi_reduction <maximumf>, %48, %cst_17 [1] : vector<8x8xf32> to vector<8xf32>
    %50 = vector.shape_cast %49 : vector<8xf32> to vector<8x1xf32>
    %51 = vector.broadcast %50 : vector<8x1xf32> to vector<8x8xf32>
    %52 = arith.subf %48, %51 : vector<8x8xf32>
    %53 = math.exp %52 : vector<8x8xf32>
    %cst_18 = arith.constant dense<0.000000e+00> : vector<8xf32>
    %54 = vector.multi_reduction <add>, %53, %cst_18 [1] : vector<8x8xf32> to vector<8xf32>
    %55 = vector.shape_cast %54 : vector<8xf32> to vector<8x1xf32>
    %56 = tpu.reciprocal %55 {approx = true} : vector<8x1xf32> -> vector<8x1xf32>
    %57 = vector.broadcast %56 : vector<8x1xf32> to vector<8x8xf32>
    %58 = arith.mulf %53, %57 : vector<8x8xf32>
    %59 = arith.truncf %58 : vector<8x8xf32> to vector<8x8xbf16>
    %60 = arith.truncf %43 : vector<8x64xf32> to vector<8x64xbf16>
    %cst_19 = arith.constant dense<0.000000e+00> : vector<8x64xf32>
    %61 = tpu.matmul %59, %60, %cst_19 {dimension_numbers = #tpu.dot_dimension_numbers<[1], [0], [0], [1], [0, 0, 1, 1], [], []>} : vector<8x8xbf16>, vector<8x64xbf16>, vector<8x64xf32> -> vector<8x64xf32>
    %62 = arith.truncf %61 : vector<8x64xf32> to vector<8x64xbf16>
    %63 = vector.extract_strided_slice %12 {offsets = [64, 0], sizes = [64, 256], strides = [1, 1]} : vector<256x256xbf16> to vector<64x256xbf16>
    %cst_20 = arith.constant dense<0.000000e+00> : vector<8x256xf32>
    %64 = tpu.matmul %62, %63, %cst_20 {dimension_numbers = #tpu.dot_dimension_numbers<[1], [0], [0], [1], [0, 0, 1, 1], [], []>} : vector<8x64xbf16>, vector<64x256xbf16>, vector<8x256xf32> -> vector<8x256xf32>
    %65 = arith.addf %40, %64 : vector<8x256xf32>
    %66 = vector.extract_strided_slice %9 {offsets = [0, 128], sizes = [8, 64], strides = [1, 1]} : vector<16x256xf32> to vector<8x64xf32>
    %67 = vector.extract_strided_slice %10 {offsets = [0, 128], sizes = [8, 64], strides = [1, 1]} : vector<16x256xf32> to vector<8x64xf32>
    %68 = vector.extract_strided_slice %11 {offsets = [0, 128], sizes = [8, 64], strides = [1, 1]} : vector<16x256xf32> to vector<8x64xf32>
    %69 = arith.truncf %66 : vector<8x64xf32> to vector<8x64xbf16>
    %70 = arith.truncf %67 : vector<8x64xf32> to vector<8x64xbf16>
    %cst_21 = arith.constant dense<0.000000e+00> : vector<8x8xf32>
    %71 = tpu.matmul %69, %70, %cst_21 {dimension_numbers = #tpu.dot_dimension_numbers<[1], [1], [0], [0], [0, 0, 1, 0], [], []>} : vector<8x64xbf16>, vector<8x64xbf16>, vector<8x8xf32> -> vector<8x8xf32>
    %cst_22 = arith.constant -1.000000e+06 : f32
    %72 = vector.broadcast %cst_22 : f32 to vector<8x8xf32>
    %73 = arith.select %16, %71, %72 : vector<8x8xi1>, vector<8x8xf32>
    %cst_23 = arith.constant dense<0xFF800000> : vector<8xf32>
    %74 = vector.multi_reduction <maximumf>, %73, %cst_23 [1] : vector<8x8xf32> to vector<8xf32>
    %75 = vector.shape_cast %74 : vector<8xf32> to vector<8x1xf32>
    %76 = vector.broadcast %75 : vector<8x1xf32> to vector<8x8xf32>
    %77 = arith.subf %73, %76 : vector<8x8xf32>
    %78 = math.exp %77 : vector<8x8xf32>
    %cst_24 = arith.constant dense<0.000000e+00> : vector<8xf32>
    %79 = vector.multi_reduction <add>, %78, %cst_24 [1] : vector<8x8xf32> to vector<8xf32>
    %80 = vector.shape_cast %79 : vector<8xf32> to vector<8x1xf32>
    %81 = tpu.reciprocal %80 {approx = true} : vector<8x1xf32> -> vector<8x1xf32>
    %82 = vector.broadcast %81 : vector<8x1xf32> to vector<8x8xf32>
    %83 = arith.mulf %78, %82 : vector<8x8xf32>
    %84 = arith.truncf %83 : vector<8x8xf32> to vector<8x8xbf16>
    %85 = arith.truncf %68 : vector<8x64xf32> to vector<8x64xbf16>
    %cst_25 = arith.constant dense<0.000000e+00> : vector<8x64xf32>
    %86 = tpu.matmul %84, %85, %cst_25 {dimension_numbers = #tpu.dot_dimension_numbers<[1], [0], [0], [1], [0, 0, 1, 1], [], []>} : vector<8x8xbf16>, vector<8x64xbf16>, vector<8x64xf32> -> vector<8x64xf32>
    %87 = arith.truncf %86 : vector<8x64xf32> to vector<8x64xbf16>
    %88 = vector.extract_strided_slice %12 {offsets = [128, 0], sizes = [64, 256], strides = [1, 1]} : vector<256x256xbf16> to vector<64x256xbf16>
    %cst_26 = arith.constant dense<0.000000e+00> : vector<8x256xf32>
    %89 = tpu.matmul %87, %88, %cst_26 {dimension_numbers = #tpu.dot_dimension_numbers<[1], [0], [0], [1], [0, 0, 1, 1], [], []>} : vector<8x64xbf16>, vector<64x256xbf16>, vector<8x256xf32> -> vector<8x256xf32>
    %90 = arith.addf %65, %89 : vector<8x256xf32>
    %91 = vector.extract_strided_slice %9 {offsets = [0, 192], sizes = [8, 64], strides = [1, 1]} : vector<16x256xf32> to vector<8x64xf32>
    %92 = vector.extract_strided_slice %10 {offsets = [0, 192], sizes = [8, 64], strides = [1, 1]} : vector<16x256xf32> to vector<8x64xf32>
    %93 = vector.extract_strided_slice %11 {offsets = [0, 192], sizes = [8, 64], strides = [1, 1]} : vector<16x256xf32> to vector<8x64xf32>
    %94 = arith.truncf %91 : vector<8x64xf32> to vector<8x64xbf16>
    %95 = arith.truncf %92 : vector<8x64xf32> to vector<8x64xbf16>
    %cst_27 = arith.constant dense<0.000000e+00> : vector<8x8xf32>
    %96 = tpu.matmul %94, %95, %cst_27 {dimension_numbers = #tpu.dot_dimension_numbers<[1], [1], [0], [0], [0, 0, 1, 0], [], []>} : vector<8x64xbf16>, vector<8x64xbf16>, vector<8x8xf32> -> vector<8x8xf32>
    %cst_28 = arith.constant -1.000000e+06 : f32
    %97 = vector.broadcast %cst_28 : f32 to vector<8x8xf32>
    %98 = arith.select %16, %96, %97 : vector<8x8xi1>, vector<8x8xf32>
    %cst_29 = arith.constant dense<0xFF800000> : vector<8xf32>
    %99 = vector.multi_reduction <maximumf>, %98, %cst_29 [1] : vector<8x8xf32> to vector<8xf32>
    %100 = vector.shape_cast %99 : vector<8xf32> to vector<8x1xf32>
    %101 = vector.broadcast %100 : vector<8x1xf32> to vector<8x8xf32>
    %102 = arith.subf %98, %101 : vector<8x8xf32>
    %103 = math.exp %102 : vector<8x8xf32>
    %cst_30 = arith.constant dense<0.000000e+00> : vector<8xf32>
    %104 = vector.multi_reduction <add>, %103, %cst_30 [1] : vector<8x8xf32> to vector<8xf32>
    %105 = vector.shape_cast %104 : vector<8xf32> to vector<8x1xf32>
    %106 = tpu.reciprocal %105 {approx = true} : vector<8x1xf32> -> vector<8x1xf32>
    %107 = vector.broadcast %106 : vector<8x1xf32> to vector<8x8xf32>
    %108 = arith.mulf %103, %107 : vector<8x8xf32>
    %109 = arith.truncf %108 : vector<8x8xf32> to vector<8x8xbf16>
    %110 = arith.truncf %93 : vector<8x64xf32> to vector<8x64xbf16>
    %cst_31 = arith.constant dense<0.000000e+00> : vector<8x64xf32>
    %111 = tpu.matmul %109, %110, %cst_31 {dimension_numbers = #tpu.dot_dimension_numbers<[1], [0], [0], [1], [0, 0, 1, 1], [], []>} : vector<8x8xbf16>, vector<8x64xbf16>, vector<8x64xf32> -> vector<8x64xf32>
    %112 = arith.truncf %111 : vector<8x64xf32> to vector<8x64xbf16>
    %113 = vector.extract_strided_slice %12 {offsets = [192, 0], sizes = [64, 256], strides = [1, 1]} : vector<256x256xbf16> to vector<64x256xbf16>
    %cst_32 = arith.constant dense<0.000000e+00> : vector<8x256xf32>
    %114 = tpu.matmul %112, %113, %cst_32 {dimension_numbers = #tpu.dot_dimension_numbers<[1], [0], [0], [1], [0, 0, 1, 1], [], []>} : vector<8x64xbf16>, vector<64x256xbf16>, vector<8x256xf32> -> vector<8x256xf32>
    %115 = arith.addf %90, %114 : vector<8x256xf32>
    %c0_33 = arith.constant 0 : index
    %c0_34 = arith.constant 0 : index
    %116 = vector.load %arg31[%c0_33, %c0_34] : memref<16x256xf32, #tpu.memory_space<vmem>>, vector<8x256xf32>
    tpu.vector_store %arg31[%c0_33, %c0_34], %115 {strides = array<i32>} : memref<16x256xf32, #tpu.memory_space<vmem>>, vector<8x256xf32>,
    %c1 = arith.constant 1 : index
    %117 = memref.load %arg0[%c1] : memref<2xi32, #tpu.memory_space<smem>>
    %118 = vector.broadcast %117 : i32 to vector<8x8xi32>
    %119 = arith.cmpi slt, %13, %118 : vector<8x8xi32>
    %120 = vector.extract_strided_slice %9 {offsets = [8, 0], sizes = [8, 64], strides = [1, 1]} : vector<16x256xf32> to vector<8x64xf32>
    %121 = vector.extract_strided_slice %10 {offsets = [8, 0], sizes = [8, 64], strides = [1, 1]} : vector<16x256xf32> to vector<8x64xf32>
    %122 = vector.extract_strided_slice %11 {offsets = [8, 0], sizes = [8, 64], strides = [1, 1]} : vector<16x256xf32> to vector<8x64xf32>
    %123 = arith.truncf %120 : vector<8x64xf32> to vector<8x64xbf16>
    %124 = arith.truncf %121 : vector<8x64xf32> to vector<8x64xbf16>
    %cst_35 = arith.constant dense<0.000000e+00> : vector<8x8xf32>
    %125 = tpu.matmul %123, %124, %cst_35 {dimension_numbers = #tpu.dot_dimension_numbers<[1], [1], [0], [0], [0, 0, 1, 0], [], []>} : vector<8x64xbf16>, vector<8x64xbf16>, vector<8x8xf32> -> vector<8x8xf32>
    %cst_36 = arith.constant -1.000000e+06 : f32
    %126 = vector.broadcast %cst_36 : f32 to vector<8x8xf32>
    %127 = arith.select %119, %125, %126 : vector<8x8xi1>, vector<8x8xf32>
    %cst_37 = arith.constant dense<0xFF800000> : vector<8xf32>
    %128 = vector.multi_reduction <maximumf>, %127, %cst_37 [1] : vector<8x8xf32> to vector<8xf32>
    %129 = vector.shape_cast %128 : vector<8xf32> to vector<8x1xf32>
    %130 = vector.broadcast %129 : vector<8x1xf32> to vector<8x8xf32>
    %131 = arith.subf %127, %130 : vector<8x8xf32>
    %132 = math.exp %131 : vector<8x8xf32>
    %cst_38 = arith.constant dense<0.000000e+00> : vector<8xf32>
    %133 = vector.multi_reduction <add>, %132, %cst_38 [1] : vector<8x8xf32> to vector<8xf32>
    %134 = vector.shape_cast %133 : vector<8xf32> to vector<8x1xf32>
    %135 = tpu.reciprocal %134 {approx = true} : vector<8x1xf32> -> vector<8x1xf32>
    %136 = vector.broadcast %135 : vector<8x1xf32> to vector<8x8xf32>
    %137 = arith.mulf %132, %136 : vector<8x8xf32>
    %138 = arith.truncf %137 : vector<8x8xf32> to vector<8x8xbf16>
    %139 = arith.truncf %122 : vector<8x64xf32> to vector<8x64xbf16>
    %cst_39 = arith.constant dense<0.000000e+00> : vector<8x64xf32>
    %140 = tpu.matmul %138, %139, %cst_39 {dimension_numbers = #tpu.dot_dimension_numbers<[1], [0], [0], [1], [0, 0, 1, 1], [], []>} : vector<8x8xbf16>, vector<8x64xbf16>, vector<8x64xf32> -> vector<8x64xf32>
    %141 = arith.truncf %140 : vector<8x64xf32> to vector<8x64xbf16>
    %142 = vector.extract_strided_slice %12 {offsets = [0, 0], sizes = [64, 256], strides = [1, 1]} : vector<256x256xbf16> to vector<64x256xbf16>
    %cst_40 = arith.constant dense<0.000000e+00> : vector<8x256xf32>
    %143 = tpu.matmul %141, %142, %cst_40 {dimension_numbers = #tpu.dot_dimension_numbers<[1], [0], [0], [1], [0, 0, 1, 1], [], []>} : vector<8x64xbf16>, vector<64x256xbf16>, vector<8x256xf32> -> vector<8x256xf32>
    %144 = vector.extract_strided_slice %9 {offsets = [8, 64], sizes = [8, 64], strides = [1, 1]} : vector<16x256xf32> to vector<8x64xf32>
    %145 = vector.extract_strided_slice %10 {offsets = [8, 64], sizes = [8, 64], strides = [1, 1]} : vector<16x256xf32> to vector<8x64xf32>
    %146 = vector.extract_strided_slice %11 {offsets = [8, 64], sizes = [8, 64], strides = [1, 1]} : vector<16x256xf32> to vector<8x64xf32>
    %147 = arith.truncf %144 : vector<8x64xf32> to vector<8x64xbf16>
    %148 = arith.truncf %145 : vector<8x64xf32> to vector<8x64xbf16>
    %cst_41 = arith.constant dense<0.000000e+00> : vector<8x8xf32>
    %149 = tpu.matmul %147, %148, %cst_41 {dimension_numbers = #tpu.dot_dimension_numbers<[1], [1], [0], [0], [0, 0, 1, 0], [], []>} : vector<8x64xbf16>, vector<8x64xbf16>, vector<8x8xf32> -> vector<8x8xf32>
    %cst_42 = arith.constant -1.000000e+06 : f32
    %150 = vector.broadcast %cst_42 : f32 to vector<8x8xf32>
    %151 = arith.select %119, %149, %150 : vector<8x8xi1>, vector<8x8xf32>
    %cst_43 = arith.constant dense<0xFF800000> : vector<8xf32>
    %152 = vector.multi_reduction <maximumf>, %151, %cst_43 [1] : vector<8x8xf32> to vector<8xf32>
    %153 = vector.shape_cast %152 : vector<8xf32> to vector<8x1xf32>
    %154 = vector.broadcast %153 : vector<8x1xf32> to vector<8x8xf32>
    %155 = arith.subf %151, %154 : vector<8x8xf32>
    %156 = math.exp %155 : vector<8x8xf32>
    %cst_44 = arith.constant dense<0.000000e+00> : vector<8xf32>
    %157 = vector.multi_reduction <add>, %156, %cst_44 [1] : vector<8x8xf32> to vector<8xf32>
    %158 = vector.shape_cast %157 : vector<8xf32> to vector<8x1xf32>
    %159 = tpu.reciprocal %158 {approx = true} : vector<8x1xf32> -> vector<8x1xf32>
    %160 = vector.broadcast %159 : vector<8x1xf32> to vector<8x8xf32>
    %161 = arith.mulf %156, %160 : vector<8x8xf32>
    %162 = arith.truncf %161 : vector<8x8xf32> to vector<8x8xbf16>
    %163 = arith.truncf %146 : vector<8x64xf32> to vector<8x64xbf16>
    %cst_45 = arith.constant dense<0.000000e+00> : vector<8x64xf32>
    %164 = tpu.matmul %162, %163, %cst_45 {dimension_numbers = #tpu.dot_dimension_numbers<[1], [0], [0], [1], [0, 0, 1, 1], [], []>} : vector<8x8xbf16>, vector<8x64xbf16>, vector<8x64xf32> -> vector<8x64xf32>
    %165 = arith.truncf %164 : vector<8x64xf32> to vector<8x64xbf16>
    %166 = vector.extract_strided_slice %12 {offsets = [64, 0], sizes = [64, 256], strides = [1, 1]} : vector<256x256xbf16> to vector<64x256xbf16>
    %cst_46 = arith.constant dense<0.000000e+00> : vector<8x256xf32>
    %167 = tpu.matmul %165, %166, %cst_46 {dimension_numbers = #tpu.dot_dimension_numbers<[1], [0], [0], [1], [0, 0, 1, 1], [], []>} : vector<8x64xbf16>, vector<64x256xbf16>, vector<8x256xf32> -> vector<8x256xf32>
    %168 = arith.addf %143, %167 : vector<8x256xf32>
    %169 = vector.extract_strided_slice %9 {offsets = [8, 128], sizes = [8, 64], strides = [1, 1]} : vector<16x256xf32> to vector<8x64xf32>
    %170 = vector.extract_strided_slice %10 {offsets = [8, 128], sizes = [8, 64], strides = [1, 1]} : vector<16x256xf32> to vector<8x64xf32>
    %171 = vector.extract_strided_slice %11 {offsets = [8, 128], sizes = [8, 64], strides = [1, 1]} : vector<16x256xf32> to vector<8x64xf32>
    %172 = arith.truncf %169 : vector<8x64xf32> to vector<8x64xbf16>
    %173 = arith.truncf %170 : vector<8x64xf32> to vector<8x64xbf16>
    %cst_47 = arith.constant dense<0.000000e+00> : vector<8x8xf32>
    %174 = tpu.matmul %172, %173, %cst_47 {dimension_numbers = #tpu.dot_dimension_numbers<[1], [1], [0], [0], [0, 0, 1, 0], [], []>} : vector<8x64xbf16>, vector<8x64xbf16>, vector<8x8xf32> -> vector<8x8xf32>
    %cst_48 = arith.constant -1.000000e+06 : f32
    %175 = vector.broadcast %cst_48 : f32 to vector<8x8xf32>
    %176 = arith.select %119, %174, %175 : vector<8x8xi1>, vector<8x8xf32>
    %cst_49 = arith.constant dense<0xFF800000> : vector<8xf32>
    %177 = vector.multi_reduction <maximumf>, %176, %cst_49 [1] : vector<8x8xf32> to vector<8xf32>
    %178 = vector.shape_cast %177 : vector<8xf32> to vector<8x1xf32>
    %179 = vector.broadcast %178 : vector<8x1xf32> to vector<8x8xf32>
    %180 = arith.subf %176, %179 : vector<8x8xf32>
    %181 = math.exp %180 : vector<8x8xf32>
    %cst_50 = arith.constant dense<0.000000e+00> : vector<8xf32>
    %182 = vector.multi_reduction <add>, %181, %cst_50 [1] : vector<8x8xf32> to vector<8xf32>
    %183 = vector.shape_cast %182 : vector<8xf32> to vector<8x1xf32>
    %184 = tpu.reciprocal %183 {approx = true} : vector<8x1xf32> -> vector<8x1xf32>
    %185 = vector.broadcast %184 : vector<8x1xf32> to vector<8x8xf32>
    %186 = arith.mulf %181, %185 : vector<8x8xf32>
    %187 = arith.truncf %186 : vector<8x8xf32> to vector<8x8xbf16>
    %188 = arith.truncf %171 : vector<8x64xf32> to vector<8x64xbf16>
    %cst_51 = arith.constant dense<0.000000e+00> : vector<8x64xf32>
    %189 = tpu.matmul %187, %188, %cst_51 {dimension_numbers = #tpu.dot_dimension_numbers<[1], [0], [0], [1], [0, 0, 1, 1], [], []>} : vector<8x8xbf16>, vector<8x64xbf16>, vector<8x64xf32> -> vector<8x64xf32>
    %190 = arith.truncf %189 : vector<8x64xf32> to vector<8x64xbf16>
    %191 = vector.extract_strided_slice %12 {offsets = [128, 0], sizes = [64, 256], strides = [1, 1]} : vector<256x256xbf16> to vector<64x256xbf16>
    %cst_52 = arith.constant dense<0.000000e+00> : vector<8x256xf32>
    %192 = tpu.matmul %190, %191, %cst_52 {dimension_numbers = #tpu.dot_dimension_numbers<[1], [0], [0], [1], [0, 0, 1, 1], [], []>} : vector<8x64xbf16>, vector<64x256xbf16>, vector<8x256xf32> -> vector<8x256xf32>
    %193 = arith.addf %168, %192 : vector<8x256xf32>
    %194 = vector.extract_strided_slice %9 {offsets = [8, 192], sizes = [8, 64], strides = [1, 1]} : vector<16x256xf32> to vector<8x64xf32>
    %195 = vector.extract_strided_slice %10 {offsets = [8, 192], sizes = [8, 64], strides = [1, 1]} : vector<16x256xf32> to vector<8x64xf32>
    %196 = vector.extract_strided_slice %11 {offsets = [8, 192], sizes = [8, 64], strides = [1, 1]} : vector<16x256xf32> to vector<8x64xf32>
    %197 = arith.truncf %194 : vector<8x64xf32> to vector<8x64xbf16>
    %198 = arith.truncf %195 : vector<8x64xf32> to vector<8x64xbf16>
    %cst_53 = arith.constant dense<0.000000e+00> : vector<8x8xf32>
    %199 = tpu.matmul %197, %198, %cst_53 {dimension_numbers = #tpu.dot_dimension_numbers<[1], [1], [0], [0], [0, 0, 1, 0], [], []>} : vector<8x64xbf16>, vector<8x64xbf16>, vector<8x8xf32> -> vector<8x8xf32>
    %cst_54 = arith.constant -1.000000e+06 : f32
    %200 = vector.broadcast %cst_54 : f32 to vector<8x8xf32>
    %201 = arith.select %119, %199, %200 : vector<8x8xi1>, vector<8x8xf32>
    %cst_55 = arith.constant dense<0xFF800000> : vector<8xf32>
    %202 = vector.multi_reduction <maximumf>, %201, %cst_55 [1] : vector<8x8xf32> to vector<8xf32>
    %203 = vector.shape_cast %202 : vector<8xf32> to vector<8x1xf32>
    %204 = vector.broadcast %203 : vector<8x1xf32> to vector<8x8xf32>
    %205 = arith.subf %201, %204 : vector<8x8xf32>
    %206 = math.exp %205 : vector<8x8xf32>
    %cst_56 = arith.constant dense<0.000000e+00> : vector<8xf32>
    %207 = vector.multi_reduction <add>, %206, %cst_56 [1] : vector<8x8xf32> to vector<8xf32>
    %208 = vector.shape_cast %207 : vector<8xf32> to vector<8x1xf32>
    %209 = tpu.reciprocal %208 {approx = true} : vector<8x1xf32> -> vector<8x1xf32>
    %210 = vector.broadcast %209 : vector<8x1xf32> to vector<8x8xf32>
    %211 = arith.mulf %206, %210 : vector<8x8xf32>
    %212 = arith.truncf %211 : vector<8x8xf32> to vector<8x8xbf16>
    %213 = arith.truncf %196 : vector<8x64xf32> to vector<8x64xbf16>
    %cst_57 = arith.constant dense<0.000000e+00> : vector<8x64xf32>
    %214 = tpu.matmul %212, %213, %cst_57 {dimension_numbers = #tpu.dot_dimension_numbers<[1], [0], [0], [1], [0, 0, 1, 1], [], []>} : vector<8x8xbf16>, vector<8x64xbf16>, vector<8x64xf32> -> vector<8x64xf32>
    %215 = arith.truncf %214 : vector<8x64xf32> to vector<8x64xbf16>
    %216 = vector.extract_strided_slice %12 {offsets = [192, 0], sizes = [64, 256], strides = [1, 1]} : vector<256x256xbf16> to vector<64x256xbf16>
    %cst_58 = arith.constant dense<0.000000e+00> : vector<8x256xf32>
    %217 = tpu.matmul %215, %216, %cst_58 {dimension_numbers = #tpu.dot_dimension_numbers<[1], [0], [0], [1], [0, 0, 1, 1], [], []>} : vector<8x64xbf16>, vector<64x256xbf16>, vector<8x256xf32> -> vector<8x256xf32>
    %218 = arith.addf %193, %217 : vector<8x256xf32>
    %c8 = arith.constant 8 : index
    %c0_59 = arith.constant 0 : index
    %219 = vector.load %arg31[%c8, %c0_59] : memref<16x256xf32, #tpu.memory_space<vmem>>, vector<8x256xf32>
    tpu.vector_store %arg31[%c8, %c0_59], %218 {strides = array<i32>} : memref<16x256xf32, #tpu.memory_space<vmem>>, vector<8x256xf32>,
    %c0_60 = arith.constant 0 : index
    %c0_61 = arith.constant 0 : index
    %220 = vector.load %arg31[%c0_60, %c0_61] : memref<16x256xf32, #tpu.memory_space<vmem>>, vector<16x256xf32>
    %221 = arith.addf %0, %220 : vector<16x256xf32>
    %c0_62 = arith.constant 0 : index
    %c0_63 = arith.constant 0 : index
    %222 = vector.load %arg5[%c0_62, %c0_63] : memref<1x256xf32, #tpu.memory_space<vmem>>, vector<1x256xf32>
    %223 = vector.broadcast %222 : vector<1x256xf32> to vector<16x256xf32>
    %224 = arith.addf %221, %223 : vector<16x256xf32>
    %c0_64 = arith.constant 0 : index
    %c0_65 = arith.constant 0 : index
    %225 = vector.load %arg6[%c0_64, %c0_65] : memref<1x256xf32, #tpu.memory_space<vmem>>, vector<1x256xf32>
    %c0_66 = arith.constant 0 : index
    %c0_67 = arith.constant 0 : index
    %226 = vector.load %arg7[%c0_66, %c0_67] : memref<1x256xf32, #tpu.memory_space<vmem>>, vector<1x256xf32>
    %cst_68 = arith.constant dense<0.000000e+00> : vector<16xf32>
    %227 = vector.multi_reduction <add>, %224, %cst_68 [1] : vector<16x256xf32> to vector<16xf32>
    %228 = vector.shape_cast %227 : vector<16xf32> to vector<16x1xf32>
    %cst_69 = arith.constant 2.560000e+02 : f32
    %229 = vector.broadcast %cst_69 : f32 to vector<16x1xf32>
    %230 = arith.divf %228, %229 : vector<16x1xf32>
    %231 = vector.broadcast %230 : vector<16x1xf32> to vector<16x256xf32>
    %232 = arith.subf %224, %231 : vector<16x256xf32>
    %233 = arith.mulf %232, %232 : vector<16x256xf32>
    %cst_70 = arith.constant dense<0.000000e+00> : vector<16xf32>
    %234 = vector.multi_reduction <add>, %233, %cst_70 [1] : vector<16x256xf32> to vector<16xf32>
    %235 = vector.shape_cast %234 : vector<16xf32> to vector<16x1xf32>
    %cst_71 = arith.constant 2.560000e+02 : f32
    %236 = vector.broadcast %cst_71 : f32 to vector<16x1xf32>
    %237 = arith.divf %235, %236 : vector<16x1xf32>
    %238 = vector.broadcast %230 : vector<16x1xf32> to vector<16x256xf32>
    %239 = arith.subf %224, %238 : vector<16x256xf32>
    %cst_72 = arith.constant 9.99999974E-6 : f32
    %240 = vector.broadcast %cst_72 : f32 to vector<16x1xf32>
    %241 = arith.addf %237, %240 : vector<16x1xf32>
    %242 = math.rsqrt %241 : vector<16x1xf32>
    %243 = vector.broadcast %242 : vector<16x1xf32> to vector<16x256xf32>
    %244 = arith.mulf %239, %243 : vector<16x256xf32>
    %245 = vector.broadcast %225 : vector<1x256xf32> to vector<16x256xf32>
    %246 = arith.mulf %244, %245 : vector<16x256xf32>
    %247 = vector.broadcast %226 : vector<1x256xf32> to vector<16x256xf32>
    %248 = arith.addf %246, %247 : vector<16x256xf32>
    %c0_73 = arith.constant 0 : index
    %c0_74 = arith.constant 0 : index
    %249 = vector.load %arg8[%c0_73, %c0_74] : memref<256x512xbf16, #tpu.memory_space<vmem>>, vector<256x512xbf16>
    %250 = arith.truncf %248 : vector<16x256xf32> to vector<16x256xbf16>
    %cst_75 = arith.constant dense<0.000000e+00> : vector<16x512xf32>
    %251 = tpu.matmul %250, %249, %cst_75 {dimension_numbers = #tpu.dot_dimension_numbers<[1], [0], [0], [1], [0, 0, 1, 1], [], []>} : vector<16x256xbf16>, vector<256x512xbf16>, vector<16x512xf32> -> vector<16x512xf32>
    %c0_76 = arith.constant 0 : index
    %c0_77 = arith.constant 0 : index
    %252 = vector.load %arg9[%c0_76, %c0_77] : memref<1x512xf32, #tpu.memory_space<vmem>>, vector<1x512xf32>
    %253 = vector.broadcast %252 : vector<1x512xf32> to vector<16x512xf32>
    %254 = arith.addf %251, %253 : vector<16x512xf32>
    %cst_78 = arith.constant 0.000000e+00 : f32
    %255 = vector.broadcast %cst_78 : f32 to vector<16x512xf32>
    %256 = arith.maximumf %254, %255 : vector<16x512xf32>
    %c0_79 = arith.constant 0 : index
    %c0_80 = arith.constant 0 : index
    %257 = vector.load %arg10[%c0_79, %c0_80] : memref<512x256xbf16, #tpu.memory_space<vmem>>, vector<512x256xbf16>
    %258 = arith.truncf %256 : vector<16x512xf32> to vector<16x512xbf16>
    %cst_81 = arith.constant dense<0.000000e+00> : vector<16x256xf32>
    %259 = tpu.matmul %258, %257, %cst_81 {dimension_numbers = #tpu.dot_dimension_numbers<[1], [0], [0], [1], [0, 0, 1, 1], [], []>} : vector<16x512xbf16>, vector<512x256xbf16>, vector<16x256xf32> -> vector<16x256xf32>
    %c0_82 = arith.constant 0 : index
    %c0_83 = arith.constant 0 : index
    %260 = vector.load %arg11[%c0_82, %c0_83] : memref<1x256xf32, #tpu.memory_space<vmem>>, vector<1x256xf32>
    %261 = vector.broadcast %260 : vector<1x256xf32> to vector<16x256xf32>
    %262 = arith.addf %259, %261 : vector<16x256xf32>
    %263 = arith.addf %248, %262 : vector<16x256xf32>
    %c0_84 = arith.constant 0 : index
    %c0_85 = arith.constant 0 : index
    %264 = vector.load %arg12[%c0_84, %c0_85] : memref<1x256xf32, #tpu.memory_space<vmem>>, vector<1x256xf32>
    %c0_86 = arith.constant 0 : index
    %c0_87 = arith.constant 0 : index
    %265 = vector.load %arg13[%c0_86, %c0_87] : memref<1x256xf32, #tpu.memory_space<vmem>>, vector<1x256xf32>
    %cst_88 = arith.constant dense<0.000000e+00> : vector<16xf32>
    %266 = vector.multi_reduction <add>, %263, %cst_88 [1] : vector<16x256xf32> to vector<16xf32>
    %267 = vector.shape_cast %266 : vector<16xf32> to vector<16x1xf32>
    %cst_89 = arith.constant 2.560000e+02 : f32
    %268 = vector.broadcast %cst_89 : f32 to vector<16x1xf32>
    %269 = arith.divf %267, %268 : vector<16x1xf32>
    %270 = vector.broadcast %269 : vector<16x1xf32> to vector<16x256xf32>
    %271 = arith.subf %263, %270 : vector<16x256xf32>
    %272 = arith.mulf %271, %271 : vector<16x256xf32>
    %cst_90 = arith.constant dense<0.000000e+00> : vector<16xf32>
    %273 = vector.multi_reduction <add>, %272, %cst_90 [1] : vector<16x256xf32> to vector<16xf32>
    %274 = vector.shape_cast %273 : vector<16xf32> to vector<16x1xf32>
    %cst_91 = arith.constant 2.560000e+02 : f32
    %275 = vector.broadcast %cst_91 : f32 to vector<16x1xf32>
    %276 = arith.divf %274, %275 : vector<16x1xf32>
    %277 = vector.broadcast %269 : vector<16x1xf32> to vector<16x256xf32>
    %278 = arith.subf %263, %277 : vector<16x256xf32>
    %cst_92 = arith.constant 9.99999974E-6 : f32
    %279 = vector.broadcast %cst_92 : f32 to vector<16x1xf32>
    %280 = arith.addf %276, %279 : vector<16x1xf32>
    %281 = math.rsqrt %280 : vector<16x1xf32>
    %282 = vector.broadcast %281 : vector<16x1xf32> to vector<16x256xf32>
    %283 = arith.mulf %278, %282 : vector<16x256xf32>
    %284 = vector.broadcast %264 : vector<1x256xf32> to vector<16x256xf32>
    %285 = arith.mulf %283, %284 : vector<16x256xf32>
    %286 = vector.broadcast %265 : vector<1x256xf32> to vector<16x256xf32>
    %287 = arith.addf %285, %286 : vector<16x256xf32>
    %c0_93 = arith.constant 0 : index
    %c0_94 = arith.constant 0 : index
    %288 = vector.load %arg14[%c0_93, %c0_94] : memref<256x768xbf16, #tpu.memory_space<vmem>>, vector<256x768xbf16>
    %289 = arith.truncf %287 : vector<16x256xf32> to vector<16x256xbf16>
    %cst_95 = arith.constant dense<0.000000e+00> : vector<16x768xf32>
    %290 = tpu.matmul %289, %288, %cst_95 {dimension_numbers = #tpu.dot_dimension_numbers<[1], [0], [0], [1], [0, 0, 1, 1], [], []>} : vector<16x256xbf16>, vector<256x768xbf16>, vector<16x768xf32> -> vector<16x768xf32>
    %c0_96 = arith.constant 0 : index
    %c0_97 = arith.constant 0 : index
    %291 = vector.load %arg15[%c0_96, %c0_97] : memref<1x768xf32, #tpu.memory_space<vmem>>, vector<1x768xf32>
    %292 = vector.broadcast %291 : vector<1x768xf32> to vector<16x768xf32>
    %293 = arith.addf %290, %292 : vector<16x768xf32>
    %294 = vector.extract_strided_slice %293 {offsets = [0, 0], sizes = [16, 256], strides = [1, 1]} : vector<16x768xf32> to vector<16x256xf32>
    %cst_98 = arith.constant 1.250000e-01 : f32
    %295 = vector.broadcast %cst_98 : f32 to vector<16x256xf32>
    %296 = arith.mulf %294, %295 : vector<16x256xf32>
    %297 = vector.extract_strided_slice %293 {offsets = [0, 256], sizes = [16, 256], strides = [1, 1]} : vector<16x768xf32> to vector<16x256xf32>
    %298 = vector.extract_strided_slice %293 {offsets = [0, 512], sizes = [16, 256], strides = [1, 1]} : vector<16x768xf32> to vector<16x256xf32>
    %c0_99 = arith.constant 0 : index
    %c0_100 = arith.constant 0 : index
    %299 = vector.load %arg16[%c0_99, %c0_100] : memref<256x256xbf16, #tpu.memory_space<vmem>>, vector<256x256xbf16>
    %300 = tpu.iota {dimensions = array<i32: 1>} : vector<8x8xi32>
    %c0_101 = arith.constant 0 : index
    %301 = memref.load %arg0[%c0_101] : memref<2xi32, #tpu.memory_space<smem>>
    %302 = vector.broadcast %301 : i32 to vector<8x8xi32>
    %303 = arith.cmpi slt, %300, %302 : vector<8x8xi32>
    %304 = vector.extract_strided_slice %296 {offsets = [0, 0], sizes = [8, 64], strides = [1, 1]} : vector<16x256xf32> to vector<8x64xf32>
    %305 = vector.extract_strided_slice %297 {offsets = [0, 0], sizes = [8, 64], strides = [1, 1]} : vector<16x256xf32> to vector<8x64xf32>
    %306 = vector.extract_strided_slice %298 {offsets = [0, 0], sizes = [8, 64], strides = [1, 1]} : vector<16x256xf32> to vector<8x64xf32>
    %307 = arith.truncf %304 : vector<8x64xf32> to vector<8x64xbf16>
    %308 = arith.truncf %305 : vector<8x64xf32> to vector<8x64xbf16>
    %cst_102 = arith.constant dense<0.000000e+00> : vector<8x8xf32>
    %309 = tpu.matmul %307, %308, %cst_102 {dimension_numbers = #tpu.dot_dimension_numbers<[1], [1], [0], [0], [0, 0, 1, 0], [], []>} : vector<8x64xbf16>, vector<8x64xbf16>, vector<8x8xf32> -> vector<8x8xf32>
    %cst_103 = arith.constant -1.000000e+06 : f32
    %310 = vector.broadcast %cst_103 : f32 to vector<8x8xf32>
    %311 = arith.select %303, %309, %310 : vector<8x8xi1>, vector<8x8xf32>
    %cst_104 = arith.constant dense<0xFF800000> : vector<8xf32>
    %312 = vector.multi_reduction <maximumf>, %311, %cst_104 [1] : vector<8x8xf32> to vector<8xf32>
    %313 = vector.shape_cast %312 : vector<8xf32> to vector<8x1xf32>
    %314 = vector.broadcast %313 : vector<8x1xf32> to vector<8x8xf32>
    %315 = arith.subf %311, %314 : vector<8x8xf32>
    %316 = math.exp %315 : vector<8x8xf32>
    %cst_105 = arith.constant dense<0.000000e+00> : vector<8xf32>
    %317 = vector.multi_reduction <add>, %316, %cst_105 [1] : vector<8x8xf32> to vector<8xf32>
    %318 = vector.shape_cast %317 : vector<8xf32> to vector<8x1xf32>
    %319 = tpu.reciprocal %318 {approx = true} : vector<8x1xf32> -> vector<8x1xf32>
    %320 = vector.broadcast %319 : vector<8x1xf32> to vector<8x8xf32>
    %321 = arith.mulf %316, %320 : vector<8x8xf32>
    %322 = arith.truncf %321 : vector<8x8xf32> to vector<8x8xbf16>
    %323 = arith.truncf %306 : vector<8x64xf32> to vector<8x64xbf16>
    %cst_106 = arith.constant dense<0.000000e+00> : vector<8x64xf32>
    %324 = tpu.matmul %322, %323, %cst_106 {dimension_numbers = #tpu.dot_dimension_numbers<[1], [0], [0], [1], [0, 0, 1, 1], [], []>} : vector<8x8xbf16>, vector<8x64xbf16>, vector<8x64xf32> -> vector<8x64xf32>
    %325 = arith.truncf %324 : vector<8x64xf32> to vector<8x64xbf16>
    %326 = vector.extract_strided_slice %299 {offsets = [0, 0], sizes = [64, 256], strides = [1, 1]} : vector<256x256xbf16> to vector<64x256xbf16>
    %cst_107 = arith.constant dense<0.000000e+00> : vector<8x256xf32>
    %327 = tpu.matmul %325, %326, %cst_107 {dimension_numbers = #tpu.dot_dimension_numbers<[1], [0], [0], [1], [0, 0, 1, 1], [], []>} : vector<8x64xbf16>, vector<64x256xbf16>, vector<8x256xf32> -> vector<8x256xf32>
    %328 = vector.extract_strided_slice %296 {offsets = [0, 64], sizes = [8, 64], strides = [1, 1]} : vector<16x256xf32> to vector<8x64xf32>
    %329 = vector.extract_strided_slice %297 {offsets = [0, 64], sizes = [8, 64], strides = [1, 1]} : vector<16x256xf32> to vector<8x64xf32>
    %330 = vector.extract_strided_slice %298 {offsets = [0, 64], sizes = [8, 64], strides = [1, 1]} : vector<16x256xf32> to vector<8x64xf32>
    %331 = arith.truncf %328 : vector<8x64xf32> to vector<8x64xbf16>
    %332 = arith.truncf %329 : vector<8x64xf32> to vector<8x64xbf16>
    %cst_108 = arith.constant dense<0.000000e+00> : vector<8x8xf32>
    %333 = tpu.matmul %331, %332, %cst_108 {dimension_numbers = #tpu.dot_dimension_numbers<[1], [1], [0], [0], [0, 0, 1, 0], [], []>} : vector<8x64xbf16>, vector<8x64xbf16>, vector<8x8xf32> -> vector<8x8xf32>
    %cst_109 = arith.constant -1.000000e+06 : f32
    %334 = vector.broadcast %cst_109 : f32 to vector<8x8xf32>
    %335 = arith.select %303, %333, %334 : vector<8x8xi1>, vector<8x8xf32>
    %cst_110 = arith.constant dense<0xFF800000> : vector<8xf32>
    %336 = vector.multi_reduction <maximumf>, %335, %cst_110 [1] : vector<8x8xf32> to vector<8xf32>
    %337 = vector.shape_cast %336 : vector<8xf32> to vector<8x1xf32>
    %338 = vector.broadcast %337 : vector<8x1xf32> to vector<8x8xf32>
    %339 = arith.subf %335, %338 : vector<8x8xf32>
    %340 = math.exp %339 : vector<8x8xf32>
    %cst_111 = arith.constant dense<0.000000e+00> : vector<8xf32>
    %341 = vector.multi_reduction <add>, %340, %cst_111 [1] : vector<8x8xf32> to vector<8xf32>
    %342 = vector.shape_cast %341 : vector<8xf32> to vector<8x1xf32>
    %343 = tpu.reciprocal %342 {approx = true} : vector<8x1xf32> -> vector<8x1xf32>
    %344 = vector.broadcast %343 : vector<8x1xf32> to vector<8x8xf32>
    %345 = arith.mulf %340, %344 : vector<8x8xf32>
    %346 = arith.truncf %345 : vector<8x8xf32> to vector<8x8xbf16>
    %347 = arith.truncf %330 : vector<8x64xf32> to vector<8x64xbf16>
    %cst_112 = arith.constant dense<0.000000e+00> : vector<8x64xf32>
    %348 = tpu.matmul %346, %347, %cst_112 {dimension_numbers = #tpu.dot_dimension_numbers<[1], [0], [0], [1], [0, 0, 1, 1], [], []>} : vector<8x8xbf16>, vector<8x64xbf16>, vector<8x64xf32> -> vector<8x64xf32>
    %349 = arith.truncf %348 : vector<8x64xf32> to vector<8x64xbf16>
    %350 = vector.extract_strided_slice %299 {offsets = [64, 0], sizes = [64, 256], strides = [1, 1]} : vector<256x256xbf16> to vector<64x256xbf16>
    %cst_113 = arith.constant dense<0.000000e+00> : vector<8x256xf32>
    %351 = tpu.matmul %349, %350, %cst_113 {dimension_numbers = #tpu.dot_dimension_numbers<[1], [0], [0], [1], [0, 0, 1, 1], [], []>} : vector<8x64xbf16>, vector<64x256xbf16>, vector<8x256xf32> -> vector<8x256xf32>
    %352 = arith.addf %327, %351 : vector<8x256xf32>
    %353 = vector.extract_strided_slice %296 {offsets = [0, 128], sizes = [8, 64], strides = [1, 1]} : vector<16x256xf32> to vector<8x64xf32>
    %354 = vector.extract_strided_slice %297 {offsets = [0, 128], sizes = [8, 64], strides = [1, 1]} : vector<16x256xf32> to vector<8x64xf32>
    %355 = vector.extract_strided_slice %298 {offsets = [0, 128], sizes = [8, 64], strides = [1, 1]} : vector<16x256xf32> to vector<8x64xf32>
    %356 = arith.truncf %353 : vector<8x64xf32> to vector<8x64xbf16>
    %357 = arith.truncf %354 : vector<8x64xf32> to vector<8x64xbf16>
    %cst_114 = arith.constant dense<0.000000e+00> : vector<8x8xf32>
    %358 = tpu.matmul %356, %357, %cst_114 {dimension_numbers = #tpu.dot_dimension_numbers<[1], [1], [0], [0], [0, 0, 1, 0], [], []>} : vector<8x64xbf16>, vector<8x64xbf16>, vector<8x8xf32> -> vector<8x8xf32>
    %cst_115 = arith.constant -1.000000e+06 : f32
    %359 = vector.broadcast %cst_115 : f32 to vector<8x8xf32>
    %360 = arith.select %303, %358, %359 : vector<8x8xi1>, vector<8x8xf32>
    %cst_116 = arith.constant dense<0xFF800000> : vector<8xf32>
    %361 = vector.multi_reduction <maximumf>, %360, %cst_116 [1] : vector<8x8xf32> to vector<8xf32>
    %362 = vector.shape_cast %361 : vector<8xf32> to vector<8x1xf32>
    %363 = vector.broadcast %362 : vector<8x1xf32> to vector<8x8xf32>
    %364 = arith.subf %360, %363 : vector<8x8xf32>
    %365 = math.exp %364 : vector<8x8xf32>
    %cst_117 = arith.constant dense<0.000000e+00> : vector<8xf32>
    %366 = vector.multi_reduction <add>, %365, %cst_117 [1] : vector<8x8xf32> to vector<8xf32>
    %367 = vector.shape_cast %366 : vector<8xf32> to vector<8x1xf32>
    %368 = tpu.reciprocal %367 {approx = true} : vector<8x1xf32> -> vector<8x1xf32>
    %369 = vector.broadcast %368 : vector<8x1xf32> to vector<8x8xf32>
    %370 = arith.mulf %365, %369 : vector<8x8xf32>
    %371 = arith.truncf %370 : vector<8x8xf32> to vector<8x8xbf16>
    %372 = arith.truncf %355 : vector<8x64xf32> to vector<8x64xbf16>
    %cst_118 = arith.constant dense<0.000000e+00> : vector<8x64xf32>
    %373 = tpu.matmul %371, %372, %cst_118 {dimension_numbers = #tpu.dot_dimension_numbers<[1], [0], [0], [1], [0, 0, 1, 1], [], []>} : vector<8x8xbf16>, vector<8x64xbf16>, vector<8x64xf32> -> vector<8x64xf32>
    %374 = arith.truncf %373 : vector<8x64xf32> to vector<8x64xbf16>
    %375 = vector.extract_strided_slice %299 {offsets = [128, 0], sizes = [64, 256], strides = [1, 1]} : vector<256x256xbf16> to vector<64x256xbf16>
    %cst_119 = arith.constant dense<0.000000e+00> : vector<8x256xf32>
    %376 = tpu.matmul %374, %375, %cst_119 {dimension_numbers = #tpu.dot_dimension_numbers<[1], [0], [0], [1], [0, 0, 1, 1], [], []>} : vector<8x64xbf16>, vector<64x256xbf16>, vector<8x256xf32> -> vector<8x256xf32>
    %377 = arith.addf %352, %376 : vector<8x256xf32>
    %378 = vector.extract_strided_slice %296 {offsets = [0, 192], sizes = [8, 64], strides = [1, 1]} : vector<16x256xf32> to vector<8x64xf32>
    %379 = vector.extract_strided_slice %297 {offsets = [0, 192], sizes = [8, 64], strides = [1, 1]} : vector<16x256xf32> to vector<8x64xf32>
    %380 = vector.extract_strided_slice %298 {offsets = [0, 192], sizes = [8, 64], strides = [1, 1]} : vector<16x256xf32> to vector<8x64xf32>
    %381 = arith.truncf %378 : vector<8x64xf32> to vector<8x64xbf16>
    %382 = arith.truncf %379 : vector<8x64xf32> to vector<8x64xbf16>
    %cst_120 = arith.constant dense<0.000000e+00> : vector<8x8xf32>
    %383 = tpu.matmul %381, %382, %cst_120 {dimension_numbers = #tpu.dot_dimension_numbers<[1], [1], [0], [0], [0, 0, 1, 0], [], []>} : vector<8x64xbf16>, vector<8x64xbf16>, vector<8x8xf32> -> vector<8x8xf32>
    %cst_121 = arith.constant -1.000000e+06 : f32
    %384 = vector.broadcast %cst_121 : f32 to vector<8x8xf32>
    %385 = arith.select %303, %383, %384 : vector<8x8xi1>, vector<8x8xf32>
    %cst_122 = arith.constant dense<0xFF800000> : vector<8xf32>
    %386 = vector.multi_reduction <maximumf>, %385, %cst_122 [1] : vector<8x8xf32> to vector<8xf32>
    %387 = vector.shape_cast %386 : vector<8xf32> to vector<8x1xf32>
    %388 = vector.broadcast %387 : vector<8x1xf32> to vector<8x8xf32>
    %389 = arith.subf %385, %388 : vector<8x8xf32>
    %390 = math.exp %389 : vector<8x8xf32>
    %cst_123 = arith.constant dense<0.000000e+00> : vector<8xf32>
    %391 = vector.multi_reduction <add>, %390, %cst_123 [1] : vector<8x8xf32> to vector<8xf32>
    %392 = vector.shape_cast %391 : vector<8xf32> to vector<8x1xf32>
    %393 = tpu.reciprocal %392 {approx = true} : vector<8x1xf32> -> vector<8x1xf32>
    %394 = vector.broadcast %393 : vector<8x1xf32> to vector<8x8xf32>
    %395 = arith.mulf %390, %394 : vector<8x8xf32>
    %396 = arith.truncf %395 : vector<8x8xf32> to vector<8x8xbf16>
    %397 = arith.truncf %380 : vector<8x64xf32> to vector<8x64xbf16>
    %cst_124 = arith.constant dense<0.000000e+00> : vector<8x64xf32>
    %398 = tpu.matmul %396, %397, %cst_124 {dimension_numbers = #tpu.dot_dimension_numbers<[1], [0], [0], [1], [0, 0, 1, 1], [], []>} : vector<8x8xbf16>, vector<8x64xbf16>, vector<8x64xf32> -> vector<8x64xf32>
    %399 = arith.truncf %398 : vector<8x64xf32> to vector<8x64xbf16>
    %400 = vector.extract_strided_slice %299 {offsets = [192, 0], sizes = [64, 256], strides = [1, 1]} : vector<256x256xbf16> to vector<64x256xbf16>
    %cst_125 = arith.constant dense<0.000000e+00> : vector<8x256xf32>
    %401 = tpu.matmul %399, %400, %cst_125 {dimension_numbers = #tpu.dot_dimension_numbers<[1], [0], [0], [1], [0, 0, 1, 1], [], []>} : vector<8x64xbf16>, vector<64x256xbf16>, vector<8x256xf32> -> vector<8x256xf32>
    %402 = arith.addf %377, %401 : vector<8x256xf32>
    %c0_126 = arith.constant 0 : index
    %c0_127 = arith.constant 0 : index
    %403 = vector.load %arg31[%c0_126, %c0_127] : memref<16x256xf32, #tpu.memory_space<vmem>>, vector<8x256xf32>
    tpu.vector_store %arg31[%c0_126, %c0_127], %402 {strides = array<i32>} : memref<16x256xf32, #tpu.memory_space<vmem>>, vector<8x256xf32>,
    %c1_128 = arith.constant 1 : index
    %404 = memref.load %arg0[%c1_128] : memref<2xi32, #tpu.memory_space<smem>>
    %405 = vector.broadcast %404 : i32 to vector<8x8xi32>
    %406 = arith.cmpi slt, %300, %405 : vector<8x8xi32>
    %407 = vector.extract_strided_slice %296 {offsets = [8, 0], sizes = [8, 64], strides = [1, 1]} : vector<16x256xf32> to vector<8x64xf32>
    %408 = vector.extract_strided_slice %297 {offsets = [8, 0], sizes = [8, 64], strides = [1, 1]} : vector<16x256xf32> to vector<8x64xf32>
    %409 = vector.extract_strided_slice %298 {offsets = [8, 0], sizes = [8, 64], strides = [1, 1]} : vector<16x256xf32> to vector<8x64xf32>
    %410 = arith.truncf %407 : vector<8x64xf32> to vector<8x64xbf16>
    %411 = arith.truncf %408 : vector<8x64xf32> to vector<8x64xbf16>
    %cst_129 = arith.constant dense<0.000000e+00> : vector<8x8xf32>
    %412 = tpu.matmul %410, %411, %cst_129 {dimension_numbers = #tpu.dot_dimension_numbers<[1], [1], [0], [0], [0, 0, 1, 0], [], []>} : vector<8x64xbf16>, vector<8x64xbf16>, vector<8x8xf32> -> vector<8x8xf32>
    %cst_130 = arith.constant -1.000000e+06 : f32
    %413 = vector.broadcast %cst_130 : f32 to vector<8x8xf32>
    %414 = arith.select %406, %412, %413 : vector<8x8xi1>, vector<8x8xf32>
    %cst_131 = arith.constant dense<0xFF800000> : vector<8xf32>
    %415 = vector.multi_reduction <maximumf>, %414, %cst_131 [1] : vector<8x8xf32> to vector<8xf32>
    %416 = vector.shape_cast %415 : vector<8xf32> to vector<8x1xf32>
    %417 = vector.broadcast %416 : vector<8x1xf32> to vector<8x8xf32>
    %418 = arith.subf %414, %417 : vector<8x8xf32>
    %419 = math.exp %418 : vector<8x8xf32>
    %cst_132 = arith.constant dense<0.000000e+00> : vector<8xf32>
    %420 = vector.multi_reduction <add>, %419, %cst_132 [1] : vector<8x8xf32> to vector<8xf32>
    %421 = vector.shape_cast %420 : vector<8xf32> to vector<8x1xf32>
    %422 = tpu.reciprocal %421 {approx = true} : vector<8x1xf32> -> vector<8x1xf32>
    %423 = vector.broadcast %422 : vector<8x1xf32> to vector<8x8xf32>
    %424 = arith.mulf %419, %423 : vector<8x8xf32>
    %425 = arith.truncf %424 : vector<8x8xf32> to vector<8x8xbf16>
    %426 = arith.truncf %409 : vector<8x64xf32> to vector<8x64xbf16>
    %cst_133 = arith.constant dense<0.000000e+00> : vector<8x64xf32>
    %427 = tpu.matmul %425, %426, %cst_133 {dimension_numbers = #tpu.dot_dimension_numbers<[1], [0], [0], [1], [0, 0, 1, 1], [], []>} : vector<8x8xbf16>, vector<8x64xbf16>, vector<8x64xf32> -> vector<8x64xf32>
    %428 = arith.truncf %427 : vector<8x64xf32> to vector<8x64xbf16>
    %429 = vector.extract_strided_slice %299 {offsets = [0, 0], sizes = [64, 256], strides = [1, 1]} : vector<256x256xbf16> to vector<64x256xbf16>
    %cst_134 = arith.constant dense<0.000000e+00> : vector<8x256xf32>
    %430 = tpu.matmul %428, %429, %cst_134 {dimension_numbers = #tpu.dot_dimension_numbers<[1], [0], [0], [1], [0, 0, 1, 1], [], []>} : vector<8x64xbf16>, vector<64x256xbf16>, vector<8x256xf32> -> vector<8x256xf32>
    %431 = vector.extract_strided_slice %296 {offsets = [8, 64], sizes = [8, 64], strides = [1, 1]} : vector<16x256xf32> to vector<8x64xf32>
    %432 = vector.extract_strided_slice %297 {offsets = [8, 64], sizes = [8, 64], strides = [1, 1]} : vector<16x256xf32> to vector<8x64xf32>
    %433 = vector.extract_strided_slice %298 {offsets = [8, 64], sizes = [8, 64], strides = [1, 1]} : vector<16x256xf32> to vector<8x64xf32>
    %434 = arith.truncf %431 : vector<8x64xf32> to vector<8x64xbf16>
    %435 = arith.truncf %432 : vector<8x64xf32> to vector<8x64xbf16>
    %cst_135 = arith.constant dense<0.000000e+00> : vector<8x8xf32>
    %436 = tpu.matmul %434, %435, %cst_135 {dimension_numbers = #tpu.dot_dimension_numbers<[1], [1], [0], [0], [0, 0, 1, 0], [], []>} : vector<8x64xbf16>, vector<8x64xbf16>, vector<8x8xf32> -> vector<8x8xf32>
    %cst_136 = arith.constant -1.000000e+06 : f32
    %437 = vector.broadcast %cst_136 : f32 to vector<8x8xf32>
    %438 = arith.select %406, %436, %437 : vector<8x8xi1>, vector<8x8xf32>
    %cst_137 = arith.constant dense<0xFF800000> : vector<8xf32>
    %439 = vector.multi_reduction <maximumf>, %438, %cst_137 [1] : vector<8x8xf32> to vector<8xf32>
    %440 = vector.shape_cast %439 : vector<8xf32> to vector<8x1xf32>
    %441 = vector.broadcast %440 : vector<8x1xf32> to vector<8x8xf32>
    %442 = arith.subf %438, %441 : vector<8x8xf32>
    %443 = math.exp %442 : vector<8x8xf32>
    %cst_138 = arith.constant dense<0.000000e+00> : vector<8xf32>
    %444 = vector.multi_reduction <add>, %443, %cst_138 [1] : vector<8x8xf32> to vector<8xf32>
    %445 = vector.shape_cast %444 : vector<8xf32> to vector<8x1xf32>
    %446 = tpu.reciprocal %445 {approx = true} : vector<8x1xf32> -> vector<8x1xf32>
    %447 = vector.broadcast %446 : vector<8x1xf32> to vector<8x8xf32>
    %448 = arith.mulf %443, %447 : vector<8x8xf32>
    %449 = arith.truncf %448 : vector<8x8xf32> to vector<8x8xbf16>
    %450 = arith.truncf %433 : vector<8x64xf32> to vector<8x64xbf16>
    %cst_139 = arith.constant dense<0.000000e+00> : vector<8x64xf32>
    %451 = tpu.matmul %449, %450, %cst_139 {dimension_numbers = #tpu.dot_dimension_numbers<[1], [0], [0], [1], [0, 0, 1, 1], [], []>} : vector<8x8xbf16>, vector<8x64xbf16>, vector<8x64xf32> -> vector<8x64xf32>
    %452 = arith.truncf %451 : vector<8x64xf32> to vector<8x64xbf16>
    %453 = vector.extract_strided_slice %299 {offsets = [64, 0], sizes = [64, 256], strides = [1, 1]} : vector<256x256xbf16> to vector<64x256xbf16>
    %cst_140 = arith.constant dense<0.000000e+00> : vector<8x256xf32>
    %454 = tpu.matmul %452, %453, %cst_140 {dimension_numbers = #tpu.dot_dimension_numbers<[1], [0], [0], [1], [0, 0, 1, 1], [], []>} : vector<8x64xbf16>, vector<64x256xbf16>, vector<8x256xf32> -> vector<8x256xf32>
    %455 = arith.addf %430, %454 : vector<8x256xf32>
    %456 = vector.extract_strided_slice %296 {offsets = [8, 128], sizes = [8, 64], strides = [1, 1]} : vector<16x256xf32> to vector<8x64xf32>
    %457 = vector.extract_strided_slice %297 {offsets = [8, 128], sizes = [8, 64], strides = [1, 1]} : vector<16x256xf32> to vector<8x64xf32>
    %458 = vector.extract_strided_slice %298 {offsets = [8, 128], sizes = [8, 64], strides = [1, 1]} : vector<16x256xf32> to vector<8x64xf32>
    %459 = arith.truncf %456 : vector<8x64xf32> to vector<8x64xbf16>
    %460 = arith.truncf %457 : vector<8x64xf32> to vector<8x64xbf16>
    %cst_141 = arith.constant dense<0.000000e+00> : vector<8x8xf32>
    %461 = tpu.matmul %459, %460, %cst_141 {dimension_numbers = #tpu.dot_dimension_numbers<[1], [1], [0], [0], [0, 0, 1, 0], [], []>} : vector<8x64xbf16>, vector<8x64xbf16>, vector<8x8xf32> -> vector<8x8xf32>
    %cst_142 = arith.constant -1.000000e+06 : f32
    %462 = vector.broadcast %cst_142 : f32 to vector<8x8xf32>
    %463 = arith.select %406, %461, %462 : vector<8x8xi1>, vector<8x8xf32>
    %cst_143 = arith.constant dense<0xFF800000> : vector<8xf32>
    %464 = vector.multi_reduction <maximumf>, %463, %cst_143 [1] : vector<8x8xf32> to vector<8xf32>
    %465 = vector.shape_cast %464 : vector<8xf32> to vector<8x1xf32>
    %466 = vector.broadcast %465 : vector<8x1xf32> to vector<8x8xf32>
    %467 = arith.subf %463, %466 : vector<8x8xf32>
    %468 = math.exp %467 : vector<8x8xf32>
    %cst_144 = arith.constant dense<0.000000e+00> : vector<8xf32>
    %469 = vector.multi_reduction <add>, %468, %cst_144 [1] : vector<8x8xf32> to vector<8xf32>
    %470 = vector.shape_cast %469 : vector<8xf32> to vector<8x1xf32>
    %471 = tpu.reciprocal %470 {approx = true} : vector<8x1xf32> -> vector<8x1xf32>
    %472 = vector.broadcast %471 : vector<8x1xf32> to vector<8x8xf32>
    %473 = arith.mulf %468, %472 : vector<8x8xf32>
    %474 = arith.truncf %473 : vector<8x8xf32> to vector<8x8xbf16>
    %475 = arith.truncf %458 : vector<8x64xf32> to vector<8x64xbf16>
    %cst_145 = arith.constant dense<0.000000e+00> : vector<8x64xf32>
    %476 = tpu.matmul %474, %475, %cst_145 {dimension_numbers = #tpu.dot_dimension_numbers<[1], [0], [0], [1], [0, 0, 1, 1], [], []>} : vector<8x8xbf16>, vector<8x64xbf16>, vector<8x64xf32> -> vector<8x64xf32>
    %477 = arith.truncf %476 : vector<8x64xf32> to vector<8x64xbf16>
    %478 = vector.extract_strided_slice %299 {offsets = [128, 0], sizes = [64, 256], strides = [1, 1]} : vector<256x256xbf16> to vector<64x256xbf16>
    %cst_146 = arith.constant dense<0.000000e+00> : vector<8x256xf32>
    %479 = tpu.matmul %477, %478, %cst_146 {dimension_numbers = #tpu.dot_dimension_numbers<[1], [0], [0], [1], [0, 0, 1, 1], [], []>} : vector<8x64xbf16>, vector<64x256xbf16>, vector<8x256xf32> -> vector<8x256xf32>
    %480 = arith.addf %455, %479 : vector<8x256xf32>
    %481 = vector.extract_strided_slice %296 {offsets = [8, 192], sizes = [8, 64], strides = [1, 1]} : vector<16x256xf32> to vector<8x64xf32>
    %482 = vector.extract_strided_slice %297 {offsets = [8, 192], sizes = [8, 64], strides = [1, 1]} : vector<16x256xf32> to vector<8x64xf32>
    %483 = vector.extract_strided_slice %298 {offsets = [8, 192], sizes = [8, 64], strides = [1, 1]} : vector<16x256xf32> to vector<8x64xf32>
    %484 = arith.truncf %481 : vector<8x64xf32> to vector<8x64xbf16>
    %485 = arith.truncf %482 : vector<8x64xf32> to vector<8x64xbf16>
    %cst_147 = arith.constant dense<0.000000e+00> : vector<8x8xf32>
    %486 = tpu.matmul %484, %485, %cst_147 {dimension_numbers = #tpu.dot_dimension_numbers<[1], [1], [0], [0], [0, 0, 1, 0], [], []>} : vector<8x64xbf16>, vector<8x64xbf16>, vector<8x8xf32> -> vector<8x8xf32>
    %cst_148 = arith.constant -1.000000e+06 : f32
    %487 = vector.broadcast %cst_148 : f32 to vector<8x8xf32>
    %488 = arith.select %406, %486, %487 : vector<8x8xi1>, vector<8x8xf32>
    %cst_149 = arith.constant dense<0xFF800000> : vector<8xf32>
    %489 = vector.multi_reduction <maximumf>, %488, %cst_149 [1] : vector<8x8xf32> to vector<8xf32>
    %490 = vector.shape_cast %489 : vector<8xf32> to vector<8x1xf32>
    %491 = vector.broadcast %490 : vector<8x1xf32> to vector<8x8xf32>
    %492 = arith.subf %488, %491 : vector<8x8xf32>
    %493 = math.exp %492 : vector<8x8xf32>
    %cst_150 = arith.constant dense<0.000000e+00> : vector<8xf32>
    %494 = vector.multi_reduction <add>, %493, %cst_150 [1] : vector<8x8xf32> to vector<8xf32>
    %495 = vector.shape_cast %494 : vector<8xf32> to vector<8x1xf32>
    %496 = tpu.reciprocal %495 {approx = true} : vector<8x1xf32> -> vector<8x1xf32>
    %497 = vector.broadcast %496 : vector<8x1xf32> to vector<8x8xf32>
    %498 = arith.mulf %493, %497 : vector<8x8xf32>
    %499 = arith.truncf %498 : vector<8x8xf32> to vector<8x8xbf16>
    %500 = arith.truncf %483 : vector<8x64xf32> to vector<8x64xbf16>
    %cst_151 = arith.constant dense<0.000000e+00> : vector<8x64xf32>
    %501 = tpu.matmul %499, %500, %cst_151 {dimension_numbers = #tpu.dot_dimension_numbers<[1], [0], [0], [1], [0, 0, 1, 1], [], []>} : vector<8x8xbf16>, vector<8x64xbf16>, vector<8x64xf32> -> vector<8x64xf32>
    %502 = arith.truncf %501 : vector<8x64xf32> to vector<8x64xbf16>
    %503 = vector.extract_strided_slice %299 {offsets = [192, 0], sizes = [64, 256], strides = [1, 1]} : vector<256x256xbf16> to vector<64x256xbf16>
    %cst_152 = arith.constant dense<0.000000e+00> : vector<8x256xf32>
    %504 = tpu.matmul %502, %503, %cst_152 {dimension_numbers = #tpu.dot_dimension_numbers<[1], [0], [0], [1], [0, 0, 1, 1], [], []>} : vector<8x64xbf16>, vector<64x256xbf16>, vector<8x256xf32> -> vector<8x256xf32>
    %505 = arith.addf %480, %504 : vector<8x256xf32>
    %c8_153 = arith.constant 8 : index
    %c0_154 = arith.constant 0 : index
    %506 = vector.load %arg31[%c8_153, %c0_154] : memref<16x256xf32, #tpu.memory_space<vmem>>, vector<8x256xf32>
    tpu.vector_store %arg31[%c8_153, %c0_154], %505 {strides = array<i32>} : memref<16x256xf32, #tpu.memory_space<vmem>>, vector<8x256xf32>,
    %c0_155 = arith.constant 0 : index
    %c0_156 = arith.constant 0 : index
    %507 = vector.load %arg31[%c0_155, %c0_156] : memref<16x256xf32, #tpu.memory_space<vmem>>, vector<16x256xf32>
    %508 = arith.addf %287, %507 : vector<16x256xf32>
    %c0_157 = arith.constant 0 : index
    %c0_158 = arith.constant 0 : index
    %509 = vector.load %arg17[%c0_157, %c0_158] : memref<1x256xf32, #tpu.memory_space<vmem>>, vector<1x256xf32>
    %510 = vector.broadcast %509 : vector<1x256xf32> to vector<16x256xf32>
    %511 = arith.addf %508, %510 : vector<16x256xf32>
    %c0_159 = arith.constant 0 : index
    %c0_160 = arith.constant 0 : index
    %512 = vector.load %arg18[%c0_159, %c0_160] : memref<1x256xf32, #tpu.memory_space<vmem>>, vector<1x256xf32>
    %c0_161 = arith.constant 0 : index
    %c0_162 = arith.constant 0 : index
    %513 = vector.load %arg19[%c0_161, %c0_162] : memref<1x256xf32, #tpu.memory_space<vmem>>, vector<1x256xf32>
    %cst_163 = arith.constant dense<0.000000e+00> : vector<16xf32>
    %514 = vector.multi_reduction <add>, %511, %cst_163 [1] : vector<16x256xf32> to vector<16xf32>
    %515 = vector.shape_cast %514 : vector<16xf32> to vector<16x1xf32>
    %cst_164 = arith.constant 2.560000e+02 : f32
    %516 = vector.broadcast %cst_164 : f32 to vector<16x1xf32>
    %517 = arith.divf %515, %516 : vector<16x1xf32>
    %518 = vector.broadcast %517 : vector<16x1xf32> to vector<16x256xf32>
    %519 = arith.subf %511, %518 : vector<16x256xf32>
    %520 = arith.mulf %519, %519 : vector<16x256xf32>
    %cst_165 = arith.constant dense<0.000000e+00> : vector<16xf32>
    %521 = vector.multi_reduction <add>, %520, %cst_165 [1] : vector<16x256xf32> to vector<16xf32>
    %522 = vector.shape_cast %521 : vector<16xf32> to vector<16x1xf32>
    %cst_166 = arith.constant 2.560000e+02 : f32
    %523 = vector.broadcast %cst_166 : f32 to vector<16x1xf32>
    %524 = arith.divf %522, %523 : vector<16x1xf32>
    %525 = vector.broadcast %517 : vector<16x1xf32> to vector<16x256xf32>
    %526 = arith.subf %511, %525 : vector<16x256xf32>
    %cst_167 = arith.constant 9.99999974E-6 : f32
    %527 = vector.broadcast %cst_167 : f32 to vector<16x1xf32>
    %528 = arith.addf %524, %527 : vector<16x1xf32>
    %529 = math.rsqrt %528 : vector<16x1xf32>
    %530 = vector.broadcast %529 : vector<16x1xf32> to vector<16x256xf32>
    %531 = arith.mulf %526, %530 : vector<16x256xf32>
    %532 = vector.broadcast %512 : vector<1x256xf32> to vector<16x256xf32>
    %533 = arith.mulf %531, %532 : vector<16x256xf32>
    %534 = vector.broadcast %513 : vector<1x256xf32> to vector<16x256xf32>
    %535 = arith.addf %533, %534 : vector<16x256xf32>
    %c0_168 = arith.constant 0 : index
    %c0_169 = arith.constant 0 : index
    %536 = vector.load %arg20[%c0_168, %c0_169] : memref<256x512xbf16, #tpu.memory_space<vmem>>, vector<256x512xbf16>
    %537 = arith.truncf %535 : vector<16x256xf32> to vector<16x256xbf16>
    %cst_170 = arith.constant dense<0.000000e+00> : vector<16x512xf32>
    %538 = tpu.matmul %537, %536, %cst_170 {dimension_numbers = #tpu.dot_dimension_numbers<[1], [0], [0], [1], [0, 0, 1, 1], [], []>} : vector<16x256xbf16>, vector<256x512xbf16>, vector<16x512xf32> -> vector<16x512xf32>
    %c0_171 = arith.constant 0 : index
    %c0_172 = arith.constant 0 : index
    %539 = vector.load %arg21[%c0_171, %c0_172] : memref<1x512xf32, #tpu.memory_space<vmem>>, vector<1x512xf32>
    %540 = vector.broadcast %539 : vector<1x512xf32> to vector<16x512xf32>
    %541 = arith.addf %538, %540 : vector<16x512xf32>
    %cst_173 = arith.constant 0.000000e+00 : f32
    %542 = vector.broadcast %cst_173 : f32 to vector<16x512xf32>
    %543 = arith.maximumf %541, %542 : vector<16x512xf32>
    %c0_174 = arith.constant 0 : index
    %c0_175 = arith.constant 0 : index
    %544 = vector.load %arg22[%c0_174, %c0_175] : memref<512x256xbf16, #tpu.memory_space<vmem>>, vector<512x256xbf16>
    %545 = arith.truncf %543 : vector<16x512xf32> to vector<16x512xbf16>
    %cst_176 = arith.constant dense<0.000000e+00> : vector<16x256xf32>
    %546 = tpu.matmul %545, %544, %cst_176 {dimension_numbers = #tpu.dot_dimension_numbers<[1], [0], [0], [1], [0, 0, 1, 1], [], []>} : vector<16x512xbf16>, vector<512x256xbf16>, vector<16x256xf32> -> vector<16x256xf32>
    %c0_177 = arith.constant 0 : index
    %c0_178 = arith.constant 0 : index
    %547 = vector.load %arg23[%c0_177, %c0_178] : memref<1x256xf32, #tpu.memory_space<vmem>>, vector<1x256xf32>
    %548 = vector.broadcast %547 : vector<1x256xf32> to vector<16x256xf32>
    %549 = arith.addf %546, %548 : vector<16x256xf32>
    %550 = arith.addf %535, %549 : vector<16x256xf32>
    %c0_179 = arith.constant 0 : index
    %c0_180 = arith.constant 0 : index
    %551 = vector.load %arg24[%c0_179, %c0_180] : memref<1x256xf32, #tpu.memory_space<vmem>>, vector<1x256xf32>
    %c0_181 = arith.constant 0 : index
    %c0_182 = arith.constant 0 : index
    %552 = vector.load %arg25[%c0_181, %c0_182] : memref<1x256xf32, #tpu.memory_space<vmem>>, vector<1x256xf32>
    %cst_183 = arith.constant dense<0.000000e+00> : vector<16xf32>
    %553 = vector.multi_reduction <add>, %550, %cst_183 [1] : vector<16x256xf32> to vector<16xf32>
    %554 = vector.shape_cast %553 : vector<16xf32> to vector<16x1xf32>
    %cst_184 = arith.constant 2.560000e+02 : f32
    %555 = vector.broadcast %cst_184 : f32 to vector<16x1xf32>
    %556 = arith.divf %554, %555 : vector<16x1xf32>
    %557 = vector.broadcast %556 : vector<16x1xf32> to vector<16x256xf32>
    %558 = arith.subf %550, %557 : vector<16x256xf32>
    %559 = arith.mulf %558, %558 : vector<16x256xf32>
    %cst_185 = arith.constant dense<0.000000e+00> : vector<16xf32>
    %560 = vector.multi_reduction <add>, %559, %cst_185 [1] : vector<16x256xf32> to vector<16xf32>
    %561 = vector.shape_cast %560 : vector<16xf32> to vector<16x1xf32>
    %cst_186 = arith.constant 2.560000e+02 : f32
    %562 = vector.broadcast %cst_186 : f32 to vector<16x1xf32>
    %563 = arith.divf %561, %562 : vector<16x1xf32>
    %564 = vector.broadcast %556 : vector<16x1xf32> to vector<16x256xf32>
    %565 = arith.subf %550, %564 : vector<16x256xf32>
    %cst_187 = arith.constant 9.99999974E-6 : f32
    %566 = vector.broadcast %cst_187 : f32 to vector<16x1xf32>
    %567 = arith.addf %563, %566 : vector<16x1xf32>
    %568 = math.rsqrt %567 : vector<16x1xf32>
    %569 = vector.broadcast %568 : vector<16x1xf32> to vector<16x256xf32>
    %570 = arith.mulf %565, %569 : vector<16x256xf32>
    %571 = vector.broadcast %551 : vector<1x256xf32> to vector<16x256xf32>
    %572 = arith.mulf %570, %571 : vector<16x256xf32>
    %573 = vector.broadcast %552 : vector<1x256xf32> to vector<16x256xf32>
    %574 = arith.addf %572, %573 : vector<16x256xf32>
    %c0_188 = arith.constant 0 : index
    %c0_189 = arith.constant 0 : index
    %575 = vector.load %arg26[%c0_188, %c0_189] : memref<256x256xbf16, #tpu.memory_space<vmem>>, vector<256x256xbf16>
    %c0_190 = arith.constant 0 : index
    %c0_191 = arith.constant 0 : index
    %576 = vector.load %arg27[%c0_190, %c0_191] : memref<1x256xf32, #tpu.memory_space<vmem>>, vector<1x256xf32>
    %c0_192 = arith.constant 0 : index
    %c0_193 = arith.constant 0 : index
    %577 = vector.load %arg28[%c0_192, %c0_193] : memref<256x128xbf16, #tpu.memory_space<vmem>>, vector<256x128xbf16>
    %c0_194 = arith.constant 0 : index
    %c0_195 = arith.constant 0 : index
    %578 = vector.load %arg29[%c0_194, %c0_195] : memref<1x128xf32, #tpu.memory_space<vmem>>, vector<1x128xf32>
    %579 = vector.extract_strided_slice %574 {offsets = [0, 0], sizes = [1, 256], strides = [1, 1]} : vector<16x256xf32> to vector<1x256xf32>
    %580 = arith.truncf %579 : vector<1x256xf32> to vector<1x256xbf16>
    %cst_196 = arith.constant dense<0.000000e+00> : vector<1x256xf32>
    %581 = tpu.matmul %580, %575, %cst_196 {dimension_numbers = #tpu.dot_dimension_numbers<[1], [0], [0], [1], [0, 0, 1, 1], [], []>} : vector<1x256xbf16>, vector<256x256xbf16>, vector<1x256xf32> -> vector<1x256xf32>
    %582 = arith.addf %581, %576 : vector<1x256xf32>
    %583 = math.tanh %582 : vector<1x256xf32>
    %584 = arith.truncf %583 : vector<1x256xf32> to vector<1x256xbf16>
    %cst_197 = arith.constant dense<0.000000e+00> : vector<1x128xf32>
    %585 = tpu.matmul %584, %577, %cst_197 {dimension_numbers = #tpu.dot_dimension_numbers<[1], [0], [0], [1], [0, 0, 1, 1], [], []>} : vector<1x256xbf16>, vector<256x128xbf16>, vector<1x128xf32> -> vector<1x128xf32>
    %586 = arith.addf %585, %578 : vector<1x128xf32>
    %c0_198 = arith.constant 0 : index
    %c0_199 = arith.constant 0 : index
    %587 = vector.load %arg30[%c0_198, %c0_199] : memref<2x128xf32, #tpu.memory_space<vmem>>, vector<1x128xf32>
    tpu.vector_store %arg30[%c0_198, %c0_199], %586 {strides = array<i32>} : memref<2x128xf32, #tpu.memory_space<vmem>>, vector<1x128xf32>,
    %588 = vector.extract_strided_slice %574 {offsets = [8, 0], sizes = [1, 256], strides = [1, 1]} : vector<16x256xf32> to vector<1x256xf32>
    %589 = arith.truncf %588 : vector<1x256xf32> to vector<1x256xbf16>
    %cst_200 = arith.constant dense<0.000000e+00> : vector<1x256xf32>
    %590 = tpu.matmul %589, %575, %cst_200 {dimension_numbers = #tpu.dot_dimension_numbers<[1], [0], [0], [1], [0, 0, 1, 1], [], []>} : vector<1x256xbf16>, vector<256x256xbf16>, vector<1x256xf32> -> vector<1x256xf32>
    %591 = arith.addf %590, %576 : vector<1x256xf32>
    %592 = math.tanh %591 : vector<1x256xf32>
    %593 = arith.truncf %592 : vector<1x256xf32> to vector<1x256xbf16>
    %cst_201 = arith.constant dense<0.000000e+00> : vector<1x128xf32>
    %594 = tpu.matmul %593, %577, %cst_201 {dimension_numbers = #tpu.dot_dimension_numbers<[1], [0], [0], [1], [0, 0, 1, 1], [], []>} : vector<1x256xbf16>, vector<256x128xbf16>, vector<1x128xf32> -> vector<1x128xf32>
    %595 = arith.addf %594, %578 : vector<1x128xf32>
    %c1_202 = arith.constant 1 : index
    %c0_203 = arith.constant 0 : index
    %596 = vector.load %arg30[%c1_202, %c0_203] : memref<2x128xf32, #tpu.memory_space<vmem>>, vector<1x128xf32>
    tpu.vector_store %arg30[%c1_202, %c0_203], %595 {strides = array<i32>} : memref<2x128xf32, #tpu.memory_space<vmem>>, vector<1x128xf32>,
    return
  }
}

</mosaic_0001>

<llo_original>
// kernel: bert_classifier_forward.1
$region0: #{bert_classifier_forward.1}
  #allocation0 [shape = 'u32[]', space=smem, size = 0x4, offset = 0x4, fixed_abs, tag = 'smem constant byte address 0x4 - core index']
  #allocation1 [shape = 'u32[144,128]{1,0:T(1,128)}', space=vmem, size = 0x12000, scoped, tag = 'internal scratch']
  #allocation2 [shape = 'f32[16,256]{1,0:T(8,128)}', space=vmem, size = 0x4000, scoped, tag = 'scratch operand']
  %s0 = inlined_call_operand.smem [shape: u32[31], index: -1, kind: input, shape index: {}]
  %s1 = sld [smem:[%s0]]
  %s2 = scalar_lea.smem %s0, 1
  %s3 = sld [smem:[%s2]]
  %s4 = scalar_lea.smem %s0, 2
  %s5 = sld [smem:[%s4]]
  %s6 = scalar_lea.smem %s0, 3
  %s7 = sld [smem:[%s6]]
  %s8 = scalar_lea.smem %s0, 4
  %s9 = sld [smem:[%s8]]
  %s10 = scalar_lea.smem %s0, 5
  %s11 = sld [smem:[%s10]]
  %s12 = scalar_lea.smem %s0, 6
  %s13 = sld [smem:[%s12]]
  %s14 = scalar_lea.smem %s0, 7
  %s15 = sld [smem:[%s14]]
  %s16 = scalar_lea.smem %s0, 8
  %s17 = sld [smem:[%s16]]
  %s18 = scalar_lea.smem %s0, 9
  %s19 = sld [smem:[%s18]]
  %s20 = scalar_lea.smem %s0, 10
  %s21 = sld [smem:[%s20]]
  %s22 = scalar_lea.smem %s0, 11
  %s23 = sld [smem:[%s22]]
  %s24 = scalar_lea.smem %s0, 12
  %s25 = sld [smem:[%s24]]
  %s26 = scalar_lea.smem %s0, 13
  %s27 = sld [smem:[%s26]]
  %s28 = scalar_lea.smem %s0, 14
  %s29 = sld [smem:[%s28]]
  %s30 = scalar_lea.smem %s0, 15
  %s31 = sld [smem:[%s30]]
  %s32 = scalar_lea.smem %s0, 16
  %s33 = sld [smem:[%s32]]
  %s34 = scalar_lea.smem %s0, 17
  %s35 = sld [smem:[%s34]]
  %s36 = scalar_lea.smem %s0, 18
  %s37 = sld [smem:[%s36]]
  %s38 = scalar_lea.smem %s0, 19
  %s39 = sld [smem:[%s38]]
  %s40 = scalar_lea.smem %s0, 20
  %s41 = sld [smem:[%s40]]
  %s42 = scalar_lea.smem %s0, 21
  %s43 = sld [smem:[%s42]]
  %s44 = scalar_lea.smem %s0, 22
  %s45 = sld [smem:[%s44]]
  %s46 = scalar_lea.smem %s0, 23
  %s47 = sld [smem:[%s46]]
  %s48 = scalar_lea.smem %s0, 24
  %s49 = sld [smem:[%s48]]
  %s50 = scalar_lea.smem %s0, 25
  %s51 = sld [smem:[%s50]]
  %s52 = scalar_lea.smem %s0, 26
  %s53 = sld [smem:[%s52]]
  %s54 = scalar_lea.smem %s0, 27
  %s55 = sld [smem:[%s54]]
  %s56 = scalar_lea.smem %s0, 28
  %s57 = sld [smem:[%s56]]
  %s58 = scalar_lea.smem %s0, 29
  %s59 = sld [smem:[%s58]]
  %s60 = scalar_lea.smem %s0, 30
  %s61 = sld [smem:[%s60]]
  %s62 = sld [smem:[#allocation0]]
  $region158: #{bert_classifier_forward.1} parent=0
    _
  %s64 = ssub.s32 1, %s62
  %s65 = scalar_select 0, %s64, %s62
  $region1: #{bert_classifier_forward.1} parent=0
    #allocation3 [shape = 'u8[512]{0}', space=smem, size = 0x200, scoped, tag = 'input window, operand 0, single buffered']
    #allocation4 [shape = 's32[1]{0}', space=sflag, size = 0x4, scoped, tag = 'scoped memory for bert_classifier_forward.1']
    #allocation5 [shape = 's32[1]{0}', space=sflag, size = 0x4, scoped, tag = 'scoped memory for bert_classifier_forward.1']
    #allocation6 [shape = 's32[1]{0}', space=sflag, size = 0x4, scoped, tag = 'scoped memory for bert_classifier_forward.1']
    #allocation7 [shape = 'u8[262144]{0}', space=vmem, size = 0x40000, scoped, tag = 'input window, operand 8, single buffered']
    #allocation8 [shape = 'u8[262144]{0}', space=vmem, size = 0x40000, scoped, tag = 'input window, operand 10, single buffered']
    #allocation9 [shape = 's32[1]{0}', space=sflag, size = 0x4, scoped, tag = 'scoped memory for bert_classifier_forward.1']
    #allocation10 [shape = 'u8[393216]{0}', space=vmem, size = 0x60000, scoped, tag = 'input window, operand 14, single buffered']
    #allocation11 [shape = 'u8[262144]{0}', space=vmem, size = 0x40000, scoped, tag = 'input window, operand 20, single buffered']
    #allocation12 [shape = 's32[1]{0}', space=sflag, size = 0x4, scoped, tag = 'scoped memory for bert_classifier_forward.1']
    #allocation13 [shape = 'u8[262144]{0}', space=vmem, size = 0x40000, scoped, tag = 'input window, operand 22, single buffered']
    #allocation14 [shape = 'u8[131072]{0}', space=vmem, size = 0x20000, scoped, tag = 'input window, operand 26, single buffered']
    #allocation15 [shape = 's32[1]{0}', space=sflag, size = 0x4, scoped, tag = 'scoped memory for bert_classifier_forward.1']
    #allocation16 [shape = 'u8[1024]{0}', space=vmem, size = 0x400, scoped, tag = 'output window, operand 0, single buffered']
    %66 = vsyncpa [#allocation6], 0
    %67 = vsyncpa [#allocation4], 0
    %68 = vsyncpa [#allocation9], 0
    %69 = vsyncpa [#allocation12], 0
    %70 = vsyncpa [#allocation15], 0
    %71 = vsyncpa [#allocation5], 0
    // Predicated region
    $region2: #{bert_classifier_forward.1} parent=1 // pred_check
      _
    $region3: #{bert_classifier_forward.1} parent=1 // pred_check_branch
      %73 = sbr.rel (0) target = $region5
    $region4: #{bert_classifier_forward.1} parent=1 // pred_region
      %s75 = ssub.s32 16, 16
      %76 = vsyncadd [#allocation6], %s75
      %s78 = sshll.u32 %s1, 4
      %s79 = int_to_ptr.vmem [resolvable:$true] %s78
      %81 = dma.vmem_to_smem %s79, 16, [#allocation3], [#allocation6]
    $region5: #{bert_classifier_forward.1} parent=1 // pred_fallthru
      _
    // Predicated region
    $region6: #{bert_classifier_forward.1} parent=1 // pred_check
      _
    $region7: #{bert_classifier_forward.1} parent=1 // pred_check_branch
      %83 = sbr.rel (0) target = $region9
    $region8: #{bert_classifier_forward.1} parent=1 // pred_region
      _
    $region9: #{bert_classifier_forward.1} parent=1 // pred_fallthru
      _
    // Predicated region
    $region10: #{bert_classifier_forward.1} parent=1 // pred_check
      _
    $region11: #{bert_classifier_forward.1} parent=1 // pred_check_branch
      %85 = sbr.rel (0) target = $region13
    $region12: #{bert_classifier_forward.1} parent=1 // pred_region
      _
    $region13: #{bert_classifier_forward.1} parent=1 // pred_fallthru
      _
    // Predicated region
    $region14: #{bert_classifier_forward.1} parent=1 // pred_check
      _
    $region15: #{bert_classifier_forward.1} parent=1 // pred_check_branch
      %87 = sbr.rel (0) target = $region17
    $region16: #{bert_classifier_forward.1} parent=1 // pred_region
      _
    $region17: #{bert_classifier_forward.1} parent=1 // pred_fallthru
      _
    // Predicated region
    $region18: #{bert_classifier_forward.1} parent=1 // pred_check
      _
    $region19: #{bert_classifier_forward.1} parent=1 // pred_check_branch
      %89 = sbr.rel (0) target = $region21
    $region20: #{bert_classifier_forward.1} parent=1 // pred_region
      _
    $region21: #{bert_classifier_forward.1} parent=1 // pred_fallthru
      _
    // Predicated region
    $region22: #{bert_classifier_forward.1} parent=1 // pred_check
      _
    $region23: #{bert_classifier_forward.1} parent=1 // pred_check_branch
      %91 = sbr.rel (0) target = $region25
    $region24: #{bert_classifier_forward.1} parent=1 // pred_region
      _
    $region25: #{bert_classifier_forward.1} parent=1 // pred_fallthru
      _
    // Predicated region
    $region26: #{bert_classifier_forward.1} parent=1 // pred_check
      _
    $region27: #{bert_classifier_forward.1} parent=1 // pred_check_branch
      %93 = sbr.rel (0) target = $region29
    $region28: #{bert_classifier_forward.1} parent=1 // pred_region
      _
    $region29: #{bert_classifier_forward.1} parent=1 // pred_fallthru
      _
    // Predicated region
    $region30: #{bert_classifier_forward.1} parent=1 // pred_check
      _
    $region31: #{bert_classifier_forward.1} parent=1 // pred_check_branch
      %95 = sbr.rel (0) target = $region33
    $region32: #{bert_classifier_forward.1} parent=1 // pred_region
      _
    $region33: #{bert_classifier_forward.1} parent=1 // pred_fallthru
      _
    // Predicated region
    $region34: #{bert_classifier_forward.1} parent=1 // pred_check
      _
    $region35: #{bert_classifier_forward.1} parent=1 // pred_check_branch
      %97 = sbr.rel (0) target = $region37
    $region36: #{bert_classifier_forward.1} parent=1 // pred_region
      %s99 = ssub.s32 8192, 8192
      %100 = vsyncadd [#allocation4], %s99
      %s101 = sshll.u32 [#allocation7], 4
      %s102 = int_to_ptr.vmem [resolvable:$true] %s101
      %107 = dma.hbm_to_vmem [thread:$0]  %s17, 8192, %s102, [#allocation4], 256, 256, 16
    $region37: #{bert_classifier_forward.1} parent=1 // pred_fallthru
      _
    // Predicated region
    $region38: #{bert_classifier_forward.1} parent=1 // pred_check
      _
    $region39: #{bert_classifier_forward.1} parent=1 // pred_check_branch
      %109 = sbr.rel (0) target = $region41
    $region40: #{bert_classifier_forward.1} parent=1 // pred_region
      _
    $region41: #{bert_classifier_forward.1} parent=1 // pred_fallthru
      _
    // Predicated region
    $region42: #{bert_classifier_forward.1} parent=1 // pred_check
      _
    $region43: #{bert_classifier_forward.1} parent=1 // pred_check_branch
      %111 = sbr.rel (0) target = $region45
    $region44: #{bert_classifier_forward.1} parent=1 // pred_region
      %s113 = ssub.s32 8192, 8192
      %114 = vsyncadd [#allocation9], %s113
      %s115 = sshll.u32 [#allocation8], 4
      %s116 = int_to_ptr.vmem [resolvable:$true] %s115
      %121 = dma.hbm_to_vmem [thread:$0]  %s21, 8192, %s116, [#allocation9], 128, 128, 8
    $region45: #{bert_classifier_forward.1} parent=1 // pred_fallthru
      _
    // Predicated region
    $region46: #{bert_classifier_forward.1} parent=1 // pred_check
      _
    $region47: #{bert_classifier_forward.1} parent=1 // pred_check_branch
      %123 = sbr.rel (0) target = $region49
    $region48: #{bert_classifier_forward.1} parent=1 // pred_region
      _
    $region49: #{bert_classifier_forward.1} parent=1 // pred_fallthru
      _
    // Predicated region
    $region50: #{bert_classifier_forward.1} parent=1 // pred_check
      _
    $region51: #{bert_classifier_forward.1} parent=1 // pred_check_branch
      %125 = sbr.rel (0) target = $region53
    $region52: #{bert_classifier_forward.1} parent=1 // pred_region
      _
    $region53: #{bert_classifier_forward.1} parent=1 // pred_fallthru
      _
    // Predicated region
    $region54: #{bert_classifier_forward.1} parent=1 // pred_check
      _
    $region55: #{bert_classifier_forward.1} parent=1 // pred_check_branch
      %127 = sbr.rel (0) target = $region57
    $region56: #{bert_classifier_forward.1} parent=1 // pred_region
      _
    $region57: #{bert_classifier_forward.1} parent=1 // pred_fallthru
      _
    // Predicated region
    $region58: #{bert_classifier_forward.1} parent=1 // pred_check
      _
    $region59: #{bert_classifier_forward.1} parent=1 // pred_check_branch
      %129 = sbr.rel (0) target = $region61
    $region60: #{bert_classifier_forward.1} parent=1 // pred_region
      %s131 = ssub.s32 12288, 12288
      %132 = vsyncadd [#allocation9], %s131
      %s133 = sshll.u32 [#allocation10], 4
      %s134 = int_to_ptr.vmem [resolvable:$true] %s133
      %139 = dma.hbm_to_vmem [thread:$0]  %s29, 12288, %s134, [#allocation9], 384, 384, 24
    $region61: #{bert_classifier_forward.1} parent=1 // pred_fallthru
      _
    // Predicated region
    $region62: #{bert_classifier_forward.1} parent=1 // pred_check
      _
    $region63: #{bert_classifier_forward.1} parent=1 // pred_check_branch
      %141 = sbr.rel (0) target = $region65
    $region64: #{bert_classifier_forward.1} parent=1 // pred_region
      _
    $region65: #{bert_classifier_forward.1} parent=1 // pred_fallthru
      _
    // Predicated region
    $region66: #{bert_classifier_forward.1} parent=1 // pred_check
      _
    $region67: #{bert_classifier_forward.1} parent=1 // pred_check_branch
      %143 = sbr.rel (0) target = $region69
    $region68: #{bert_classifier_forward.1} parent=1 // pred_region
      _
    $region69: #{bert_classifier_forward.1} parent=1 // pred_fallthru
      _
    // Predicated region
    $region70: #{bert_classifier_forward.1} parent=1 // pred_check
      _
    $region71: #{bert_classifier_forward.1} parent=1 // pred_check_branch
      %145 = sbr.rel (0) target = $region73
    $region72: #{bert_classifier_forward.1} parent=1 // pred_region
      _
    $region73: #{bert_classifier_forward.1} parent=1 // pred_fallthru
      _
    // Predicated region
    $region74: #{bert_classifier_forward.1} parent=1 // pred_check
      _
    $region75: #{bert_classifier_forward.1} parent=1 // pred_check_branch
      %147 = sbr.rel (0) target = $region77
    $region76: #{bert_classifier_forward.1} parent=1 // pred_region
      _
    $region77: #{bert_classifier_forward.1} parent=1 // pred_fallthru
      _
    // Predicated region
    $region78: #{bert_classifier_forward.1} parent=1 // pred_check
      _
    $region79: #{bert_classifier_forward.1} parent=1 // pred_check_branch
      %149 = sbr.rel (0) target = $region81
    $region80: #{bert_classifier_forward.1} parent=1 // pred_region
      _
    $region81: #{bert_classifier_forward.1} parent=1 // pred_fallthru
      _
    // Predicated region
    $region82: #{bert_classifier_forward.1} parent=1 // pred_check
      _
    $region83: #{bert_classifier_forward.1} parent=1 // pred_check_branch
      %151 = sbr.rel (0) target = $region85
    $region84: #{bert_classifier_forward.1} parent=1 // pred_region
      %s153 = ssub.s32 8192, 8192
      %154 = vsyncadd [#allocation12], %s153
      %s155 = sshll.u32 [#allocation11], 4
      %s156 = int_to_ptr.vmem [resolvable:$true] %s155
      %161 = dma.hbm_to_vmem [thread:$0]  %s41, 8192, %s156, [#allocation12], 256, 256, 16
    $region85: #{bert_classifier_forward.1} parent=1 // pred_fallthru
      _
    // Predicated region
    $region86: #{bert_classifier_forward.1} parent=1 // pred_check
      _
    $region87: #{bert_classifier_forward.1} parent=1 // pred_check_branch
      %163 = sbr.rel (0) target = $region89
    $region88: #{bert_classifier_forward.1} parent=1 // pred_region
      _
    $region89: #{bert_classifier_forward.1} parent=1 // pred_fallthru
      _
    // Predicated region
    $region90: #{bert_classifier_forward.1} parent=1 // pred_check
      _
    $region91: #{bert_classifier_forward.1} parent=1 // pred_check_branch
      %165 = sbr.rel (0) target = $region93
    $region92: #{bert_classifier_forward.1} parent=1 // pred_region
      %s167 = ssub.s32 8192, 8192
      %168 = vsyncadd [#allocation12], %s167
      %s169 = sshll.u32 [#allocation13], 4
      %s170 = int_to_ptr.vmem [resolvable:$true] %s169
      %175 = dma.hbm_to_vmem [thread:$0]  %s45, 8192, %s170, [#allocation12], 128, 128, 8
    $region93: #{bert_classifier_forward.1} parent=1 // pred_fallthru
      _
    // Predicated region
    $region94: #{bert_classifier_forward.1} parent=1 // pred_check
      _
    $region95: #{bert_classifier_forward.1} parent=1 // pred_check_branch
      %177 = sbr.rel (0) target = $region97
    $region96: #{bert_classifier_forward.1} parent=1 // pred_region
      _
    $region97: #{bert_classifier_forward.1} parent=1 // pred_fallthru
      _
    // Predicated region
    $region98: #{bert_classifier_forward.1} parent=1 // pred_check
      _
    $region99: #{bert_classifier_forward.1} parent=1 // pred_check_branch
      %179 = sbr.rel (0) target = $region101
    $region100: #{bert_classifier_forward.1} parent=1 // pred_region
      _
    $region101: #{bert_classifier_forward.1} parent=1 // pred_fallthru
      _
    // Predicated region
    $region102: #{bert_classifier_forward.1} parent=1 // pred_check
      _
    $region103: #{bert_classifier_forward.1} parent=1 // pred_check_branch
      %181 = sbr.rel (0) target = $region105
    $region104: #{bert_classifier_forward.1} parent=1 // pred_region
      _
    $region105: #{bert_classifier_forward.1} parent=1 // pred_fallthru
      _
    // Predicated region
    $region106: #{bert_classifier_forward.1} parent=1 // pred_check
      _
    $region107: #{bert_classifier_forward.1} parent=1 // pred_check_branch
      %183 = sbr.rel (0) target = $region109
    $region108: #{bert_classifier_forward.1} parent=1 // pred_region
      %s185 = ssub.s32 4096, 4096
      %186 = vsyncadd [#allocation15], %s185
      %s187 = sshll.u32 [#allocation14], 4
      %s188 = int_to_ptr.vmem [resolvable:$true] %s187
      %193 = dma.hbm_to_vmem [thread:$0]  %s53, 4096, %s188, [#allocation15], 128, 128, 8
    $region109: #{bert_classifier_forward.1} parent=1 // pred_fallthru
      _
    // Predicated region
    $region110: #{bert_classifier_forward.1} parent=1 // pred_check
      _
    $region111: #{bert_classifier_forward.1} parent=1 // pred_check_branch
      %195 = sbr.rel (0) target = $region113
    $region112: #{bert_classifier_forward.1} parent=1 // pred_region
      _
    $region113: #{bert_classifier_forward.1} parent=1 // pred_fallthru
      _
    // Predicated region
    $region114: #{bert_classifier_forward.1} parent=1 // pred_check
      _
    $region115: #{bert_classifier_forward.1} parent=1 // pred_check_branch
      %197 = sbr.rel (0) target = $region117
    $region116: #{bert_classifier_forward.1} parent=1 // pred_region
      _
    $region117: #{bert_classifier_forward.1} parent=1 // pred_fallthru
      _
    // Predicated region
    $region118: #{bert_classifier_forward.1} parent=1 // pred_check
      _
    $region119: #{bert_classifier_forward.1} parent=1 // pred_check_branch
      %199 = sbr.rel (0) target = $region121
    $region120: #{bert_classifier_forward.1} parent=1 // pred_region
      _
    $region121: #{bert_classifier_forward.1} parent=1 // pred_fallthru
      _
    // Predicated region
    $region122: #{bert_classifier_forward.1} parent=1 // pred_check
      _
    $region123: #{bert_classifier_forward.1} parent=1 // pred_check_branch
      %201 = sbr.rel (0) target = $region125
    $region124: #{bert_classifier_forward.1} parent=1 // pred_region
      %202 = dma.done [#allocation6], 16
    $region125: #{bert_classifier_forward.1} parent=1 // pred_fallthru
      _
    // Predicated region
    $region126: #{bert_classifier_forward.1} parent=1 // pred_check
      _
    $region127: #{bert_classifier_forward.1} parent=1 // pred_check_branch
      %204 = sbr.rel (0) target = $region129
    $region128: #{bert_classifier_forward.1} parent=1 // pred_region
      %205 = dma.done [#allocation4], 8192
    $region129: #{bert_classifier_forward.1} parent=1 // pred_fallthru
      _
    // Predicated region
    $region130: #{bert_classifier_forward.1} parent=1 // pred_check
      _
    $region131: #{bert_classifier_forward.1} parent=1 // pred_check_branch
      %207 = sbr.rel (0) target = $region133
    $region132: #{bert_classifier_forward.1} parent=1 // pred_region
      %208 = dma.done [#allocation9], 8192
    $region133: #{bert_classifier_forward.1} parent=1 // pred_fallthru
      _
    // Predicated region
    $region134: #{bert_classifier_forward.1} parent=1 // pred_check
      _
    $region135: #{bert_classifier_forward.1} parent=1 // pred_check_branch
      %210 = sbr.rel (0) target = $region137
    $region136: #{bert_classifier_forward.1} parent=1 // pred_region
      %211 = dma.done [#allocation9], 12288
    $region137: #{bert_classifier_forward.1} parent=1 // pred_fallthru
      _
    // Predicated region
    $region138: #{bert_classifier_forward.1} parent=1 // pred_check
      _
    $region139: #{bert_classifier_forward.1} parent=1 // pred_check_branch
      %213 = sbr.rel (0) target = $region141
    $region140: #{bert_classifier_forward.1} parent=1 // pred_region
      %214 = dma.done [#allocation12], 8192
    $region141: #{bert_classifier_forward.1} parent=1 // pred_fallthru
      _
    // Predicated region
    $region142: #{bert_classifier_forward.1} parent=1 // pred_check
      _
    $region143: #{bert_classifier_forward.1} parent=1 // pred_check_branch
      %216 = sbr.rel (0) target = $region145
    $region144: #{bert_classifier_forward.1} parent=1 // pred_region
      %217 = dma.done [#allocation12], 8192
    $region145: #{bert_classifier_forward.1} parent=1 // pred_fallthru
      _
    // Predicated region
    $region146: #{bert_classifier_forward.1} parent=1 // pred_check
      _
    $region147: #{bert_classifier_forward.1} parent=1 // pred_check_branch
      %219 = sbr.rel (0) target = $region149
    $region148: #{bert_classifier_forward.1} parent=1 // pred_region
      %220 = dma.done [#allocation15], 4096
    $region149: #{bert_classifier_forward.1} parent=1 // pred_fallthru
      _
    %221 = sfence
    %v223 = vld [vmem:[%s3] sm:$0xff]
    %v224 = vld [vmem:[%s3 + $0x8] sm:$0xff]
    %v225 = vld [vmem:[%s3 + $0x10] sm:$0xff]
    %v226 = vld [vmem:[%s3 + $0x18] sm:$0xff]
    %v227 = vld [vmem:[%s5] sm:$0xff]
    %v228 = vld [vmem:[%s5 + $0x8] sm:$0xff]
    %v229 = vld [vmem:[%s5 + $0x10] sm:$0xff]
    %v230 = vld [vmem:[%s5 + $0x18] sm:$0xff]
    %v231 = vld [vmem:[%s5 + $0x20] sm:$0xff]
    %v232 = vld [vmem:[%s5 + $0x28] sm:$0xff]
    %v233 = vld [vmem:[%s5 + $0x30] sm:$0xff]
    %v234 = vld [vmem:[%s5 + $0x38] sm:$0xff]
    %v235 = vld [vmem:[%s5 + $0x40] sm:$0xff]
    %v236 = vld [vmem:[%s5 + $0x48] sm:$0xff]
    %v237 = vld [vmem:[%s5 + $0x50] sm:$0xff]
    %v238 = vld [vmem:[%s5 + $0x58] sm:$0xff]
    %v239 = vld [vmem:[%s5 + $0x60] sm:$0xff]
    %v240 = vld [vmem:[%s5 + $0x68] sm:$0xff]
    %v241 = vld [vmem:[%s5 + $0x70] sm:$0xff]
    %v242 = vld [vmem:[%s5 + $0x78] sm:$0xff]
    %v243 = vld [vmem:[%s5 + $0x80] sm:$0xff]
    %v244 = vld [vmem:[%s5 + $0x88] sm:$0xff]
    %v245 = vld [vmem:[%s5 + $0x90] sm:$0xff]
    %v246 = vld [vmem:[%s5 + $0x98] sm:$0xff]
    %v247 = vld [vmem:[%s5 + $0xa0] sm:$0xff]
    %v248 = vld [vmem:[%s5 + $0xa8] sm:$0xff]
    %v249 = vld [vmem:[%s5 + $0xb0] sm:$0xff]
    %v250 = vld [vmem:[%s5 + $0xb8] sm:$0xff]
    %v251 = vld [vmem:[%s5 + $0xc0] sm:$0xff]
    %v252 = vld [vmem:[%s5 + $0xc8] sm:$0xff]
    %v253 = vld [vmem:[%s5 + $0xd0] sm:$0xff]
    %v254 = vld [vmem:[%s5 + $0xd8] sm:$0xff]
    %v255 = vld [vmem:[%s5 + $0xe0] sm:$0xff]
    %v256 = vld [vmem:[%s5 + $0xe8] sm:$0xff]
    %v257 = vld [vmem:[%s5 + $0xf0] sm:$0xff]
    %v258 = vld [vmem:[%s5 + $0xf8] sm:$0xff]
    %v259 = vld [vmem:[%s5 + $0x100] sm:$0xff]
    %v260 = vld [vmem:[%s5 + $0x108] sm:$0xff]
    %v261 = vld [vmem:[%s5 + $0x110] sm:$0xff]
    %v262 = vld [vmem:[%s5 + $0x118] sm:$0xff]
    %v263 = vld [vmem:[%s5 + $0x120] sm:$0xff]
    %v264 = vld [vmem:[%s5 + $0x128] sm:$0xff]
    %v265 = vld [vmem:[%s5 + $0x130] sm:$0xff]
    %v266 = vld [vmem:[%s5 + $0x138] sm:$0xff]
    %v267 = vld [vmem:[%s5 + $0x140] sm:$0xff]
    %v268 = vld [vmem:[%s5 + $0x148] sm:$0xff]
    %v269 = vld [vmem:[%s5 + $0x150] sm:$0xff]
    %v270 = vld [vmem:[%s5 + $0x158] sm:$0xff]
    %v271 = vld [vmem:[%s5 + $0x160] sm:$0xff]
    %v272 = vld [vmem:[%s5 + $0x168] sm:$0xff]
    %v273 = vld [vmem:[%s5 + $0x170] sm:$0xff]
    %v274 = vld [vmem:[%s5 + $0x178] sm:$0xff]
    %v275 = vld [vmem:[%s5 + $0x180] sm:$0xff]
    %v276 = vld [vmem:[%s5 + $0x188] sm:$0xff]
    %v277 = vld [vmem:[%s5 + $0x190] sm:$0xff]
    %v278 = vld [vmem:[%s5 + $0x198] sm:$0xff]
    %v279 = vld [vmem:[%s5 + $0x1a0] sm:$0xff]
    %v280 = vld [vmem:[%s5 + $0x1a8] sm:$0xff]
    %v281 = vld [vmem:[%s5 + $0x1b0] sm:$0xff]
    %v282 = vld [vmem:[%s5 + $0x1b8] sm:$0xff]
    %v283 = vld [vmem:[%s5 + $0x1c0] sm:$0xff]
    %v284 = vld [vmem:[%s5 + $0x1c8] sm:$0xff]
    %v285 = vld [vmem:[%s5 + $0x1d0] sm:$0xff]
    %v286 = vld [vmem:[%s5 + $0x1d8] sm:$0xff]
    %v287 = vld [vmem:[%s5 + $0x1e0] sm:$0xff]
    %v288 = vld [vmem:[%s5 + $0x1e8] sm:$0xff]
    %v289 = vld [vmem:[%s5 + $0x1f0] sm:$0xff]
    %v290 = vld [vmem:[%s5 + $0x1f8] sm:$0xff]
    %v291 = vld [vmem:[%s5 + $0x200] sm:$0xff]
    %v292 = vld [vmem:[%s5 + $0x208] sm:$0xff]
    %v293 = vld [vmem:[%s5 + $0x210] sm:$0xff]
    %v294 = vld [vmem:[%s5 + $0x218] sm:$0xff]
    %v295 = vld [vmem:[%s5 + $0x220] sm:$0xff]
    %v296 = vld [vmem:[%s5 + $0x228] sm:$0xff]
    %v297 = vld [vmem:[%s5 + $0x230] sm:$0xff]
    %v298 = vld [vmem:[%s5 + $0x238] sm:$0xff]
    %v299 = vld [vmem:[%s5 + $0x240] sm:$0xff]
    %v300 = vld [vmem:[%s5 + $0x248] sm:$0xff]
    %v301 = vld [vmem:[%s5 + $0x250] sm:$0xff]
    %v302 = vld [vmem:[%s5 + $0x258] sm:$0xff]
    %v303 = vld [vmem:[%s5 + $0x260] sm:$0xff]
    %v304 = vld [vmem:[%s5 + $0x268] sm:$0xff]
    %v305 = vld [vmem:[%s5 + $0x270] sm:$0xff]
    %v306 = vld [vmem:[%s5 + $0x278] sm:$0xff]
    %v307 = vld [vmem:[%s5 + $0x280] sm:$0xff]
    %v308 = vld [vmem:[%s5 + $0x288] sm:$0xff]
    %v309 = vld [vmem:[%s5 + $0x290] sm:$0xff]
    %v310 = vld [vmem:[%s5 + $0x298] sm:$0xff]
    %v311 = vld [vmem:[%s5 + $0x2a0] sm:$0xff]
    %v312 = vld [vmem:[%s5 + $0x2a8] sm:$0xff]
    %v313 = vld [vmem:[%s5 + $0x2b0] sm:$0xff]
    %v314 = vld [vmem:[%s5 + $0x2b8] sm:$0xff]
    %v315 = vld [vmem:[%s5 + $0x2c0] sm:$0xff]
    %v316 = vld [vmem:[%s5 + $0x2c8] sm:$0xff]
    %v317 = vld [vmem:[%s5 + $0x2d0] sm:$0xff]
    %v318 = vld [vmem:[%s5 + $0x2d8] sm:$0xff]
    %v319 = vld [vmem:[%s5 + $0x2e0] sm:$0xff]
    %v320 = vld [vmem:[%s5 + $0x2e8] sm:$0xff]
    %v321 = vld [vmem:[%s5 + $0x2f0] sm:$0xff]
    %v322 = vld [vmem:[%s5 + $0x2f8] sm:$0xff]
    %v323 = vpack.c.bf16 %v225, %v223
    %v324 = vpack.c.bf16 %v226, %v224
    %v325 = vld [vmem:[%s7] sm:$0x3f]
    %v327 = vlaneseq
    %v328 = vshrl.u32 %v327, 7
    %v329 = vsub.s32 0, %v328
    %v330 = vrot.slane %v325, %v329
    %v331 = vlaneseq
    %v332 = vshrl.u32 %v331, 7
    %v333 = vsub.s32 1, %v332
    %v334 = vrot.slane %v325, %v333
    %v335 = vlaneseq
    %v336 = vshrl.u32 %v335, 7
    %v337 = vsub.s32 2, %v336
    %v338 = vrot.slane %v325, %v337
    %v339 = vlaneseq
    %v340 = vshrl.u32 %v339, 7
    %v341 = vsub.s32 3, %v340
    %v342 = vrot.slane %v325, %v341
    %v343 = vlaneseq
    %v344 = vshrl.u32 %v343, 7
    %v345 = vsub.s32 4, %v344
    %v346 = vrot.slane %v325, %v345
    %v347 = vlaneseq
    %v348 = vshrl.u32 %v347, 7
    %v349 = vsub.s32 5, %v348
    %v350 = vrot.slane %v325, %v349
    %v453 = vunpack.c.l.b16 %v227
    %v454 = vunpack.c.h.b16 %v227
    %v455 = vunpack.c.l.b16 %v228
    %v456 = vunpack.c.h.b16 %v228
    %v457 = vunpack.c.l.b16 %v229
    %v458 = vunpack.c.h.b16 %v229
    %v459 = vunpack.c.l.b16 %v230
    %v460 = vunpack.c.h.b16 %v230
    %v461 = vunpack.c.l.b16 %v231
    %v462 = vunpack.c.h.b16 %v231
    %v463 = vunpack.c.l.b16 %v232
    %v464 = vunpack.c.h.b16 %v232
    %v465 = vunpack.c.l.b16 %v233
    %v466 = vunpack.c.h.b16 %v233
    %v467 = vunpack.c.l.b16 %v234
    %v468 = vunpack.c.h.b16 %v234
    %v469 = vunpack.c.l.b16 %v235
    %v470 = vunpack.c.h.b16 %v235
    %v471 = vunpack.c.l.b16 %v236
    %v472 = vunpack.c.h.b16 %v236
    %v473 = vunpack.c.l.b16 %v237
    %v474 = vunpack.c.h.b16 %v237
    %v475 = vunpack.c.l.b16 %v238
    %v476 = vunpack.c.h.b16 %v238
    %v477 = vunpack.c.l.b16 %v239
    %v478 = vunpack.c.h.b16 %v239
    %v479 = vunpack.c.l.b16 %v240
    %v480 = vunpack.c.h.b16 %v240
    %v481 = vunpack.c.l.b16 %v241
    %v482 = vunpack.c.h.b16 %v241
    %v483 = vunpack.c.l.b16 %v242
    %v484 = vunpack.c.h.b16 %v242
    %v485 = vunpack.c.l.b16 %v243
    %v486 = vunpack.c.h.b16 %v243
    %v487 = vunpack.c.l.b16 %v244
    %v488 = vunpack.c.h.b16 %v244
    %v489 = vunpack.c.l.b16 %v245
    %v490 = vunpack.c.h.b16 %v245
    %v491 = vunpack.c.l.b16 %v246
    %v492 = vunpack.c.h.b16 %v246
    %v493 = vunpack.c.l.b16 %v247
    %v494 = vunpack.c.h.b16 %v247
    %v495 = vunpack.c.l.b16 %v248
    %v496 = vunpack.c.h.b16 %v248
    %v497 = vunpack.c.l.b16 %v249
    %v498 = vunpack.c.h.b16 %v249
    %v499 = vunpack.c.l.b16 %v250
    %v500 = vunpack.c.h.b16 %v250
    %v501 = vunpack.c.l.b16 %v251
    %v502 = vunpack.c.h.b16 %v251
    %v503 = vunpack.c.l.b16 %v252
    %v504 = vunpack.c.h.b16 %v252
    %v505 = vunpack.c.l.b16 %v253
    %v506 = vunpack.c.h.b16 %v253
    %v507 = vunpack.c.l.b16 %v254
    %v508 = vunpack.c.h.b16 %v254
    %v509 = vunpack.c.l.b16 %v255
    %v510 = vunpack.c.h.b16 %v255
    %v511 = vunpack.c.l.b16 %v256
    %v512 = vunpack.c.h.b16 %v256
    %v513 = vunpack.c.l.b16 %v257
    %v514 = vunpack.c.h.b16 %v257
    %v515 = vunpack.c.l.b16 %v258
    %v516 = vunpack.c.h.b16 %v258
    %v517 = vunpack.c.l.b16 %v259
    %v518 = vunpack.c.h.b16 %v259
    %v519 = vunpack.c.l.b16 %v260
    %v520 = vunpack.c.h.b16 %v260
    %v521 = vunpack.c.l.b16 %v261
    %v522 = vunpack.c.h.b16 %v261
    %v523 = vunpack.c.l.b16 %v262
    %v524 = vunpack.c.h.b16 %v262
    %v525 = vunpack.c.l.b16 %v263
    %v526 = vunpack.c.h.b16 %v263
    %v527 = vunpack.c.l.b16 %v264
    %v528 = vunpack.c.h.b16 %v264
    %v529 = vunpack.c.l.b16 %v265
    %v530 = vunpack.c.h.b16 %v265
    %v531 = vunpack.c.l.b16 %v266
    %v532 = vunpack.c.h.b16 %v266
    %v533 = vunpack.c.l.b16 %v267
    %v534 = vunpack.c.h.b16 %v267
    %v535 = vunpack.c.l.b16 %v268
    %v536 = vunpack.c.h.b16 %v268
    %v537 = vunpack.c.l.b16 %v269
    %v538 = vunpack.c.h.b16 %v269
    %v539 = vunpack.c.l.b16 %v270
    %v540 = vunpack.c.h.b16 %v270
    %v541 = vunpack.c.l.b16 %v271
    %v542 = vunpack.c.h.b16 %v271
    %v543 = vunpack.c.l.b16 %v272
    %v544 = vunpack.c.h.b16 %v272
    %v545 = vunpack.c.l.b16 %v273
    %v546 = vunpack.c.h.b16 %v273
    %v547 = vunpack.c.l.b16 %v274
    %v548 = vunpack.c.h.b16 %v274
    %v549 = vunpack.c.l.b16 %v275
    %v550 = vunpack.c.h.b16 %v275
    %v551 = vunpack.c.l.b16 %v276
    %v552 = vunpack.c.h.b16 %v276
    %v553 = vunpack.c.l.b16 %v277
    %v554 = vunpack.c.h.b16 %v277
    %v555 = vunpack.c.l.b16 %v278
    %v556 = vunpack.c.h.b16 %v278
    %v557 = vunpack.c.l.b16 %v279
    %v558 = vunpack.c.h.b16 %v279
    %v559 = vunpack.c.l.b16 %v280
    %v560 = vunpack.c.h.b16 %v280
    %v561 = vunpack.c.l.b16 %v281
    %v562 = vunpack.c.h.b16 %v281
    %v563 = vunpack.c.l.b16 %v282
    %v564 = vunpack.c.h.b16 %v282
    %v565 = vunpack.c.l.b16 %v283
    %v566 = vunpack.c.h.b16 %v283
    %v567 = vunpack.c.l.b16 %v284
    %v568 = vunpack.c.h.b16 %v284
    %v569 = vunpack.c.l.b16 %v285
    %v570 = vunpack.c.h.b16 %v285
    %v571 = vunpack.c.l.b16 %v286
    %v572 = vunpack.c.h.b16 %v286
    %v573 = vunpack.c.l.b16 %v287
    %v574 = vunpack.c.h.b16 %v287
    %v575 = vunpack.c.l.b16 %v288
    %v576 = vunpack.c.h.b16 %v288
    %v577 = vunpack.c.l.b16 %v289
    %v578 = vunpack.c.h.b16 %v289
    %v579 = vunpack.c.l.b16 %v290
    %v580 = vunpack.c.h.b16 %v290
    %v581 = vunpack.c.l.b16 %v291
    %v582 = vunpack.c.h.b16 %v291
    %v583 = vunpack.c.l.b16 %v292
    %v584 = vunpack.c.h.b16 %v292
    %v585 = vunpack.c.l.b16 %v293
    %v586 = vunpack.c.h.b16 %v293
    %v587 = vunpack.c.l.b16 %v294
    %v588 = vunpack.c.h.b16 %v294
    %v589 = vunpack.c.l.b16 %v295
    %v590 = vunpack.c.h.b16 %v295
    %v591 = vunpack.c.l.b16 %v296
    %v592 = vunpack.c.h.b16 %v296
    %v593 = vunpack.c.l.b16 %v297
    %v594 = vunpack.c.h.b16 %v297
    %v595 = vunpack.c.l.b16 %v298
    %v596 = vunpack.c.h.b16 %v298
    %v597 = vunpack.c.l.b16 %v299
    %v598 = vunpack.c.h.b16 %v299
    %v599 = vunpack.c.l.b16 %v300
    %v600 = vunpack.c.h.b16 %v300
    %v601 = vunpack.c.l.b16 %v301
    %v602 = vunpack.c.h.b16 %v301
    %v603 = vunpack.c.l.b16 %v302
    %v604 = vunpack.c.h.b16 %v302
    %v605 = vunpack.c.l.b16 %v303
    %v606 = vunpack.c.h.b16 %v303
    %v607 = vunpack.c.l.b16 %v304
    %v608 = vunpack.c.h.b16 %v304
    %v609 = vunpack.c.l.b16 %v305
    %v610 = vunpack.c.h.b16 %v305
    %v611 = vunpack.c.l.b16 %v306
    %v612 = vunpack.c.h.b16 %v306
    %v613 = vunpack.c.l.b16 %v307
    %v614 = vunpack.c.h.b16 %v307
    %v615 = vunpack.c.l.b16 %v308
    %v616 = vunpack.c.h.b16 %v308
    %v617 = vunpack.c.l.b16 %v309
    %v618 = vunpack.c.h.b16 %v309
    %v619 = vunpack.c.l.b16 %v310
    %v620 = vunpack.c.h.b16 %v310
    %v621 = vunpack.c.l.b16 %v311
    %v622 = vunpack.c.h.b16 %v311
    %v623 = vunpack.c.l.b16 %v312
    %v624 = vunpack.c.h.b16 %v312
    %v625 = vunpack.c.l.b16 %v313
    %v626 = vunpack.c.h.b16 %v313
    %v627 = vunpack.c.l.b16 %v314
    %v628 = vunpack.c.h.b16 %v314
    %v629 = vunpack.c.l.b16 %v315
    %v630 = vunpack.c.h.b16 %v315
    %v631 = vunpack.c.l.b16 %v316
    %v632 = vunpack.c.h.b16 %v316
    %v633 = vunpack.c.l.b16 %v317
    %v634 = vunpack.c.h.b16 %v317
    %v635 = vunpack.c.l.b16 %v318
    %v636 = vunpack.c.h.b16 %v318
    %v637 = vunpack.c.l.b16 %v319
    %v638 = vunpack.c.h.b16 %v319
    %v639 = vunpack.c.l.b16 %v320
    %v640 = vunpack.c.h.b16 %v320
    %v641 = vunpack.c.l.b16 %v321
    %v642 = vunpack.c.h.b16 %v321
    %v643 = vunpack.c.l.b16 %v322
    %v644 = vunpack.c.h.b16 %v322
    %v645 = vpack.c.b16 %v459, %v453
    %v646 = vpack.c.b16 %v460, %v454
    %v647 = vpack.c.b16 %v461, %v455
    %v648 = vpack.c.b16 %v462, %v456
    %v649 = vpack.c.b16 %v463, %v457
    %v650 = vpack.c.b16 %v464, %v458
    %v651 = vpack.c.b16 %v471, %v465
    %v652 = vpack.c.b16 %v472, %v466
    %v653 = vpack.c.b16 %v473, %v467
    %v654 = vpack.c.b16 %v474, %v468
    %v655 = vpack.c.b16 %v475, %v469
    %v656 = vpack.c.b16 %v476, %v470
    %v657 = vpack.c.b16 %v483, %v477
    %v658 = vpack.c.b16 %v484, %v478
    %v659 = vpack.c.b16 %v485, %v479
    %v660 = vpack.c.b16 %v486, %v480
    %v661 = vpack.c.b16 %v487, %v481
    %v662 = vpack.c.b16 %v488, %v482
    %v663 = vpack.c.b16 %v495, %v489
    %v664 = vpack.c.b16 %v496, %v490
    %v665 = vpack.c.b16 %v497, %v491
    %v666 = vpack.c.b16 %v498, %v492
    %v667 = vpack.c.b16 %v499, %v493
    %v668 = vpack.c.b16 %v500, %v494
    %v669 = vpack.c.b16 %v507, %v501
    %v670 = vpack.c.b16 %v508, %v502
    %v671 = vpack.c.b16 %v509, %v503
    %v672 = vpack.c.b16 %v510, %v504
    %v673 = vpack.c.b16 %v511, %v505
    %v674 = vpack.c.b16 %v512, %v506
    %v675 = vpack.c.b16 %v519, %v513
    %v676 = vpack.c.b16 %v520, %v514
    %v677 = vpack.c.b16 %v521, %v515
    %v678 = vpack.c.b16 %v522, %v516
    %v679 = vpack.c.b16 %v523, %v517
    %v680 = vpack.c.b16 %v524, %v518
    %v681 = vpack.c.b16 %v531, %v525
    %v682 = vpack.c.b16 %v532, %v526
    %v683 = vpack.c.b16 %v533, %v527
    %v684 = vpack.c.b16 %v534, %v528
    %v685 = vpack.c.b16 %v535, %v529
    %v686 = vpack.c.b16 %v536, %v530
    %v687 = vpack.c.b16 %v543, %v537
    %v688 = vpack.c.b16 %v544, %v538
    %v689 = vpack.c.b16 %v545, %v539
    %v690 = vpack.c.b16 %v546, %v540
    %v691 = vpack.c.b16 %v547, %v541
    %v692 = vpack.c.b16 %v548, %v542
    %v693 = vpack.c.b16 %v555, %v549
    %v694 = vpack.c.b16 %v556, %v550
    %v695 = vpack.c.b16 %v557, %v551
    %v696 = vpack.c.b16 %v558, %v552
    %v697 = vpack.c.b16 %v559, %v553
    %v698 = vpack.c.b16 %v560, %v554
    %v699 = vpack.c.b16 %v567, %v561
    %v700 = vpack.c.b16 %v568, %v562
    %v701 = vpack.c.b16 %v569, %v563
    %v702 = vpack.c.b16 %v570, %v564
    %v703 = vpack.c.b16 %v571, %v565
    %v704 = vpack.c.b16 %v572, %v566
    %v705 = vpack.c.b16 %v579, %v573
    %v706 = vpack.c.b16 %v580, %v574
    %v707 = vpack.c.b16 %v581, %v575
    %v708 = vpack.c.b16 %v582, %v576
    %v709 = vpack.c.b16 %v583, %v577
    %v710 = vpack.c.b16 %v584, %v578
    %v711 = vpack.c.b16 %v591, %v585
    %v712 = vpack.c.b16 %v592, %v586
    %v713 = vpack.c.b16 %v593, %v587
    %v714 = vpack.c.b16 %v594, %v588
    %v715 = vpack.c.b16 %v595, %v589
    %v716 = vpack.c.b16 %v596, %v590
    %v717 = vpack.c.b16 %v603, %v597
    %v718 = vpack.c.b16 %v604, %v598
    %v719 = vpack.c.b16 %v605, %v599
    %v720 = vpack.c.b16 %v606, %v600
    %v721 = vpack.c.b16 %v607, %v601
    %v722 = vpack.c.b16 %v608, %v602
    %v723 = vpack.c.b16 %v615, %v609
    %v724 = vpack.c.b16 %v616, %v610
    %v725 = vpack.c.b16 %v617, %v611
    %v726 = vpack.c.b16 %v618, %v612
    %v727 = vpack.c.b16 %v619, %v613
    %v728 = vpack.c.b16 %v620, %v614
    %v729 = vpack.c.b16 %v627, %v621
    %v730 = vpack.c.b16 %v628, %v622
    %v731 = vpack.c.b16 %v629, %v623
    %v732 = vpack.c.b16 %v630, %v624
    %v733 = vpack.c.b16 %v631, %v625
    %v734 = vpack.c.b16 %v632, %v626
    %v735 = vpack.c.b16 %v639, %v633
    %v736 = vpack.c.b16 %v640, %v634
    %v737 = vpack.c.b16 %v641, %v635
    %v738 = vpack.c.b16 %v642, %v636
    %v739 = vpack.c.b16 %v643, %v637
    %v740 = vpack.c.b16 %v644, %v638
    %837 = vmatprep.subr.bf16.mxu0 %v646
    %838 = vmatpush1.bf16.msra.mxu0 %v645
    %839 = vmatprep.subr.bf16.mxu0 %v652
    %840 = vmatpush1.bf16.msra.mxu0 %v651
    %841 = vmatprep.subr.bf16.mxu0 %v658
    %842 = vmatpush1.bf16.msra.mxu0 %v657
    %843 = vmatprep.subr.bf16.mxu0 %v664
    %844 = vmatpush1.bf16.msra.mxu0 %v663
    %845 = vmatprep.subr.bf16.mxu0 %v670
    %846 = vmatpush1.bf16.msra.mxu0 %v669
    %847 = vmatprep.subr.bf16.mxu0 %v676
    %848 = vmatpush1.bf16.msra.mxu0 %v675
    %849 = vmatprep.subr.bf16.mxu0 %v682
    %850 = vmatpush1.bf16.msra.mxu0 %v681
    %851 = vmatprep.subr.bf16.mxu0 %v688
    %852 = vmatpush1.bf16.msra.mxu0 %v687
    %853 = vmatprep.subr.bf16.mxu0 %v694
    %854 = vmatpush1.bf16.msra.mxu0 %v693
    %855 = vmatprep.subr.bf16.mxu0 %v700
    %856 = vmatpush1.bf16.msra.mxu0 %v699
    %857 = vmatprep.subr.bf16.mxu0 %v706
    %858 = vmatpush1.bf16.msra.mxu0 %v705
    %859 = vmatprep.subr.bf16.mxu0 %v712
    %860 = vmatpush1.bf16.msra.mxu0 %v711
    %861 = vmatprep.subr.bf16.mxu0 %v718
    %862 = vmatpush1.bf16.msra.mxu0 %v717
    %863 = vmatprep.subr.bf16.mxu0 %v724
    %864 = vmatpush1.bf16.msra.mxu0 %v723
    %865 = vmatprep.subr.bf16.mxu0 %v730
    %866 = vmatpush1.bf16.msra.mxu0 %v729
    %867 = vmatprep.subr.bf16.mxu0 %v736
    %868 = vmatpush1.bf16.msra.mxu0 %v735
    %869 = vmatprep.mubr.bf16.mxu0 %v324
    %870 = vmatmul.mubr.bf16.gmra.mrb[0].mxu0 %v323
    %v871 = vpop.f32.mrb[0].mxu0
    %v872 = vadd.f32 %v330, %v871
    %v873 = vpop.f32.mrb[0].mxu0
    %v874 = vadd.f32 %v334, %v873
    %v875 = vpop.f32.mrb[0].mxu0
    %v876 = vadd.f32 %v330, %v875
    %v877 = vpop.f32.mrb[0].mxu0
    %v878 = vadd.f32 %v334, %v877
    %879 = vdwg.mxu0
    %880 = vmatprep.subr.bf16.mxu0 %v648
    %881 = vmatpush1.bf16.msra.mxu0 %v647
    %882 = vmatprep.subr.bf16.mxu0 %v654
    %883 = vmatpush1.bf16.msra.mxu0 %v653
    %884 = vmatprep.subr.bf16.mxu0 %v660
    %885 = vmatpush1.bf16.msra.mxu0 %v659
    %886 = vmatprep.subr.bf16.mxu0 %v666
    %887 = vmatpush1.bf16.msra.mxu0 %v665
    %888 = vmatprep.subr.bf16.mxu0 %v672
    %889 = vmatpush1.bf16.msra.mxu0 %v671
    %890 = vmatprep.subr.bf16.mxu0 %v678
    %891 = vmatpush1.bf16.msra.mxu0 %v677
    %892 = vmatprep.subr.bf16.mxu0 %v684
    %893 = vmatpush1.bf16.msra.mxu0 %v683
    %894 = vmatprep.subr.bf16.mxu0 %v690
    %895 = vmatpush1.bf16.msra.mxu0 %v689
    %896 = vmatprep.subr.bf16.mxu0 %v696
    %897 = vmatpush1.bf16.msra.mxu0 %v695
    %898 = vmatprep.subr.bf16.mxu0 %v702
    %899 = vmatpush1.bf16.msra.mxu0 %v701
    %900 = vmatprep.subr.bf16.mxu0 %v708
    %901 = vmatpush1.bf16.msra.mxu0 %v707
    %902 = vmatprep.subr.bf16.mxu0 %v714
    %903 = vmatpush1.bf16.msra.mxu0 %v713
    %904 = vmatprep.subr.bf16.mxu0 %v720
    %905 = vmatpush1.bf16.msra.mxu0 %v719
    %906 = vmatprep.subr.bf16.mxu0 %v726
    %907 = vmatpush1.bf16.msra.mxu0 %v725
    %908 = vmatprep.subr.bf16.mxu0 %v732
    %909 = vmatpush1.bf16.msra.mxu0 %v731
    %910 = vmatprep.subr.bf16.mxu0 %v738
    %911 = vmatpush1.bf16.msra.mxu0 %v737
    %912 = vmatprep.mubr.bf16.mxu0 %v324
    %913 = vmatmul.mubr.bf16.gmra.mrb[0].mxu0 %v323
    %v914 = vpop.f32.mrb[0].mxu0
    %v915 = vadd.f32 %v338, %v914
    %v916 = vpop.f32.mrb[0].mxu0
    %v917 = vadd.f32 %v342, %v916
    %v918 = vpop.f32.mrb[0].mxu0
    %v919 = vadd.f32 %v338, %v918
    %v920 = vpop.f32.mrb[0].mxu0
    %v921 = vadd.f32 %v342, %v920
    %922 = vdwg.mxu0
    %923 = vmatprep.subr.bf16.mxu0 %v650
    %924 = vmatpush1.bf16.msra.mxu0 %v649
    %925 = vmatprep.subr.bf16.mxu0 %v656
    %926 = vmatpush1.bf16.msra.mxu0 %v655
    %927 = vmatprep.subr.bf16.mxu0 %v662
    %928 = vmatpush1.bf16.msra.mxu0 %v661
    %929 = vmatprep.subr.bf16.mxu0 %v668
    %930 = vmatpush1.bf16.msra.mxu0 %v667
    %931 = vmatprep.subr.bf16.mxu0 %v674
    %932 = vmatpush1.bf16.msra.mxu0 %v673
    %933 = vmatprep.subr.bf16.mxu0 %v680
    %934 = vmatpush1.bf16.msra.mxu0 %v679
    %935 = vmatprep.subr.bf16.mxu0 %v686
    %936 = vmatpush1.bf16.msra.mxu0 %v685
    %937 = vmatprep.subr.bf16.mxu0 %v692
    %938 = vmatpush1.bf16.msra.mxu0 %v691
    %939 = vmatprep.subr.bf16.mxu0 %v698
    %940 = vmatpush1.bf16.msra.mxu0 %v697
    %941 = vmatprep.subr.bf16.mxu0 %v704
    %942 = vmatpush1.bf16.msra.mxu0 %v703
    %943 = vmatprep.subr.bf16.mxu0 %v710
    %944 = vmatpush1.bf16.msra.mxu0 %v709
    %945 = vmatprep.subr.bf16.mxu0 %v716
    %946 = vmatpush1.bf16.msra.mxu0 %v715
    %947 = vmatprep.subr.bf16.mxu0 %v722
    %948 = vmatpush1.bf16.msra.mxu0 %v721
    %949 = vmatprep.subr.bf16.mxu0 %v728
    %950 = vmatpush1.bf16.msra.mxu0 %v727
    %951 = vmatprep.subr.bf16.mxu0 %v734
    %952 = vmatpush1.bf16.msra.mxu0 %v733
    %953 = vmatprep.subr.bf16.mxu0 %v740
    %954 = vmatpush1.bf16.msra.mxu0 %v739
    %955 = vmatprep.mubr.bf16.mxu0 %v324
    %956 = vmatmul.mubr.bf16.gmra.mrb[0].mxu0 %v323
    %v957 = vpop.f32.mrb[0].mxu0
    %v958 = vadd.f32 %v346, %v957
    %v959 = vpop.f32.mrb[0].mxu0
    %v960 = vadd.f32 %v350, %v959
    %v961 = vpop.f32.mrb[0].mxu0
    %v962 = vadd.f32 %v346, %v961
    %v963 = vpop.f32.mrb[0].mxu0
    %v964 = vadd.f32 %v350, %v963
    %965 = vdwg.mxu0
    %v966 = vmul.f32 %v872, 0.125
    %v967 = vmul.f32 %v874, 0.125
    %v968 = vmul.f32 %v876, 0.125
    %v969 = vmul.f32 %v878, 0.125
    %v970 = vld [vmem:[%s9] sm:$0xff]
    %v971 = vld [vmem:[%s9 + $0x8] sm:$0xff]
    %v972 = vld [vmem:[%s9 + $0x10] sm:$0xff]
    %v973 = vld [vmem:[%s9 + $0x18] sm:$0xff]
    %v974 = vld [vmem:[%s9 + $0x20] sm:$0xff]
    %v975 = vld [vmem:[%s9 + $0x28] sm:$0xff]
    %v976 = vld [vmem:[%s9 + $0x30] sm:$0xff]
    %v977 = vld [vmem:[%s9 + $0x38] sm:$0xff]
    %v978 = vld [vmem:[%s9 + $0x40] sm:$0xff]
    %v979 = vld [vmem:[%s9 + $0x48] sm:$0xff]
    %v980 = vld [vmem:[%s9 + $0x50] sm:$0xff]
    %v981 = vld [vmem:[%s9 + $0x58] sm:$0xff]
    %v982 = vld [vmem:[%s9 + $0x60] sm:$0xff]
    %v983 = vld [vmem:[%s9 + $0x68] sm:$0xff]
    %v984 = vld [vmem:[%s9 + $0x70] sm:$0xff]
    %v985 = vld [vmem:[%s9 + $0x78] sm:$0xff]
    %v986 = vld [vmem:[%s9 + $0x80] sm:$0xff]
    %v987 = vld [vmem:[%s9 + $0x88] sm:$0xff]
    %v988 = vld [vmem:[%s9 + $0x90] sm:$0xff]
    %v989 = vld [vmem:[%s9 + $0x98] sm:$0xff]
    %v990 = vld [vmem:[%s9 + $0xa0] sm:$0xff]
    %v991 = vld [vmem:[%s9 + $0xa8] sm:$0xff]
    %v992 = vld [vmem:[%s9 + $0xb0] sm:$0xff]
    %v993 = vld [vmem:[%s9 + $0xb8] sm:$0xff]
    %v994 = vld [vmem:[%s9 + $0xc0] sm:$0xff]
    %v995 = vld [vmem:[%s9 + $0xc8] sm:$0xff]
    %v996 = vld [vmem:[%s9 + $0xd0] sm:$0xff]
    %v997 = vld [vmem:[%s9 + $0xd8] sm:$0xff]
    %v998 = vld [vmem:[%s9 + $0xe0] sm:$0xff]
    %v999 = vld [vmem:[%s9 + $0xe8] sm:$0xff]
    %v1000 = vld [vmem:[%s9 + $0xf0] sm:$0xff]
    %v1001 = vld [vmem:[%s9 + $0xf8] sm:$0xff]
    %v1002 = vlaneseq
    %v1003 = vand.u32 %v1002, 127
    %s1004 = sld [smem:[#allocation3]]
    %v1005 = vstv %s1004
    %vm1006 = vcmp.lt.s32.totalorder %v1003, %v1005
    %v1007 = vpack.c.bf16 %v966, %v966
    %v1008 = vpack.c.bf16 %v915, %v915
    %vm1009 = vcmask 523264
    %v1011 = vsel %vm1009, %v1007, 0
    %v1014 = vsel %vm1009, %v1008, 0
    %1016 = vmatprep.subr.bf16.mxu0 0
    %1017 = vmatpush1.bf16.xpose.msra.mxu0 %v1014
    %1018 = vmatprep.subr.bf16.mxu0 0
    %1019 = vmatpush1.bf16.xpose.msra.mxu0 0
    %1020 = vmatprep.subr.bf16.mxu0 0
    %1021 = vmatpush1.bf16.xpose.msra.mxu0 0
    %1022 = vmatprep.subr.bf16.mxu0 0
    %1023 = vmatpush1.bf16.xpose.msra.mxu0 0
    %1024 = vmatprep.subr.bf16.mxu0 0
    %1025 = vmatpush1.bf16.xpose.msra.mxu0 0
    %1026 = vmatprep.subr.bf16.mxu0 0
    %1027 = vmatpush1.bf16.xpose.msra.mxu0 0
    %1028 = vmatprep.subr.bf16.mxu0 0
    %1029 = vmatpush1.bf16.xpose.msra.mxu0 0
    %1030 = vmatprep.subr.bf16.mxu0 0
    %1031 = vmatpush1.bf16.xpose.msra.mxu0 0
    %1032 = vmatprep.subr.bf16.mxu0 0
    %1033 = vmatpush1.bf16.xpose.msra.mxu0 0
    %1034 = vmatprep.subr.bf16.mxu0 0
    %1035 = vmatpush1.bf16.xpose.msra.mxu0 0
    %1036 = vmatprep.subr.bf16.mxu0 0
    %1037 = vmatpush1.bf16.xpose.msra.mxu0 0
    %1038 = vmatprep.subr.bf16.mxu0 0
    %1039 = vmatpush1.bf16.xpose.msra.mxu0 0
    %1040 = vmatprep.subr.bf16.mxu0 0
    %1041 = vmatpush1.bf16.xpose.msra.mxu0 0
    %1042 = vmatprep.subr.bf16.mxu0 0
    %1043 = vmatpush1.bf16.xpose.msra.mxu0 0
    %1044 = vmatprep.subr.bf16.mxu0 0
    %1045 = vmatpush1.bf16.xpose.msra.mxu0 0
    %1046 = vmatprep.subr.bf16.mxu0 0
    %1047 = vmatpush1.bf16.xpose.msra.mxu0 0
    %1048 = vmatprep.mubr.bf16.mxu0 0
    %1049 = vmatmul.mubr.bf16.gmra.mrb[0].mxu0 %v1011
    %v1050 = vpop.f32.mrb[0].mxu0
    %v1051 = vadd.f32 0.0, %v1050
    %v1052 = vpop.f32.mrb[0].mxu0
    %v1053 = vpop.f32.mrb[0].mxu0
    %v1054 = vpop.f32.mrb[0].mxu0
    %1055 = vdwg.mxu0
    %v1056 = vsel %vm1006, %v1051, -1000000.0
    %vm1057 = vcmask 64512
    %v1058 = vsel %vm1057, %v1056, -inf
    %1059 = vmax.xlane.f32.xlu0 %v1058
    %v1060 = vpop.xlane.xlu0 %1059
    %v1061 = vsub.f32 %v1056, %v1060
    %v1062 = vmul.f32 %v1061, 1.442695
    %v1063 = vpow.pop %v1062
    %v1064 = vsel %vm1057, %v1063, 0.0
    %1065 = vadd.xlane.f32.xlu0 %v1064
    %v1066 = vpop.xlane.xlu0 %1065
    %v1067 = vrcp.pop %v1066
    %v1068 = vmul.f32 %v1063, %v1067
    %v1069 = vpack.c.bf16 %v1068, %v1068
    %v1070 = vpack.c.bf16 %v958, %v958
    %v1072 = vsel %vm1057, %v1069, 0
    %vm1074 = vcmask 1043456
    %v1076 = vsel %vm1074, %v1070, 0
    %1078 = vmatprep.subr.bf16.mxu0 0
    %1079 = vmatpush1.bf16.msra.mxu0 %v1076
    %1080 = vmatprep.subr.bf16.mxu0 0
    %1081 = vmatpush1.bf16.msra.mxu0 0
    %1082 = vmatprep.subr.bf16.mxu0 0
    %1083 = vmatpush1.bf16.msra.mxu0 0
    %1084 = vmatprep.subr.bf16.mxu0 0
    %1085 = vmatpush1.bf16.msra.mxu0 0
    %1086 = vmatprep.subr.bf16.mxu0 0
    %1087 = vmatpush1.bf16.msra.mxu0 0
    %1088 = vmatprep.subr.bf16.mxu0 0
    %1089 = vmatpush1.bf16.msra.mxu0 0
    %1090 = vmatprep.subr.bf16.mxu0 0
    %1091 = vmatpush1.bf16.msra.mxu0 0
    %1092 = vmatprep.subr.bf16.mxu0 0
    %1093 = vmatpush1.bf16.msra.mxu0 0
    %1094 = vmatprep.subr.bf16.mxu0 0
    %1095 = vmatpush1.bf16.msra.mxu0 0
    %1096 = vmatprep.subr.bf16.mxu0 0
    %1097 = vmatpush1.bf16.msra.mxu0 0
    %1098 = vmatprep.subr.bf16.mxu0 0
    %1099 = vmatpush1.bf16.msra.mxu0 0
    %1100 = vmatprep.subr.bf16.mxu0 0
    %1101 = vmatpush1.bf16.msra.mxu0 0
    %1102 = vmatprep.subr.bf16.mxu0 0
    %1103 = vmatpush1.bf16.msra.mxu0 0
    %1104 = vmatprep.subr.bf16.mxu0 0
    %1105 = vmatpush1.bf16.msra.mxu0 0
    %1106 = vmatprep.subr.bf16.mxu0 0
    %1107 = vmatpush1.bf16.msra.mxu0 0
    %1108 = vmatprep.subr.bf16.mxu0 0
    %1109 = vmatpush1.bf16.msra.mxu0 0
    %1110 = vmatprep.mubr.bf16.mxu0 0
    %1111 = vmatmul.mubr.bf16.gmra.mrb[0].mxu0 %v1072
    %v1112 = vpop.f32.mrb[0].mxu0
    %v1113 = vadd.f32 0.0, %v1112
    %v1114 = vpop.f32.mrb[0].mxu0
    %v1115 = vpop.f32.mrb[0].mxu0
    %v1116 = vpop.f32.mrb[0].mxu0
    %1117 = vdwg.mxu0
    %v1118 = vpack.c.bf16 %v1113, %v1113
    %1120 = vrot.lane.b32.xlu0 %v1007, 64
    %v1121 = vpop.permute.xlu0 %1120
    %1123 = vrot.lane.b32.xlu0 %v1008, 64
    %v1124 = vpop.permute.xlu0 %1123
    %v1126 = vsel %vm1009, %v1121, 0
    %v1129 = vsel %vm1009, %v1124, 0
    %1131 = vmatprep.subr.bf16.mxu0 0
    %1132 = vmatpush1.bf16.xpose.msra.mxu0 %v1129
    %1133 = vmatprep.subr.bf16.mxu0 0
    %1134 = vmatpush1.bf16.xpose.msra.mxu0 0
    %1135 = vmatprep.subr.bf16.mxu0 0
    %1136 = vmatpush1.bf16.xpose.msra.mxu0 0
    %1137 = vmatprep.subr.bf16.mxu0 0
    %1138 = vmatpush1.bf16.xpose.msra.mxu0 0
    %1139 = vmatprep.subr.bf16.mxu0 0
    %1140 = vmatpush1.bf16.xpose.msra.mxu0 0
    %1141 = vmatprep.subr.bf16.mxu0 0
    %1142 = vmatpush1.bf16.xpose.msra.mxu0 0
    %1143 = vmatprep.subr.bf16.mxu0 0
    %1144 = vmatpush1.bf16.xpose.msra.mxu0 0
    %1145 = vmatprep.subr.bf16.mxu0 0
    %1146 = vmatpush1.bf16.xpose.msra.mxu0 0
    %1147 = vmatprep.subr.bf16.mxu0 0
    %1148 = vmatpush1.bf16.xpose.msra.mxu0 0
    %1149 = vmatprep.subr.bf16.mxu0 0
    %1150 = vmatpush1.bf16.xpose.msra.mxu0 0
    %1151 = vmatprep.subr.bf16.mxu0 0
    %1152 = vmatpush1.bf16.xpose.msra.mxu0 0
    %1153 = vmatprep.subr.bf16.mxu0 0
    %1154 = vmatpush1.bf16.xpose.msra.mxu0 0
    %1155 = vmatprep.subr.bf16.mxu0 0
    %1156 = vmatpush1.bf16.xpose.msra.mxu0 0
    %1157 = vmatprep.subr.bf16.mxu0 0
    %1158 = vmatpush1.bf16.xpose.msra.mxu0 0
    %1159 = vmatprep.subr.bf16.mxu0 0
    %1160 = vmatpush1.bf16.xpose.msra.mxu0 0
    %1161 = vmatprep.subr.bf16.mxu0 0
    %1162 = vmatpush1.bf16.xpose.msra.mxu0 0
    %1163 = vmatprep.mubr.bf16.mxu0 0
    %1164 = vmatmul.mubr.bf16.gmra.mrb[0].mxu0 %v1126
    %v1165 = vpop.f32.mrb[0].mxu0
    %v1166 = vadd.f32 0.0, %v1165
    %v1167 = vpop.f32.mrb[0].mxu0
    %v1168 = vpop.f32.mrb[0].mxu0
    %v1169 = vpop.f32.mrb[0].mxu0
    %1170 = vdwg.mxu0
    %v1171 = vsel %vm1006, %v1166, -1000000.0
    %v1172 = vsel %vm1057, %v1171, -inf
    %1173 = vmax.xlane.f32.xlu0 %v1172
    %v1174 = vpop.xlane.xlu0 %1173
    %v1175 = vsub.f32 %v1171, %v1174
    %v1176 = vmul.f32 %v1175, 1.442695
    %v1177 = vpow.pop %v1176
    %v1178 = vsel %vm1057, %v1177, 0.0
    %1179 = vadd.xlane.f32.xlu0 %v1178
    %v1180 = vpop.xlane.xlu0 %1179
    %v1181 = vrcp.pop %v1180
    %v1182 = vmul.f32 %v1177, %v1181
    %v1183 = vpack.c.bf16 %v1182, %v1182
    %1185 = vrot.lane.b32.xlu0 %v1070, 64
    %v1186 = vpop.permute.xlu0 %1185
    %v1188 = vsel %vm1057, %v1183, 0
    %v1191 = vsel %vm1074, %v1186, 0
    %1193 = vmatprep.subr.bf16.mxu0 0
    %1194 = vmatpush1.bf16.msra.mxu0 %v1191
    %1195 = vmatprep.subr.bf16.mxu0 0
    %1196 = vmatpush1.bf16.msra.mxu0 0
    %1197 = vmatprep.subr.bf16.mxu0 0
    %1198 = vmatpush1.bf16.msra.mxu0 0
    %1199 = vmatprep.subr.bf16.mxu0 0
    %1200 = vmatpush1.bf16.msra.mxu0 0
    %1201 = vmatprep.subr.bf16.mxu0 0
    %1202 = vmatpush1.bf16.msra.mxu0 0
    %1203 = vmatprep.subr.bf16.mxu0 0
    %1204 = vmatpush1.bf16.msra.mxu0 0
    %1205 = vmatprep.subr.bf16.mxu0 0
    %1206 = vmatpush1.bf16.msra.mxu0 0
    %1207 = vmatprep.subr.bf16.mxu0 0
    %1208 = vmatpush1.bf16.msra.mxu0 0
    %1209 = vmatprep.subr.bf16.mxu0 0
    %1210 = vmatpush1.bf16.msra.mxu0 0
    %1211 = vmatprep.subr.bf16.mxu0 0
    %1212 = vmatpush1.bf16.msra.mxu0 0
    %1213 = vmatprep.subr.bf16.mxu0 0
    %1214 = vmatpush1.bf16.msra.mxu0 0
    %1215 = vmatprep.subr.bf16.mxu0 0
    %1216 = vmatpush1.bf16.msra.mxu0 0
    %1217 = vmatprep.subr.bf16.mxu0 0
    %1218 = vmatpush1.bf16.msra.mxu0 0
    %1219 = vmatprep.subr.bf16.mxu0 0
    %1220 = vmatpush1.bf16.msra.mxu0 0
    %1221 = vmatprep.subr.bf16.mxu0 0
    %1222 = vmatpush1.bf16.msra.mxu0 0
    %1223 = vmatprep.subr.bf16.mxu0 0
    %1224 = vmatpush1.bf16.msra.mxu0 0
    %1225 = vmatprep.mubr.bf16.mxu0 0
    %1226 = vmatmul.mubr.bf16.gmra.mrb[0].mxu0 %v1188
    %v1227 = vpop.f32.mrb[0].mxu0
    %v1228 = vadd.f32 0.0, %v1227
    %v1229 = vpop.f32.mrb[0].mxu0
    %v1230 = vpop.f32.mrb[0].mxu0
    %v1231 = vpop.f32.mrb[0].mxu0
    %1232 = vdwg.mxu0
    %v1233 = vpack.c.bf16 %v1228, %v1228
    %v1242 = vunpack.c.l.b16 %v978
    %v1243 = vunpack.c.h.b16 %v978
    %v1244 = vunpack.c.l.b16 %v979
    %v1245 = vunpack.c.h.b16 %v979
    %v1246 = vunpack.c.l.b16 %v980
    %v1247 = vunpack.c.h.b16 %v980
    %v1248 = vunpack.c.l.b16 %v981
    %v1249 = vunpack.c.h.b16 %v981
    %v1250 = vunpack.c.l.b16 %v982
    %v1251 = vunpack.c.h.b16 %v982
    %v1252 = vunpack.c.l.b16 %v983
    %v1253 = vunpack.c.h.b16 %v983
    %v1254 = vunpack.c.l.b16 %v984
    %v1255 = vunpack.c.h.b16 %v984
    %v1256 = vunpack.c.l.b16 %v985
    %v1257 = vunpack.c.h.b16 %v985
    %v1258 = vpack.c.b16 %v1244, %v1242
    %v1259 = vpack.c.b16 %v1245, %v1243
    %v1260 = vpack.c.b16 %v1248, %v1246
    %v1261 = vpack.c.b16 %v1249, %v1247
    %v1262 = vpack.c.b16 %v1252, %v1250
    %v1263 = vpack.c.b16 %v1253, %v1251
    %v1264 = vpack.c.b16 %v1256, %v1254
    %v1265 = vpack.c.b16 %v1257, %v1255
    %v1275 = vsel %vm1009, %v1233, 0
    %1277 = vmatprep.subr.bf16.mxu0 %v1259
    %1278 = vmatpush1.bf16.msra.mxu0 %v1258
    %1279 = vmatprep.subr.bf16.mxu0 %v1261
    %1280 = vmatpush1.bf16.msra.mxu0 %v1260
    %1281 = vmatprep.subr.bf16.mxu0 %v1263
    %1282 = vmatpush1.bf16.msra.mxu0 %v1262
    %1283 = vmatprep.subr.bf16.mxu0 %v1265
    %1284 = vmatpush1.bf16.msra.mxu0 %v1264
    %1285 = vmatprep.subr.bf16.mxu0 0
    %1286 = vmatpush1.bf16.msra.mxu0 0
    %1287 = vmatprep.subr.bf16.mxu0 0
    %1288 = vmatpush1.bf16.msra.mxu0 0
    %1289 = vmatprep.subr.bf16.mxu0 0
    %1290 = vmatpush1.bf16.msra.mxu0 0
    %1291 = vmatprep.subr.bf16.mxu0 0
    %1292 = vmatpush1.bf16.msra.mxu0 0
    %1293 = vmatprep.subr.bf16.mxu0 0
    %1294 = vmatpush1.bf16.msra.mxu0 0
    %1295 = vmatprep.subr.bf16.mxu0 0
    %1296 = vmatpush1.bf16.msra.mxu0 0
    %1297 = vmatprep.subr.bf16.mxu0 0
    %1298 = vmatpush1.bf16.msra.mxu0 0
    %1299 = vmatprep.subr.bf16.mxu0 0
    %1300 = vmatpush1.bf16.msra.mxu0 0
    %1301 = vmatprep.subr.bf16.mxu0 0
    %1302 = vmatpush1.bf16.msra.mxu0 0
    %1303 = vmatprep.subr.bf16.mxu0 0
    %1304 = vmatpush1.bf16.msra.mxu0 0
    %1305 = vmatprep.subr.bf16.mxu0 0
    %1306 = vmatpush1.bf16.msra.mxu0 0
    %1307 = vmatprep.subr.bf16.mxu0 0
    %1308 = vmatpush1.bf16.msra.mxu0 0
    %1309 = vmatprep.mubr.bf16.mxu0 0
    %1310 = vmatmul.mubr.bf16.gmra.mrb[0].mxu0 %v1275
    %v1311 = vpop.f32.mrb[0].mxu0
    %v1312 = vadd.f32 0.0, %v1311
    %v1313 = vpop.f32.mrb[0].mxu0
    %v1314 = vadd.f32 0.0, %v1313
    %v1315 = vpop.f32.mrb[0].mxu0
    %v1316 = vpop.f32.mrb[0].mxu0
    %1317 = vdwg.mxu0
    %v1326 = vunpack.c.l.b16 %v970
    %v1327 = vunpack.c.h.b16 %v970
    %v1328 = vunpack.c.l.b16 %v971
    %v1329 = vunpack.c.h.b16 %v971
    %v1330 = vunpack.c.l.b16 %v972
    %v1331 = vunpack.c.h.b16 %v972
    %v1332 = vunpack.c.l.b16 %v973
    %v1333 = vunpack.c.h.b16 %v973
    %v1334 = vunpack.c.l.b16 %v974
    %v1335 = vunpack.c.h.b16 %v974
    %v1336 = vunpack.c.l.b16 %v975
    %v1337 = vunpack.c.h.b16 %v975
    %v1338 = vunpack.c.l.b16 %v976
    %v1339 = vunpack.c.h.b16 %v976
    %v1340 = vunpack.c.l.b16 %v977
    %v1341 = vunpack.c.h.b16 %v977
    %v1342 = vpack.c.b16 %v1328, %v1326
    %v1343 = vpack.c.b16 %v1329, %v1327
    %v1344 = vpack.c.b16 %v1332, %v1330
    %v1345 = vpack.c.b16 %v1333, %v1331
    %v1346 = vpack.c.b16 %v1336, %v1334
    %v1347 = vpack.c.b16 %v1337, %v1335
    %v1348 = vpack.c.b16 %v1340, %v1338
    %v1349 = vpack.c.b16 %v1341, %v1339
    %v1359 = vsel %vm1009, %v1118, 0
    %1361 = vmatprep.subr.bf16.mxu0 %v1343
    %1362 = vmatpush1.bf16.msra.mxu0 %v1342
    %1363 = vmatprep.subr.bf16.mxu0 %v1345
    %1364 = vmatpush1.bf16.msra.mxu0 %v1344
    %1365 = vmatprep.subr.bf16.mxu0 %v1347
    %1366 = vmatpush1.bf16.msra.mxu0 %v1346
    %1367 = vmatprep.subr.bf16.mxu0 %v1349
    %1368 = vmatpush1.bf16.msra.mxu0 %v1348
    %1369 = vmatprep.subr.bf16.mxu0 0
    %1370 = vmatpush1.bf16.msra.mxu0 0
    %1371 = vmatprep.subr.bf16.mxu0 0
    %1372 = vmatpush1.bf16.msra.mxu0 0
    %1373 = vmatprep.subr.bf16.mxu0 0
    %1374 = vmatpush1.bf16.msra.mxu0 0
    %1375 = vmatprep.subr.bf16.mxu0 0
    %1376 = vmatpush1.bf16.msra.mxu0 0
    %1377 = vmatprep.subr.bf16.mxu0 0
    %1378 = vmatpush1.bf16.msra.mxu0 0
    %1379 = vmatprep.subr.bf16.mxu0 0
    %1380 = vmatpush1.bf16.msra.mxu0 0
    %1381 = vmatprep.subr.bf16.mxu0 0
    %1382 = vmatpush1.bf16.msra.mxu0 0
    %1383 = vmatprep.subr.bf16.mxu0 0
    %1384 = vmatpush1.bf16.msra.mxu0 0
    %1385 = vmatprep.subr.bf16.mxu0 0
    %1386 = vmatpush1.bf16.msra.mxu0 0
    %1387 = vmatprep.subr.bf16.mxu0 0
    %1388 = vmatpush1.bf16.msra.mxu0 0
    %1389 = vmatprep.subr.bf16.mxu0 0
    %1390 = vmatpush1.bf16.msra.mxu0 0
    %1391 = vmatprep.subr.bf16.mxu0 0
    %1392 = vmatpush1.bf16.msra.mxu0 0
    %1393 = vmatprep.mubr.bf16.mxu0 0
    %1394 = vmatmul.mubr.bf16.gmra.mrb[0].mxu0 %v1359
    %v1395 = vpop.f32.mrb[0].mxu0
    %v1396 = vadd.f32 %v1312, %v1395
    %v1397 = vpop.f32.mrb[0].mxu0
    %v1398 = vadd.f32 %v1314, %v1397
    %v1399 = vpop.f32.mrb[0].mxu0
    %v1400 = vpop.f32.mrb[0].mxu0
    %1401 = vdwg.mxu0
    %v1402 = vpack.c.bf16 %v967, %v967
    %v1403 = vpack.c.bf16 %v917, %v917
    %v1405 = vsel %vm1009, %v1402, 0
    %v1408 = vsel %vm1009, %v1403, 0
    %1410 = vmatprep.subr.bf16.mxu0 0
    %1411 = vmatpush1.bf16.xpose.msra.mxu0 %v1408
    %1412 = vmatprep.subr.bf16.mxu0 0
    %1413 = vmatpush1.bf16.xpose.msra.mxu0 0
    %1414 = vmatprep.subr.bf16.mxu0 0
    %1415 = vmatpush1.bf16.xpose.msra.mxu0 0
    %1416 = vmatprep.subr.bf16.mxu0 0
    %1417 = vmatpush1.bf16.xpose.msra.mxu0 0
    %1418 = vmatprep.subr.bf16.mxu0 0
    %1419 = vmatpush1.bf16.xpose.msra.mxu0 0
    %1420 = vmatprep.subr.bf16.mxu0 0
    %1421 = vmatpush1.bf16.xpose.msra.mxu0 0
    %1422 = vmatprep.subr.bf16.mxu0 0
    %1423 = vmatpush1.bf16.xpose.msra.mxu0 0
    %1424 = vmatprep.subr.bf16.mxu0 0
    %1425 = vmatpush1.bf16.xpose.msra.mxu0 0
    %1426 = vmatprep.subr.bf16.mxu0 0
    %1427 = vmatpush1.bf16.xpose.msra.mxu0 0
    %1428 = vmatprep.subr.bf16.mxu0 0
    %1429 = vmatpush1.bf16.xpose.msra.mxu0 0
    %1430 = vmatprep.subr.bf16.mxu0 0
    %1431 = vmatpush1.bf16.xpose.msra.mxu0 0
    %1432 = vmatprep.subr.bf16.mxu0 0
    %1433 = vmatpush1.bf16.xpose.msra.mxu0 0
    %1434 = vmatprep.subr.bf16.mxu0 0
    %1435 = vmatpush1.bf16.xpose.msra.mxu0 0
    %1436 = vmatprep.subr.bf16.mxu0 0
    %1437 = vmatpush1.bf16.xpose.msra.mxu0 0
    %1438 = vmatprep.subr.bf16.mxu0 0
    %1439 = vmatpush1.bf16.xpose.msra.mxu0 0
    %1440 = vmatprep.subr.bf16.mxu0 0
    %1441 = vmatpush1.bf16.xpose.msra.mxu0 0
    %1442 = vmatprep.mubr.bf16.mxu0 0
    %1443 = vmatmul.mubr.bf16.gmra.mrb[0].mxu0 %v1405
    %v1444 = vpop.f32.mrb[0].mxu0
    %v1445 = vadd.f32 0.0, %v1444
    %v1446 = vpop.f32.mrb[0].mxu0
    %v1447 = vpop.f32.mrb[0].mxu0
    %v1448 = vpop.f32.mrb[0].mxu0
    %1449 = vdwg.mxu0
    %v1450 = vsel %vm1006, %v1445, -1000000.0
    %v1451 = vsel %vm1057, %v1450, -inf
    %1452 = vmax.xlane.f32.xlu0 %v1451
    %v1453 = vpop.xlane.xlu0 %1452
    %v1454 = vsub.f32 %v1450, %v1453
    %v1455 = vmul.f32 %v1454, 1.442695
    %v1456 = vpow.pop %v1455
    %v1457 = vsel %vm1057, %v1456, 0.0
    %1458 = vadd.xlane.f32.xlu0 %v1457
    %v1459 = vpop.xlane.xlu0 %1458
    %v1460 = vrcp.pop %v1459
    %v1461 = vmul.f32 %v1456, %v1460
    %v1462 = vpack.c.bf16 %v1461, %v1461
    %v1463 = vpack.c.bf16 %v960, %v960
    %v1465 = vsel %vm1057, %v1462, 0
    %v1468 = vsel %vm1074, %v1463, 0
    %1470 = vmatprep.subr.bf16.mxu0 0
    %1471 = vmatpush1.bf16.msra.mxu0 %v1468
    %1472 = vmatprep.subr.bf16.mxu0 0
    %1473 = vmatpush1.bf16.msra.mxu0 0
    %1474 = vmatprep.subr.bf16.mxu0 0
    %1475 = vmatpush1.bf16.msra.mxu0 0
    %1476 = vmatprep.subr.bf16.mxu0 0
    %1477 = vmatpush1.bf16.msra.mxu0 0
    %1478 = vmatprep.subr.bf16.mxu0 0
    %1479 = vmatpush1.bf16.msra.mxu0 0
    %1480 = vmatprep.subr.bf16.mxu0 0
    %1481 = vmatpush1.bf16.msra.mxu0 0
    %1482 = vmatprep.subr.bf16.mxu0 0
    %1483 = vmatpush1.bf16.msra.mxu0 0
    %1484 = vmatprep.subr.bf16.mxu0 0
    %1485 = vmatpush1.bf16.msra.mxu0 0
    %1486 = vmatprep.subr.bf16.mxu0 0
    %1487 = vmatpush1.bf16.msra.mxu0 0
    %1488 = vmatprep.subr.bf16.mxu0 0
    %1489 = vmatpush1.bf16.msra.mxu0 0
    %1490 = vmatprep.subr.bf16.mxu0 0
    %1491 = vmatpush1.bf16.msra.mxu0 0
    %1492 = vmatprep.subr.bf16.mxu0 0
    %1493 = vmatpush1.bf16.msra.mxu0 0
    %1494 = vmatprep.subr.bf16.mxu0 0
    %1495 = vmatpush1.bf16.msra.mxu0 0
    %1496 = vmatprep.subr.bf16.mxu0 0
    %1497 = vmatpush1.bf16.msra.mxu0 0
    %1498 = vmatprep.subr.bf16.mxu0 0
    %1499 = vmatpush1.bf16.msra.mxu0 0
    %1500 = vmatprep.subr.bf16.mxu0 0
    %1501 = vmatpush1.bf16.msra.mxu0 0
    %1502 = vmatprep.mubr.bf16.mxu0 0
    %1503 = vmatmul.mubr.bf16.gmra.mrb[0].mxu0 %v1465
    %v1504 = vpop.f32.mrb[0].mxu0
    %v1505 = vadd.f32 0.0, %v1504
    %v1506 = vpop.f32.mrb[0].mxu0
    %v1507 = vpop.f32.mrb[0].mxu0
    %v1508 = vpop.f32.mrb[0].mxu0
    %1509 = vdwg.mxu0
    %v1510 = vpack.c.bf16 %v1505, %v1505
    %v1519 = vunpack.c.l.b16 %v986
    %v1520 = vunpack.c.h.b16 %v986
    %v1521 = vunpack.c.l.b16 %v987
    %v1522 = vunpack.c.h.b16 %v987
    %v1523 = vunpack.c.l.b16 %v988
    %v1524 = vunpack.c.h.b16 %v988
    %v1525 = vunpack.c.l.b16 %v989
    %v1526 = vunpack.c.h.b16 %v989
    %v1527 = vunpack.c.l.b16 %v990
    %v1528 = vunpack.c.h.b16 %v990
    %v1529 = vunpack.c.l.b16 %v991
    %v1530 = vunpack.c.h.b16 %v991
    %v1531 = vunpack.c.l.b16 %v992
    %v1532 = vunpack.c.h.b16 %v992
    %v1533 = vunpack.c.l.b16 %v993
    %v1534 = vunpack.c.h.b16 %v993
    %v1535 = vpack.c.b16 %v1521, %v1519
    %v1536 = vpack.c.b16 %v1522, %v1520
    %v1537 = vpack.c.b16 %v1525, %v1523
    %v1538 = vpack.c.b16 %v1526, %v1524
    %v1539 = vpack.c.b16 %v1529, %v1527
    %v1540 = vpack.c.b16 %v1530, %v1528
    %v1541 = vpack.c.b16 %v1533, %v1531
    %v1542 = vpack.c.b16 %v1534, %v1532
    %v1552 = vsel %vm1009, %v1510, 0
    %1554 = vmatprep.subr.bf16.mxu0 %v1536
    %1555 = vmatpush1.bf16.msra.mxu0 %v1535
    %1556 = vmatprep.subr.bf16.mxu0 %v1538
    %1557 = vmatpush1.bf16.msra.mxu0 %v1537
    %1558 = vmatprep.subr.bf16.mxu0 %v1540
    %1559 = vmatpush1.bf16.msra.mxu0 %v1539
    %1560 = vmatprep.subr.bf16.mxu0 %v1542
    %1561 = vmatpush1.bf16.msra.mxu0 %v1541
    %1562 = vmatprep.subr.bf16.mxu0 0
    %1563 = vmatpush1.bf16.msra.mxu0 0
    %1564 = vmatprep.subr.bf16.mxu0 0
    %1565 = vmatpush1.bf16.msra.mxu0 0
    %1566 = vmatprep.subr.bf16.mxu0 0
    %1567 = vmatpush1.bf16.msra.mxu0 0
    %1568 = vmatprep.subr.bf16.mxu0 0
    %1569 = vmatpush1.bf16.msra.mxu0 0
    %1570 = vmatprep.subr.bf16.mxu0 0
    %1571 = vmatpush1.bf16.msra.mxu0 0
    %1572 = vmatprep.subr.bf16.mxu0 0
    %1573 = vmatpush1.bf16.msra.mxu0 0
    %1574 = vmatprep.subr.bf16.mxu0 0
    %1575 = vmatpush1.bf16.msra.mxu0 0
    %1576 = vmatprep.subr.bf16.mxu0 0
    %1577 = vmatpush1.bf16.msra.mxu0 0
    %1578 = vmatprep.subr.bf16.mxu0 0
    %1579 = vmatpush1.bf16.msra.mxu0 0
    %1580 = vmatprep.subr.bf16.mxu0 0
    %1581 = vmatpush1.bf16.msra.mxu0 0
    %1582 = vmatprep.subr.bf16.mxu0 0
    %1583 = vmatpush1.bf16.msra.mxu0 0
    %1584 = vmatprep.subr.bf16.mxu0 0
    %1585 = vmatpush1.bf16.msra.mxu0 0
    %1586 = vmatprep.mubr.bf16.mxu0 0
    %1587 = vmatmul.mubr.bf16.gmra.mrb[0].mxu0 %v1552
    %v1588 = vpop.f32.mrb[0].mxu0
    %v1589 = vadd.f32 0.0, %v1588
    %v1590 = vpop.f32.mrb[0].mxu0
    %v1591 = vadd.f32 0.0, %v1590
    %v1592 = vpop.f32.mrb[0].mxu0
    %v1593 = vpop.f32.mrb[0].mxu0
    %1594 = vdwg.mxu0
    %v1595 = vadd.f32 %v1396, %v1589
    %v1596 = vadd.f32 %v1398, %v1591
    %1598 = vrot.lane.b32.xlu0 %v1402, 64
    %v1599 = vpop.permute.xlu0 %1598
    %1601 = vrot.lane.b32.xlu0 %v1403, 64
    %v1602 = vpop.permute.xlu0 %1601
    %v1604 = vsel %vm1009, %v1599, 0
    %v1607 = vsel %vm1009, %v1602, 0
    %1609 = vmatprep.subr.bf16.mxu0 0
    %1610 = vmatpush1.bf16.xpose.msra.mxu0 %v1607
    %1611 = vmatprep.subr.bf16.mxu0 0
    %1612 = vmatpush1.bf16.xpose.msra.mxu0 0
    %1613 = vmatprep.subr.bf16.mxu0 0
    %1614 = vmatpush1.bf16.xpose.msra.mxu0 0
    %1615 = vmatprep.subr.bf16.mxu0 0
    %1616 = vmatpush1.bf16.xpose.msra.mxu0 0
    %1617 = vmatprep.subr.bf16.mxu0 0
    %1618 = vmatpush1.bf16.xpose.msra.mxu0 0
    %1619 = vmatprep.subr.bf16.mxu0 0
    %1620 = vmatpush1.bf16.xpose.msra.mxu0 0
    %1621 = vmatprep.subr.bf16.mxu0 0
    %1622 = vmatpush1.bf16.xpose.msra.mxu0 0
    %1623 = vmatprep.subr.bf16.mxu0 0
    %1624 = vmatpush1.bf16.xpose.msra.mxu0 0
    %1625 = vmatprep.subr.bf16.mxu0 0
    %1626 = vmatpush1.bf16.xpose.msra.mxu0 0
    %1627 = vmatprep.subr.bf16.mxu0 0
    %1628 = vmatpush1.bf16.xpose.msra.mxu0 0
    %1629 = vmatprep.subr.bf16.mxu0 0
    %1630 = vmatpush1.bf16.xpose.msra.mxu0 0
    %1631 = vmatprep.subr.bf16.mxu0 0
    %1632 = vmatpush1.bf16.xpose.msra.mxu0 0
    %1633 = vmatprep.subr.bf16.mxu0 0
    %1634 = vmatpush1.bf16.xpose.msra.mxu0 0
    %1635 = vmatprep.subr.bf16.mxu0 0
    %1636 = vmatpush1.bf16.xpose.msra.mxu0 0
    %1637 = vmatprep.subr.bf16.mxu0 0
    %1638 = vmatpush1.bf16.xpose.msra.mxu0 0
    %1639 = vmatprep.subr.bf16.mxu0 0
    %1640 = vmatpush1.bf16.xpose.msra.mxu0 0
    %1641 = vmatprep.mubr.bf16.mxu0 0
    %1642 = vmatmul.mubr.bf16.gmra.mrb[0].mxu0 %v1604
    %v1643 = vpop.f32.mrb[0].mxu0
    %v1644 = vadd.f32 0.0, %v1643
    %v1645 = vpop.f32.mrb[0].mxu0
    %v1646 = vpop.f32.mrb[0].mxu0
    %v1647 = vpop.f32.mrb[0].mxu0
    %1648 = vdwg.mxu0
    %v1649 = vsel %vm1006, %v1644, -1000000.0
    %v1650 = vsel %vm1057, %v1649, -inf
    %1651 = vmax.xlane.f32.xlu0 %v1650
    %v1652 = vpop.xlane.xlu0 %1651
    %v1653 = vsub.f32 %v1649, %v1652
    %v1654 = vmul.f32 %v1653, 1.442695
    %v1655 = vpow.pop %v1654
    %v1656 = vsel %vm1057, %v1655, 0.0
    %1657 = vadd.xlane.f32.xlu0 %v1656
    %v1658 = vpop.xlane.xlu0 %1657
    %v1659 = vrcp.pop %v1658
    %v1660 = vmul.f32 %v1655, %v1659
    %v1661 = vpack.c.bf16 %v1660, %v1660
    %1663 = vrot.lane.b32.xlu0 %v1463, 64
    %v1664 = vpop.permute.xlu0 %1663
    %v1666 = vsel %vm1057, %v1661, 0
    %v1669 = vsel %vm1074, %v1664, 0
    %1671 = vmatprep.subr.bf16.mxu0 0
    %1672 = vmatpush1.bf16.msra.mxu0 %v1669
    %1673 = vmatprep.subr.bf16.mxu0 0
    %1674 = vmatpush1.bf16.msra.mxu0 0
    %1675 = vmatprep.subr.bf16.mxu0 0
    %1676 = vmatpush1.bf16.msra.mxu0 0
    %1677 = vmatprep.subr.bf16.mxu0 0
    %1678 = vmatpush1.bf16.msra.mxu0 0
    %1679 = vmatprep.subr.bf16.mxu0 0
    %1680 = vmatpush1.bf16.msra.mxu0 0
    %1681 = vmatprep.subr.bf16.mxu0 0
    %1682 = vmatpush1.bf16.msra.mxu0 0
    %1683 = vmatprep.subr.bf16.mxu0 0
    %1684 = vmatpush1.bf16.msra.mxu0 0
    %1685 = vmatprep.subr.bf16.mxu0 0
    %1686 = vmatpush1.bf16.msra.mxu0 0
    %1687 = vmatprep.subr.bf16.mxu0 0
    %1688 = vmatpush1.bf16.msra.mxu0 0
    %1689 = vmatprep.subr.bf16.mxu0 0
    %1690 = vmatpush1.bf16.msra.mxu0 0
    %1691 = vmatprep.subr.bf16.mxu0 0
    %1692 = vmatpush1.bf16.msra.mxu0 0
    %1693 = vmatprep.subr.bf16.mxu0 0
    %1694 = vmatpush1.bf16.msra.mxu0 0
    %1695 = vmatprep.subr.bf16.mxu0 0
    %1696 = vmatpush1.bf16.msra.mxu0 0
    %1697 = vmatprep.subr.bf16.mxu0 0
    %1698 = vmatpush1.bf16.msra.mxu0 0
    %1699 = vmatprep.subr.bf16.mxu0 0
    %1700 = vmatpush1.bf16.msra.mxu0 0
    %1701 = vmatprep.subr.bf16.mxu0 0
    %1702 = vmatpush1.bf16.msra.mxu0 0
    %1703 = vmatprep.mubr.bf16.mxu0 0
    %1704 = vmatmul.mubr.bf16.gmra.mrb[0].mxu0 %v1666
    %v1705 = vpop.f32.mrb[0].mxu0
    %v1706 = vadd.f32 0.0, %v1705
    %v1707 = vpop.f32.mrb[0].mxu0
    %v1708 = vpop.f32.mrb[0].mxu0
    %v1709 = vpop.f32.mrb[0].mxu0
    %1710 = vdwg.mxu0
    %v1711 = vpack.c.bf16 %v1706, %v1706
    %v1720 = vunpack.c.l.b16 %v994
    %v1721 = vunpack.c.h.b16 %v994
    %v1722 = vunpack.c.l.b16 %v995
    %v1723 = vunpack.c.h.b16 %v995
    %v1724 = vunpack.c.l.b16 %v996
    %v1725 = vunpack.c.h.b16 %v996
    %v1726 = vunpack.c.l.b16 %v997
    %v1727 = vunpack.c.h.b16 %v997
    %v1728 = vunpack.c.l.b16 %v998
    %v1729 = vunpack.c.h.b16 %v998
    %v1730 = vunpack.c.l.b16 %v999
    %v1731 = vunpack.c.h.b16 %v999
    %v1732 = vunpack.c.l.b16 %v1000
    %v1733 = vunpack.c.h.b16 %v1000
    %v1734 = vunpack.c.l.b16 %v1001
    %v1735 = vunpack.c.h.b16 %v1001
    %v1736 = vpack.c.b16 %v1722, %v1720
    %v1737 = vpack.c.b16 %v1723, %v1721
    %v1738 = vpack.c.b16 %v1726, %v1724
    %v1739 = vpack.c.b16 %v1727, %v1725
    %v1740 = vpack.c.b16 %v1730, %v1728
    %v1741 = vpack.c.b16 %v1731, %v1729
    %v1742 = vpack.c.b16 %v1734, %v1732
    %v1743 = vpack.c.b16 %v1735, %v1733
    %v1753 = vsel %vm1009, %v1711, 0
    %1755 = vmatprep.subr.bf16.mxu0 %v1737
    %1756 = vmatpush1.bf16.msra.mxu0 %v1736
    %1757 = vmatprep.subr.bf16.mxu0 %v1739
    %1758 = vmatpush1.bf16.msra.mxu0 %v1738
    %1759 = vmatprep.subr.bf16.mxu0 %v1741
    %1760 = vmatpush1.bf16.msra.mxu0 %v1740
    %1761 = vmatprep.subr.bf16.mxu0 %v1743
    %1762 = vmatpush1.bf16.msra.mxu0 %v1742
    %1763 = vmatprep.subr.bf16.mxu0 0
    %1764 = vmatpush1.bf16.msra.mxu0 0
    %1765 = vmatprep.subr.bf16.mxu0 0
    %1766 = vmatpush1.bf16.msra.mxu0 0
    %1767 = vmatprep.subr.bf16.mxu0 0
    %1768 = vmatpush1.bf16.msra.mxu0 0
    %1769 = vmatprep.subr.bf16.mxu0 0
    %1770 = vmatpush1.bf16.msra.mxu0 0
    %1771 = vmatprep.subr.bf16.mxu0 0
    %1772 = vmatpush1.bf16.msra.mxu0 0
    %1773 = vmatprep.subr.bf16.mxu0 0
    %1774 = vmatpush1.bf16.msra.mxu0 0
    %1775 = vmatprep.subr.bf16.mxu0 0
    %1776 = vmatpush1.bf16.msra.mxu0 0
    %1777 = vmatprep.subr.bf16.mxu0 0
    %1778 = vmatpush1.bf16.msra.mxu0 0
    %1779 = vmatprep.subr.bf16.mxu0 0
    %1780 = vmatpush1.bf16.msra.mxu0 0
    %1781 = vmatprep.subr.bf16.mxu0 0
    %1782 = vmatpush1.bf16.msra.mxu0 0
    %1783 = vmatprep.subr.bf16.mxu0 0
    %1784 = vmatpush1.bf16.msra.mxu0 0
    %1785 = vmatprep.subr.bf16.mxu0 0
    %1786 = vmatpush1.bf16.msra.mxu0 0
    %1787 = vmatprep.mubr.bf16.mxu0 0
    %1788 = vmatmul.mubr.bf16.gmra.mrb[0].mxu0 %v1753
    %v1789 = vpop.f32.mrb[0].mxu0
    %v1790 = vadd.f32 0.0, %v1789
    %v1791 = vpop.f32.mrb[0].mxu0
    %v1792 = vadd.f32 0.0, %v1791
    %v1793 = vpop.f32.mrb[0].mxu0
    %v1794 = vpop.f32.mrb[0].mxu0
    %1795 = vdwg.mxu0
    %v1796 = vadd.f32 %v1595, %v1790
    %v1797 = vadd.f32 %v1596, %v1792
    %1798 = vst [vmem:[#allocation2] sm:$0xff] %v1796
    %1799 = vst [vmem:[#allocation2 + $0x8] sm:$0xff] %v1797
    %s1800 = sld [smem:[#allocation3 + $0x1]]
    %v1801 = vstv %s1800
    %vm1802 = vcmp.lt.s32.totalorder %v1003, %v1801
    %v1803 = vpack.c.bf16 %v968, %v968
    %v1804 = vpack.c.bf16 %v919, %v919
    %v1806 = vsel %vm1009, %v1803, 0
    %v1809 = vsel %vm1009, %v1804, 0
    %1811 = vmatprep.subr.bf16.mxu0 0
    %1812 = vmatpush1.bf16.xpose.msra.mxu0 %v1809
    %1813 = vmatprep.subr.bf16.mxu0 0
    %1814 = vmatpush1.bf16.xpose.msra.mxu0 0
    %1815 = vmatprep.subr.bf16.mxu0 0
    %1816 = vmatpush1.bf16.xpose.msra.mxu0 0
    %1817 = vmatprep.subr.bf16.mxu0 0
    %1818 = vmatpush1.bf16.xpose.msra.mxu0 0
    %1819 = vmatprep.subr.bf16.mxu0 0
    %1820 = vmatpush1.bf16.xpose.msra.mxu0 0
    %1821 = vmatprep.subr.bf16.mxu0 0
    %1822 = vmatpush1.bf16.xpose.msra.mxu0 0
    %1823 = vmatprep.subr.bf16.mxu0 0
    %1824 = vmatpush1.bf16.xpose.msra.mxu0 0
    %1825 = vmatprep.subr.bf16.mxu0 0
    %1826 = vmatpush1.bf16.xpose.msra.mxu0 0
    %1827 = vmatprep.subr.bf16.mxu0 0
    %1828 = vmatpush1.bf16.xpose.msra.mxu0 0
    %1829 = vmatprep.subr.bf16.mxu0 0
    %1830 = vmatpush1.bf16.xpose.msra.mxu0 0
    %1831 = vmatprep.subr.bf16.mxu0 0
    %1832 = vmatpush1.bf16.xpose.msra.mxu0 0
    %1833 = vmatprep.subr.bf16.mxu0 0
    %1834 = vmatpush1.bf16.xpose.msra.mxu0 0
    %1835 = vmatprep.subr.bf16.mxu0 0
    %1836 = vmatpush1.bf16.xpose.msra.mxu0 0
    %1837 = vmatprep.subr.bf16.mxu0 0
    %1838 = vmatpush1.bf16.xpose.msra.mxu0 0
    %1839 = vmatprep.subr.bf16.mxu0 0
    %1840 = vmatpush1.bf16.xpose.msra.mxu0 0
    %1841 = vmatprep.subr.bf16.mxu0 0
    %1842 = vmatpush1.bf16.xpose.msra.mxu0 0
    %1843 = vmatprep.mubr.bf16.mxu0 0
    %1844 = vmatmul.mubr.bf16.gmra.mrb[0].mxu0 %v1806
    %v1845 = vpop.f32.mrb[0].mxu0
    %v1846 = vadd.f32 0.0, %v1845
    %v1847 = vpop.f32.mrb[0].mxu0
    %v1848 = vpop.f32.mrb[0].mxu0
    %v1849 = vpop.f32.mrb[0].mxu0
    %1850 = vdwg.mxu0
    %v1851 = vsel %vm1802, %v1846, -1000000.0
    %v1852 = vsel %vm1057, %v1851, -inf
    %1853 = vmax.xlane.f32.xlu0 %v1852
    %v1854 = vpop.xlane.xlu0 %1853
    %v1855 = vsub.f32 %v1851, %v1854
    %v1856 = vmul.f32 %v1855, 1.442695
    %v1857 = vpow.pop %v1856
    %v1858 = vsel %vm1057, %v1857, 0.0
    %1859 = vadd.xlane.f32.xlu0 %v1858
    %v1860 = vpop.xlane.xlu0 %1859
    %v1861 = vrcp.pop %v1860
    %v1862 = vmul.f32 %v1857, %v1861
    %v1863 = vpack.c.bf16 %v1862, %v1862
    %v1864 = vpack.c.bf16 %v962, %v962
    %v1866 = vsel %vm1057, %v1863, 0
    %v1869 = vsel %vm1074, %v1864, 0
    %1871 = vmatprep.subr.bf16.mxu0 0
    %1872 = vmatpush1.bf16.msra.mxu0 %v1869
    %1873 = vmatprep.subr.bf16.mxu0 0
    %1874 = vmatpush1.bf16.msra.mxu0 0
    %1875 = vmatprep.subr.bf16.mxu0 0
    %1876 = vmatpush1.bf16.msra.mxu0 0
    %1877 = vmatprep.subr.bf16.mxu0 0
    %1878 = vmatpush1.bf16.msra.mxu0 0
    %1879 = vmatprep.subr.bf16.mxu0 0
    %1880 = vmatpush1.bf16.msra.mxu0 0
    %1881 = vmatprep.subr.bf16.mxu0 0
    %1882 = vmatpush1.bf16.msra.mxu0 0
    %1883 = vmatprep.subr.bf16.mxu0 0
    %1884 = vmatpush1.bf16.msra.mxu0 0
    %1885 = vmatprep.subr.bf16.mxu0 0
    %1886 = vmatpush1.bf16.msra.mxu0 0
    %1887 = vmatprep.subr.bf16.mxu0 0
    %1888 = vmatpush1.bf16.msra.mxu0 0
    %1889 = vmatprep.subr.bf16.mxu0 0
    %1890 = vmatpush1.bf16.msra.mxu0 0
    %1891 = vmatprep.subr.bf16.mxu0 0
    %1892 = vmatpush1.bf16.msra.mxu0 0
    %1893 = vmatprep.subr.bf16.mxu0 0
    %1894 = vmatpush1.bf16.msra.mxu0 0
    %1895 = vmatprep.subr.bf16.mxu0 0
    %1896 = vmatpush1.bf16.msra.mxu0 0
    %1897 = vmatprep.subr.bf16.mxu0 0
    %1898 = vmatpush1.bf16.msra.mxu0 0
    %1899 = vmatprep.subr.bf16.mxu0 0
    %1900 = vmatpush1.bf16.msra.mxu0 0
    %1901 = vmatprep.subr.bf16.mxu0 0
    %1902 = vmatpush1.bf16.msra.mxu0 0
    %1903 = vmatprep.mubr.bf16.mxu0 0
    %1904 = vmatmul.mubr.bf16.gmra.mrb[0].mxu0 %v1866
    %v1905 = vpop.f32.mrb[0].mxu0
    %v1906 = vadd.f32 0.0, %v1905
    %v1907 = vpop.f32.mrb[0].mxu0
    %v1908 = vpop.f32.mrb[0].mxu0
    %v1909 = vpop.f32.mrb[0].mxu0
    %1910 = vdwg.mxu0
    %v1911 = vpack.c.bf16 %v1906, %v1906
    %1913 = vrot.lane.b32.xlu0 %v1803, 64
    %v1914 = vpop.permute.xlu0 %1913
    %1916 = vrot.lane.b32.xlu0 %v1804, 64
    %v1917 = vpop.permute.xlu0 %1916
    %v1919 = vsel %vm1009, %v1914, 0
    %v1922 = vsel %vm1009, %v1917, 0
    %1924 = vmatprep.subr.bf16.mxu0 0
    %1925 = vmatpush1.bf16.xpose.msra.mxu0 %v1922
    %1926 = vmatprep.subr.bf16.mxu0 0
    %1927 = vmatpush1.bf16.xpose.msra.mxu0 0
    %1928 = vmatprep.subr.bf16.mxu0 0
    %1929 = vmatpush1.bf16.xpose.msra.mxu0 0
    %1930 = vmatprep.subr.bf16.mxu0 0
    %1931 = vmatpush1.bf16.xpose.msra.mxu0 0
    %1932 = vmatprep.subr.bf16.mxu0 0
    %1933 = vmatpush1.bf16.xpose.msra.mxu0 0
    %1934 = vmatprep.subr.bf16.mxu0 0
    %1935 = vmatpush1.bf16.xpose.msra.mxu0 0
    %1936 = vmatprep.subr.bf16.mxu0 0
    %1937 = vmatpush1.bf16.xpose.msra.mxu0 0
    %1938 = vmatprep.subr.bf16.mxu0 0
    %1939 = vmatpush1.bf16.xpose.msra.mxu0 0
    %1940 = vmatprep.subr.bf16.mxu0 0
    %1941 = vmatpush1.bf16.xpose.msra.mxu0 0
    %1942 = vmatprep.subr.bf16.mxu0 0
    %1943 = vmatpush1.bf16.xpose.msra.mxu0 0
    %1944 = vmatprep.subr.bf16.mxu0 0
    %1945 = vmatpush1.bf16.xpose.msra.mxu0 0
    %1946 = vmatprep.subr.bf16.mxu0 0
    %1947 = vmatpush1.bf16.xpose.msra.mxu0 0
    %1948 = vmatprep.subr.bf16.mxu0 0
    %1949 = vmatpush1.bf16.xpose.msra.mxu0 0
    %1950 = vmatprep.subr.bf16.mxu0 0
    %1951 = vmatpush1.bf16.xpose.msra.mxu0 0
    %1952 = vmatprep.subr.bf16.mxu0 0
    %1953 = vmatpush1.bf16.xpose.msra.mxu0 0
    %1954 = vmatprep.subr.bf16.mxu0 0
    %1955 = vmatpush1.bf16.xpose.msra.mxu0 0
    %1956 = vmatprep.mubr.bf16.mxu0 0
    %1957 = vmatmul.mubr.bf16.gmra.mrb[0].mxu0 %v1919
    %v1958 = vpop.f32.mrb[0].mxu0
    %v1959 = vadd.f32 0.0, %v1958
    %v1960 = vpop.f32.mrb[0].mxu0
    %v1961 = vpop.f32.mrb[0].mxu0
    %v1962 = vpop.f32.mrb[0].mxu0
    %1963 = vdwg.mxu0
    %v1964 = vsel %vm1802, %v1959, -1000000.0
    %v1965 = vsel %vm1057, %v1964, -inf
    %1966 = vmax.xlane.f32.xlu0 %v1965
    %v1967 = vpop.xlane.xlu0 %1966
    %v1968 = vsub.f32 %v1964, %v1967
    %v1969 = vmul.f32 %v1968, 1.442695
    %v1970 = vpow.pop %v1969
    %v1971 = vsel %vm1057, %v1970, 0.0
    %1972 = vadd.xlane.f32.xlu0 %v1971
    %v1973 = vpop.xlane.xlu0 %1972
    %v1974 = vrcp.pop %v1973
    %v1975 = vmul.f32 %v1970, %v1974
    %v1976 = vpack.c.bf16 %v1975, %v1975
    %1978 = vrot.lane.b32.xlu0 %v1864, 64
    %v1979 = vpop.permute.xlu0 %1978
    %v1981 = vsel %vm1057, %v1976, 0
    %v1984 = vsel %vm1074, %v1979, 0
    %1986 = vmatprep.subr.bf16.mxu0 0
    %1987 = vmatpush1.bf16.msra.mxu0 %v1984
    %1988 = vmatprep.subr.bf16.mxu0 0
    %1989 = vmatpush1.bf16.msra.mxu0 0
    %1990 = vmatprep.subr.bf16.mxu0 0
    %1991 = vmatpush1.bf16.msra.mxu0 0
    %1992 = vmatprep.subr.bf16.mxu0 0
    %1993 = vmatpush1.bf16.msra.mxu0 0
    %1994 = vmatprep.subr.bf16.mxu0 0
    %1995 = vmatpush1.bf16.msra.mxu0 0
    %1996 = vmatprep.subr.bf16.mxu0 0
    %1997 = vmatpush1.bf16.msra.mxu0 0
    %1998 = vmatprep.subr.bf16.mxu0 0
    %1999 = vmatpush1.bf16.msra.mxu0 0
    %2000 = vmatprep.subr.bf16.mxu0 0
    %2001 = vmatpush1.bf16.msra.mxu0 0
    %2002 = vmatprep.subr.bf16.mxu0 0
    %2003 = vmatpush1.bf16.msra.mxu0 0
    %2004 = vmatprep.subr.bf16.mxu0 0
    %2005 = vmatpush1.bf16.msra.mxu0 0
    %2006 = vmatprep.subr.bf16.mxu0 0
    %2007 = vmatpush1.bf16.msra.mxu0 0
    %2008 = vmatprep.subr.bf16.mxu0 0
    %2009 = vmatpush1.bf16.msra.mxu0 0
    %2010 = vmatprep.subr.bf16.mxu0 0
    %2011 = vmatpush1.bf16.msra.mxu0 0
    %2012 = vmatprep.subr.bf16.mxu0 0
    %2013 = vmatpush1.bf16.msra.mxu0 0
    %2014 = vmatprep.subr.bf16.mxu0 0
    %2015 = vmatpush1.bf16.msra.mxu0 0
    %2016 = vmatprep.subr.bf16.mxu0 0
    %2017 = vmatpush1.bf16.msra.mxu0 0
    %2018 = vmatprep.mubr.bf16.mxu0 0
    %2019 = vmatmul.mubr.bf16.gmra.mrb[0].mxu0 %v1981
    %v2020 = vpop.f32.mrb[0].mxu0
    %v2021 = vadd.f32 0.0, %v2020
    %v2022 = vpop.f32.mrb[0].mxu0
    %v2023 = vpop.f32.mrb[0].mxu0
    %v2024 = vpop.f32.mrb[0].mxu0
    %2025 = vdwg.mxu0
    %v2026 = vpack.c.bf16 %v2021, %v2021
    %v2028 = vsel %vm1009, %v2026, 0
    %2030 = vmatprep.subr.bf16.mxu0 %v1259
    %2031 = vmatpush1.bf16.msra.mxu0 %v1258
    %2032 = vmatprep.subr.bf16.mxu0 %v1261
    %2033 = vmatpush1.bf16.msra.mxu0 %v1260
    %2034 = vmatprep.subr.bf16.mxu0 %v1263
    %2035 = vmatpush1.bf16.msra.mxu0 %v1262
    %2036 = vmatprep.subr.bf16.mxu0 %v1265
    %2037 = vmatpush1.bf16.msra.mxu0 %v1264
    %2038 = vmatprep.subr.bf16.mxu0 0
    %2039 = vmatpush1.bf16.msra.mxu0 0
    %2040 = vmatprep.subr.bf16.mxu0 0
    %2041 = vmatpush1.bf16.msra.mxu0 0
    %2042 = vmatprep.subr.bf16.mxu0 0
    %2043 = vmatpush1.bf16.msra.mxu0 0
    %2044 = vmatprep.subr.bf16.mxu0 0
    %2045 = vmatpush1.bf16.msra.mxu0 0
    %2046 = vmatprep.subr.bf16.mxu0 0
    %2047 = vmatpush1.bf16.msra.mxu0 0
    %2048 = vmatprep.subr.bf16.mxu0 0
    %2049 = vmatpush1.bf16.msra.mxu0 0
    %2050 = vmatprep.subr.bf16.mxu0 0
    %2051 = vmatpush1.bf16.msra.mxu0 0
    %2052 = vmatprep.subr.bf16.mxu0 0
    %2053 = vmatpush1.bf16.msra.mxu0 0
    %2054 = vmatprep.subr.bf16.mxu0 0
    %2055 = vmatpush1.bf16.msra.mxu0 0
    %2056 = vmatprep.subr.bf16.mxu0 0
    %2057 = vmatpush1.bf16.msra.mxu0 0
    %2058 = vmatprep.subr.bf16.mxu0 0
    %2059 = vmatpush1.bf16.msra.mxu0 0
    %2060 = vmatprep.subr.bf16.mxu0 0
    %2061 = vmatpush1.bf16.msra.mxu0 0
    %2062 = vmatprep.mubr.bf16.mxu0 0
    %2063 = vmatmul.mubr.bf16.gmra.mrb[0].mxu0 %v2028
    %v2064 = vpop.f32.mrb[0].mxu0
    %v2065 = vadd.f32 0.0, %v2064
    %v2066 = vpop.f32.mrb[0].mxu0
    %v2067 = vadd.f32 0.0, %v2066
    %v2068 = vpop.f32.mrb[0].mxu0
    %v2069 = vpop.f32.mrb[0].mxu0
    %2070 = vdwg.mxu0
    %v2072 = vsel %vm1009, %v1911, 0
    %2074 = vmatprep.subr.bf16.mxu0 %v1343
    %2075 = vmatpush1.bf16.msra.mxu0 %v1342
    %2076 = vmatprep.subr.bf16.mxu0 %v1345
    %2077 = vmatpush1.bf16.msra.mxu0 %v1344
    %2078 = vmatprep.subr.bf16.mxu0 %v1347
    %2079 = vmatpush1.bf16.msra.mxu0 %v1346
    %2080 = vmatprep.subr.bf16.mxu0 %v1349
    %2081 = vmatpush1.bf16.msra.mxu0 %v1348
    %2082 = vmatprep.subr.bf16.mxu0 0
    %2083 = vmatpush1.bf16.msra.mxu0 0
    %2084 = vmatprep.subr.bf16.mxu0 0
    %2085 = vmatpush1.bf16.msra.mxu0 0
    %2086 = vmatprep.subr.bf16.mxu0 0
    %2087 = vmatpush1.bf16.msra.mxu0 0
    %2088 = vmatprep.subr.bf16.mxu0 0
    %2089 = vmatpush1.bf16.msra.mxu0 0
    %2090 = vmatprep.subr.bf16.mxu0 0
    %2091 = vmatpush1.bf16.msra.mxu0 0
    %2092 = vmatprep.subr.bf16.mxu0 0
    %2093 = vmatpush1.bf16.msra.mxu0 0
    %2094 = vmatprep.subr.bf16.mxu0 0
    %2095 = vmatpush1.bf16.msra.mxu0 0
    %2096 = vmatprep.subr.bf16.mxu0 0
    %2097 = vmatpush1.bf16.msra.mxu0 0
    %2098 = vmatprep.subr.bf16.mxu0 0
    %2099 = vmatpush1.bf16.msra.mxu0 0
    %2100 = vmatprep.subr.bf16.mxu0 0
    %2101 = vmatpush1.bf16.msra.mxu0 0
    %2102 = vmatprep.subr.bf16.mxu0 0
    %2103 = vmatpush1.bf16.msra.mxu0 0
    %2104 = vmatprep.subr.bf16.mxu0 0
    %2105 = vmatpush1.bf16.msra.mxu0 0
    %2106 = vmatprep.mubr.bf16.mxu0 0
    %2107 = vmatmul.mubr.bf16.gmra.mrb[0].mxu0 %v2072
    %v2108 = vpop.f32.mrb[0].mxu0
    %v2109 = vadd.f32 %v2065, %v2108
    %v2110 = vpop.f32.mrb[0].mxu0
    %v2111 = vadd.f32 %v2067, %v2110
    %v2112 = vpop.f32.mrb[0].mxu0
    %v2113 = vpop.f32.mrb[0].mxu0
    %2114 = vdwg.mxu0
    %v2115 = vpack.c.bf16 %v969, %v969
    %v2116 = vpack.c.bf16 %v921, %v921
    %v2118 = vsel %vm1009, %v2115, 0
    %v2121 = vsel %vm1009, %v2116, 0
    %2123 = vmatprep.subr.bf16.mxu0 0
    %2124 = vmatpush1.bf16.xpose.msra.mxu0 %v2121
    %2125 = vmatprep.subr.bf16.mxu0 0
    %2126 = vmatpush1.bf16.xpose.msra.mxu0 0
    %2127 = vmatprep.subr.bf16.mxu0 0
    %2128 = vmatpush1.bf16.xpose.msra.mxu0 0
    %2129 = vmatprep.subr.bf16.mxu0 0
    %2130 = vmatpush1.bf16.xpose.msra.mxu0 0
    %2131 = vmatprep.subr.bf16.mxu0 0
    %2132 = vmatpush1.bf16.xpose.msra.mxu0 0
    %2133 = vmatprep.subr.bf16.mxu0 0
    %2134 = vmatpush1.bf16.xpose.msra.mxu0 0
    %2135 = vmatprep.subr.bf16.mxu0 0
    %2136 = vmatpush1.bf16.xpose.msra.mxu0 0
    %2137 = vmatprep.subr.bf16.mxu0 0
    %2138 = vmatpush1.bf16.xpose.msra.mxu0 0
    %2139 = vmatprep.subr.bf16.mxu0 0
    %2140 = vmatpush1.bf16.xpose.msra.mxu0 0
    %2141 = vmatprep.subr.bf16.mxu0 0
    %2142 = vmatpush1.bf16.xpose.msra.mxu0 0
    %2143 = vmatprep.subr.bf16.mxu0 0
    %2144 = vmatpush1.bf16.xpose.msra.mxu0 0
    %2145 = vmatprep.subr.bf16.mxu0 0
    %2146 = vmatpush1.bf16.xpose.msra.mxu0 0
    %2147 = vmatprep.subr.bf16.mxu0 0
    %2148 = vmatpush1.bf16.xpose.msra.mxu0 0
    %2149 = vmatprep.subr.bf16.mxu0 0
    %2150 = vmatpush1.bf16.xpose.msra.mxu0 0
    %2151 = vmatprep.subr.bf16.mxu0 0
    %2152 = vmatpush1.bf16.xpose.msra.mxu0 0
    %2153 = vmatprep.subr.bf16.mxu0 0
    %2154 = vmatpush1.bf16.xpose.msra.mxu0 0
    %2155 = vmatprep.mubr.bf16.mxu0 0
    %2156 = vmatmul.mubr.bf16.gmra.mrb[0].mxu0 %v2118
    %v2157 = vpop.f32.mrb[0].mxu0
    %v2158 = vadd.f32 0.0, %v2157
    %v2159 = vpop.f32.mrb[0].mxu0
    %v2160 = vpop.f32.mrb[0].mxu0
    %v2161 = vpop.f32.mrb[0].mxu0
    %2162 = vdwg.mxu0
    %v2163 = vsel %vm1802, %v2158, -1000000.0
    %v2164 = vsel %vm1057, %v2163, -inf
    %2165 = vmax.xlane.f32.xlu0 %v2164
    %v2166 = vpop.xlane.xlu0 %2165
    %v2167 = vsub.f32 %v2163, %v2166
    %v2168 = vmul.f32 %v2167, 1.442695
    %v2169 = vpow.pop %v2168
    %v2170 = vsel %vm1057, %v2169, 0.0
    %2171 = vadd.xlane.f32.xlu0 %v2170
    %v2172 = vpop.xlane.xlu0 %2171
    %v2173 = vrcp.pop %v2172
    %v2174 = vmul.f32 %v2169, %v2173
    %v2175 = vpack.c.bf16 %v2174, %v2174
    %v2176 = vpack.c.bf16 %v964, %v964
    %v2178 = vsel %vm1057, %v2175, 0
    %v2181 = vsel %vm1074, %v2176, 0
    %2183 = vmatprep.subr.bf16.mxu0 0
    %2184 = vmatpush1.bf16.msra.mxu0 %v2181
    %2185 = vmatprep.subr.bf16.mxu0 0
    %2186 = vmatpush1.bf16.msra.mxu0 0
    %2187 = vmatprep.subr.bf16.mxu0 0
    %2188 = vmatpush1.bf16.msra.mxu0 0
    %2189 = vmatprep.subr.bf16.mxu0 0
    %2190 = vmatpush1.bf16.msra.mxu0 0
    %2191 = vmatprep.subr.bf16.mxu0 0
    %2192 = vmatpush1.bf16.msra.mxu0 0
    %2193 = vmatprep.subr.bf16.mxu0 0
    %2194 = vmatpush1.bf16.msra.mxu0 0
    %2195 = vmatprep.subr.bf16.mxu0 0
    %2196 = vmatpush1.bf16.msra.mxu0 0
    %2197 = vmatprep.subr.bf16.mxu0 0
    %2198 = vmatpush1.bf16.msra.mxu0 0
    %2199 = vmatprep.subr.bf16.mxu0 0
    %2200 = vmatpush1.bf16.msra.mxu0 0
    %2201 = vmatprep.subr.bf16.mxu0 0
    %2202 = vmatpush1.bf16.msra.mxu0 0
    %2203 = vmatprep.subr.bf16.mxu0 0
    %2204 = vmatpush1.bf16.msra.mxu0 0
    %2205 = vmatprep.subr.bf16.mxu0 0
    %2206 = vmatpush1.bf16.msra.mxu0 0
    %2207 = vmatprep.subr.bf16.mxu0 0
    %2208 = vmatpush1.bf16.msra.mxu0 0
    %2209 = vmatprep.subr.bf16.mxu0 0
    %2210 = vmatpush1.bf16.msra.mxu0 0
    %2211 = vmatprep.subr.bf16.mxu0 0
    %2212 = vmatpush1.bf16.msra.mxu0 0
    %2213 = vmatprep.subr.bf16.mxu0 0
    %2214 = vmatpush1.bf16.msra.mxu0 0
    %2215 = vmatprep.mubr.bf16.mxu0 0
    %2216 = vmatmul.mubr.bf16.gmra.mrb[0].mxu0 %v2178
    %v2217 = vpop.f32.mrb[0].mxu0
    %v2218 = vadd.f32 0.0, %v2217
    %v2219 = vpop.f32.mrb[0].mxu0
    %v2220 = vpop.f32.mrb[0].mxu0
    %v2221 = vpop.f32.mrb[0].mxu0
    %2222 = vdwg.mxu0
    %v2223 = vpack.c.bf16 %v2218, %v2218
    %v2225 = vsel %vm1009, %v2223, 0
    %2227 = vmatprep.subr.bf16.mxu0 %v1536
    %2228 = vmatpush1.bf16.msra.mxu0 %v1535
    %2229 = vmatprep.subr.bf16.mxu0 %v1538
    %2230 = vmatpush1.bf16.msra.mxu0 %v1537
    %2231 = vmatprep.subr.bf16.mxu0 %v1540
    %2232 = vmatpush1.bf16.msra.mxu0 %v1539
    %2233 = vmatprep.subr.bf16.mxu0 %v1542
    %2234 = vmatpush1.bf16.msra.mxu0 %v1541
    %2235 = vmatprep.subr.bf16.mxu0 0
    %2236 = vmatpush1.bf16.msra.mxu0 0
    %2237 = vmatprep.subr.bf16.mxu0 0
    %2238 = vmatpush1.bf16.msra.mxu0 0
    %2239 = vmatprep.subr.bf16.mxu0 0
    %2240 = vmatpush1.bf16.msra.mxu0 0
    %2241 = vmatprep.subr.bf16.mxu0 0
    %2242 = vmatpush1.bf16.msra.mxu0 0
    %2243 = vmatprep.subr.bf16.mxu0 0
    %2244 = vmatpush1.bf16.msra.mxu0 0
    %2245 = vmatprep.subr.bf16.mxu0 0
    %2246 = vmatpush1.bf16.msra.mxu0 0
    %2247 = vmatprep.subr.bf16.mxu0 0
    %2248 = vmatpush1.bf16.msra.mxu0 0
    %2249 = vmatprep.subr.bf16.mxu0 0
    %2250 = vmatpush1.bf16.msra.mxu0 0
    %2251 = vmatprep.subr.bf16.mxu0 0
    %2252 = vmatpush1.bf16.msra.mxu0 0
    %2253 = vmatprep.subr.bf16.mxu0 0
    %2254 = vmatpush1.bf16.msra.mxu0 0
    %2255 = vmatprep.subr.bf16.mxu0 0
    %2256 = vmatpush1.bf16.msra.mxu0 0
    %2257 = vmatprep.subr.bf16.mxu0 0
    %2258 = vmatpush1.bf16.msra.mxu0 0
    %2259 = vmatprep.mubr.bf16.mxu0 0
    %2260 = vmatmul.mubr.bf16.gmra.mrb[0].mxu0 %v2225
    %v2261 = vpop.f32.mrb[0].mxu0
    %v2262 = vadd.f32 0.0, %v2261
    %v2263 = vpop.f32.mrb[0].mxu0
    %v2264 = vadd.f32 0.0, %v2263
    %v2265 = vpop.f32.mrb[0].mxu0
    %v2266 = vpop.f32.mrb[0].mxu0
    %2267 = vdwg.mxu0
    %v2268 = vadd.f32 %v2109, %v2262
    %v2269 = vadd.f32 %v2111, %v2264
    %2271 = vrot.lane.b32.xlu0 %v2115, 64
    %v2272 = vpop.permute.xlu0 %2271
    %2274 = vrot.lane.b32.xlu0 %v2116, 64
    %v2275 = vpop.permute.xlu0 %2274
    %v2277 = vsel %vm1009, %v2272, 0
    %v2280 = vsel %vm1009, %v2275, 0
    %2282 = vmatprep.subr.bf16.mxu0 0
    %2283 = vmatpush1.bf16.xpose.msra.mxu0 %v2280
    %2284 = vmatprep.subr.bf16.mxu0 0
    %2285 = vmatpush1.bf16.xpose.msra.mxu0 0
    %2286 = vmatprep.subr.bf16.mxu0 0
    %2287 = vmatpush1.bf16.xpose.msra.mxu0 0
    %2288 = vmatprep.subr.bf16.mxu0 0
    %2289 = vmatpush1.bf16.xpose.msra.mxu0 0
    %2290 = vmatprep.subr.bf16.mxu0 0
    %2291 = vmatpush1.bf16.xpose.msra.mxu0 0
    %2292 = vmatprep.subr.bf16.mxu0 0
    %2293 = vmatpush1.bf16.xpose.msra.mxu0 0
    %2294 = vmatprep.subr.bf16.mxu0 0
    %2295 = vmatpush1.bf16.xpose.msra.mxu0 0
    %2296 = vmatprep.subr.bf16.mxu0 0
    %2297 = vmatpush1.bf16.xpose.msra.mxu0 0
    %2298 = vmatprep.subr.bf16.mxu0 0
    %2299 = vmatpush1.bf16.xpose.msra.mxu0 0
    %2300 = vmatprep.subr.bf16.mxu0 0
    %2301 = vmatpush1.bf16.xpose.msra.mxu0 0
    %2302 = vmatprep.subr.bf16.mxu0 0
    %2303 = vmatpush1.bf16.xpose.msra.mxu0 0
    %2304 = vmatprep.subr.bf16.mxu0 0
    %2305 = vmatpush1.bf16.xpose.msra.mxu0 0
    %2306 = vmatprep.subr.bf16.mxu0 0
    %2307 = vmatpush1.bf16.xpose.msra.mxu0 0
    %2308 = vmatprep.subr.bf16.mxu0 0
    %2309 = vmatpush1.bf16.xpose.msra.mxu0 0
    %2310 = vmatprep.subr.bf16.mxu0 0
    %2311 = vmatpush1.bf16.xpose.msra.mxu0 0
    %2312 = vmatprep.subr.bf16.mxu0 0
    %2313 = vmatpush1.bf16.xpose.msra.mxu0 0
    %2314 = vmatprep.mubr.bf16.mxu0 0
    %2315 = vmatmul.mubr.bf16.gmra.mrb[0].mxu0 %v2277
    %v2316 = vpop.f32.mrb[0].mxu0
    %v2317 = vadd.f32 0.0, %v2316
    %v2318 = vpop.f32.mrb[0].mxu0
    %v2319 = vpop.f32.mrb[0].mxu0
    %v2320 = vpop.f32.mrb[0].mxu0
    %2321 = vdwg.mxu0
    %v2322 = vsel %vm1802, %v2317, -1000000.0
    %v2323 = vsel %vm1057, %v2322, -inf
    %2324 = vmax.xlane.f32.xlu0 %v2323
    %v2325 = vpop.xlane.xlu0 %2324
    %v2326 = vsub.f32 %v2322, %v2325
    %v2327 = vmul.f32 %v2326, 1.442695
    %v2328 = vpow.pop %v2327
    %v2329 = vsel %vm1057, %v2328, 0.0
    %2330 = vadd.xlane.f32.xlu0 %v2329
    %v2331 = vpop.xlane.xlu0 %2330
    %v2332 = vrcp.pop %v2331
    %v2333 = vmul.f32 %v2328, %v2332
    %v2334 = vpack.c.bf16 %v2333, %v2333
    %2336 = vrot.lane.b32.xlu0 %v2176, 64
    %v2337 = vpop.permute.xlu0 %2336
    %v2339 = vsel %vm1057, %v2334, 0
    %v2342 = vsel %vm1074, %v2337, 0
    %2344 = vmatprep.subr.bf16.mxu0 0
    %2345 = vmatpush1.bf16.msra.mxu0 %v2342
    %2346 = vmatprep.subr.bf16.mxu0 0
    %2347 = vmatpush1.bf16.msra.mxu0 0
    %2348 = vmatprep.subr.bf16.mxu0 0
    %2349 = vmatpush1.bf16.msra.mxu0 0
    %2350 = vmatprep.subr.bf16.mxu0 0
    %2351 = vmatpush1.bf16.msra.mxu0 0
    %2352 = vmatprep.subr.bf16.mxu0 0
    %2353 = vmatpush1.bf16.msra.mxu0 0
    %2354 = vmatprep.subr.bf16.mxu0 0
    %2355 = vmatpush1.bf16.msra.mxu0 0
    %2356 = vmatprep.subr.bf16.mxu0 0
    %2357 = vmatpush1.bf16.msra.mxu0 0
    %2358 = vmatprep.subr.bf16.mxu0 0
    %2359 = vmatpush1.bf16.msra.mxu0 0
    %2360 = vmatprep.subr.bf16.mxu0 0
    %2361 = vmatpush1.bf16.msra.mxu0 0
    %2362 = vmatprep.subr.bf16.mxu0 0
    %2363 = vmatpush1.bf16.msra.mxu0 0
    %2364 = vmatprep.subr.bf16.mxu0 0
    %2365 = vmatpush1.bf16.msra.mxu0 0
    %2366 = vmatprep.subr.bf16.mxu0 0
    %2367 = vmatpush1.bf16.msra.mxu0 0
    %2368 = vmatprep.subr.bf16.mxu0 0
    %2369 = vmatpush1.bf16.msra.mxu0 0
    %2370 = vmatprep.subr.bf16.mxu0 0
    %2371 = vmatpush1.bf16.msra.mxu0 0
    %2372 = vmatprep.subr.bf16.mxu0 0
    %2373 = vmatpush1.bf16.msra.mxu0 0
    %2374 = vmatprep.subr.bf16.mxu0 0
    %2375 = vmatpush1.bf16.msra.mxu0 0
    %2376 = vmatprep.mubr.bf16.mxu0 0
    %2377 = vmatmul.mubr.bf16.gmra.mrb[0].mxu0 %v2339
    %v2378 = vpop.f32.mrb[0].mxu0
    %v2379 = vadd.f32 0.0, %v2378
    %v2380 = vpop.f32.mrb[0].mxu0
    %v2381 = vpop.f32.mrb[0].mxu0
    %v2382 = vpop.f32.mrb[0].mxu0
    %2383 = vdwg.mxu0
    %v2384 = vpack.c.bf16 %v2379, %v2379
    %v2386 = vsel %vm1009, %v2384, 0
    %2388 = vmatprep.subr.bf16.mxu0 %v1737
    %2389 = vmatpush1.bf16.msra.mxu0 %v1736
    %2390 = vmatprep.subr.bf16.mxu0 %v1739
    %2391 = vmatpush1.bf16.msra.mxu0 %v1738
    %2392 = vmatprep.subr.bf16.mxu0 %v1741
    %2393 = vmatpush1.bf16.msra.mxu0 %v1740
    %2394 = vmatprep.subr.bf16.mxu0 %v1743
    %2395 = vmatpush1.bf16.msra.mxu0 %v1742
    %2396 = vmatprep.subr.bf16.mxu0 0
    %2397 = vmatpush1.bf16.msra.mxu0 0
    %2398 = vmatprep.subr.bf16.mxu0 0
    %2399 = vmatpush1.bf16.msra.mxu0 0
    %2400 = vmatprep.subr.bf16.mxu0 0
    %2401 = vmatpush1.bf16.msra.mxu0 0
    %2402 = vmatprep.subr.bf16.mxu0 0
    %2403 = vmatpush1.bf16.msra.mxu0 0
    %2404 = vmatprep.subr.bf16.mxu0 0
    %2405 = vmatpush1.bf16.msra.mxu0 0
    %2406 = vmatprep.subr.bf16.mxu0 0
    %2407 = vmatpush1.bf16.msra.mxu0 0
    %2408 = vmatprep.subr.bf16.mxu0 0
    %2409 = vmatpush1.bf16.msra.mxu0 0
    %2410 = vmatprep.subr.bf16.mxu0 0
    %2411 = vmatpush1.bf16.msra.mxu0 0
    %2412 = vmatprep.subr.bf16.mxu0 0
    %2413 = vmatpush1.bf16.msra.mxu0 0
    %2414 = vmatprep.subr.bf16.mxu0 0
    %2415 = vmatpush1.bf16.msra.mxu0 0
    %2416 = vmatprep.subr.bf16.mxu0 0
    %2417 = vmatpush1.bf16.msra.mxu0 0
    %2418 = vmatprep.subr.bf16.mxu0 0
    %2419 = vmatpush1.bf16.msra.mxu0 0
    %2420 = vmatprep.mubr.bf16.mxu0 0
    %2421 = vmatmul.mubr.bf16.gmra.mrb[0].mxu0 %v2386
    %v2422 = vpop.f32.mrb[0].mxu0
    %v2423 = vadd.f32 0.0, %v2422
    %v2424 = vpop.f32.mrb[0].mxu0
    %v2425 = vadd.f32 0.0, %v2424
    %v2426 = vpop.f32.mrb[0].mxu0
    %v2427 = vpop.f32.mrb[0].mxu0
    %2428 = vdwg.mxu0
    %v2429 = vadd.f32 %v2268, %v2423
    %v2430 = vadd.f32 %v2269, %v2425
    %2431 = vst [vmem:[#allocation2 + $0x10] sm:$0xff] %v2429
    %2432 = vst [vmem:[#allocation2 + $0x18] sm:$0xff] %v2430
    %v2433 = vld [vmem:[#allocation2] sm:$0xff]
    %v2434 = vld [vmem:[#allocation2 + $0x8] sm:$0xff]
    %v2435 = vld [vmem:[#allocation2 + $0x10] sm:$0xff]
    %v2436 = vld [vmem:[#allocation2 + $0x18] sm:$0xff]
    %v2437 = vadd.f32 %v223, %v2433
    %v2438 = vadd.f32 %v224, %v2434
    %v2439 = vadd.f32 %v225, %v2435
    %v2440 = vadd.f32 %v226, %v2436
    %v2441 = vld [vmem:[%s11] sm:$0x3]
    %v2443 = vlaneseq
    %v2444 = vshrl.u32 %v2443, 7
    %v2445 = vsub.s32 0, %v2444
    %v2446 = vrot.slane %v2441, %v2445
    %v2447 = vlaneseq
    %v2448 = vshrl.u32 %v2447, 7
    %v2449 = vsub.s32 1, %v2448
    %v2450 = vrot.slane %v2441, %v2449
    %v2453 = vadd.f32 %v2437, %v2446
    %v2454 = vadd.f32 %v2438, %v2450
    %v2455 = vadd.f32 %v2439, %v2446
    %v2456 = vadd.f32 %v2440, %v2450
    %v2457 = vld [vmem:[%s13] sm:$0x3]
    %v2458 = vld [vmem:[%s15] sm:$0x3]
    %v2459 = vadd.f32 %v2453, %v2454
    %2460 = vadd.xlane.f32.xlu0 %v2459
    %v2461 = vpop.xlane.xlu0 %2460
    %v2462 = vadd.f32 %v2455, %v2456
    %2463 = vadd.xlane.f32.xlu0 %v2462
    %v2464 = vpop.xlane.xlu0 %2463
    %v2465 = vrcp.pop 256.0
    %v2466 = vmul.f32 %v2461, %v2465
    %v2467 = vmul.f32 %v2464, %v2465
    %v2468 = vsub.f32 %v2453, %v2466
    %v2469 = vsub.f32 %v2454, %v2466
    %v2470 = vsub.f32 %v2455, %v2467
    %v2471 = vsub.f32 %v2456, %v2467
    %v2472 = vmul.f32 %v2468, %v2468
    %v2473 = vmul.f32 %v2469, %v2469
    %v2474 = vmul.f32 %v2470, %v2470
    %v2475 = vmul.f32 %v2471, %v2471
    %v2476 = vadd.f32 %v2472, %v2473
    %2477 = vadd.xlane.f32.xlu0 %v2476
    %v2478 = vpop.xlane.xlu0 %2477
    %v2479 = vadd.f32 %v2474, %v2475
    %2480 = vadd.xlane.f32.xlu0 %v2479
    %v2481 = vpop.xlane.xlu0 %2480
    %v2482 = vmul.f32 %v2478, %v2465
    %v2483 = vmul.f32 %v2481, %v2465
    %v2484 = vadd.f32 %v2482, 1e-05
    %v2485 = vadd.f32 %v2483, 1e-05
    %v2486 = vrsqrt.pop %v2484
    %v2487 = vrsqrt.pop %v2485
    %v2488 = vmul.f32 %v2468, %v2486
    %v2489 = vmul.f32 %v2469, %v2486
    %v2490 = vmul.f32 %v2470, %v2487
    %v2491 = vmul.f32 %v2471, %v2487
    %v2493 = vlaneseq
    %v2494 = vshrl.u32 %v2493, 7
    %v2495 = vsub.s32 0, %v2494
    %v2496 = vrot.slane %v2457, %v2495
    %v2497 = vlaneseq
    %v2498 = vshrl.u32 %v2497, 7
    %v2499 = vsub.s32 1, %v2498
    %v2500 = vrot.slane %v2457, %v2499
    %v2503 = vmul.f32 %v2488, %v2496
    %v2504 = vmul.f32 %v2489, %v2500
    %v2505 = vmul.f32 %v2490, %v2496
    %v2506 = vmul.f32 %v2491, %v2500
    %v2508 = vlaneseq
    %v2509 = vshrl.u32 %v2508, 7
    %v2510 = vsub.s32 0, %v2509
    %v2511 = vrot.slane %v2458, %v2510
    %v2512 = vlaneseq
    %v2513 = vshrl.u32 %v2512, 7
    %v2514 = vsub.s32 1, %v2513
    %v2515 = vrot.slane %v2458, %v2514
    %v2518 = vadd.f32 %v2503, %v2511
    %v2519 = vadd.f32 %v2504, %v2515
    %v2520 = vadd.f32 %v2505, %v2511
    %v2521 = vadd.f32 %v2506, %v2515
    %v2522 = vld [vmem:[#allocation7] sm:$0xff]
    %v2523 = vld [vmem:[#allocation7 + $0x8] sm:$0xff]
    %v2524 = vld [vmem:[#allocation7 + $0x10] sm:$0xff]
    %v2525 = vld [vmem:[#allocation7 + $0x18] sm:$0xff]
    %v2526 = vld [vmem:[#allocation7 + $0x20] sm:$0xff]
    %v2527 = vld [vmem:[#allocation7 + $0x28] sm:$0xff]
    %v2528 = vld [vmem:[#allocation7 + $0x30] sm:$0xff]
    %v2529 = vld [vmem:[#allocation7 + $0x38] sm:$0xff]
    %v2530 = vld [vmem:[#allocation7 + $0x40] sm:$0xff]
    %v2531 = vld [vmem:[#allocation7 + $0x48] sm:$0xff]
    %v2532 = vld [vmem:[#allocation7 + $0x50] sm:$0xff]
    %v2533 = vld [vmem:[#allocation7 + $0x58] sm:$0xff]
    %v2534 = vld [vmem:[#allocation7 + $0x60] sm:$0xff]
    %v2535 = vld [vmem:[#allocation7 + $0x68] sm:$0xff]
    %v2536 = vld [vmem:[#allocation7 + $0x70] sm:$0xff]
    %v2537 = vld [vmem:[#allocation7 + $0x78] sm:$0xff]
    %v2538 = vld [vmem:[#allocation7 + $0x80] sm:$0xff]
    %v2539 = vld [vmem:[#allocation7 + $0x88] sm:$0xff]
    %v2540 = vld [vmem:[#allocation7 + $0x90] sm:$0xff]
    %v2541 = vld [vmem:[#allocation7 + $0x98] sm:$0xff]
    %v2542 = vld [vmem:[#allocation7 + $0xa0] sm:$0xff]
    %v2543 = vld [vmem:[#allocation7 + $0xa8] sm:$0xff]
    %v2544 = vld [vmem:[#allocation7 + $0xb0] sm:$0xff]
    %v2545 = vld [vmem:[#allocation7 + $0xb8] sm:$0xff]
    %v2546 = vld [vmem:[#allocation7 + $0xc0] sm:$0xff]
    %v2547 = vld [vmem:[#allocation7 + $0xc8] sm:$0xff]
    %v2548 = vld [vmem:[#allocation7 + $0xd0] sm:$0xff]
    %v2549 = vld [vmem:[#allocation7 + $0xd8] sm:$0xff]
    %v2550 = vld [vmem:[#allocation7 + $0xe0] sm:$0xff]
    %v2551 = vld [vmem:[#allocation7 + $0xe8] sm:$0xff]
    %v2552 = vld [vmem:[#allocation7 + $0xf0] sm:$0xff]
    %v2553 = vld [vmem:[#allocation7 + $0xf8] sm:$0xff]
    %v2554 = vld [vmem:[#allocation7 + $0x100] sm:$0xff]
    %v2555 = vld [vmem:[#allocation7 + $0x108] sm:$0xff]
    %v2556 = vld [vmem:[#allocation7 + $0x110] sm:$0xff]
    %v2557 = vld [vmem:[#allocation7 + $0x118] sm:$0xff]
    %v2558 = vld [vmem:[#allocation7 + $0x120] sm:$0xff]
    %v2559 = vld [vmem:[#allocation7 + $0x128] sm:$0xff]
    %v2560 = vld [vmem:[#allocation7 + $0x130] sm:$0xff]
    %v2561 = vld [vmem:[#allocation7 + $0x138] sm:$0xff]
    %v2562 = vld [vmem:[#allocation7 + $0x140] sm:$0xff]
    %v2563 = vld [vmem:[#allocation7 + $0x148] sm:$0xff]
    %v2564 = vld [vmem:[#allocation7 + $0x150] sm:$0xff]
    %v2565 = vld [vmem:[#allocation7 + $0x158] sm:$0xff]
    %v2566 = vld [vmem:[#allocation7 + $0x160] sm:$0xff]
    %v2567 = vld [vmem:[#allocation7 + $0x168] sm:$0xff]
    %v2568 = vld [vmem:[#allocation7 + $0x170] sm:$0xff]
    %v2569 = vld [vmem:[#allocation7 + $0x178] sm:$0xff]
    %v2570 = vld [vmem:[#allocation7 + $0x180] sm:$0xff]
    %v2571 = vld [vmem:[#allocation7 + $0x188] sm:$0xff]
    %v2572 = vld [vmem:[#allocation7 + $0x190] sm:$0xff]
    %v2573 = vld [vmem:[#allocation7 + $0x198] sm:$0xff]
    %v2574 = vld [vmem:[#allocation7 + $0x1a0] sm:$0xff]
    %v2575 = vld [vmem:[#allocation7 + $0x1a8] sm:$0xff]
    %v2576 = vld [vmem:[#allocation7 + $0x1b0] sm:$0xff]
    %v2577 = vld [vmem:[#allocation7 + $0x1b8] sm:$0xff]
    %v2578 = vld [vmem:[#allocation7 + $0x1c0] sm:$0xff]
    %v2579 = vld [vmem:[#allocation7 + $0x1c8] sm:$0xff]
    %v2580 = vld [vmem:[#allocation7 + $0x1d0] sm:$0xff]
    %v2581 = vld [vmem:[#allocation7 + $0x1d8] sm:$0xff]
    %v2582 = vld [vmem:[#allocation7 + $0x1e0] sm:$0xff]
    %v2583 = vld [vmem:[#allocation7 + $0x1e8] sm:$0xff]
    %v2584 = vld [vmem:[#allocation7 + $0x1f0] sm:$0xff]
    %v2585 = vld [vmem:[#allocation7 + $0x1f8] sm:$0xff]
    %v2586 = vpack.c.bf16 %v2520, %v2518
    %v2587 = vpack.c.bf16 %v2521, %v2519
    %v2588 = vld [vmem:[%s19] sm:$0xf]
    %v2590 = vlaneseq
    %v2591 = vshrl.u32 %v2590, 7
    %v2592 = vsub.s32 0, %v2591
    %v2593 = vrot.slane %v2588, %v2592
    %v2594 = vlaneseq
    %v2595 = vshrl.u32 %v2594, 7
    %v2596 = vsub.s32 1, %v2595
    %v2597 = vrot.slane %v2588, %v2596
    %v2598 = vlaneseq
    %v2599 = vshrl.u32 %v2598, 7
    %v2600 = vsub.s32 2, %v2599
    %v2601 = vrot.slane %v2588, %v2600
    %v2602 = vlaneseq
    %v2603 = vshrl.u32 %v2602, 7
    %v2604 = vsub.s32 3, %v2603
    %v2605 = vrot.slane %v2588, %v2604
    %v2674 = vunpack.c.l.b16 %v2522
    %v2675 = vunpack.c.h.b16 %v2522
    %v2676 = vunpack.c.l.b16 %v2523
    %v2677 = vunpack.c.h.b16 %v2523
    %v2678 = vunpack.c.l.b16 %v2524
    %v2679 = vunpack.c.h.b16 %v2524
    %v2680 = vunpack.c.l.b16 %v2525
    %v2681 = vunpack.c.h.b16 %v2525
    %v2682 = vunpack.c.l.b16 %v2526
    %v2683 = vunpack.c.h.b16 %v2526
    %v2684 = vunpack.c.l.b16 %v2527
    %v2685 = vunpack.c.h.b16 %v2527
    %v2686 = vunpack.c.l.b16 %v2528
    %v2687 = vunpack.c.h.b16 %v2528
    %v2688 = vunpack.c.l.b16 %v2529
    %v2689 = vunpack.c.h.b16 %v2529
    %v2690 = vunpack.c.l.b16 %v2530
    %v2691 = vunpack.c.h.b16 %v2530
    %v2692 = vunpack.c.l.b16 %v2531
    %v2693 = vunpack.c.h.b16 %v2531
    %v2694 = vunpack.c.l.b16 %v2532
    %v2695 = vunpack.c.h.b16 %v2532
    %v2696 = vunpack.c.l.b16 %v2533
    %v2697 = vunpack.c.h.b16 %v2533
    %v2698 = vunpack.c.l.b16 %v2534
    %v2699 = vunpack.c.h.b16 %v2534
    %v2700 = vunpack.c.l.b16 %v2535
    %v2701 = vunpack.c.h.b16 %v2535
    %v2702 = vunpack.c.l.b16 %v2536
    %v2703 = vunpack.c.h.b16 %v2536
    %v2704 = vunpack.c.l.b16 %v2537
    %v2705 = vunpack.c.h.b16 %v2537
    %v2706 = vunpack.c.l.b16 %v2538
    %v2707 = vunpack.c.h.b16 %v2538
    %v2708 = vunpack.c.l.b16 %v2539
    %v2709 = vunpack.c.h.b16 %v2539
    %v2710 = vunpack.c.l.b16 %v2540
    %v2711 = vunpack.c.h.b16 %v2540
    %v2712 = vunpack.c.l.b16 %v2541
    %v2713 = vunpack.c.h.b16 %v2541
    %v2714 = vunpack.c.l.b16 %v2542
    %v2715 = vunpack.c.h.b16 %v2542
    %v2716 = vunpack.c.l.b16 %v2543
    %v2717 = vunpack.c.h.b16 %v2543
    %v2718 = vunpack.c.l.b16 %v2544
    %v2719 = vunpack.c.h.b16 %v2544
    %v2720 = vunpack.c.l.b16 %v2545
    %v2721 = vunpack.c.h.b16 %v2545
    %v2722 = vunpack.c.l.b16 %v2546
    %v2723 = vunpack.c.h.b16 %v2546
    %v2724 = vunpack.c.l.b16 %v2547
    %v2725 = vunpack.c.h.b16 %v2547
    %v2726 = vunpack.c.l.b16 %v2548
    %v2727 = vunpack.c.h.b16 %v2548
    %v2728 = vunpack.c.l.b16 %v2549
    %v2729 = vunpack.c.h.b16 %v2549
    %v2730 = vunpack.c.l.b16 %v2550
    %v2731 = vunpack.c.h.b16 %v2550
    %v2732 = vunpack.c.l.b16 %v2551
    %v2733 = vunpack.c.h.b16 %v2551
    %v2734 = vunpack.c.l.b16 %v2552
    %v2735 = vunpack.c.h.b16 %v2552
    %v2736 = vunpack.c.l.b16 %v2553
    %v2737 = vunpack.c.h.b16 %v2553
    %v2738 = vunpack.c.l.b16 %v2554
    %v2739 = vunpack.c.h.b16 %v2554
    %v2740 = vunpack.c.l.b16 %v2555
    %v2741 = vunpack.c.h.b16 %v2555
    %v2742 = vunpack.c.l.b16 %v2556
    %v2743 = vunpack.c.h.b16 %v2556
    %v2744 = vunpack.c.l.b16 %v2557
    %v2745 = vunpack.c.h.b16 %v2557
    %v2746 = vunpack.c.l.b16 %v2558
    %v2747 = vunpack.c.h.b16 %v2558
    %v2748 = vunpack.c.l.b16 %v2559
    %v2749 = vunpack.c.h.b16 %v2559
    %v2750 = vunpack.c.l.b16 %v2560
    %v2751 = vunpack.c.h.b16 %v2560
    %v2752 = vunpack.c.l.b16 %v2561
    %v2753 = vunpack.c.h.b16 %v2561
    %v2754 = vunpack.c.l.b16 %v2562
    %v2755 = vunpack.c.h.b16 %v2562
    %v2756 = vunpack.c.l.b16 %v2563
    %v2757 = vunpack.c.h.b16 %v2563
    %v2758 = vunpack.c.l.b16 %v2564
    %v2759 = vunpack.c.h.b16 %v2564
    %v2760 = vunpack.c.l.b16 %v2565
    %v2761 = vunpack.c.h.b16 %v2565
    %v2762 = vunpack.c.l.b16 %v2566
    %v2763 = vunpack.c.h.b16 %v2566
    %v2764 = vunpack.c.l.b16 %v2567
    %v2765 = vunpack.c.h.b16 %v2567
    %v2766 = vunpack.c.l.b16 %v2568
    %v2767 = vunpack.c.h.b16 %v2568
    %v2768 = vunpack.c.l.b16 %v2569
    %v2769 = vunpack.c.h.b16 %v2569
    %v2770 = vunpack.c.l.b16 %v2570
    %v2771 = vunpack.c.h.b16 %v2570
    %v2772 = vunpack.c.l.b16 %v2571
    %v2773 = vunpack.c.h.b16 %v2571
    %v2774 = vunpack.c.l.b16 %v2572
    %v2775 = vunpack.c.h.b16 %v2572
    %v2776 = vunpack.c.l.b16 %v2573
    %v2777 = vunpack.c.h.b16 %v2573
    %v2778 = vunpack.c.l.b16 %v2574
    %v2779 = vunpack.c.h.b16 %v2574
    %v2780 = vunpack.c.l.b16 %v2575
    %v2781 = vunpack.c.h.b16 %v2575
    %v2782 = vunpack.c.l.b16 %v2576
    %v2783 = vunpack.c.h.b16 %v2576
    %v2784 = vunpack.c.l.b16 %v2577
    %v2785 = vunpack.c.h.b16 %v2577
    %v2786 = vunpack.c.l.b16 %v2578
    %v2787 = vunpack.c.h.b16 %v2578
    %v2788 = vunpack.c.l.b16 %v2579
    %v2789 = vunpack.c.h.b16 %v2579
    %v2790 = vunpack.c.l.b16 %v2580
    %v2791 = vunpack.c.h.b16 %v2580
    %v2792 = vunpack.c.l.b16 %v2581
    %v2793 = vunpack.c.h.b16 %v2581
    %v2794 = vunpack.c.l.b16 %v2582
    %v2795 = vunpack.c.h.b16 %v2582
    %v2796 = vunpack.c.l.b16 %v2583
    %v2797 = vunpack.c.h.b16 %v2583
    %v2798 = vunpack.c.l.b16 %v2584
    %v2799 = vunpack.c.h.b16 %v2584
    %v2800 = vunpack.c.l.b16 %v2585
    %v2801 = vunpack.c.h.b16 %v2585
    %v2802 = vpack.c.b16 %v2678, %v2674
    %v2803 = vpack.c.b16 %v2679, %v2675
    %v2804 = vpack.c.b16 %v2680, %v2676
    %v2805 = vpack.c.b16 %v2681, %v2677
    %v2806 = vpack.c.b16 %v2686, %v2682
    %v2807 = vpack.c.b16 %v2687, %v2683
    %v2808 = vpack.c.b16 %v2688, %v2684
    %v2809 = vpack.c.b16 %v2689, %v2685
    %v2810 = vpack.c.b16 %v2694, %v2690
    %v2811 = vpack.c.b16 %v2695, %v2691
    %v2812 = vpack.c.b16 %v2696, %v2692
    %v2813 = vpack.c.b16 %v2697, %v2693
    %v2814 = vpack.c.b16 %v2702, %v2698
    %v2815 = vpack.c.b16 %v2703, %v2699
    %v2816 = vpack.c.b16 %v2704, %v2700
    %v2817 = vpack.c.b16 %v2705, %v2701
    %v2818 = vpack.c.b16 %v2710, %v2706
    %v2819 = vpack.c.b16 %v2711, %v2707
    %v2820 = vpack.c.b16 %v2712, %v2708
    %v2821 = vpack.c.b16 %v2713, %v2709
    %v2822 = vpack.c.b16 %v2718, %v2714
    %v2823 = vpack.c.b16 %v2719, %v2715
    %v2824 = vpack.c.b16 %v2720, %v2716
    %v2825 = vpack.c.b16 %v2721, %v2717
    %v2826 = vpack.c.b16 %v2726, %v2722
    %v2827 = vpack.c.b16 %v2727, %v2723
    %v2828 = vpack.c.b16 %v2728, %v2724
    %v2829 = vpack.c.b16 %v2729, %v2725
    %v2830 = vpack.c.b16 %v2734, %v2730
    %v2831 = vpack.c.b16 %v2735, %v2731
    %v2832 = vpack.c.b16 %v2736, %v2732
    %v2833 = vpack.c.b16 %v2737, %v2733
    %v2834 = vpack.c.b16 %v2742, %v2738
    %v2835 = vpack.c.b16 %v2743, %v2739
    %v2836 = vpack.c.b16 %v2744, %v2740
    %v2837 = vpack.c.b16 %v2745, %v2741
    %v2838 = vpack.c.b16 %v2750, %v2746
    %v2839 = vpack.c.b16 %v2751, %v2747
    %v2840 = vpack.c.b16 %v2752, %v2748
    %v2841 = vpack.c.b16 %v2753, %v2749
    %v2842 = vpack.c.b16 %v2758, %v2754
    %v2843 = vpack.c.b16 %v2759, %v2755
    %v2844 = vpack.c.b16 %v2760, %v2756
    %v2845 = vpack.c.b16 %v2761, %v2757
    %v2846 = vpack.c.b16 %v2766, %v2762
    %v2847 = vpack.c.b16 %v2767, %v2763
    %v2848 = vpack.c.b16 %v2768, %v2764
    %v2849 = vpack.c.b16 %v2769, %v2765
    %v2850 = vpack.c.b16 %v2774, %v2770
    %v2851 = vpack.c.b16 %v2775, %v2771
    %v2852 = vpack.c.b16 %v2776, %v2772
    %v2853 = vpack.c.b16 %v2777, %v2773
    %v2854 = vpack.c.b16 %v2782, %v2778
    %v2855 = vpack.c.b16 %v2783, %v2779
    %v2856 = vpack.c.b16 %v2784, %v2780
    %v2857 = vpack.c.b16 %v2785, %v2781
    %v2858 = vpack.c.b16 %v2790, %v2786
    %v2859 = vpack.c.b16 %v2791, %v2787
    %v2860 = vpack.c.b16 %v2792, %v2788
    %v2861 = vpack.c.b16 %v2793, %v2789
    %v2862 = vpack.c.b16 %v2798, %v2794
    %v2863 = vpack.c.b16 %v2799, %v2795
    %v2864 = vpack.c.b16 %v2800, %v2796
    %v2865 = vpack.c.b16 %v2801, %v2797
    %2930 = vmatprep.subr.bf16.mxu0 %v2803
    %2931 = vmatpush1.bf16.msra.mxu0 %v2802
    %2932 = vmatprep.subr.bf16.mxu0 %v2807
    %2933 = vmatpush1.bf16.msra.mxu0 %v2806
    %2934 = vmatprep.subr.bf16.mxu0 %v2811
    %2935 = vmatpush1.bf16.msra.mxu0 %v2810
    %2936 = vmatprep.subr.bf16.mxu0 %v2815
    %2937 = vmatpush1.bf16.msra.mxu0 %v2814
    %2938 = vmatprep.subr.bf16.mxu0 %v2819
    %2939 = vmatpush1.bf16.msra.mxu0 %v2818
    %2940 = vmatprep.subr.bf16.mxu0 %v2823
    %2941 = vmatpush1.bf16.msra.mxu0 %v2822
    %2942 = vmatprep.subr.bf16.mxu0 %v2827
    %2943 = vmatpush1.bf16.msra.mxu0 %v2826
    %2944 = vmatprep.subr.bf16.mxu0 %v2831
    %2945 = vmatpush1.bf16.msra.mxu0 %v2830
    %2946 = vmatprep.subr.bf16.mxu0 %v2835
    %2947 = vmatpush1.bf16.msra.mxu0 %v2834
    %2948 = vmatprep.subr.bf16.mxu0 %v2839
    %2949 = vmatpush1.bf16.msra.mxu0 %v2838
    %2950 = vmatprep.subr.bf16.mxu0 %v2843
    %2951 = vmatpush1.bf16.msra.mxu0 %v2842
    %2952 = vmatprep.subr.bf16.mxu0 %v2847
    %2953 = vmatpush1.bf16.msra.mxu0 %v2846
    %2954 = vmatprep.subr.bf16.mxu0 %v2851
    %2955 = vmatpush1.bf16.msra.mxu0 %v2850
    %2956 = vmatprep.subr.bf16.mxu0 %v2855
    %2957 = vmatpush1.bf16.msra.mxu0 %v2854
    %2958 = vmatprep.subr.bf16.mxu0 %v2859
    %2959 = vmatpush1.bf16.msra.mxu0 %v2858
    %2960 = vmatprep.subr.bf16.mxu0 %v2863
    %2961 = vmatpush1.bf16.msra.mxu0 %v2862
    %2962 = vmatprep.mubr.bf16.mxu0 %v2587
    %2963 = vmatmul.mubr.bf16.gmra.mrb[0].mxu0 %v2586
    %v2964 = vpop.f32.mrb[0].mxu0
    %v2965 = vadd.f32 %v2593, %v2964
    %v2966 = vpop.f32.mrb[0].mxu0
    %v2967 = vadd.f32 %v2597, %v2966
    %v2968 = vpop.f32.mrb[0].mxu0
    %v2969 = vadd.f32 %v2593, %v2968
    %v2970 = vpop.f32.mrb[0].mxu0
    %v2971 = vadd.f32 %v2597, %v2970
    %2972 = vdwg.mxu0
    %2973 = vmatprep.subr.bf16.mxu0 %v2805
    %2974 = vmatpush1.bf16.msra.mxu0 %v2804
    %2975 = vmatprep.subr.bf16.mxu0 %v2809
    %2976 = vmatpush1.bf16.msra.mxu0 %v2808
    %2977 = vmatprep.subr.bf16.mxu0 %v2813
    %2978 = vmatpush1.bf16.msra.mxu0 %v2812
    %2979 = vmatprep.subr.bf16.mxu0 %v2817
    %2980 = vmatpush1.bf16.msra.mxu0 %v2816
    %2981 = vmatprep.subr.bf16.mxu0 %v2821
    %2982 = vmatpush1.bf16.msra.mxu0 %v2820
    %2983 = vmatprep.subr.bf16.mxu0 %v2825
    %2984 = vmatpush1.bf16.msra.mxu0 %v2824
    %2985 = vmatprep.subr.bf16.mxu0 %v2829
    %2986 = vmatpush1.bf16.msra.mxu0 %v2828
    %2987 = vmatprep.subr.bf16.mxu0 %v2833
    %2988 = vmatpush1.bf16.msra.mxu0 %v2832
    %2989 = vmatprep.subr.bf16.mxu0 %v2837
    %2990 = vmatpush1.bf16.msra.mxu0 %v2836
    %2991 = vmatprep.subr.bf16.mxu0 %v2841
    %2992 = vmatpush1.bf16.msra.mxu0 %v2840
    %2993 = vmatprep.subr.bf16.mxu0 %v2845
    %2994 = vmatpush1.bf16.msra.mxu0 %v2844
    %2995 = vmatprep.subr.bf16.mxu0 %v2849
    %2996 = vmatpush1.bf16.msra.mxu0 %v2848
    %2997 = vmatprep.subr.bf16.mxu0 %v2853
    %2998 = vmatpush1.bf16.msra.mxu0 %v2852
    %2999 = vmatprep.subr.bf16.mxu0 %v2857
    %3000 = vmatpush1.bf16.msra.mxu0 %v2856
    %3001 = vmatprep.subr.bf16.mxu0 %v2861
    %3002 = vmatpush1.bf16.msra.mxu0 %v2860
    %3003 = vmatprep.subr.bf16.mxu0 %v2865
    %3004 = vmatpush1.bf16.msra.mxu0 %v2864
    %3005 = vmatprep.mubr.bf16.mxu0 %v2587
    %3006 = vmatmul.mubr.bf16.gmra.mrb[0].mxu0 %v2586
    %v3007 = vpop.f32.mrb[0].mxu0
    %v3008 = vadd.f32 %v2601, %v3007
    %v3009 = vpop.f32.mrb[0].mxu0
    %v3010 = vadd.f32 %v2605, %v3009
    %v3011 = vpop.f32.mrb[0].mxu0
    %v3012 = vadd.f32 %v2601, %v3011
    %v3013 = vpop.f32.mrb[0].mxu0
    %v3014 = vadd.f32 %v2605, %v3013
    %3015 = vdwg.mxu0
    %v3016 = vmax.f32 %v2965, 0.0
    %v3017 = vmax.f32 %v2967, 0.0
    %v3018 = vmax.f32 %v3008, 0.0
    %v3019 = vmax.f32 %v3010, 0.0
    %v3020 = vmax.f32 %v2969, 0.0
    %v3021 = vmax.f32 %v2971, 0.0
    %v3022 = vmax.f32 %v3012, 0.0
    %v3023 = vmax.f32 %v3014, 0.0
    %v3024 = vld [vmem:[#allocation8] sm:$0xff]
    %v3025 = vld [vmem:[#allocation8 + $0x8] sm:$0xff]
    %v3026 = vld [vmem:[#allocation8 + $0x10] sm:$0xff]
    %v3027 = vld [vmem:[#allocation8 + $0x18] sm:$0xff]
    %v3028 = vld [vmem:[#allocation8 + $0x20] sm:$0xff]
    %v3029 = vld [vmem:[#allocation8 + $0x28] sm:$0xff]
    %v3030 = vld [vmem:[#allocation8 + $0x30] sm:$0xff]
    %v3031 = vld [vmem:[#allocation8 + $0x38] sm:$0xff]
    %v3032 = vld [vmem:[#allocation8 + $0x40] sm:$0xff]
    %v3033 = vld [vmem:[#allocation8 + $0x48] sm:$0xff]
    %v3034 = vld [vmem:[#allocation8 + $0x50] sm:$0xff]
    %v3035 = vld [vmem:[#allocation8 + $0x58] sm:$0xff]
    %v3036 = vld [vmem:[#allocation8 + $0x60] sm:$0xff]
    %v3037 = vld [vmem:[#allocation8 + $0x68] sm:$0xff]
    %v3038 = vld [vmem:[#allocation8 + $0x70] sm:$0xff]
    %v3039 = vld [vmem:[#allocation8 + $0x78] sm:$0xff]
    %v3040 = vld [vmem:[#allocation8 + $0x80] sm:$0xff]
    %v3041 = vld [vmem:[#allocation8 + $0x88] sm:$0xff]
    %v3042 = vld [vmem:[#allocation8 + $0x90] sm:$0xff]
    %v3043 = vld [vmem:[#allocation8 + $0x98] sm:$0xff]
    %v3044 = vld [vmem:[#allocation8 + $0xa0] sm:$0xff]
    %v3045 = vld [vmem:[#allocation8 + $0xa8] sm:$0xff]
    %v3046 = vld [vmem:[#allocation8 + $0xb0] sm:$0xff]
    %v3047 = vld [vmem:[#allocation8 + $0xb8] sm:$0xff]
    %v3048 = vld [vmem:[#allocation8 + $0xc0] sm:$0xff]
    %v3049 = vld [vmem:[#allocation8 + $0xc8] sm:$0xff]
    %v3050 = vld [vmem:[#allocation8 + $0xd0] sm:$0xff]
    %v3051 = vld [vmem:[#allocation8 + $0xd8] sm:$0xff]
    %v3052 = vld [vmem:[#allocation8 + $0xe0] sm:$0xff]
    %v3053 = vld [vmem:[#allocation8 + $0xe8] sm:$0xff]
    %v3054 = vld [vmem:[#allocation8 + $0xf0] sm:$0xff]
    %v3055 = vld [vmem:[#allocation8 + $0xf8] sm:$0xff]
    %v3056 = vld [vmem:[#allocation8 + $0x100] sm:$0xff]
    %v3057 = vld [vmem:[#allocation8 + $0x108] sm:$0xff]
    %v3058 = vld [vmem:[#allocation8 + $0x110] sm:$0xff]
    %v3059 = vld [vmem:[#allocation8 + $0x118] sm:$0xff]
    %v3060 = vld [vmem:[#allocation8 + $0x120] sm:$0xff]
    %v3061 = vld [vmem:[#allocation8 + $0x128] sm:$0xff]
    %v3062 = vld [vmem:[#allocation8 + $0x130] sm:$0xff]
    %v3063 = vld [vmem:[#allocation8 + $0x138] sm:$0xff]
    %v3064 = vld [vmem:[#allocation8 + $0x140] sm:$0xff]
    %v3065 = vld [vmem:[#allocation8 + $0x148] sm:$0xff]
    %v3066 = vld [vmem:[#allocation8 + $0x150] sm:$0xff]
    %v3067 = vld [vmem:[#allocation8 + $0x158] sm:$0xff]
    %v3068 = vld [vmem:[#allocation8 + $0x160] sm:$0xff]
    %v3069 = vld [vmem:[#allocation8 + $0x168] sm:$0xff]
    %v3070 = vld [vmem:[#allocation8 + $0x170] sm:$0xff]
    %v3071 = vld [vmem:[#allocation8 + $0x178] sm:$0xff]
    %v3072 = vld [vmem:[#allocation8 + $0x180] sm:$0xff]
    %v3073 = vld [vmem:[#allocation8 + $0x188] sm:$0xff]
    %v3074 = vld [vmem:[#allocation8 + $0x190] sm:$0xff]
    %v3075 = vld [vmem:[#allocation8 + $0x198] sm:$0xff]
    %v3076 = vld [vmem:[#allocation8 + $0x1a0] sm:$0xff]
    %v3077 = vld [vmem:[#allocation8 + $0x1a8] sm:$0xff]
    %v3078 = vld [vmem:[#allocation8 + $0x1b0] sm:$0xff]
    %v3079 = vld [vmem:[#allocation8 + $0x1b8] sm:$0xff]
    %v3080 = vld [vmem:[#allocation8 + $0x1c0] sm:$0xff]
    %v3081 = vld [vmem:[#allocation8 + $0x1c8] sm:$0xff]
    %v3082 = vld [vmem:[#allocation8 + $0x1d0] sm:$0xff]
    %v3083 = vld [vmem:[#allocation8 + $0x1d8] sm:$0xff]
    %v3084 = vld [vmem:[#allocation8 + $0x1e0] sm:$0xff]
    %v3085 = vld [vmem:[#allocation8 + $0x1e8] sm:$0xff]
    %v3086 = vld [vmem:[#allocation8 + $0x1f0] sm:$0xff]
    %v3087 = vld [vmem:[#allocation8 + $0x1f8] sm:$0xff]
    %v3088 = vpack.c.bf16 %v3020, %v3016
    %v3089 = vpack.c.bf16 %v3021, %v3017
    %v3090 = vpack.c.bf16 %v3022, %v3018
    %v3091 = vpack.c.bf16 %v3023, %v3019
    %v3092 = vld [vmem:[%s23] sm:$0x3]
    %v3094 = vlaneseq
    %v3095 = vshrl.u32 %v3094, 7
    %v3096 = vsub.s32 0, %v3095
    %v3097 = vrot.slane %v3092, %v3096
    %v3098 = vlaneseq
    %v3099 = vshrl.u32 %v3098, 7
    %v3100 = vsub.s32 1, %v3099
    %v3101 = vrot.slane %v3092, %v3100
    %v3168 = vunpack.c.l.b16 %v3024
    %v3169 = vunpack.c.h.b16 %v3024
    %v3170 = vunpack.c.l.b16 %v3025
    %v3171 = vunpack.c.h.b16 %v3025
    %v3172 = vunpack.c.l.b16 %v3026
    %v3173 = vunpack.c.h.b16 %v3026
    %v3174 = vunpack.c.l.b16 %v3027
    %v3175 = vunpack.c.h.b16 %v3027
    %v3176 = vunpack.c.l.b16 %v3028
    %v3177 = vunpack.c.h.b16 %v3028
    %v3178 = vunpack.c.l.b16 %v3029
    %v3179 = vunpack.c.h.b16 %v3029
    %v3180 = vunpack.c.l.b16 %v3030
    %v3181 = vunpack.c.h.b16 %v3030
    %v3182 = vunpack.c.l.b16 %v3031
    %v3183 = vunpack.c.h.b16 %v3031
    %v3184 = vunpack.c.l.b16 %v3032
    %v3185 = vunpack.c.h.b16 %v3032
    %v3186 = vunpack.c.l.b16 %v3033
    %v3187 = vunpack.c.h.b16 %v3033
    %v3188 = vunpack.c.l.b16 %v3034
    %v3189 = vunpack.c.h.b16 %v3034
    %v3190 = vunpack.c.l.b16 %v3035
    %v3191 = vunpack.c.h.b16 %v3035
    %v3192 = vunpack.c.l.b16 %v3036
    %v3193 = vunpack.c.h.b16 %v3036
    %v3194 = vunpack.c.l.b16 %v3037
    %v3195 = vunpack.c.h.b16 %v3037
    %v3196 = vunpack.c.l.b16 %v3038
    %v3197 = vunpack.c.h.b16 %v3038
    %v3198 = vunpack.c.l.b16 %v3039
    %v3199 = vunpack.c.h.b16 %v3039
    %v3200 = vunpack.c.l.b16 %v3040
    %v3201 = vunpack.c.h.b16 %v3040
    %v3202 = vunpack.c.l.b16 %v3041
    %v3203 = vunpack.c.h.b16 %v3041
    %v3204 = vunpack.c.l.b16 %v3042
    %v3205 = vunpack.c.h.b16 %v3042
    %v3206 = vunpack.c.l.b16 %v3043
    %v3207 = vunpack.c.h.b16 %v3043
    %v3208 = vunpack.c.l.b16 %v3044
    %v3209 = vunpack.c.h.b16 %v3044
    %v3210 = vunpack.c.l.b16 %v3045
    %v3211 = vunpack.c.h.b16 %v3045
    %v3212 = vunpack.c.l.b16 %v3046
    %v3213 = vunpack.c.h.b16 %v3046
    %v3214 = vunpack.c.l.b16 %v3047
    %v3215 = vunpack.c.h.b16 %v3047
    %v3216 = vunpack.c.l.b16 %v3048
    %v3217 = vunpack.c.h.b16 %v3048
    %v3218 = vunpack.c.l.b16 %v3049
    %v3219 = vunpack.c.h.b16 %v3049
    %v3220 = vunpack.c.l.b16 %v3050
    %v3221 = vunpack.c.h.b16 %v3050
    %v3222 = vunpack.c.l.b16 %v3051
    %v3223 = vunpack.c.h.b16 %v3051
    %v3224 = vunpack.c.l.b16 %v3052
    %v3225 = vunpack.c.h.b16 %v3052
    %v3226 = vunpack.c.l.b16 %v3053
    %v3227 = vunpack.c.h.b16 %v3053
    %v3228 = vunpack.c.l.b16 %v3054
    %v3229 = vunpack.c.h.b16 %v3054
    %v3230 = vunpack.c.l.b16 %v3055
    %v3231 = vunpack.c.h.b16 %v3055
    %v3232 = vunpack.c.l.b16 %v3056
    %v3233 = vunpack.c.h.b16 %v3056
    %v3234 = vunpack.c.l.b16 %v3057
    %v3235 = vunpack.c.h.b16 %v3057
    %v3236 = vunpack.c.l.b16 %v3058
    %v3237 = vunpack.c.h.b16 %v3058
    %v3238 = vunpack.c.l.b16 %v3059
    %v3239 = vunpack.c.h.b16 %v3059
    %v3240 = vunpack.c.l.b16 %v3060
    %v3241 = vunpack.c.h.b16 %v3060
    %v3242 = vunpack.c.l.b16 %v3061
    %v3243 = vunpack.c.h.b16 %v3061
    %v3244 = vunpack.c.l.b16 %v3062
    %v3245 = vunpack.c.h.b16 %v3062
    %v3246 = vunpack.c.l.b16 %v3063
    %v3247 = vunpack.c.h.b16 %v3063
    %v3248 = vunpack.c.l.b16 %v3064
    %v3249 = vunpack.c.h.b16 %v3064
    %v3250 = vunpack.c.l.b16 %v3065
    %v3251 = vunpack.c.h.b16 %v3065
    %v3252 = vunpack.c.l.b16 %v3066
    %v3253 = vunpack.c.h.b16 %v3066
    %v3254 = vunpack.c.l.b16 %v3067
    %v3255 = vunpack.c.h.b16 %v3067
    %v3256 = vunpack.c.l.b16 %v3068
    %v3257 = vunpack.c.h.b16 %v3068
    %v3258 = vunpack.c.l.b16 %v3069
    %v3259 = vunpack.c.h.b16 %v3069
    %v3260 = vunpack.c.l.b16 %v3070
    %v3261 = vunpack.c.h.b16 %v3070
    %v3262 = vunpack.c.l.b16 %v3071
    %v3263 = vunpack.c.h.b16 %v3071
    %v3264 = vunpack.c.l.b16 %v3072
    %v3265 = vunpack.c.h.b16 %v3072
    %v3266 = vunpack.c.l.b16 %v3073
    %v3267 = vunpack.c.h.b16 %v3073
    %v3268 = vunpack.c.l.b16 %v3074
    %v3269 = vunpack.c.h.b16 %v3074
    %v3270 = vunpack.c.l.b16 %v3075
    %v3271 = vunpack.c.h.b16 %v3075
    %v3272 = vunpack.c.l.b16 %v3076
    %v3273 = vunpack.c.h.b16 %v3076
    %v3274 = vunpack.c.l.b16 %v3077
    %v3275 = vunpack.c.h.b16 %v3077
    %v3276 = vunpack.c.l.b16 %v3078
    %v3277 = vunpack.c.h.b16 %v3078
    %v3278 = vunpack.c.l.b16 %v3079
    %v3279 = vunpack.c.h.b16 %v3079
    %v3280 = vunpack.c.l.b16 %v3080
    %v3281 = vunpack.c.h.b16 %v3080
    %v3282 = vunpack.c.l.b16 %v3081
    %v3283 = vunpack.c.h.b16 %v3081
    %v3284 = vunpack.c.l.b16 %v3082
    %v3285 = vunpack.c.h.b16 %v3082
    %v3286 = vunpack.c.l.b16 %v3083
    %v3287 = vunpack.c.h.b16 %v3083
    %v3288 = vunpack.c.l.b16 %v3084
    %v3289 = vunpack.c.h.b16 %v3084
    %v3290 = vunpack.c.l.b16 %v3085
    %v3291 = vunpack.c.h.b16 %v3085
    %v3292 = vunpack.c.l.b16 %v3086
    %v3293 = vunpack.c.h.b16 %v3086
    %v3294 = vunpack.c.l.b16 %v3087
    %v3295 = vunpack.c.h.b16 %v3087
    %v3296 = vpack.c.b16 %v3170, %v3168
    %v3297 = vpack.c.b16 %v3171, %v3169
    %v3298 = vpack.c.b16 %v3174, %v3172
    %v3299 = vpack.c.b16 %v3175, %v3173
    %v3300 = vpack.c.b16 %v3178, %v3176
    %v3301 = vpack.c.b16 %v3179, %v3177
    %v3302 = vpack.c.b16 %v3182, %v3180
    %v3303 = vpack.c.b16 %v3183, %v3181
    %v3304 = vpack.c.b16 %v3186, %v3184
    %v3305 = vpack.c.b16 %v3187, %v3185
    %v3306 = vpack.c.b16 %v3190, %v3188
    %v3307 = vpack.c.b16 %v3191, %v3189
    %v3308 = vpack.c.b16 %v3194, %v3192
    %v3309 = vpack.c.b16 %v3195, %v3193
    %v3310 = vpack.c.b16 %v3198, %v3196
    %v3311 = vpack.c.b16 %v3199, %v3197
    %v3312 = vpack.c.b16 %v3202, %v3200
    %v3313 = vpack.c.b16 %v3203, %v3201
    %v3314 = vpack.c.b16 %v3206, %v3204
    %v3315 = vpack.c.b16 %v3207, %v3205
    %v3316 = vpack.c.b16 %v3210, %v3208
    %v3317 = vpack.c.b16 %v3211, %v3209
    %v3318 = vpack.c.b16 %v3214, %v3212
    %v3319 = vpack.c.b16 %v3215, %v3213
    %v3320 = vpack.c.b16 %v3218, %v3216
    %v3321 = vpack.c.b16 %v3219, %v3217
    %v3322 = vpack.c.b16 %v3222, %v3220
    %v3323 = vpack.c.b16 %v3223, %v3221
    %v3324 = vpack.c.b16 %v3226, %v3224
    %v3325 = vpack.c.b16 %v3227, %v3225
    %v3326 = vpack.c.b16 %v3230, %v3228
    %v3327 = vpack.c.b16 %v3231, %v3229
    %v3328 = vpack.c.b16 %v3234, %v3232
    %v3329 = vpack.c.b16 %v3235, %v3233
    %v3330 = vpack.c.b16 %v3238, %v3236
    %v3331 = vpack.c.b16 %v3239, %v3237
    %v3332 = vpack.c.b16 %v3242, %v3240
    %v3333 = vpack.c.b16 %v3243, %v3241
    %v3334 = vpack.c.b16 %v3246, %v3244
    %v3335 = vpack.c.b16 %v3247, %v3245
    %v3336 = vpack.c.b16 %v3250, %v3248
    %v3337 = vpack.c.b16 %v3251, %v3249
    %v3338 = vpack.c.b16 %v3254, %v3252
    %v3339 = vpack.c.b16 %v3255, %v3253
    %v3340 = vpack.c.b16 %v3258, %v3256
    %v3341 = vpack.c.b16 %v3259, %v3257
    %v3342 = vpack.c.b16 %v3262, %v3260
    %v3343 = vpack.c.b16 %v3263, %v3261
    %v3344 = vpack.c.b16 %v3266, %v3264
    %v3345 = vpack.c.b16 %v3267, %v3265
    %v3346 = vpack.c.b16 %v3270, %v3268
    %v3347 = vpack.c.b16 %v3271, %v3269
    %v3348 = vpack.c.b16 %v3274, %v3272
    %v3349 = vpack.c.b16 %v3275, %v3273
    %v3350 = vpack.c.b16 %v3278, %v3276
    %v3351 = vpack.c.b16 %v3279, %v3277
    %v3352 = vpack.c.b16 %v3282, %v3280
    %v3353 = vpack.c.b16 %v3283, %v3281
    %v3354 = vpack.c.b16 %v3286, %v3284
    %v3355 = vpack.c.b16 %v3287, %v3285
    %v3356 = vpack.c.b16 %v3290, %v3288
    %v3357 = vpack.c.b16 %v3291, %v3289
    %v3358 = vpack.c.b16 %v3294, %v3292
    %v3359 = vpack.c.b16 %v3295, %v3293
    %3424 = vmatprep.subr.bf16.mxu0 %v3297
    %3425 = vmatpush1.bf16.msra.mxu0 %v3296
    %3426 = vmatprep.subr.bf16.mxu0 %v3299
    %3427 = vmatpush1.bf16.msra.mxu0 %v3298
    %3428 = vmatprep.subr.bf16.mxu0 %v3301
    %3429 = vmatpush1.bf16.msra.mxu0 %v3300
    %3430 = vmatprep.subr.bf16.mxu0 %v3303
    %3431 = vmatpush1.bf16.msra.mxu0 %v3302
    %3432 = vmatprep.subr.bf16.mxu0 %v3305
    %3433 = vmatpush1.bf16.msra.mxu0 %v3304
    %3434 = vmatprep.subr.bf16.mxu0 %v3307
    %3435 = vmatpush1.bf16.msra.mxu0 %v3306
    %3436 = vmatprep.subr.bf16.mxu0 %v3309
    %3437 = vmatpush1.bf16.msra.mxu0 %v3308
    %3438 = vmatprep.subr.bf16.mxu0 %v3311
    %3439 = vmatpush1.bf16.msra.mxu0 %v3310
    %3440 = vmatprep.subr.bf16.mxu0 %v3313
    %3441 = vmatpush1.bf16.msra.mxu0 %v3312
    %3442 = vmatprep.subr.bf16.mxu0 %v3315
    %3443 = vmatpush1.bf16.msra.mxu0 %v3314
    %3444 = vmatprep.subr.bf16.mxu0 %v3317
    %3445 = vmatpush1.bf16.msra.mxu0 %v3316
    %3446 = vmatprep.subr.bf16.mxu0 %v3319
    %3447 = vmatpush1.bf16.msra.mxu0 %v3318
    %3448 = vmatprep.subr.bf16.mxu0 %v3321
    %3449 = vmatpush1.bf16.msra.mxu0 %v3320
    %3450 = vmatprep.subr.bf16.mxu0 %v3323
    %3451 = vmatpush1.bf16.msra.mxu0 %v3322
    %3452 = vmatprep.subr.bf16.mxu0 %v3325
    %3453 = vmatpush1.bf16.msra.mxu0 %v3324
    %3454 = vmatprep.subr.bf16.mxu0 %v3327
    %3455 = vmatpush1.bf16.msra.mxu0 %v3326
    %3456 = vmatprep.mubr.bf16.mxu0 %v3089
    %3457 = vmatmul.mubr.bf16.gmra.mrb[0].mxu0 %v3088
    %v3458 = vpop.f32.mrb[0].mxu0
    %v3459 = vadd.f32 %v3097, %v3458
    %v3460 = vpop.f32.mrb[0].mxu0
    %v3461 = vadd.f32 %v3101, %v3460
    %v3462 = vpop.f32.mrb[0].mxu0
    %v3463 = vadd.f32 %v3097, %v3462
    %v3464 = vpop.f32.mrb[0].mxu0
    %v3465 = vadd.f32 %v3101, %v3464
    %3466 = vdwg.mxu0
    %3467 = vmatprep.subr.bf16.mxu0 %v3329
    %3468 = vmatpush1.bf16.msra.mxu0 %v3328
    %3469 = vmatprep.subr.bf16.mxu0 %v3331
    %3470 = vmatpush1.bf16.msra.mxu0 %v3330
    %3471 = vmatprep.subr.bf16.mxu0 %v3333
    %3472 = vmatpush1.bf16.msra.mxu0 %v3332
    %3473 = vmatprep.subr.bf16.mxu0 %v3335
    %3474 = vmatpush1.bf16.msra.mxu0 %v3334
    %3475 = vmatprep.subr.bf16.mxu0 %v3337
    %3476 = vmatpush1.bf16.msra.mxu0 %v3336
    %3477 = vmatprep.subr.bf16.mxu0 %v3339
    %3478 = vmatpush1.bf16.msra.mxu0 %v3338
    %3479 = vmatprep.subr.bf16.mxu0 %v3341
    %3480 = vmatpush1.bf16.msra.mxu0 %v3340
    %3481 = vmatprep.subr.bf16.mxu0 %v3343
    %3482 = vmatpush1.bf16.msra.mxu0 %v3342
    %3483 = vmatprep.subr.bf16.mxu0 %v3345
    %3484 = vmatpush1.bf16.msra.mxu0 %v3344
    %3485 = vmatprep.subr.bf16.mxu0 %v3347
    %3486 = vmatpush1.bf16.msra.mxu0 %v3346
    %3487 = vmatprep.subr.bf16.mxu0 %v3349
    %3488 = vmatpush1.bf16.msra.mxu0 %v3348
    %3489 = vmatprep.subr.bf16.mxu0 %v3351
    %3490 = vmatpush1.bf16.msra.mxu0 %v3350
    %3491 = vmatprep.subr.bf16.mxu0 %v3353
    %3492 = vmatpush1.bf16.msra.mxu0 %v3352
    %3493 = vmatprep.subr.bf16.mxu0 %v3355
    %3494 = vmatpush1.bf16.msra.mxu0 %v3354
    %3495 = vmatprep.subr.bf16.mxu0 %v3357
    %3496 = vmatpush1.bf16.msra.mxu0 %v3356
    %3497 = vmatprep.subr.bf16.mxu0 %v3359
    %3498 = vmatpush1.bf16.msra.mxu0 %v3358
    %3499 = vmatprep.mubr.bf16.mxu0 %v3091
    %3500 = vmatmul.mubr.bf16.gmra.mrb[0].mxu0 %v3090
    %v3501 = vpop.f32.mrb[0].mxu0
    %v3502 = vadd.f32 %v3459, %v3501
    %v3503 = vpop.f32.mrb[0].mxu0
    %v3504 = vadd.f32 %v3461, %v3503
    %v3505 = vpop.f32.mrb[0].mxu0
    %v3506 = vadd.f32 %v3463, %v3505
    %v3507 = vpop.f32.mrb[0].mxu0
    %v3508 = vadd.f32 %v3465, %v3507
    %3509 = vdwg.mxu0
    %v3510 = vadd.f32 %v2518, %v3502
    %v3511 = vadd.f32 %v2519, %v3504
    %v3512 = vadd.f32 %v2520, %v3506
    %v3513 = vadd.f32 %v2521, %v3508
    %v3514 = vld [vmem:[%s25] sm:$0x3]
    %v3515 = vld [vmem:[%s27] sm:$0x3]
    %v3516 = vadd.f32 %v3510, %v3511
    %3517 = vadd.xlane.f32.xlu0 %v3516
    %v3518 = vpop.xlane.xlu0 %3517
    %v3519 = vadd.f32 %v3512, %v3513
    %3520 = vadd.xlane.f32.xlu0 %v3519
    %v3521 = vpop.xlane.xlu0 %3520
    %v3522 = vmul.f32 %v3518, %v2465
    %v3523 = vmul.f32 %v3521, %v2465
    %v3524 = vsub.f32 %v3510, %v3522
    %v3525 = vsub.f32 %v3511, %v3522
    %v3526 = vsub.f32 %v3512, %v3523
    %v3527 = vsub.f32 %v3513, %v3523
    %v3528 = vmul.f32 %v3524, %v3524
    %v3529 = vmul.f32 %v3525, %v3525
    %v3530 = vmul.f32 %v3526, %v3526
    %v3531 = vmul.f32 %v3527, %v3527
    %v3532 = vadd.f32 %v3528, %v3529
    %3533 = vadd.xlane.f32.xlu0 %v3532
    %v3534 = vpop.xlane.xlu0 %3533
    %v3535 = vadd.f32 %v3530, %v3531
    %3536 = vadd.xlane.f32.xlu0 %v3535
    %v3537 = vpop.xlane.xlu0 %3536
    %v3538 = vmul.f32 %v3534, %v2465
    %v3539 = vmul.f32 %v3537, %v2465
    %v3540 = vadd.f32 %v3538, 1e-05
    %v3541 = vadd.f32 %v3539, 1e-05
    %v3542 = vrsqrt.pop %v3540
    %v3543 = vrsqrt.pop %v3541
    %v3544 = vmul.f32 %v3524, %v3542
    %v3545 = vmul.f32 %v3525, %v3542
    %v3546 = vmul.f32 %v3526, %v3543
    %v3547 = vmul.f32 %v3527, %v3543
    %v3549 = vlaneseq
    %v3550 = vshrl.u32 %v3549, 7
    %v3551 = vsub.s32 0, %v3550
    %v3552 = vrot.slane %v3514, %v3551
    %v3553 = vlaneseq
    %v3554 = vshrl.u32 %v3553, 7
    %v3555 = vsub.s32 1, %v3554
    %v3556 = vrot.slane %v3514, %v3555
    %v3559 = vmul.f32 %v3544, %v3552
    %v3560 = vmul.f32 %v3545, %v3556
    %v3561 = vmul.f32 %v3546, %v3552
    %v3562 = vmul.f32 %v3547, %v3556
    %v3564 = vlaneseq
    %v3565 = vshrl.u32 %v3564, 7
    %v3566 = vsub.s32 0, %v3565
    %v3567 = vrot.slane %v3515, %v3566
    %v3568 = vlaneseq
    %v3569 = vshrl.u32 %v3568, 7
    %v3570 = vsub.s32 1, %v3569
    %v3571 = vrot.slane %v3515, %v3570
    %v3574 = vadd.f32 %v3559, %v3567
    %v3575 = vadd.f32 %v3560, %v3571
    %v3576 = vadd.f32 %v3561, %v3567
    %v3577 = vadd.f32 %v3562, %v3571
    %v3578 = vld [vmem:[#allocation10] sm:$0xff]
    %v3579 = vld [vmem:[#allocation10 + $0x8] sm:$0xff]
    %v3580 = vld [vmem:[#allocation10 + $0x10] sm:$0xff]
    %v3581 = vld [vmem:[#allocation10 + $0x18] sm:$0xff]
    %v3582 = vld [vmem:[#allocation10 + $0x20] sm:$0xff]
    %v3583 = vld [vmem:[#allocation10 + $0x28] sm:$0xff]
    %v3584 = vld [vmem:[#allocation10 + $0x30] sm:$0xff]
    %v3585 = vld [vmem:[#allocation10 + $0x38] sm:$0xff]
    %v3586 = vld [vmem:[#allocation10 + $0x40] sm:$0xff]
    %v3587 = vld [vmem:[#allocation10 + $0x48] sm:$0xff]
    %v3588 = vld [vmem:[#allocation10 + $0x50] sm:$0xff]
    %v3589 = vld [vmem:[#allocation10 + $0x58] sm:$0xff]
    %v3590 = vld [vmem:[#allocation10 + $0x60] sm:$0xff]
    %v3591 = vld [vmem:[#allocation10 + $0x68] sm:$0xff]
    %v3592 = vld [vmem:[#allocation10 + $0x70] sm:$0xff]
    %v3593 = vld [vmem:[#allocation10 + $0x78] sm:$0xff]
    %v3594 = vld [vmem:[#allocation10 + $0x80] sm:$0xff]
    %v3595 = vld [vmem:[#allocation10 + $0x88] sm:$0xff]
    %v3596 = vld [vmem:[#allocation10 + $0x90] sm:$0xff]
    %v3597 = vld [vmem:[#allocation10 + $0x98] sm:$0xff]
    %v3598 = vld [vmem:[#allocation10 + $0xa0] sm:$0xff]
    %v3599 = vld [vmem:[#allocation10 + $0xa8] sm:$0xff]
    %v3600 = vld [vmem:[#allocation10 + $0xb0] sm:$0xff]
    %v3601 = vld [vmem:[#allocation10 + $0xb8] sm:$0xff]
    %v3602 = vld [vmem:[#allocation10 + $0xc0] sm:$0xff]
    %v3603 = vld [vmem:[#allocation10 + $0xc8] sm:$0xff]
    %v3604 = vld [vmem:[#allocation10 + $0xd0] sm:$0xff]
    %v3605 = vld [vmem:[#allocation10 + $0xd8] sm:$0xff]
    %v3606 = vld [vmem:[#allocation10 + $0xe0] sm:$0xff]
    %v3607 = vld [vmem:[#allocation10 + $0xe8] sm:$0xff]
    %v3608 = vld [vmem:[#allocation10 + $0xf0] sm:$0xff]
    %v3609 = vld [vmem:[#allocation10 + $0xf8] sm:$0xff]
    %v3610 = vld [vmem:[#allocation10 + $0x100] sm:$0xff]
    %v3611 = vld [vmem:[#allocation10 + $0x108] sm:$0xff]
    %v3612 = vld [vmem:[#allocation10 + $0x110] sm:$0xff]
    %v3613 = vld [vmem:[#allocation10 + $0x118] sm:$0xff]
    %v3614 = vld [vmem:[#allocation10 + $0x120] sm:$0xff]
    %v3615 = vld [vmem:[#allocation10 + $0x128] sm:$0xff]
    %v3616 = vld [vmem:[#allocation10 + $0x130] sm:$0xff]
    %v3617 = vld [vmem:[#allocation10 + $0x138] sm:$0xff]
    %v3618 = vld [vmem:[#allocation10 + $0x140] sm:$0xff]
    %v3619 = vld [vmem:[#allocation10 + $0x148] sm:$0xff]
    %v3620 = vld [vmem:[#allocation10 + $0x150] sm:$0xff]
    %v3621 = vld [vmem:[#allocation10 + $0x158] sm:$0xff]
    %v3622 = vld [vmem:[#allocation10 + $0x160] sm:$0xff]
    %v3623 = vld [vmem:[#allocation10 + $0x168] sm:$0xff]
    %v3624 = vld [vmem:[#allocation10 + $0x170] sm:$0xff]
    %v3625 = vld [vmem:[#allocation10 + $0x178] sm:$0xff]
    %v3626 = vld [vmem:[#allocation10 + $0x180] sm:$0xff]
    %v3627 = vld [vmem:[#allocation10 + $0x188] sm:$0xff]
    %v3628 = vld [vmem:[#allocation10 + $0x190] sm:$0xff]
    %v3629 = vld [vmem:[#allocation10 + $0x198] sm:$0xff]
    %v3630 = vld [vmem:[#allocation10 + $0x1a0] sm:$0xff]
    %v3631 = vld [vmem:[#allocation10 + $0x1a8] sm:$0xff]
    %v3632 = vld [vmem:[#allocation10 + $0x1b0] sm:$0xff]
    %v3633 = vld [vmem:[#allocation10 + $0x1b8] sm:$0xff]
    %v3634 = vld [vmem:[#allocation10 + $0x1c0] sm:$0xff]
    %v3635 = vld [vmem:[#allocation10 + $0x1c8] sm:$0xff]
    %v3636 = vld [vmem:[#allocation10 + $0x1d0] sm:$0xff]
    %v3637 = vld [vmem:[#allocation10 + $0x1d8] sm:$0xff]
    %v3638 = vld [vmem:[#allocation10 + $0x1e0] sm:$0xff]
    %v3639 = vld [vmem:[#allocation10 + $0x1e8] sm:$0xff]
    %v3640 = vld [vmem:[#allocation10 + $0x1f0] sm:$0xff]
    %v3641 = vld [vmem:[#allocation10 + $0x1f8] sm:$0xff]
    %v3642 = vld [vmem:[#allocation10 + $0x200] sm:$0xff]
    %v3643 = vld [vmem:[#allocation10 + $0x208] sm:$0xff]
    %v3644 = vld [vmem:[#allocation10 + $0x210] sm:$0xff]
    %v3645 = vld [vmem:[#allocation10 + $0x218] sm:$0xff]
    %v3646 = vld [vmem:[#allocation10 + $0x220] sm:$0xff]
    %v3647 = vld [vmem:[#allocation10 + $0x228] sm:$0xff]
    %v3648 = vld [vmem:[#allocation10 + $0x230] sm:$0xff]
    %v3649 = vld [vmem:[#allocation10 + $0x238] sm:$0xff]
    %v3650 = vld [vmem:[#allocation10 + $0x240] sm:$0xff]
    %v3651 = vld [vmem:[#allocation10 + $0x248] sm:$0xff]
    %v3652 = vld [vmem:[#allocation10 + $0x250] sm:$0xff]
    %v3653 = vld [vmem:[#allocation10 + $0x258] sm:$0xff]
    %v3654 = vld [vmem:[#allocation10 + $0x260] sm:$0xff]
    %v3655 = vld [vmem:[#allocation10 + $0x268] sm:$0xff]
    %v3656 = vld [vmem:[#allocation10 + $0x270] sm:$0xff]
    %v3657 = vld [vmem:[#allocation10 + $0x278] sm:$0xff]
    %v3658 = vld [vmem:[#allocation10 + $0x280] sm:$0xff]
    %v3659 = vld [vmem:[#allocation10 + $0x288] sm:$0xff]
    %v3660 = vld [vmem:[#allocation10 + $0x290] sm:$0xff]
    %v3661 = vld [vmem:[#allocation10 + $0x298] sm:$0xff]
    %v3662 = vld [vmem:[#allocation10 + $0x2a0] sm:$0xff]
    %v3663 = vld [vmem:[#allocation10 + $0x2a8] sm:$0xff]
    %v3664 = vld [vmem:[#allocation10 + $0x2b0] sm:$0xff]
    %v3665 = vld [vmem:[#allocation10 + $0x2b8] sm:$0xff]
    %v3666 = vld [vmem:[#allocation10 + $0x2c0] sm:$0xff]
    %v3667 = vld [vmem:[#allocation10 + $0x2c8] sm:$0xff]
    %v3668 = vld [vmem:[#allocation10 + $0x2d0] sm:$0xff]
    %v3669 = vld [vmem:[#allocation10 + $0x2d8] sm:$0xff]
    %v3670 = vld [vmem:[#allocation10 + $0x2e0] sm:$0xff]
    %v3671 = vld [vmem:[#allocation10 + $0x2e8] sm:$0xff]
    %v3672 = vld [vmem:[#allocation10 + $0x2f0] sm:$0xff]
    %v3673 = vld [vmem:[#allocation10 + $0x2f8] sm:$0xff]
    %v3674 = vpack.c.bf16 %v3576, %v3574
    %v3675 = vpack.c.bf16 %v3577, %v3575
    %v3676 = vld [vmem:[%s31] sm:$0x3f]
    %v3678 = vlaneseq
    %v3679 = vshrl.u32 %v3678, 7
    %v3680 = vsub.s32 0, %v3679
    %v3681 = vrot.slane %v3676, %v3680
    %v3682 = vlaneseq
    %v3683 = vshrl.u32 %v3682, 7
    %v3684 = vsub.s32 1, %v3683
    %v3685 = vrot.slane %v3676, %v3684
    %v3686 = vlaneseq
    %v3687 = vshrl.u32 %v3686, 7
    %v3688 = vsub.s32 2, %v3687
    %v3689 = vrot.slane %v3676, %v3688
    %v3690 = vlaneseq
    %v3691 = vshrl.u32 %v3690, 7
    %v3692 = vsub.s32 3, %v3691
    %v3693 = vrot.slane %v3676, %v3692
    %v3694 = vlaneseq
    %v3695 = vshrl.u32 %v3694, 7
    %v3696 = vsub.s32 4, %v3695
    %v3697 = vrot.slane %v3676, %v3696
    %v3698 = vlaneseq
    %v3699 = vshrl.u32 %v3698, 7
    %v3700 = vsub.s32 5, %v3699
    %v3701 = vrot.slane %v3676, %v3700
    %v3804 = vunpack.c.l.b16 %v3578
    %v3805 = vunpack.c.h.b16 %v3578
    %v3806 = vunpack.c.l.b16 %v3579
    %v3807 = vunpack.c.h.b16 %v3579
    %v3808 = vunpack.c.l.b16 %v3580
    %v3809 = vunpack.c.h.b16 %v3580
    %v3810 = vunpack.c.l.b16 %v3581
    %v3811 = vunpack.c.h.b16 %v3581
    %v3812 = vunpack.c.l.b16 %v3582
    %v3813 = vunpack.c.h.b16 %v3582
    %v3814 = vunpack.c.l.b16 %v3583
    %v3815 = vunpack.c.h.b16 %v3583
    %v3816 = vunpack.c.l.b16 %v3584
    %v3817 = vunpack.c.h.b16 %v3584
    %v3818 = vunpack.c.l.b16 %v3585
    %v3819 = vunpack.c.h.b16 %v3585
    %v3820 = vunpack.c.l.b16 %v3586
    %v3821 = vunpack.c.h.b16 %v3586
    %v3822 = vunpack.c.l.b16 %v3587
    %v3823 = vunpack.c.h.b16 %v3587
    %v3824 = vunpack.c.l.b16 %v3588
    %v3825 = vunpack.c.h.b16 %v3588
    %v3826 = vunpack.c.l.b16 %v3589
    %v3827 = vunpack.c.h.b16 %v3589
    %v3828 = vunpack.c.l.b16 %v3590
    %v3829 = vunpack.c.h.b16 %v3590
    %v3830 = vunpack.c.l.b16 %v3591
    %v3831 = vunpack.c.h.b16 %v3591
    %v3832 = vunpack.c.l.b16 %v3592
    %v3833 = vunpack.c.h.b16 %v3592
    %v3834 = vunpack.c.l.b16 %v3593
    %v3835 = vunpack.c.h.b16 %v3593
    %v3836 = vunpack.c.l.b16 %v3594
    %v3837 = vunpack.c.h.b16 %v3594
    %v3838 = vunpack.c.l.b16 %v3595
    %v3839 = vunpack.c.h.b16 %v3595
    %v3840 = vunpack.c.l.b16 %v3596
    %v3841 = vunpack.c.h.b16 %v3596
    %v3842 = vunpack.c.l.b16 %v3597
    %v3843 = vunpack.c.h.b16 %v3597
    %v3844 = vunpack.c.l.b16 %v3598
    %v3845 = vunpack.c.h.b16 %v3598
    %v3846 = vunpack.c.l.b16 %v3599
    %v3847 = vunpack.c.h.b16 %v3599
    %v3848 = vunpack.c.l.b16 %v3600
    %v3849 = vunpack.c.h.b16 %v3600
    %v3850 = vunpack.c.l.b16 %v3601
    %v3851 = vunpack.c.h.b16 %v3601
    %v3852 = vunpack.c.l.b16 %v3602
    %v3853 = vunpack.c.h.b16 %v3602
    %v3854 = vunpack.c.l.b16 %v3603
    %v3855 = vunpack.c.h.b16 %v3603
    %v3856 = vunpack.c.l.b16 %v3604
    %v3857 = vunpack.c.h.b16 %v3604
    %v3858 = vunpack.c.l.b16 %v3605
    %v3859 = vunpack.c.h.b16 %v3605
    %v3860 = vunpack.c.l.b16 %v3606
    %v3861 = vunpack.c.h.b16 %v3606
    %v3862 = vunpack.c.l.b16 %v3607
    %v3863 = vunpack.c.h.b16 %v3607
    %v3864 = vunpack.c.l.b16 %v3608
    %v3865 = vunpack.c.h.b16 %v3608
    %v3866 = vunpack.c.l.b16 %v3609
    %v3867 = vunpack.c.h.b16 %v3609
    %v3868 = vunpack.c.l.b16 %v3610
    %v3869 = vunpack.c.h.b16 %v3610
    %v3870 = vunpack.c.l.b16 %v3611
    %v3871 = vunpack.c.h.b16 %v3611
    %v3872 = vunpack.c.l.b16 %v3612
    %v3873 = vunpack.c.h.b16 %v3612
    %v3874 = vunpack.c.l.b16 %v3613
    %v3875 = vunpack.c.h.b16 %v3613
    %v3876 = vunpack.c.l.b16 %v3614
    %v3877 = vunpack.c.h.b16 %v3614
    %v3878 = vunpack.c.l.b16 %v3615
    %v3879 = vunpack.c.h.b16 %v3615
    %v3880 = vunpack.c.l.b16 %v3616
    %v3881 = vunpack.c.h.b16 %v3616
    %v3882 = vunpack.c.l.b16 %v3617
    %v3883 = vunpack.c.h.b16 %v3617
    %v3884 = vunpack.c.l.b16 %v3618
    %v3885 = vunpack.c.h.b16 %v3618
    %v3886 = vunpack.c.l.b16 %v3619
    %v3887 = vunpack.c.h.b16 %v3619
    %v3888 = vunpack.c.l.b16 %v3620
    %v3889 = vunpack.c.h.b16 %v3620
    %v3890 = vunpack.c.l.b16 %v3621
    %v3891 = vunpack.c.h.b16 %v3621
    %v3892 = vunpack.c.l.b16 %v3622
    %v3893 = vunpack.c.h.b16 %v3622
    %v3894 = vunpack.c.l.b16 %v3623
    %v3895 = vunpack.c.h.b16 %v3623
    %v3896 = vunpack.c.l.b16 %v3624
    %v3897 = vunpack.c.h.b16 %v3624
    %v3898 = vunpack.c.l.b16 %v3625
    %v3899 = vunpack.c.h.b16 %v3625
    %v3900 = vunpack.c.l.b16 %v3626
    %v3901 = vunpack.c.h.b16 %v3626
    %v3902 = vunpack.c.l.b16 %v3627
    %v3903 = vunpack.c.h.b16 %v3627
    %v3904 = vunpack.c.l.b16 %v3628
    %v3905 = vunpack.c.h.b16 %v3628
    %v3906 = vunpack.c.l.b16 %v3629
    %v3907 = vunpack.c.h.b16 %v3629
    %v3908 = vunpack.c.l.b16 %v3630
    %v3909 = vunpack.c.h.b16 %v3630
    %v3910 = vunpack.c.l.b16 %v3631
    %v3911 = vunpack.c.h.b16 %v3631
    %v3912 = vunpack.c.l.b16 %v3632
    %v3913 = vunpack.c.h.b16 %v3632
    %v3914 = vunpack.c.l.b16 %v3633
    %v3915 = vunpack.c.h.b16 %v3633
    %v3916 = vunpack.c.l.b16 %v3634
    %v3917 = vunpack.c.h.b16 %v3634
    %v3918 = vunpack.c.l.b16 %v3635
    %v3919 = vunpack.c.h.b16 %v3635
    %v3920 = vunpack.c.l.b16 %v3636
    %v3921 = vunpack.c.h.b16 %v3636
    %v3922 = vunpack.c.l.b16 %v3637
    %v3923 = vunpack.c.h.b16 %v3637
    %v3924 = vunpack.c.l.b16 %v3638
    %v3925 = vunpack.c.h.b16 %v3638
    %v3926 = vunpack.c.l.b16 %v3639
    %v3927 = vunpack.c.h.b16 %v3639
    %v3928 = vunpack.c.l.b16 %v3640
    %v3929 = vunpack.c.h.b16 %v3640
    %v3930 = vunpack.c.l.b16 %v3641
    %v3931 = vunpack.c.h.b16 %v3641
    %v3932 = vunpack.c.l.b16 %v3642
    %v3933 = vunpack.c.h.b16 %v3642
    %v3934 = vunpack.c.l.b16 %v3643
    %v3935 = vunpack.c.h.b16 %v3643
    %v3936 = vunpack.c.l.b16 %v3644
    %v3937 = vunpack.c.h.b16 %v3644
    %v3938 = vunpack.c.l.b16 %v3645
    %v3939 = vunpack.c.h.b16 %v3645
    %v3940 = vunpack.c.l.b16 %v3646
    %v3941 = vunpack.c.h.b16 %v3646
    %v3942 = vunpack.c.l.b16 %v3647
    %v3943 = vunpack.c.h.b16 %v3647
    %v3944 = vunpack.c.l.b16 %v3648
    %v3945 = vunpack.c.h.b16 %v3648
    %v3946 = vunpack.c.l.b16 %v3649
    %v3947 = vunpack.c.h.b16 %v3649
    %v3948 = vunpack.c.l.b16 %v3650
    %v3949 = vunpack.c.h.b16 %v3650
    %v3950 = vunpack.c.l.b16 %v3651
    %v3951 = vunpack.c.h.b16 %v3651
    %v3952 = vunpack.c.l.b16 %v3652
    %v3953 = vunpack.c.h.b16 %v3652
    %v3954 = vunpack.c.l.b16 %v3653
    %v3955 = vunpack.c.h.b16 %v3653
    %v3956 = vunpack.c.l.b16 %v3654
    %v3957 = vunpack.c.h.b16 %v3654
    %v3958 = vunpack.c.l.b16 %v3655
    %v3959 = vunpack.c.h.b16 %v3655
    %v3960 = vunpack.c.l.b16 %v3656
    %v3961 = vunpack.c.h.b16 %v3656
    %v3962 = vunpack.c.l.b16 %v3657
    %v3963 = vunpack.c.h.b16 %v3657
    %v3964 = vunpack.c.l.b16 %v3658
    %v3965 = vunpack.c.h.b16 %v3658
    %v3966 = vunpack.c.l.b16 %v3659
    %v3967 = vunpack.c.h.b16 %v3659
    %v3968 = vunpack.c.l.b16 %v3660
    %v3969 = vunpack.c.h.b16 %v3660
    %v3970 = vunpack.c.l.b16 %v3661
    %v3971 = vunpack.c.h.b16 %v3661
    %v3972 = vunpack.c.l.b16 %v3662
    %v3973 = vunpack.c.h.b16 %v3662
    %v3974 = vunpack.c.l.b16 %v3663
    %v3975 = vunpack.c.h.b16 %v3663
    %v3976 = vunpack.c.l.b16 %v3664
    %v3977 = vunpack.c.h.b16 %v3664
    %v3978 = vunpack.c.l.b16 %v3665
    %v3979 = vunpack.c.h.b16 %v3665
    %v3980 = vunpack.c.l.b16 %v3666
    %v3981 = vunpack.c.h.b16 %v3666
    %v3982 = vunpack.c.l.b16 %v3667
    %v3983 = vunpack.c.h.b16 %v3667
    %v3984 = vunpack.c.l.b16 %v3668
    %v3985 = vunpack.c.h.b16 %v3668
    %v3986 = vunpack.c.l.b16 %v3669
    %v3987 = vunpack.c.h.b16 %v3669
    %v3988 = vunpack.c.l.b16 %v3670
    %v3989 = vunpack.c.h.b16 %v3670
    %v3990 = vunpack.c.l.b16 %v3671
    %v3991 = vunpack.c.h.b16 %v3671
    %v3992 = vunpack.c.l.b16 %v3672
    %v3993 = vunpack.c.h.b16 %v3672
    %v3994 = vunpack.c.l.b16 %v3673
    %v3995 = vunpack.c.h.b16 %v3673
    %v3996 = vpack.c.b16 %v3810, %v3804
    %v3997 = vpack.c.b16 %v3811, %v3805
    %v3998 = vpack.c.b16 %v3812, %v3806
    %v3999 = vpack.c.b16 %v3813, %v3807
    %v4000 = vpack.c.b16 %v3814, %v3808
    %v4001 = vpack.c.b16 %v3815, %v3809
    %v4002 = vpack.c.b16 %v3822, %v3816
    %v4003 = vpack.c.b16 %v3823, %v3817
    %v4004 = vpack.c.b16 %v3824, %v3818
    %v4005 = vpack.c.b16 %v3825, %v3819
    %v4006 = vpack.c.b16 %v3826, %v3820
    %v4007 = vpack.c.b16 %v3827, %v3821
    %v4008 = vpack.c.b16 %v3834, %v3828
    %v4009 = vpack.c.b16 %v3835, %v3829
    %v4010 = vpack.c.b16 %v3836, %v3830
    %v4011 = vpack.c.b16 %v3837, %v3831
    %v4012 = vpack.c.b16 %v3838, %v3832
    %v4013 = vpack.c.b16 %v3839, %v3833
    %v4014 = vpack.c.b16 %v3846, %v3840
    %v4015 = vpack.c.b16 %v3847, %v3841
    %v4016 = vpack.c.b16 %v3848, %v3842
    %v4017 = vpack.c.b16 %v3849, %v3843
    %v4018 = vpack.c.b16 %v3850, %v3844
    %v4019 = vpack.c.b16 %v3851, %v3845
    %v4020 = vpack.c.b16 %v3858, %v3852
    %v4021 = vpack.c.b16 %v3859, %v3853
    %v4022 = vpack.c.b16 %v3860, %v3854
    %v4023 = vpack.c.b16 %v3861, %v3855
    %v4024 = vpack.c.b16 %v3862, %v3856
    %v4025 = vpack.c.b16 %v3863, %v3857
    %v4026 = vpack.c.b16 %v3870, %v3864
    %v4027 = vpack.c.b16 %v3871, %v3865
    %v4028 = vpack.c.b16 %v3872, %v3866
    %v4029 = vpack.c.b16 %v3873, %v3867
    %v4030 = vpack.c.b16 %v3874, %v3868
    %v4031 = vpack.c.b16 %v3875, %v3869
    %v4032 = vpack.c.b16 %v3882, %v3876
    %v4033 = vpack.c.b16 %v3883, %v3877
    %v4034 = vpack.c.b16 %v3884, %v3878
    %v4035 = vpack.c.b16 %v3885, %v3879
    %v4036 = vpack.c.b16 %v3886, %v3880
    %v4037 = vpack.c.b16 %v3887, %v3881
    %v4038 = vpack.c.b16 %v3894, %v3888
    %v4039 = vpack.c.b16 %v3895, %v3889
    %v4040 = vpack.c.b16 %v3896, %v3890
    %v4041 = vpack.c.b16 %v3897, %v3891
    %v4042 = vpack.c.b16 %v3898, %v3892
    %v4043 = vpack.c.b16 %v3899, %v3893
    %v4044 = vpack.c.b16 %v3906, %v3900
    %v4045 = vpack.c.b16 %v3907, %v3901
    %v4046 = vpack.c.b16 %v3908, %v3902
    %v4047 = vpack.c.b16 %v3909, %v3903
    %v4048 = vpack.c.b16 %v3910, %v3904
    %v4049 = vpack.c.b16 %v3911, %v3905
    %v4050 = vpack.c.b16 %v3918, %v3912
    %v4051 = vpack.c.b16 %v3919, %v3913
    %v4052 = vpack.c.b16 %v3920, %v3914
    %v4053 = vpack.c.b16 %v3921, %v3915
    %v4054 = vpack.c.b16 %v3922, %v3916
    %v4055 = vpack.c.b16 %v3923, %v3917
    %v4056 = vpack.c.b16 %v3930, %v3924
    %v4057 = vpack.c.b16 %v3931, %v3925
    %v4058 = vpack.c.b16 %v3932, %v3926
    %v4059 = vpack.c.b16 %v3933, %v3927
    %v4060 = vpack.c.b16 %v3934, %v3928
    %v4061 = vpack.c.b16 %v3935, %v3929
    %v4062 = vpack.c.b16 %v3942, %v3936
    %v4063 = vpack.c.b16 %v3943, %v3937
    %v4064 = vpack.c.b16 %v3944, %v3938
    %v4065 = vpack.c.b16 %v3945, %v3939
    %v4066 = vpack.c.b16 %v3946, %v3940
    %v4067 = vpack.c.b16 %v3947, %v3941
    %v4068 = vpack.c.b16 %v3954, %v3948
    %v4069 = vpack.c.b16 %v3955, %v3949
    %v4070 = vpack.c.b16 %v3956, %v3950
    %v4071 = vpack.c.b16 %v3957, %v3951
    %v4072 = vpack.c.b16 %v3958, %v3952
    %v4073 = vpack.c.b16 %v3959, %v3953
    %v4074 = vpack.c.b16 %v3966, %v3960
    %v4075 = vpack.c.b16 %v3967, %v3961
    %v4076 = vpack.c.b16 %v3968, %v3962
    %v4077 = vpack.c.b16 %v3969, %v3963
    %v4078 = vpack.c.b16 %v3970, %v3964
    %v4079 = vpack.c.b16 %v3971, %v3965
    %v4080 = vpack.c.b16 %v3978, %v3972
    %v4081 = vpack.c.b16 %v3979, %v3973
    %v4082 = vpack.c.b16 %v3980, %v3974
    %v4083 = vpack.c.b16 %v3981, %v3975
    %v4084 = vpack.c.b16 %v3982, %v3976
    %v4085 = vpack.c.b16 %v3983, %v3977
    %v4086 = vpack.c.b16 %v3990, %v3984
    %v4087 = vpack.c.b16 %v3991, %v3985
    %v4088 = vpack.c.b16 %v3992, %v3986
    %v4089 = vpack.c.b16 %v3993, %v3987
    %v4090 = vpack.c.b16 %v3994, %v3988
    %v4091 = vpack.c.b16 %v3995, %v3989
    %4188 = vmatprep.subr.bf16.mxu0 %v3997
    %4189 = vmatpush1.bf16.msra.mxu0 %v3996
    %4190 = vmatprep.subr.bf16.mxu0 %v4003
    %4191 = vmatpush1.bf16.msra.mxu0 %v4002
    %4192 = vmatprep.subr.bf16.mxu0 %v4009
    %4193 = vmatpush1.bf16.msra.mxu0 %v4008
    %4194 = vmatprep.subr.bf16.mxu0 %v4015
    %4195 = vmatpush1.bf16.msra.mxu0 %v4014
    %4196 = vmatprep.subr.bf16.mxu0 %v4021
    %4197 = vmatpush1.bf16.msra.mxu0 %v4020
    %4198 = vmatprep.subr.bf16.mxu0 %v4027
    %4199 = vmatpush1.bf16.msra.mxu0 %v4026
    %4200 = vmatprep.subr.bf16.mxu0 %v4033
    %4201 = vmatpush1.bf16.msra.mxu0 %v4032
    %4202 = vmatprep.subr.bf16.mxu0 %v4039
    %4203 = vmatpush1.bf16.msra.mxu0 %v4038
    %4204 = vmatprep.subr.bf16.mxu0 %v4045
    %4205 = vmatpush1.bf16.msra.mxu0 %v4044
    %4206 = vmatprep.subr.bf16.mxu0 %v4051
    %4207 = vmatpush1.bf16.msra.mxu0 %v4050
    %4208 = vmatprep.subr.bf16.mxu0 %v4057
    %4209 = vmatpush1.bf16.msra.mxu0 %v4056
    %4210 = vmatprep.subr.bf16.mxu0 %v4063
    %4211 = vmatpush1.bf16.msra.mxu0 %v4062
    %4212 = vmatprep.subr.bf16.mxu0 %v4069
    %4213 = vmatpush1.bf16.msra.mxu0 %v4068
    %4214 = vmatprep.subr.bf16.mxu0 %v4075
    %4215 = vmatpush1.bf16.msra.mxu0 %v4074
    %4216 = vmatprep.subr.bf16.mxu0 %v4081
    %4217 = vmatpush1.bf16.msra.mxu0 %v4080
    %4218 = vmatprep.subr.bf16.mxu0 %v4087
    %4219 = vmatpush1.bf16.msra.mxu0 %v4086
    %4220 = vmatprep.mubr.bf16.mxu0 %v3675
    %4221 = vmatmul.mubr.bf16.gmra.mrb[0].mxu0 %v3674
    %v4222 = vpop.f32.mrb[0].mxu0
    %v4223 = vadd.f32 %v3681, %v4222
    %v4224 = vpop.f32.mrb[0].mxu0
    %v4225 = vadd.f32 %v3685, %v4224
    %v4226 = vpop.f32.mrb[0].mxu0
    %v4227 = vadd.f32 %v3681, %v4226
    %v4228 = vpop.f32.mrb[0].mxu0
    %v4229 = vadd.f32 %v3685, %v4228
    %4230 = vdwg.mxu0
    %4231 = vmatprep.subr.bf16.mxu0 %v3999
    %4232 = vmatpush1.bf16.msra.mxu0 %v3998
    %4233 = vmatprep.subr.bf16.mxu0 %v4005
    %4234 = vmatpush1.bf16.msra.mxu0 %v4004
    %4235 = vmatprep.subr.bf16.mxu0 %v4011
    %4236 = vmatpush1.bf16.msra.mxu0 %v4010
    %4237 = vmatprep.subr.bf16.mxu0 %v4017
    %4238 = vmatpush1.bf16.msra.mxu0 %v4016
    %4239 = vmatprep.subr.bf16.mxu0 %v4023
    %4240 = vmatpush1.bf16.msra.mxu0 %v4022
    %4241 = vmatprep.subr.bf16.mxu0 %v4029
    %4242 = vmatpush1.bf16.msra.mxu0 %v4028
    %4243 = vmatprep.subr.bf16.mxu0 %v4035
    %4244 = vmatpush1.bf16.msra.mxu0 %v4034
    %4245 = vmatprep.subr.bf16.mxu0 %v4041
    %4246 = vmatpush1.bf16.msra.mxu0 %v4040
    %4247 = vmatprep.subr.bf16.mxu0 %v4047
    %4248 = vmatpush1.bf16.msra.mxu0 %v4046
    %4249 = vmatprep.subr.bf16.mxu0 %v4053
    %4250 = vmatpush1.bf16.msra.mxu0 %v4052
    %4251 = vmatprep.subr.bf16.mxu0 %v4059
    %4252 = vmatpush1.bf16.msra.mxu0 %v4058
    %4253 = vmatprep.subr.bf16.mxu0 %v4065
    %4254 = vmatpush1.bf16.msra.mxu0 %v4064
    %4255 = vmatprep.subr.bf16.mxu0 %v4071
    %4256 = vmatpush1.bf16.msra.mxu0 %v4070
    %4257 = vmatprep.subr.bf16.mxu0 %v4077
    %4258 = vmatpush1.bf16.msra.mxu0 %v4076
    %4259 = vmatprep.subr.bf16.mxu0 %v4083
    %4260 = vmatpush1.bf16.msra.mxu0 %v4082
    %4261 = vmatprep.subr.bf16.mxu0 %v4089
    %4262 = vmatpush1.bf16.msra.mxu0 %v4088
    %4263 = vmatprep.mubr.bf16.mxu0 %v3675
    %4264 = vmatmul.mubr.bf16.gmra.mrb[0].mxu0 %v3674
    %v4265 = vpop.f32.mrb[0].mxu0
    %v4266 = vadd.f32 %v3689, %v4265
    %v4267 = vpop.f32.mrb[0].mxu0
    %v4268 = vadd.f32 %v3693, %v4267
    %v4269 = vpop.f32.mrb[0].mxu0
    %v4270 = vadd.f32 %v3689, %v4269
    %v4271 = vpop.f32.mrb[0].mxu0
    %v4272 = vadd.f32 %v3693, %v4271
    %4273 = vdwg.mxu0
    %4274 = vmatprep.subr.bf16.mxu0 %v4001
    %4275 = vmatpush1.bf16.msra.mxu0 %v4000
    %4276 = vmatprep.subr.bf16.mxu0 %v4007
    %4277 = vmatpush1.bf16.msra.mxu0 %v4006
    %4278 = vmatprep.subr.bf16.mxu0 %v4013
    %4279 = vmatpush1.bf16.msra.mxu0 %v4012
    %4280 = vmatprep.subr.bf16.mxu0 %v4019
    %4281 = vmatpush1.bf16.msra.mxu0 %v4018
    %4282 = vmatprep.subr.bf16.mxu0 %v4025
    %4283 = vmatpush1.bf16.msra.mxu0 %v4024
    %4284 = vmatprep.subr.bf16.mxu0 %v4031
    %4285 = vmatpush1.bf16.msra.mxu0 %v4030
    %4286 = vmatprep.subr.bf16.mxu0 %v4037
    %4287 = vmatpush1.bf16.msra.mxu0 %v4036
    %4288 = vmatprep.subr.bf16.mxu0 %v4043
    %4289 = vmatpush1.bf16.msra.mxu0 %v4042
    %4290 = vmatprep.subr.bf16.mxu0 %v4049
    %4291 = vmatpush1.bf16.msra.mxu0 %v4048
    %4292 = vmatprep.subr.bf16.mxu0 %v4055
    %4293 = vmatpush1.bf16.msra.mxu0 %v4054
    %4294 = vmatprep.subr.bf16.mxu0 %v4061
    %4295 = vmatpush1.bf16.msra.mxu0 %v4060
    %4296 = vmatprep.subr.bf16.mxu0 %v4067
    %4297 = vmatpush1.bf16.msra.mxu0 %v4066
    %4298 = vmatprep.subr.bf16.mxu0 %v4073
    %4299 = vmatpush1.bf16.msra.mxu0 %v4072
    %4300 = vmatprep.subr.bf16.mxu0 %v4079
    %4301 = vmatpush1.bf16.msra.mxu0 %v4078
    %4302 = vmatprep.subr.bf16.mxu0 %v4085
    %4303 = vmatpush1.bf16.msra.mxu0 %v4084
    %4304 = vmatprep.subr.bf16.mxu0 %v4091
    %4305 = vmatpush1.bf16.msra.mxu0 %v4090
    %4306 = vmatprep.mubr.bf16.mxu0 %v3675
    %4307 = vmatmul.mubr.bf16.gmra.mrb[0].mxu0 %v3674
    %v4308 = vpop.f32.mrb[0].mxu0
    %v4309 = vadd.f32 %v3697, %v4308
    %v4310 = vpop.f32.mrb[0].mxu0
    %v4311 = vadd.f32 %v3701, %v4310
    %v4312 = vpop.f32.mrb[0].mxu0
    %v4313 = vadd.f32 %v3697, %v4312
    %v4314 = vpop.f32.mrb[0].mxu0
    %v4315 = vadd.f32 %v3701, %v4314
    %4316 = vdwg.mxu0
    %v4317 = vmul.f32 %v4223, 0.125
    %v4318 = vmul.f32 %v4225, 0.125
    %v4319 = vmul.f32 %v4227, 0.125
    %v4320 = vmul.f32 %v4229, 0.125
    %v4321 = vld [vmem:[%s33] sm:$0xff]
    %v4322 = vld [vmem:[%s33 + $0x8] sm:$0xff]
    %v4323 = vld [vmem:[%s33 + $0x10] sm:$0xff]
    %v4324 = vld [vmem:[%s33 + $0x18] sm:$0xff]
    %v4325 = vld [vmem:[%s33 + $0x20] sm:$0xff]
    %v4326 = vld [vmem:[%s33 + $0x28] sm:$0xff]
    %v4327 = vld [vmem:[%s33 + $0x30] sm:$0xff]
    %v4328 = vld [vmem:[%s33 + $0x38] sm:$0xff]
    %v4329 = vld [vmem:[%s33 + $0x40] sm:$0xff]
    %v4330 = vld [vmem:[%s33 + $0x48] sm:$0xff]
    %v4331 = vld [vmem:[%s33 + $0x50] sm:$0xff]
    %v4332 = vld [vmem:[%s33 + $0x58] sm:$0xff]
    %v4333 = vld [vmem:[%s33 + $0x60] sm:$0xff]
    %v4334 = vld [vmem:[%s33 + $0x68] sm:$0xff]
    %v4335 = vld [vmem:[%s33 + $0x70] sm:$0xff]
    %v4336 = vld [vmem:[%s33 + $0x78] sm:$0xff]
    %v4337 = vld [vmem:[%s33 + $0x80] sm:$0xff]
    %v4338 = vld [vmem:[%s33 + $0x88] sm:$0xff]
    %v4339 = vld [vmem:[%s33 + $0x90] sm:$0xff]
    %v4340 = vld [vmem:[%s33 + $0x98] sm:$0xff]
    %v4341 = vld [vmem:[%s33 + $0xa0] sm:$0xff]
    %v4342 = vld [vmem:[%s33 + $0xa8] sm:$0xff]
    %v4343 = vld [vmem:[%s33 + $0xb0] sm:$0xff]
    %v4344 = vld [vmem:[%s33 + $0xb8] sm:$0xff]
    %v4345 = vld [vmem:[%s33 + $0xc0] sm:$0xff]
    %v4346 = vld [vmem:[%s33 + $0xc8] sm:$0xff]
    %v4347 = vld [vmem:[%s33 + $0xd0] sm:$0xff]
    %v4348 = vld [vmem:[%s33 + $0xd8] sm:$0xff]
    %v4349 = vld [vmem:[%s33 + $0xe0] sm:$0xff]
    %v4350 = vld [vmem:[%s33 + $0xe8] sm:$0xff]
    %v4351 = vld [vmem:[%s33 + $0xf0] sm:$0xff]
    %v4352 = vld [vmem:[%s33 + $0xf8] sm:$0xff]
    %s4353 = sld [smem:[#allocation3]]
    %v4354 = vstv %s4353
    %vm4355 = vcmp.lt.s32.totalorder %v1003, %v4354
    %v4356 = vpack.c.bf16 %v4317, %v4317
    %v4357 = vpack.c.bf16 %v4266, %v4266
    %v4359 = vsel %vm1009, %v4356, 0
    %v4362 = vsel %vm1009, %v4357, 0
    %4364 = vmatprep.subr.bf16.mxu0 0
    %4365 = vmatpush1.bf16.xpose.msra.mxu0 %v4362
    %4366 = vmatprep.subr.bf16.mxu0 0
    %4367 = vmatpush1.bf16.xpose.msra.mxu0 0
    %4368 = vmatprep.subr.bf16.mxu0 0
    %4369 = vmatpush1.bf16.xpose.msra.mxu0 0
    %4370 = vmatprep.subr.bf16.mxu0 0
    %4371 = vmatpush1.bf16.xpose.msra.mxu0 0
    %4372 = vmatprep.subr.bf16.mxu0 0
    %4373 = vmatpush1.bf16.xpose.msra.mxu0 0
    %4374 = vmatprep.subr.bf16.mxu0 0
    %4375 = vmatpush1.bf16.xpose.msra.mxu0 0
    %4376 = vmatprep.subr.bf16.mxu0 0
    %4377 = vmatpush1.bf16.xpose.msra.mxu0 0
    %4378 = vmatprep.subr.bf16.mxu0 0
    %4379 = vmatpush1.bf16.xpose.msra.mxu0 0
    %4380 = vmatprep.subr.bf16.mxu0 0
    %4381 = vmatpush1.bf16.xpose.msra.mxu0 0
    %4382 = vmatprep.subr.bf16.mxu0 0
    %4383 = vmatpush1.bf16.xpose.msra.mxu0 0
    %4384 = vmatprep.subr.bf16.mxu0 0
    %4385 = vmatpush1.bf16.xpose.msra.mxu0 0
    %4386 = vmatprep.subr.bf16.mxu0 0
    %4387 = vmatpush1.bf16.xpose.msra.mxu0 0
    %4388 = vmatprep.subr.bf16.mxu0 0
    %4389 = vmatpush1.bf16.xpose.msra.mxu0 0
    %4390 = vmatprep.subr.bf16.mxu0 0
    %4391 = vmatpush1.bf16.xpose.msra.mxu0 0
    %4392 = vmatprep.subr.bf16.mxu0 0
    %4393 = vmatpush1.bf16.xpose.msra.mxu0 0
    %4394 = vmatprep.subr.bf16.mxu0 0
    %4395 = vmatpush1.bf16.xpose.msra.mxu0 0
    %4396 = vmatprep.mubr.bf16.mxu0 0
    %4397 = vmatmul.mubr.bf16.gmra.mrb[0].mxu0 %v4359
    %v4398 = vpop.f32.mrb[0].mxu0
    %v4399 = vadd.f32 0.0, %v4398
    %v4400 = vpop.f32.mrb[0].mxu0
    %v4401 = vpop.f32.mrb[0].mxu0
    %v4402 = vpop.f32.mrb[0].mxu0
    %4403 = vdwg.mxu0
    %v4404 = vsel %vm4355, %v4399, -1000000.0
    %v4405 = vsel %vm1057, %v4404, -inf
    %4406 = vmax.xlane.f32.xlu0 %v4405
    %v4407 = vpop.xlane.xlu0 %4406
    %v4408 = vsub.f32 %v4404, %v4407
    %v4409 = vmul.f32 %v4408, 1.442695
    %v4410 = vpow.pop %v4409
    %v4411 = vsel %vm1057, %v4410, 0.0
    %4412 = vadd.xlane.f32.xlu0 %v4411
    %v4413 = vpop.xlane.xlu0 %4412
    %v4414 = vrcp.pop %v4413
    %v4415 = vmul.f32 %v4410, %v4414
    %v4416 = vpack.c.bf16 %v4415, %v4415
    %v4417 = vpack.c.bf16 %v4309, %v4309
    %v4419 = vsel %vm1057, %v4416, 0
    %v4422 = vsel %vm1074, %v4417, 0
    %4424 = vmatprep.subr.bf16.mxu0 0
    %4425 = vmatpush1.bf16.msra.mxu0 %v4422
    %4426 = vmatprep.subr.bf16.mxu0 0
    %4427 = vmatpush1.bf16.msra.mxu0 0
    %4428 = vmatprep.subr.bf16.mxu0 0
    %4429 = vmatpush1.bf16.msra.mxu0 0
    %4430 = vmatprep.subr.bf16.mxu0 0
    %4431 = vmatpush1.bf16.msra.mxu0 0
    %4432 = vmatprep.subr.bf16.mxu0 0
    %4433 = vmatpush1.bf16.msra.mxu0 0
    %4434 = vmatprep.subr.bf16.mxu0 0
    %4435 = vmatpush1.bf16.msra.mxu0 0
    %4436 = vmatprep.subr.bf16.mxu0 0
    %4437 = vmatpush1.bf16.msra.mxu0 0
    %4438 = vmatprep.subr.bf16.mxu0 0
    %4439 = vmatpush1.bf16.msra.mxu0 0
    %4440 = vmatprep.subr.bf16.mxu0 0
    %4441 = vmatpush1.bf16.msra.mxu0 0
    %4442 = vmatprep.subr.bf16.mxu0 0
    %4443 = vmatpush1.bf16.msra.mxu0 0
    %4444 = vmatprep.subr.bf16.mxu0 0
    %4445 = vmatpush1.bf16.msra.mxu0 0
    %4446 = vmatprep.subr.bf16.mxu0 0
    %4447 = vmatpush1.bf16.msra.mxu0 0
    %4448 = vmatprep.subr.bf16.mxu0 0
    %4449 = vmatpush1.bf16.msra.mxu0 0
    %4450 = vmatprep.subr.bf16.mxu0 0
    %4451 = vmatpush1.bf16.msra.mxu0 0
    %4452 = vmatprep.subr.bf16.mxu0 0
    %4453 = vmatpush1.bf16.msra.mxu0 0
    %4454 = vmatprep.subr.bf16.mxu0 0
    %4455 = vmatpush1.bf16.msra.mxu0 0
    %4456 = vmatprep.mubr.bf16.mxu0 0
    %4457 = vmatmul.mubr.bf16.gmra.mrb[0].mxu0 %v4419
    %v4458 = vpop.f32.mrb[0].mxu0
    %v4459 = vadd.f32 0.0, %v4458
    %v4460 = vpop.f32.mrb[0].mxu0
    %v4461 = vpop.f32.mrb[0].mxu0
    %v4462 = vpop.f32.mrb[0].mxu0
    %4463 = vdwg.mxu0
    %v4464 = vpack.c.bf16 %v4459, %v4459
    %4466 = vrot.lane.b32.xlu0 %v4356, 64
    %v4467 = vpop.permute.xlu0 %4466
    %4469 = vrot.lane.b32.xlu0 %v4357, 64
    %v4470 = vpop.permute.xlu0 %4469
    %v4472 = vsel %vm1009, %v4467, 0
    %v4475 = vsel %vm1009, %v4470, 0
    %4477 = vmatprep.subr.bf16.mxu0 0
    %4478 = vmatpush1.bf16.xpose.msra.mxu0 %v4475
    %4479 = vmatprep.subr.bf16.mxu0 0
    %4480 = vmatpush1.bf16.xpose.msra.mxu0 0
    %4481 = vmatprep.subr.bf16.mxu0 0
    %4482 = vmatpush1.bf16.xpose.msra.mxu0 0
    %4483 = vmatprep.subr.bf16.mxu0 0
    %4484 = vmatpush1.bf16.xpose.msra.mxu0 0
    %4485 = vmatprep.subr.bf16.mxu0 0
    %4486 = vmatpush1.bf16.xpose.msra.mxu0 0
    %4487 = vmatprep.subr.bf16.mxu0 0
    %4488 = vmatpush1.bf16.xpose.msra.mxu0 0
    %4489 = vmatprep.subr.bf16.mxu0 0
    %4490 = vmatpush1.bf16.xpose.msra.mxu0 0
    %4491 = vmatprep.subr.bf16.mxu0 0
    %4492 = vmatpush1.bf16.xpose.msra.mxu0 0
    %4493 = vmatprep.subr.bf16.mxu0 0
    %4494 = vmatpush1.bf16.xpose.msra.mxu0 0
    %4495 = vmatprep.subr.bf16.mxu0 0
    %4496 = vmatpush1.bf16.xpose.msra.mxu0 0
    %4497 = vmatprep.subr.bf16.mxu0 0
    %4498 = vmatpush1.bf16.xpose.msra.mxu0 0
    %4499 = vmatprep.subr.bf16.mxu0 0
    %4500 = vmatpush1.bf16.xpose.msra.mxu0 0
    %4501 = vmatprep.subr.bf16.mxu0 0
    %4502 = vmatpush1.bf16.xpose.msra.mxu0 0
    %4503 = vmatprep.subr.bf16.mxu0 0
    %4504 = vmatpush1.bf16.xpose.msra.mxu0 0
    %4505 = vmatprep.subr.bf16.mxu0 0
    %4506 = vmatpush1.bf16.xpose.msra.mxu0 0
    %4507 = vmatprep.subr.bf16.mxu0 0
    %4508 = vmatpush1.bf16.xpose.msra.mxu0 0
    %4509 = vmatprep.mubr.bf16.mxu0 0
    %4510 = vmatmul.mubr.bf16.gmra.mrb[0].mxu0 %v4472
    %v4511 = vpop.f32.mrb[0].mxu0
    %v4512 = vadd.f32 0.0, %v4511
    %v4513 = vpop.f32.mrb[0].mxu0
    %v4514 = vpop.f32.mrb[0].mxu0
    %v4515 = vpop.f32.mrb[0].mxu0
    %4516 = vdwg.mxu0
    %v4517 = vsel %vm4355, %v4512, -1000000.0
    %v4518 = vsel %vm1057, %v4517, -inf
    %4519 = vmax.xlane.f32.xlu0 %v4518
    %v4520 = vpop.xlane.xlu0 %4519
    %v4521 = vsub.f32 %v4517, %v4520
    %v4522 = vmul.f32 %v4521, 1.442695
    %v4523 = vpow.pop %v4522
    %v4524 = vsel %vm1057, %v4523, 0.0
    %4525 = vadd.xlane.f32.xlu0 %v4524
    %v4526 = vpop.xlane.xlu0 %4525
    %v4527 = vrcp.pop %v4526
    %v4528 = vmul.f32 %v4523, %v4527
    %v4529 = vpack.c.bf16 %v4528, %v4528
    %4531 = vrot.lane.b32.xlu0 %v4417, 64
    %v4532 = vpop.permute.xlu0 %4531
    %v4534 = vsel %vm1057, %v4529, 0
    %v4537 = vsel %vm1074, %v4532, 0
    %4539 = vmatprep.subr.bf16.mxu0 0
    %4540 = vmatpush1.bf16.msra.mxu0 %v4537
    %4541 = vmatprep.subr.bf16.mxu0 0
    %4542 = vmatpush1.bf16.msra.mxu0 0
    %4543 = vmatprep.subr.bf16.mxu0 0
    %4544 = vmatpush1.bf16.msra.mxu0 0
    %4545 = vmatprep.subr.bf16.mxu0 0
    %4546 = vmatpush1.bf16.msra.mxu0 0
    %4547 = vmatprep.subr.bf16.mxu0 0
    %4548 = vmatpush1.bf16.msra.mxu0 0
    %4549 = vmatprep.subr.bf16.mxu0 0
    %4550 = vmatpush1.bf16.msra.mxu0 0
    %4551 = vmatprep.subr.bf16.mxu0 0
    %4552 = vmatpush1.bf16.msra.mxu0 0
    %4553 = vmatprep.subr.bf16.mxu0 0
    %4554 = vmatpush1.bf16.msra.mxu0 0
    %4555 = vmatprep.subr.bf16.mxu0 0
    %4556 = vmatpush1.bf16.msra.mxu0 0
    %4557 = vmatprep.subr.bf16.mxu0 0
    %4558 = vmatpush1.bf16.msra.mxu0 0
    %4559 = vmatprep.subr.bf16.mxu0 0
    %4560 = vmatpush1.bf16.msra.mxu0 0
    %4561 = vmatprep.subr.bf16.mxu0 0
    %4562 = vmatpush1.bf16.msra.mxu0 0
    %4563 = vmatprep.subr.bf16.mxu0 0
    %4564 = vmatpush1.bf16.msra.mxu0 0
    %4565 = vmatprep.subr.bf16.mxu0 0
    %4566 = vmatpush1.bf16.msra.mxu0 0
    %4567 = vmatprep.subr.bf16.mxu0 0
    %4568 = vmatpush1.bf16.msra.mxu0 0
    %4569 = vmatprep.subr.bf16.mxu0 0
    %4570 = vmatpush1.bf16.msra.mxu0 0
    %4571 = vmatprep.mubr.bf16.mxu0 0
    %4572 = vmatmul.mubr.bf16.gmra.mrb[0].mxu0 %v4534
    %v4573 = vpop.f32.mrb[0].mxu0
    %v4574 = vadd.f32 0.0, %v4573
    %v4575 = vpop.f32.mrb[0].mxu0
    %v4576 = vpop.f32.mrb[0].mxu0
    %v4577 = vpop.f32.mrb[0].mxu0
    %4578 = vdwg.mxu0
    %v4579 = vpack.c.bf16 %v4574, %v4574
    %v4588 = vunpack.c.l.b16 %v4329
    %v4589 = vunpack.c.h.b16 %v4329
    %v4590 = vunpack.c.l.b16 %v4330
    %v4591 = vunpack.c.h.b16 %v4330
    %v4592 = vunpack.c.l.b16 %v4331
    %v4593 = vunpack.c.h.b16 %v4331
    %v4594 = vunpack.c.l.b16 %v4332
    %v4595 = vunpack.c.h.b16 %v4332
    %v4596 = vunpack.c.l.b16 %v4333
    %v4597 = vunpack.c.h.b16 %v4333
    %v4598 = vunpack.c.l.b16 %v4334
    %v4599 = vunpack.c.h.b16 %v4334
    %v4600 = vunpack.c.l.b16 %v4335
    %v4601 = vunpack.c.h.b16 %v4335
    %v4602 = vunpack.c.l.b16 %v4336
    %v4603 = vunpack.c.h.b16 %v4336
    %v4604 = vpack.c.b16 %v4590, %v4588
    %v4605 = vpack.c.b16 %v4591, %v4589
    %v4606 = vpack.c.b16 %v4594, %v4592
    %v4607 = vpack.c.b16 %v4595, %v4593
    %v4608 = vpack.c.b16 %v4598, %v4596
    %v4609 = vpack.c.b16 %v4599, %v4597
    %v4610 = vpack.c.b16 %v4602, %v4600
    %v4611 = vpack.c.b16 %v4603, %v4601
    %v4621 = vsel %vm1009, %v4579, 0
    %4623 = vmatprep.subr.bf16.mxu0 %v4605
    %4624 = vmatpush1.bf16.msra.mxu0 %v4604
    %4625 = vmatprep.subr.bf16.mxu0 %v4607
    %4626 = vmatpush1.bf16.msra.mxu0 %v4606
    %4627 = vmatprep.subr.bf16.mxu0 %v4609
    %4628 = vmatpush1.bf16.msra.mxu0 %v4608
    %4629 = vmatprep.subr.bf16.mxu0 %v4611
    %4630 = vmatpush1.bf16.msra.mxu0 %v4610
    %4631 = vmatprep.subr.bf16.mxu0 0
    %4632 = vmatpush1.bf16.msra.mxu0 0
    %4633 = vmatprep.subr.bf16.mxu0 0
    %4634 = vmatpush1.bf16.msra.mxu0 0
    %4635 = vmatprep.subr.bf16.mxu0 0
    %4636 = vmatpush1.bf16.msra.mxu0 0
    %4637 = vmatprep.subr.bf16.mxu0 0
    %4638 = vmatpush1.bf16.msra.mxu0 0
    %4639 = vmatprep.subr.bf16.mxu0 0
    %4640 = vmatpush1.bf16.msra.mxu0 0
    %4641 = vmatprep.subr.bf16.mxu0 0
    %4642 = vmatpush1.bf16.msra.mxu0 0
    %4643 = vmatprep.subr.bf16.mxu0 0
    %4644 = vmatpush1.bf16.msra.mxu0 0
    %4645 = vmatprep.subr.bf16.mxu0 0
    %4646 = vmatpush1.bf16.msra.mxu0 0
    %4647 = vmatprep.subr.bf16.mxu0 0
    %4648 = vmatpush1.bf16.msra.mxu0 0
    %4649 = vmatprep.subr.bf16.mxu0 0
    %4650 = vmatpush1.bf16.msra.mxu0 0
    %4651 = vmatprep.subr.bf16.mxu0 0
    %4652 = vmatpush1.bf16.msra.mxu0 0
    %4653 = vmatprep.subr.bf16.mxu0 0
    %4654 = vmatpush1.bf16.msra.mxu0 0
    %4655 = vmatprep.mubr.bf16.mxu0 0
    %4656 = vmatmul.mubr.bf16.gmra.mrb[0].mxu0 %v4621
    %v4657 = vpop.f32.mrb[0].mxu0
    %v4658 = vadd.f32 0.0, %v4657
    %v4659 = vpop.f32.mrb[0].mxu0
    %v4660 = vadd.f32 0.0, %v4659
    %v4661 = vpop.f32.mrb[0].mxu0
    %v4662 = vpop.f32.mrb[0].mxu0
    %4663 = vdwg.mxu0
    %v4672 = vunpack.c.l.b16 %v4321
    %v4673 = vunpack.c.h.b16 %v4321
    %v4674 = vunpack.c.l.b16 %v4322
    %v4675 = vunpack.c.h.b16 %v4322
    %v4676 = vunpack.c.l.b16 %v4323
    %v4677 = vunpack.c.h.b16 %v4323
    %v4678 = vunpack.c.l.b16 %v4324
    %v4679 = vunpack.c.h.b16 %v4324
    %v4680 = vunpack.c.l.b16 %v4325
    %v4681 = vunpack.c.h.b16 %v4325
    %v4682 = vunpack.c.l.b16 %v4326
    %v4683 = vunpack.c.h.b16 %v4326
    %v4684 = vunpack.c.l.b16 %v4327
    %v4685 = vunpack.c.h.b16 %v4327
    %v4686 = vunpack.c.l.b16 %v4328
    %v4687 = vunpack.c.h.b16 %v4328
    %v4688 = vpack.c.b16 %v4674, %v4672
    %v4689 = vpack.c.b16 %v4675, %v4673
    %v4690 = vpack.c.b16 %v4678, %v4676
    %v4691 = vpack.c.b16 %v4679, %v4677
    %v4692 = vpack.c.b16 %v4682, %v4680
    %v4693 = vpack.c.b16 %v4683, %v4681
    %v4694 = vpack.c.b16 %v4686, %v4684
    %v4695 = vpack.c.b16 %v4687, %v4685
    %v4705 = vsel %vm1009, %v4464, 0
    %4707 = vmatprep.subr.bf16.mxu0 %v4689
    %4708 = vmatpush1.bf16.msra.mxu0 %v4688
    %4709 = vmatprep.subr.bf16.mxu0 %v4691
    %4710 = vmatpush1.bf16.msra.mxu0 %v4690
    %4711 = vmatprep.subr.bf16.mxu0 %v4693
    %4712 = vmatpush1.bf16.msra.mxu0 %v4692
    %4713 = vmatprep.subr.bf16.mxu0 %v4695
    %4714 = vmatpush1.bf16.msra.mxu0 %v4694
    %4715 = vmatprep.subr.bf16.mxu0 0
    %4716 = vmatpush1.bf16.msra.mxu0 0
    %4717 = vmatprep.subr.bf16.mxu0 0
    %4718 = vmatpush1.bf16.msra.mxu0 0
    %4719 = vmatprep.subr.bf16.mxu0 0
    %4720 = vmatpush1.bf16.msra.mxu0 0
    %4721 = vmatprep.subr.bf16.mxu0 0
    %4722 = vmatpush1.bf16.msra.mxu0 0
    %4723 = vmatprep.subr.bf16.mxu0 0
    %4724 = vmatpush1.bf16.msra.mxu0 0
    %4725 = vmatprep.subr.bf16.mxu0 0
    %4726 = vmatpush1.bf16.msra.mxu0 0
    %4727 = vmatprep.subr.bf16.mxu0 0
    %4728 = vmatpush1.bf16.msra.mxu0 0
    %4729 = vmatprep.subr.bf16.mxu0 0
    %4730 = vmatpush1.bf16.msra.mxu0 0
    %4731 = vmatprep.subr.bf16.mxu0 0
    %4732 = vmatpush1.bf16.msra.mxu0 0
    %4733 = vmatprep.subr.bf16.mxu0 0
    %4734 = vmatpush1.bf16.msra.mxu0 0
    %4735 = vmatprep.subr.bf16.mxu0 0
    %4736 = vmatpush1.bf16.msra.mxu0 0
    %4737 = vmatprep.subr.bf16.mxu0 0
    %4738 = vmatpush1.bf16.msra.mxu0 0
    %4739 = vmatprep.mubr.bf16.mxu0 0
    %4740 = vmatmul.mubr.bf16.gmra.mrb[0].mxu0 %v4705
    %v4741 = vpop.f32.mrb[0].mxu0
    %v4742 = vadd.f32 %v4658, %v4741
    %v4743 = vpop.f32.mrb[0].mxu0
    %v4744 = vadd.f32 %v4660, %v4743
    %v4745 = vpop.f32.mrb[0].mxu0
    %v4746 = vpop.f32.mrb[0].mxu0
    %4747 = vdwg.mxu0
    %v4748 = vpack.c.bf16 %v4318, %v4318
    %v4749 = vpack.c.bf16 %v4268, %v4268
    %v4751 = vsel %vm1009, %v4748, 0
    %v4754 = vsel %vm1009, %v4749, 0
    %4756 = vmatprep.subr.bf16.mxu0 0
    %4757 = vmatpush1.bf16.xpose.msra.mxu0 %v4754
    %4758 = vmatprep.subr.bf16.mxu0 0
    %4759 = vmatpush1.bf16.xpose.msra.mxu0 0
    %4760 = vmatprep.subr.bf16.mxu0 0
    %4761 = vmatpush1.bf16.xpose.msra.mxu0 0
    %4762 = vmatprep.subr.bf16.mxu0 0
    %4763 = vmatpush1.bf16.xpose.msra.mxu0 0
    %4764 = vmatprep.subr.bf16.mxu0 0
    %4765 = vmatpush1.bf16.xpose.msra.mxu0 0
    %4766 = vmatprep.subr.bf16.mxu0 0
    %4767 = vmatpush1.bf16.xpose.msra.mxu0 0
    %4768 = vmatprep.subr.bf16.mxu0 0
    %4769 = vmatpush1.bf16.xpose.msra.mxu0 0
    %4770 = vmatprep.subr.bf16.mxu0 0
    %4771 = vmatpush1.bf16.xpose.msra.mxu0 0
    %4772 = vmatprep.subr.bf16.mxu0 0
    %4773 = vmatpush1.bf16.xpose.msra.mxu0 0
    %4774 = vmatprep.subr.bf16.mxu0 0
    %4775 = vmatpush1.bf16.xpose.msra.mxu0 0
    %4776 = vmatprep.subr.bf16.mxu0 0
    %4777 = vmatpush1.bf16.xpose.msra.mxu0 0
    %4778 = vmatprep.subr.bf16.mxu0 0
    %4779 = vmatpush1.bf16.xpose.msra.mxu0 0
    %4780 = vmatprep.subr.bf16.mxu0 0
    %4781 = vmatpush1.bf16.xpose.msra.mxu0 0
    %4782 = vmatprep.subr.bf16.mxu0 0
    %4783 = vmatpush1.bf16.xpose.msra.mxu0 0
    %4784 = vmatprep.subr.bf16.mxu0 0
    %4785 = vmatpush1.bf16.xpose.msra.mxu0 0
    %4786 = vmatprep.subr.bf16.mxu0 0
    %4787 = vmatpush1.bf16.xpose.msra.mxu0 0
    %4788 = vmatprep.mubr.bf16.mxu0 0
    %4789 = vmatmul.mubr.bf16.gmra.mrb[0].mxu0 %v4751
    %v4790 = vpop.f32.mrb[0].mxu0
    %v4791 = vadd.f32 0.0, %v4790
    %v4792 = vpop.f32.mrb[0].mxu0
    %v4793 = vpop.f32.mrb[0].mxu0
    %v4794 = vpop.f32.mrb[0].mxu0
    %4795 = vdwg.mxu0
    %v4796 = vsel %vm4355, %v4791, -1000000.0
    %v4797 = vsel %vm1057, %v4796, -inf
    %4798 = vmax.xlane.f32.xlu0 %v4797
    %v4799 = vpop.xlane.xlu0 %4798
    %v4800 = vsub.f32 %v4796, %v4799
    %v4801 = vmul.f32 %v4800, 1.442695
    %v4802 = vpow.pop %v4801
    %v4803 = vsel %vm1057, %v4802, 0.0
    %4804 = vadd.xlane.f32.xlu0 %v4803
    %v4805 = vpop.xlane.xlu0 %4804
    %v4806 = vrcp.pop %v4805
    %v4807 = vmul.f32 %v4802, %v4806
    %v4808 = vpack.c.bf16 %v4807, %v4807
    %v4809 = vpack.c.bf16 %v4311, %v4311
    %v4811 = vsel %vm1057, %v4808, 0
    %v4814 = vsel %vm1074, %v4809, 0
    %4816 = vmatprep.subr.bf16.mxu0 0
    %4817 = vmatpush1.bf16.msra.mxu0 %v4814
    %4818 = vmatprep.subr.bf16.mxu0 0
    %4819 = vmatpush1.bf16.msra.mxu0 0
    %4820 = vmatprep.subr.bf16.mxu0 0
    %4821 = vmatpush1.bf16.msra.mxu0 0
    %4822 = vmatprep.subr.bf16.mxu0 0
    %4823 = vmatpush1.bf16.msra.mxu0 0
    %4824 = vmatprep.subr.bf16.mxu0 0
    %4825 = vmatpush1.bf16.msra.mxu0 0
    %4826 = vmatprep.subr.bf16.mxu0 0
    %4827 = vmatpush1.bf16.msra.mxu0 0
    %4828 = vmatprep.subr.bf16.mxu0 0
    %4829 = vmatpush1.bf16.msra.mxu0 0
    %4830 = vmatprep.subr.bf16.mxu0 0
    %4831 = vmatpush1.bf16.msra.mxu0 0
    %4832 = vmatprep.subr.bf16.mxu0 0
    %4833 = vmatpush1.bf16.msra.mxu0 0
    %4834 = vmatprep.subr.bf16.mxu0 0
    %4835 = vmatpush1.bf16.msra.mxu0 0
    %4836 = vmatprep.subr.bf16.mxu0 0
    %4837 = vmatpush1.bf16.msra.mxu0 0
    %4838 = vmatprep.subr.bf16.mxu0 0
    %4839 = vmatpush1.bf16.msra.mxu0 0
    %4840 = vmatprep.subr.bf16.mxu0 0
    %4841 = vmatpush1.bf16.msra.mxu0 0
    %4842 = vmatprep.subr.bf16.mxu0 0
    %4843 = vmatpush1.bf16.msra.mxu0 0
    %4844 = vmatprep.subr.bf16.mxu0 0
    %4845 = vmatpush1.bf16.msra.mxu0 0
    %4846 = vmatprep.subr.bf16.mxu0 0
    %4847 = vmatpush1.bf16.msra.mxu0 0
    %4848 = vmatprep.mubr.bf16.mxu0 0
    %4849 = vmatmul.mubr.bf16.gmra.mrb[0].mxu0 %v4811
    %v4850 = vpop.f32.mrb[0].mxu0
    %v4851 = vadd.f32 0.0, %v4850
    %v4852 = vpop.f32.mrb[0].mxu0
    %v4853 = vpop.f32.mrb[0].mxu0
    %v4854 = vpop.f32.mrb[0].mxu0
    %4855 = vdwg.mxu0
    %v4856 = vpack.c.bf16 %v4851, %v4851
    %v4865 = vunpack.c.l.b16 %v4337
    %v4866 = vunpack.c.h.b16 %v4337
    %v4867 = vunpack.c.l.b16 %v4338
    %v4868 = vunpack.c.h.b16 %v4338
    %v4869 = vunpack.c.l.b16 %v4339
    %v4870 = vunpack.c.h.b16 %v4339
    %v4871 = vunpack.c.l.b16 %v4340
    %v4872 = vunpack.c.h.b16 %v4340
    %v4873 = vunpack.c.l.b16 %v4341
    %v4874 = vunpack.c.h.b16 %v4341
    %v4875 = vunpack.c.l.b16 %v4342
    %v4876 = vunpack.c.h.b16 %v4342
    %v4877 = vunpack.c.l.b16 %v4343
    %v4878 = vunpack.c.h.b16 %v4343
    %v4879 = vunpack.c.l.b16 %v4344
    %v4880 = vunpack.c.h.b16 %v4344
    %v4881 = vpack.c.b16 %v4867, %v4865
    %v4882 = vpack.c.b16 %v4868, %v4866
    %v4883 = vpack.c.b16 %v4871, %v4869
    %v4884 = vpack.c.b16 %v4872, %v4870
    %v4885 = vpack.c.b16 %v4875, %v4873
    %v4886 = vpack.c.b16 %v4876, %v4874
    %v4887 = vpack.c.b16 %v4879, %v4877
    %v4888 = vpack.c.b16 %v4880, %v4878
    %v4898 = vsel %vm1009, %v4856, 0
    %4900 = vmatprep.subr.bf16.mxu0 %v4882
    %4901 = vmatpush1.bf16.msra.mxu0 %v4881
    %4902 = vmatprep.subr.bf16.mxu0 %v4884
    %4903 = vmatpush1.bf16.msra.mxu0 %v4883
    %4904 = vmatprep.subr.bf16.mxu0 %v4886
    %4905 = vmatpush1.bf16.msra.mxu0 %v4885
    %4906 = vmatprep.subr.bf16.mxu0 %v4888
    %4907 = vmatpush1.bf16.msra.mxu0 %v4887
    %4908 = vmatprep.subr.bf16.mxu0 0
    %4909 = vmatpush1.bf16.msra.mxu0 0
    %4910 = vmatprep.subr.bf16.mxu0 0
    %4911 = vmatpush1.bf16.msra.mxu0 0
    %4912 = vmatprep.subr.bf16.mxu0 0
    %4913 = vmatpush1.bf16.msra.mxu0 0
    %4914 = vmatprep.subr.bf16.mxu0 0
    %4915 = vmatpush1.bf16.msra.mxu0 0
    %4916 = vmatprep.subr.bf16.mxu0 0
    %4917 = vmatpush1.bf16.msra.mxu0 0
    %4918 = vmatprep.subr.bf16.mxu0 0
    %4919 = vmatpush1.bf16.msra.mxu0 0
    %4920 = vmatprep.subr.bf16.mxu0 0
    %4921 = vmatpush1.bf16.msra.mxu0 0
    %4922 = vmatprep.subr.bf16.mxu0 0
    %4923 = vmatpush1.bf16.msra.mxu0 0
    %4924 = vmatprep.subr.bf16.mxu0 0
    %4925 = vmatpush1.bf16.msra.mxu0 0
    %4926 = vmatprep.subr.bf16.mxu0 0
    %4927 = vmatpush1.bf16.msra.mxu0 0
    %4928 = vmatprep.subr.bf16.mxu0 0
    %4929 = vmatpush1.bf16.msra.mxu0 0
    %4930 = vmatprep.subr.bf16.mxu0 0
    %4931 = vmatpush1.bf16.msra.mxu0 0
    %4932 = vmatprep.mubr.bf16.mxu0 0
    %4933 = vmatmul.mubr.bf16.gmra.mrb[0].mxu0 %v4898
    %v4934 = vpop.f32.mrb[0].mxu0
    %v4935 = vadd.f32 0.0, %v4934
    %v4936 = vpop.f32.mrb[0].mxu0
    %v4937 = vadd.f32 0.0, %v4936
    %v4938 = vpop.f32.mrb[0].mxu0
    %v4939 = vpop.f32.mrb[0].mxu0
    %4940 = vdwg.mxu0
    %v4941 = vadd.f32 %v4742, %v4935
    %v4942 = vadd.f32 %v4744, %v4937
    %4944 = vrot.lane.b32.xlu0 %v4748, 64
    %v4945 = vpop.permute.xlu0 %4944
    %4947 = vrot.lane.b32.xlu0 %v4749, 64
    %v4948 = vpop.permute.xlu0 %4947
    %v4950 = vsel %vm1009, %v4945, 0
    %v4953 = vsel %vm1009, %v4948, 0
    %4955 = vmatprep.subr.bf16.mxu0 0
    %4956 = vmatpush1.bf16.xpose.msra.mxu0 %v4953
    %4957 = vmatprep.subr.bf16.mxu0 0
    %4958 = vmatpush1.bf16.xpose.msra.mxu0 0
    %4959 = vmatprep.subr.bf16.mxu0 0
    %4960 = vmatpush1.bf16.xpose.msra.mxu0 0
    %4961 = vmatprep.subr.bf16.mxu0 0
    %4962 = vmatpush1.bf16.xpose.msra.mxu0 0
    %4963 = vmatprep.subr.bf16.mxu0 0
    %4964 = vmatpush1.bf16.xpose.msra.mxu0 0
    %4965 = vmatprep.subr.bf16.mxu0 0
    %4966 = vmatpush1.bf16.xpose.msra.mxu0 0
    %4967 = vmatprep.subr.bf16.mxu0 0
    %4968 = vmatpush1.bf16.xpose.msra.mxu0 0
    %4969 = vmatprep.subr.bf16.mxu0 0
    %4970 = vmatpush1.bf16.xpose.msra.mxu0 0
    %4971 = vmatprep.subr.bf16.mxu0 0
    %4972 = vmatpush1.bf16.xpose.msra.mxu0 0
    %4973 = vmatprep.subr.bf16.mxu0 0
    %4974 = vmatpush1.bf16.xpose.msra.mxu0 0
    %4975 = vmatprep.subr.bf16.mxu0 0
    %4976 = vmatpush1.bf16.xpose.msra.mxu0 0
    %4977 = vmatprep.subr.bf16.mxu0 0
    %4978 = vmatpush1.bf16.xpose.msra.mxu0 0
    %4979 = vmatprep.subr.bf16.mxu0 0
    %4980 = vmatpush1.bf16.xpose.msra.mxu0 0
    %4981 = vmatprep.subr.bf16.mxu0 0
    %4982 = vmatpush1.bf16.xpose.msra.mxu0 0
    %4983 = vmatprep.subr.bf16.mxu0 0
    %4984 = vmatpush1.bf16.xpose.msra.mxu0 0
    %4985 = vmatprep.subr.bf16.mxu0 0
    %4986 = vmatpush1.bf16.xpose.msra.mxu0 0
    %4987 = vmatprep.mubr.bf16.mxu0 0
    %4988 = vmatmul.mubr.bf16.gmra.mrb[0].mxu0 %v4950
    %v4989 = vpop.f32.mrb[0].mxu0
    %v4990 = vadd.f32 0.0, %v4989
    %v4991 = vpop.f32.mrb[0].mxu0
    %v4992 = vpop.f32.mrb[0].mxu0
    %v4993 = vpop.f32.mrb[0].mxu0
    %4994 = vdwg.mxu0
    %v4995 = vsel %vm4355, %v4990, -1000000.0
    %v4996 = vsel %vm1057, %v4995, -inf
    %4997 = vmax.xlane.f32.xlu0 %v4996
    %v4998 = vpop.xlane.xlu0 %4997
    %v4999 = vsub.f32 %v4995, %v4998
    %v5000 = vmul.f32 %v4999, 1.442695
    %v5001 = vpow.pop %v5000
    %v5002 = vsel %vm1057, %v5001, 0.0
    %5003 = vadd.xlane.f32.xlu0 %v5002
    %v5004 = vpop.xlane.xlu0 %5003
    %v5005 = vrcp.pop %v5004
    %v5006 = vmul.f32 %v5001, %v5005
    %v5007 = vpack.c.bf16 %v5006, %v5006
    %5009 = vrot.lane.b32.xlu0 %v4809, 64
    %v5010 = vpop.permute.xlu0 %5009
    %v5012 = vsel %vm1057, %v5007, 0
    %v5015 = vsel %vm1074, %v5010, 0
    %5017 = vmatprep.subr.bf16.mxu0 0
    %5018 = vmatpush1.bf16.msra.mxu0 %v5015
    %5019 = vmatprep.subr.bf16.mxu0 0
    %5020 = vmatpush1.bf16.msra.mxu0 0
    %5021 = vmatprep.subr.bf16.mxu0 0
    %5022 = vmatpush1.bf16.msra.mxu0 0
    %5023 = vmatprep.subr.bf16.mxu0 0
    %5024 = vmatpush1.bf16.msra.mxu0 0
    %5025 = vmatprep.subr.bf16.mxu0 0
    %5026 = vmatpush1.bf16.msra.mxu0 0
    %5027 = vmatprep.subr.bf16.mxu0 0
    %5028 = vmatpush1.bf16.msra.mxu0 0
    %5029 = vmatprep.subr.bf16.mxu0 0
    %5030 = vmatpush1.bf16.msra.mxu0 0
    %5031 = vmatprep.subr.bf16.mxu0 0
    %5032 = vmatpush1.bf16.msra.mxu0 0
    %5033 = vmatprep.subr.bf16.mxu0 0
    %5034 = vmatpush1.bf16.msra.mxu0 0
    %5035 = vmatprep.subr.bf16.mxu0 0
    %5036 = vmatpush1.bf16.msra.mxu0 0
    %5037 = vmatprep.subr.bf16.mxu0 0
    %5038 = vmatpush1.bf16.msra.mxu0 0
    %5039 = vmatprep.subr.bf16.mxu0 0
    %5040 = vmatpush1.bf16.msra.mxu0 0
    %5041 = vmatprep.subr.bf16.mxu0 0
    %5042 = vmatpush1.bf16.msra.mxu0 0
    %5043 = vmatprep.subr.bf16.mxu0 0
    %5044 = vmatpush1.bf16.msra.mxu0 0
    %5045 = vmatprep.subr.bf16.mxu0 0
    %5046 = vmatpush1.bf16.msra.mxu0 0
    %5047 = vmatprep.subr.bf16.mxu0 0
    %5048 = vmatpush1.bf16.msra.mxu0 0
    %5049 = vmatprep.mubr.bf16.mxu0 0
    %5050 = vmatmul.mubr.bf16.gmra.mrb[0].mxu0 %v5012
    %v5051 = vpop.f32.mrb[0].mxu0
    %v5052 = vadd.f32 0.0, %v5051
    %v5053 = vpop.f32.mrb[0].mxu0
    %v5054 = vpop.f32.mrb[0].mxu0
    %v5055 = vpop.f32.mrb[0].mxu0
    %5056 = vdwg.mxu0
    %v5057 = vpack.c.bf16 %v5052, %v5052
    %v5066 = vunpack.c.l.b16 %v4345
    %v5067 = vunpack.c.h.b16 %v4345
    %v5068 = vunpack.c.l.b16 %v4346
    %v5069 = vunpack.c.h.b16 %v4346
    %v5070 = vunpack.c.l.b16 %v4347
    %v5071 = vunpack.c.h.b16 %v4347
    %v5072 = vunpack.c.l.b16 %v4348
    %v5073 = vunpack.c.h.b16 %v4348
    %v5074 = vunpack.c.l.b16 %v4349
    %v5075 = vunpack.c.h.b16 %v4349
    %v5076 = vunpack.c.l.b16 %v4350
    %v5077 = vunpack.c.h.b16 %v4350
    %v5078 = vunpack.c.l.b16 %v4351
    %v5079 = vunpack.c.h.b16 %v4351
    %v5080 = vunpack.c.l.b16 %v4352
    %v5081 = vunpack.c.h.b16 %v4352
    %v5082 = vpack.c.b16 %v5068, %v5066
    %v5083 = vpack.c.b16 %v5069, %v5067
    %v5084 = vpack.c.b16 %v5072, %v5070
    %v5085 = vpack.c.b16 %v5073, %v5071
    %v5086 = vpack.c.b16 %v5076, %v5074
    %v5087 = vpack.c.b16 %v5077, %v5075
    %v5088 = vpack.c.b16 %v5080, %v5078
    %v5089 = vpack.c.b16 %v5081, %v5079
    %v5099 = vsel %vm1009, %v5057, 0
    %5101 = vmatprep.subr.bf16.mxu0 %v5083
    %5102 = vmatpush1.bf16.msra.mxu0 %v5082
    %5103 = vmatprep.subr.bf16.mxu0 %v5085
    %5104 = vmatpush1.bf16.msra.mxu0 %v5084
    %5105 = vmatprep.subr.bf16.mxu0 %v5087
    %5106 = vmatpush1.bf16.msra.mxu0 %v5086
    %5107 = vmatprep.subr.bf16.mxu0 %v5089
    %5108 = vmatpush1.bf16.msra.mxu0 %v5088
    %5109 = vmatprep.subr.bf16.mxu0 0
    %5110 = vmatpush1.bf16.msra.mxu0 0
    %5111 = vmatprep.subr.bf16.mxu0 0
    %5112 = vmatpush1.bf16.msra.mxu0 0
    %5113 = vmatprep.subr.bf16.mxu0 0
    %5114 = vmatpush1.bf16.msra.mxu0 0
    %5115 = vmatprep.subr.bf16.mxu0 0
    %5116 = vmatpush1.bf16.msra.mxu0 0
    %5117 = vmatprep.subr.bf16.mxu0 0
    %5118 = vmatpush1.bf16.msra.mxu0 0
    %5119 = vmatprep.subr.bf16.mxu0 0
    %5120 = vmatpush1.bf16.msra.mxu0 0
    %5121 = vmatprep.subr.bf16.mxu0 0
    %5122 = vmatpush1.bf16.msra.mxu0 0
    %5123 = vmatprep.subr.bf16.mxu0 0
    %5124 = vmatpush1.bf16.msra.mxu0 0
    %5125 = vmatprep.subr.bf16.mxu0 0
    %5126 = vmatpush1.bf16.msra.mxu0 0
    %5127 = vmatprep.subr.bf16.mxu0 0
    %5128 = vmatpush1.bf16.msra.mxu0 0
    %5129 = vmatprep.subr.bf16.mxu0 0
    %5130 = vmatpush1.bf16.msra.mxu0 0
    %5131 = vmatprep.subr.bf16.mxu0 0
    %5132 = vmatpush1.bf16.msra.mxu0 0
    %5133 = vmatprep.mubr.bf16.mxu0 0
    %5134 = vmatmul.mubr.bf16.gmra.mrb[0].mxu0 %v5099
    %v5135 = vpop.f32.mrb[0].mxu0
    %v5136 = vadd.f32 0.0, %v5135
    %v5137 = vpop.f32.mrb[0].mxu0
    %v5138 = vadd.f32 0.0, %v5137
    %v5139 = vpop.f32.mrb[0].mxu0
    %v5140 = vpop.f32.mrb[0].mxu0
    %5141 = vdwg.mxu0
    %v5142 = vadd.f32 %v4941, %v5136
    %v5143 = vadd.f32 %v4942, %v5138
    %5144 = vst [vmem:[#allocation2] sm:$0xff] %v5142
    %5145 = vst [vmem:[#allocation2 + $0x8] sm:$0xff] %v5143
    %s5146 = sld [smem:[#allocation3 + $0x1]]
    %v5147 = vstv %s5146
    %vm5148 = vcmp.lt.s32.totalorder %v1003, %v5147
    %v5149 = vpack.c.bf16 %v4319, %v4319
    %v5150 = vpack.c.bf16 %v4270, %v4270
    %v5152 = vsel %vm1009, %v5149, 0
    %v5155 = vsel %vm1009, %v5150, 0
    %5157 = vmatprep.subr.bf16.mxu0 0
    %5158 = vmatpush1.bf16.xpose.msra.mxu0 %v5155
    %5159 = vmatprep.subr.bf16.mxu0 0
    %5160 = vmatpush1.bf16.xpose.msra.mxu0 0
    %5161 = vmatprep.subr.bf16.mxu0 0
    %5162 = vmatpush1.bf16.xpose.msra.mxu0 0
    %5163 = vmatprep.subr.bf16.mxu0 0
    %5164 = vmatpush1.bf16.xpose.msra.mxu0 0
    %5165 = vmatprep.subr.bf16.mxu0 0
    %5166 = vmatpush1.bf16.xpose.msra.mxu0 0
    %5167 = vmatprep.subr.bf16.mxu0 0
    %5168 = vmatpush1.bf16.xpose.msra.mxu0 0
    %5169 = vmatprep.subr.bf16.mxu0 0
    %5170 = vmatpush1.bf16.xpose.msra.mxu0 0
    %5171 = vmatprep.subr.bf16.mxu0 0
    %5172 = vmatpush1.bf16.xpose.msra.mxu0 0
    %5173 = vmatprep.subr.bf16.mxu0 0
    %5174 = vmatpush1.bf16.xpose.msra.mxu0 0
    %5175 = vmatprep.subr.bf16.mxu0 0
    %5176 = vmatpush1.bf16.xpose.msra.mxu0 0
    %5177 = vmatprep.subr.bf16.mxu0 0
    %5178 = vmatpush1.bf16.xpose.msra.mxu0 0
    %5179 = vmatprep.subr.bf16.mxu0 0
    %5180 = vmatpush1.bf16.xpose.msra.mxu0 0
    %5181 = vmatprep.subr.bf16.mxu0 0
    %5182 = vmatpush1.bf16.xpose.msra.mxu0 0
    %5183 = vmatprep.subr.bf16.mxu0 0
    %5184 = vmatpush1.bf16.xpose.msra.mxu0 0
    %5185 = vmatprep.subr.bf16.mxu0 0
    %5186 = vmatpush1.bf16.xpose.msra.mxu0 0
    %5187 = vmatprep.subr.bf16.mxu0 0
    %5188 = vmatpush1.bf16.xpose.msra.mxu0 0
    %5189 = vmatprep.mubr.bf16.mxu0 0
    %5190 = vmatmul.mubr.bf16.gmra.mrb[0].mxu0 %v5152
    %v5191 = vpop.f32.mrb[0].mxu0
    %v5192 = vadd.f32 0.0, %v5191
    %v5193 = vpop.f32.mrb[0].mxu0
    %v5194 = vpop.f32.mrb[0].mxu0
    %v5195 = vpop.f32.mrb[0].mxu0
    %5196 = vdwg.mxu0
    %v5197 = vsel %vm5148, %v5192, -1000000.0
    %v5198 = vsel %vm1057, %v5197, -inf
    %5199 = vmax.xlane.f32.xlu0 %v5198
    %v5200 = vpop.xlane.xlu0 %5199
    %v5201 = vsub.f32 %v5197, %v5200
    %v5202 = vmul.f32 %v5201, 1.442695
    %v5203 = vpow.pop %v5202
    %v5204 = vsel %vm1057, %v5203, 0.0
    %5205 = vadd.xlane.f32.xlu0 %v5204
    %v5206 = vpop.xlane.xlu0 %5205
    %v5207 = vrcp.pop %v5206
    %v5208 = vmul.f32 %v5203, %v5207
    %v5209 = vpack.c.bf16 %v5208, %v5208
    %v5210 = vpack.c.bf16 %v4313, %v4313
    %v5212 = vsel %vm1057, %v5209, 0
    %v5215 = vsel %vm1074, %v5210, 0
    %5217 = vmatprep.subr.bf16.mxu0 0
    %5218 = vmatpush1.bf16.msra.mxu0 %v5215
    %5219 = vmatprep.subr.bf16.mxu0 0
    %5220 = vmatpush1.bf16.msra.mxu0 0
    %5221 = vmatprep.subr.bf16.mxu0 0
    %5222 = vmatpush1.bf16.msra.mxu0 0
    %5223 = vmatprep.subr.bf16.mxu0 0
    %5224 = vmatpush1.bf16.msra.mxu0 0
    %5225 = vmatprep.subr.bf16.mxu0 0
    %5226 = vmatpush1.bf16.msra.mxu0 0
    %5227 = vmatprep.subr.bf16.mxu0 0
    %5228 = vmatpush1.bf16.msra.mxu0 0
    %5229 = vmatprep.subr.bf16.mxu0 0
    %5230 = vmatpush1.bf16.msra.mxu0 0
    %5231 = vmatprep.subr.bf16.mxu0 0
    %5232 = vmatpush1.bf16.msra.mxu0 0
    %5233 = vmatprep.subr.bf16.mxu0 0
    %5234 = vmatpush1.bf16.msra.mxu0 0
    %5235 = vmatprep.subr.bf16.mxu0 0
    %5236 = vmatpush1.bf16.msra.mxu0 0
    %5237 = vmatprep.subr.bf16.mxu0 0
    %5238 = vmatpush1.bf16.msra.mxu0 0
    %5239 = vmatprep.subr.bf16.mxu0 0
    %5240 = vmatpush1.bf16.msra.mxu0 0
    %5241 = vmatprep.subr.bf16.mxu0 0
    %5242 = vmatpush1.bf16.msra.mxu0 0
    %5243 = vmatprep.subr.bf16.mxu0 0
    %5244 = vmatpush1.bf16.msra.mxu0 0
    %5245 = vmatprep.subr.bf16.mxu0 0
    %5246 = vmatpush1.bf16.msra.mxu0 0
    %5247 = vmatprep.subr.bf16.mxu0 0
    %5248 = vmatpush1.bf16.msra.mxu0 0
    %5249 = vmatprep.mubr.bf16.mxu0 0
    %5250 = vmatmul.mubr.bf16.gmra.mrb[0].mxu0 %v5212
    %v5251 = vpop.f32.mrb[0].mxu0
    %v5252 = vadd.f32 0.0, %v5251
    %v5253 = vpop.f32.mrb[0].mxu0
    %v5254 = vpop.f32.mrb[0].mxu0
    %v5255 = vpop.f32.mrb[0].mxu0
    %5256 = vdwg.mxu0
    %v5257 = vpack.c.bf16 %v5252, %v5252
    %5259 = vrot.lane.b32.xlu0 %v5149, 64
    %v5260 = vpop.permute.xlu0 %5259
    %5262 = vrot.lane.b32.xlu0 %v5150, 64
    %v5263 = vpop.permute.xlu0 %5262
    %v5265 = vsel %vm1009, %v5260, 0
    %v5268 = vsel %vm1009, %v5263, 0
    %5270 = vmatprep.subr.bf16.mxu0 0
    %5271 = vmatpush1.bf16.xpose.msra.mxu0 %v5268
    %5272 = vmatprep.subr.bf16.mxu0 0
    %5273 = vmatpush1.bf16.xpose.msra.mxu0 0
    %5274 = vmatprep.subr.bf16.mxu0 0
    %5275 = vmatpush1.bf16.xpose.msra.mxu0 0
    %5276 = vmatprep.subr.bf16.mxu0 0
    %5277 = vmatpush1.bf16.xpose.msra.mxu0 0
    %5278 = vmatprep.subr.bf16.mxu0 0
    %5279 = vmatpush1.bf16.xpose.msra.mxu0 0
    %5280 = vmatprep.subr.bf16.mxu0 0
    %5281 = vmatpush1.bf16.xpose.msra.mxu0 0
    %5282 = vmatprep.subr.bf16.mxu0 0
    %5283 = vmatpush1.bf16.xpose.msra.mxu0 0
    %5284 = vmatprep.subr.bf16.mxu0 0
    %5285 = vmatpush1.bf16.xpose.msra.mxu0 0
    %5286 = vmatprep.subr.bf16.mxu0 0
    %5287 = vmatpush1.bf16.xpose.msra.mxu0 0
    %5288 = vmatprep.subr.bf16.mxu0 0
    %5289 = vmatpush1.bf16.xpose.msra.mxu0 0
    %5290 = vmatprep.subr.bf16.mxu0 0
    %5291 = vmatpush1.bf16.xpose.msra.mxu0 0
    %5292 = vmatprep.subr.bf16.mxu0 0
    %5293 = vmatpush1.bf16.xpose.msra.mxu0 0
    %5294 = vmatprep.subr.bf16.mxu0 0
    %5295 = vmatpush1.bf16.xpose.msra.mxu0 0
    %5296 = vmatprep.subr.bf16.mxu0 0
    %5297 = vmatpush1.bf16.xpose.msra.mxu0 0
    %5298 = vmatprep.subr.bf16.mxu0 0
    %5299 = vmatpush1.bf16.xpose.msra.mxu0 0
    %5300 = vmatprep.subr.bf16.mxu0 0
    %5301 = vmatpush1.bf16.xpose.msra.mxu0 0
    %5302 = vmatprep.mubr.bf16.mxu0 0
    %5303 = vmatmul.mubr.bf16.gmra.mrb[0].mxu0 %v5265
    %v5304 = vpop.f32.mrb[0].mxu0
    %v5305 = vadd.f32 0.0, %v5304
    %v5306 = vpop.f32.mrb[0].mxu0
    %v5307 = vpop.f32.mrb[0].mxu0
    %v5308 = vpop.f32.mrb[0].mxu0
    %5309 = vdwg.mxu0
    %v5310 = vsel %vm5148, %v5305, -1000000.0
    %v5311 = vsel %vm1057, %v5310, -inf
    %5312 = vmax.xlane.f32.xlu0 %v5311
    %v5313 = vpop.xlane.xlu0 %5312
    %v5314 = vsub.f32 %v5310, %v5313
    %v5315 = vmul.f32 %v5314, 1.442695
    %v5316 = vpow.pop %v5315
    %v5317 = vsel %vm1057, %v5316, 0.0
    %5318 = vadd.xlane.f32.xlu0 %v5317
    %v5319 = vpop.xlane.xlu0 %5318
    %v5320 = vrcp.pop %v5319
    %v5321 = vmul.f32 %v5316, %v5320
    %v5322 = vpack.c.bf16 %v5321, %v5321
    %5324 = vrot.lane.b32.xlu0 %v5210, 64
    %v5325 = vpop.permute.xlu0 %5324
    %v5327 = vsel %vm1057, %v5322, 0
    %v5330 = vsel %vm1074, %v5325, 0
    %5332 = vmatprep.subr.bf16.mxu0 0
    %5333 = vmatpush1.bf16.msra.mxu0 %v5330
    %5334 = vmatprep.subr.bf16.mxu0 0
    %5335 = vmatpush1.bf16.msra.mxu0 0
    %5336 = vmatprep.subr.bf16.mxu0 0
    %5337 = vmatpush1.bf16.msra.mxu0 0
    %5338 = vmatprep.subr.bf16.mxu0 0
    %5339 = vmatpush1.bf16.msra.mxu0 0
    %5340 = vmatprep.subr.bf16.mxu0 0
    %5341 = vmatpush1.bf16.msra.mxu0 0
    %5342 = vmatprep.subr.bf16.mxu0 0
    %5343 = vmatpush1.bf16.msra.mxu0 0
    %5344 = vmatprep.subr.bf16.mxu0 0
    %5345 = vmatpush1.bf16.msra.mxu0 0
    %5346 = vmatprep.subr.bf16.mxu0 0
    %5347 = vmatpush1.bf16.msra.mxu0 0
    %5348 = vmatprep.subr.bf16.mxu0 0
    %5349 = vmatpush1.bf16.msra.mxu0 0
    %5350 = vmatprep.subr.bf16.mxu0 0
    %5351 = vmatpush1.bf16.msra.mxu0 0
    %5352 = vmatprep.subr.bf16.mxu0 0
    %5353 = vmatpush1.bf16.msra.mxu0 0
    %5354 = vmatprep.subr.bf16.mxu0 0
    %5355 = vmatpush1.bf16.msra.mxu0 0
    %5356 = vmatprep.subr.bf16.mxu0 0
    %5357 = vmatpush1.bf16.msra.mxu0 0
    %5358 = vmatprep.subr.bf16.mxu0 0
    %5359 = vmatpush1.bf16.msra.mxu0 0
    %5360 = vmatprep.subr.bf16.mxu0 0
    %5361 = vmatpush1.bf16.msra.mxu0 0
    %5362 = vmatprep.subr.bf16.mxu0 0
    %5363 = vmatpush1.bf16.msra.mxu0 0
    %5364 = vmatprep.mubr.bf16.mxu0 0
    %5365 = vmatmul.mubr.bf16.gmra.mrb[0].mxu0 %v5327
    %v5366 = vpop.f32.mrb[0].mxu0
    %v5367 = vadd.f32 0.0, %v5366
    %v5368 = vpop.f32.mrb[0].mxu0
    %v5369 = vpop.f32.mrb[0].mxu0
    %v5370 = vpop.f32.mrb[0].mxu0
    %5371 = vdwg.mxu0
    %v5372 = vpack.c.bf16 %v5367, %v5367
    %v5374 = vsel %vm1009, %v5372, 0
    %5376 = vmatprep.subr.bf16.mxu0 %v4605
    %5377 = vmatpush1.bf16.msra.mxu0 %v4604
    %5378 = vmatprep.subr.bf16.mxu0 %v4607
    %5379 = vmatpush1.bf16.msra.mxu0 %v4606
    %5380 = vmatprep.subr.bf16.mxu0 %v4609
    %5381 = vmatpush1.bf16.msra.mxu0 %v4608
    %5382 = vmatprep.subr.bf16.mxu0 %v4611
    %5383 = vmatpush1.bf16.msra.mxu0 %v4610
    %5384 = vmatprep.subr.bf16.mxu0 0
    %5385 = vmatpush1.bf16.msra.mxu0 0
    %5386 = vmatprep.subr.bf16.mxu0 0
    %5387 = vmatpush1.bf16.msra.mxu0 0
    %5388 = vmatprep.subr.bf16.mxu0 0
    %5389 = vmatpush1.bf16.msra.mxu0 0
    %5390 = vmatprep.subr.bf16.mxu0 0
    %5391 = vmatpush1.bf16.msra.mxu0 0
    %5392 = vmatprep.subr.bf16.mxu0 0
    %5393 = vmatpush1.bf16.msra.mxu0 0
    %5394 = vmatprep.subr.bf16.mxu0 0
    %5395 = vmatpush1.bf16.msra.mxu0 0
    %5396 = vmatprep.subr.bf16.mxu0 0
    %5397 = vmatpush1.bf16.msra.mxu0 0
    %5398 = vmatprep.subr.bf16.mxu0 0
    %5399 = vmatpush1.bf16.msra.mxu0 0
    %5400 = vmatprep.subr.bf16.mxu0 0
    %5401 = vmatpush1.bf16.msra.mxu0 0
    %5402 = vmatprep.subr.bf16.mxu0 0
    %5403 = vmatpush1.bf16.msra.mxu0 0
    %5404 = vmatprep.subr.bf16.mxu0 0
    %5405 = vmatpush1.bf16.msra.mxu0 0
    %5406 = vmatprep.subr.bf16.mxu0 0
    %5407 = vmatpush1.bf16.msra.mxu0 0
    %5408 = vmatprep.mubr.bf16.mxu0 0
    %5409 = vmatmul.mubr.bf16.gmra.mrb[0].mxu0 %v5374
    %v5410 = vpop.f32.mrb[0].mxu0
    %v5411 = vadd.f32 0.0, %v5410
    %v5412 = vpop.f32.mrb[0].mxu0
    %v5413 = vadd.f32 0.0, %v5412
    %v5414 = vpop.f32.mrb[0].mxu0
    %v5415 = vpop.f32.mrb[0].mxu0
    %5416 = vdwg.mxu0
    %v5418 = vsel %vm1009, %v5257, 0
    %5420 = vmatprep.subr.bf16.mxu0 %v4689
    %5421 = vmatpush1.bf16.msra.mxu0 %v4688
    %5422 = vmatprep.subr.bf16.mxu0 %v4691
    %5423 = vmatpush1.bf16.msra.mxu0 %v4690
    %5424 = vmatprep.subr.bf16.mxu0 %v4693
    %5425 = vmatpush1.bf16.msra.mxu0 %v4692
    %5426 = vmatprep.subr.bf16.mxu0 %v4695
    %5427 = vmatpush1.bf16.msra.mxu0 %v4694
    %5428 = vmatprep.subr.bf16.mxu0 0
    %5429 = vmatpush1.bf16.msra.mxu0 0
    %5430 = vmatprep.subr.bf16.mxu0 0
    %5431 = vmatpush1.bf16.msra.mxu0 0
    %5432 = vmatprep.subr.bf16.mxu0 0
    %5433 = vmatpush1.bf16.msra.mxu0 0
    %5434 = vmatprep.subr.bf16.mxu0 0
    %5435 = vmatpush1.bf16.msra.mxu0 0
    %5436 = vmatprep.subr.bf16.mxu0 0
    %5437 = vmatpush1.bf16.msra.mxu0 0
    %5438 = vmatprep.subr.bf16.mxu0 0
    %5439 = vmatpush1.bf16.msra.mxu0 0
    %5440 = vmatprep.subr.bf16.mxu0 0
    %5441 = vmatpush1.bf16.msra.mxu0 0
    %5442 = vmatprep.subr.bf16.mxu0 0
    %5443 = vmatpush1.bf16.msra.mxu0 0
    %5444 = vmatprep.subr.bf16.mxu0 0
    %5445 = vmatpush1.bf16.msra.mxu0 0
    %5446 = vmatprep.subr.bf16.mxu0 0
    %5447 = vmatpush1.bf16.msra.mxu0 0
    %5448 = vmatprep.subr.bf16.mxu0 0
    %5449 = vmatpush1.bf16.msra.mxu0 0
    %5450 = vmatprep.subr.bf16.mxu0 0
    %5451 = vmatpush1.bf16.msra.mxu0 0
    %5452 = vmatprep.mubr.bf16.mxu0 0
    %5453 = vmatmul.mubr.bf16.gmra.mrb[0].mxu0 %v5418
    %v5454 = vpop.f32.mrb[0].mxu0
    %v5455 = vadd.f32 %v5411, %v5454
    %v5456 = vpop.f32.mrb[0].mxu0
    %v5457 = vadd.f32 %v5413, %v5456
    %v5458 = vpop.f32.mrb[0].mxu0
    %v5459 = vpop.f32.mrb[0].mxu0
    %5460 = vdwg.mxu0
    %v5461 = vpack.c.bf16 %v4320, %v4320
    %v5462 = vpack.c.bf16 %v4272, %v4272
    %v5464 = vsel %vm1009, %v5461, 0
    %v5467 = vsel %vm1009, %v5462, 0
    %5469 = vmatprep.subr.bf16.mxu0 0
    %5470 = vmatpush1.bf16.xpose.msra.mxu0 %v5467
    %5471 = vmatprep.subr.bf16.mxu0 0
    %5472 = vmatpush1.bf16.xpose.msra.mxu0 0
    %5473 = vmatprep.subr.bf16.mxu0 0
    %5474 = vmatpush1.bf16.xpose.msra.mxu0 0
    %5475 = vmatprep.subr.bf16.mxu0 0
    %5476 = vmatpush1.bf16.xpose.msra.mxu0 0
    %5477 = vmatprep.subr.bf16.mxu0 0
    %5478 = vmatpush1.bf16.xpose.msra.mxu0 0
    %5479 = vmatprep.subr.bf16.mxu0 0
    %5480 = vmatpush1.bf16.xpose.msra.mxu0 0
    %5481 = vmatprep.subr.bf16.mxu0 0
    %5482 = vmatpush1.bf16.xpose.msra.mxu0 0
    %5483 = vmatprep.subr.bf16.mxu0 0
    %5484 = vmatpush1.bf16.xpose.msra.mxu0 0
    %5485 = vmatprep.subr.bf16.mxu0 0
    %5486 = vmatpush1.bf16.xpose.msra.mxu0 0
    %5487 = vmatprep.subr.bf16.mxu0 0
    %5488 = vmatpush1.bf16.xpose.msra.mxu0 0
    %5489 = vmatprep.subr.bf16.mxu0 0
    %5490 = vmatpush1.bf16.xpose.msra.mxu0 0
    %5491 = vmatprep.subr.bf16.mxu0 0
    %5492 = vmatpush1.bf16.xpose.msra.mxu0 0
    %5493 = vmatprep.subr.bf16.mxu0 0
    %5494 = vmatpush1.bf16.xpose.msra.mxu0 0
    %5495 = vmatprep.subr.bf16.mxu0 0
    %5496 = vmatpush1.bf16.xpose.msra.mxu0 0
    %5497 = vmatprep.subr.bf16.mxu0 0
    %5498 = vmatpush1.bf16.xpose.msra.mxu0 0
    %5499 = vmatprep.subr.bf16.mxu0 0
    %5500 = vmatpush1.bf16.xpose.msra.mxu0 0
    %5501 = vmatprep.mubr.bf16.mxu0 0
    %5502 = vmatmul.mubr.bf16.gmra.mrb[0].mxu0 %v5464
    %v5503 = vpop.f32.mrb[0].mxu0
    %v5504 = vadd.f32 0.0, %v5503
    %v5505 = vpop.f32.mrb[0].mxu0
    %v5506 = vpop.f32.mrb[0].mxu0
    %v5507 = vpop.f32.mrb[0].mxu0
    %5508 = vdwg.mxu0
    %v5509 = vsel %vm5148, %v5504, -1000000.0
    %v5510 = vsel %vm1057, %v5509, -inf
    %5511 = vmax.xlane.f32.xlu0 %v5510
    %v5512 = vpop.xlane.xlu0 %5511
    %v5513 = vsub.f32 %v5509, %v5512
    %v5514 = vmul.f32 %v5513, 1.442695
    %v5515 = vpow.pop %v5514
    %v5516 = vsel %vm1057, %v5515, 0.0
    %5517 = vadd.xlane.f32.xlu0 %v5516
    %v5518 = vpop.xlane.xlu0 %5517
    %v5519 = vrcp.pop %v5518
    %v5520 = vmul.f32 %v5515, %v5519
    %v5521 = vpack.c.bf16 %v5520, %v5520
    %v5522 = vpack.c.bf16 %v4315, %v4315
    %v5524 = vsel %vm1057, %v5521, 0
    %v5527 = vsel %vm1074, %v5522, 0
    %5529 = vmatprep.subr.bf16.mxu0 0
    %5530 = vmatpush1.bf16.msra.mxu0 %v5527
    %5531 = vmatprep.subr.bf16.mxu0 0
    %5532 = vmatpush1.bf16.msra.mxu0 0
    %5533 = vmatprep.subr.bf16.mxu0 0
    %5534 = vmatpush1.bf16.msra.mxu0 0
    %5535 = vmatprep.subr.bf16.mxu0 0
    %5536 = vmatpush1.bf16.msra.mxu0 0
    %5537 = vmatprep.subr.bf16.mxu0 0
    %5538 = vmatpush1.bf16.msra.mxu0 0
    %5539 = vmatprep.subr.bf16.mxu0 0
    %5540 = vmatpush1.bf16.msra.mxu0 0
    %5541 = vmatprep.subr.bf16.mxu0 0
    %5542 = vmatpush1.bf16.msra.mxu0 0
    %5543 = vmatprep.subr.bf16.mxu0 0
    %5544 = vmatpush1.bf16.msra.mxu0 0
    %5545 = vmatprep.subr.bf16.mxu0 0
    %5546 = vmatpush1.bf16.msra.mxu0 0
    %5547 = vmatprep.subr.bf16.mxu0 0
    %5548 = vmatpush1.bf16.msra.mxu0 0
    %5549 = vmatprep.subr.bf16.mxu0 0
    %5550 = vmatpush1.bf16.msra.mxu0 0
    %5551 = vmatprep.subr.bf16.mxu0 0
    %5552 = vmatpush1.bf16.msra.mxu0 0
    %5553 = vmatprep.subr.bf16.mxu0 0
    %5554 = vmatpush1.bf16.msra.mxu0 0
    %5555 = vmatprep.subr.bf16.mxu0 0
    %5556 = vmatpush1.bf16.msra.mxu0 0
    %5557 = vmatprep.subr.bf16.mxu0 0
    %5558 = vmatpush1.bf16.msra.mxu0 0
    %5559 = vmatprep.subr.bf16.mxu0 0
    %5560 = vmatpush1.bf16.msra.mxu0 0
    %5561 = vmatprep.mubr.bf16.mxu0 0
    %5562 = vmatmul.mubr.bf16.gmra.mrb[0].mxu0 %v5524
    %v5563 = vpop.f32.mrb[0].mxu0
    %v5564 = vadd.f32 0.0, %v5563
    %v5565 = vpop.f32.mrb[0].mxu0
    %v5566 = vpop.f32.mrb[0].mxu0
    %v5567 = vpop.f32.mrb[0].mxu0
    %5568 = vdwg.mxu0
    %v5569 = vpack.c.bf16 %v5564, %v5564
    %v5571 = vsel %vm1009, %v5569, 0
    %5573 = vmatprep.subr.bf16.mxu0 %v4882
    %5574 = vmatpush1.bf16.msra.mxu0 %v4881
    %5575 = vmatprep.subr.bf16.mxu0 %v4884
    %5576 = vmatpush1.bf16.msra.mxu0 %v4883
    %5577 = vmatprep.subr.bf16.mxu0 %v4886
    %5578 = vmatpush1.bf16.msra.mxu0 %v4885
    %5579 = vmatprep.subr.bf16.mxu0 %v4888
    %5580 = vmatpush1.bf16.msra.mxu0 %v4887
    %5581 = vmatprep.subr.bf16.mxu0 0
    %5582 = vmatpush1.bf16.msra.mxu0 0
    %5583 = vmatprep.subr.bf16.mxu0 0
    %5584 = vmatpush1.bf16.msra.mxu0 0
    %5585 = vmatprep.subr.bf16.mxu0 0
    %5586 = vmatpush1.bf16.msra.mxu0 0
    %5587 = vmatprep.subr.bf16.mxu0 0
    %5588 = vmatpush1.bf16.msra.mxu0 0
    %5589 = vmatprep.subr.bf16.mxu0 0
    %5590 = vmatpush1.bf16.msra.mxu0 0
    %5591 = vmatprep.subr.bf16.mxu0 0
    %5592 = vmatpush1.bf16.msra.mxu0 0
    %5593 = vmatprep.subr.bf16.mxu0 0
    %5594 = vmatpush1.bf16.msra.mxu0 0
    %5595 = vmatprep.subr.bf16.mxu0 0
    %5596 = vmatpush1.bf16.msra.mxu0 0
    %5597 = vmatprep.subr.bf16.mxu0 0
    %5598 = vmatpush1.bf16.msra.mxu0 0
    %5599 = vmatprep.subr.bf16.mxu0 0
    %5600 = vmatpush1.bf16.msra.mxu0 0
    %5601 = vmatprep.subr.bf16.mxu0 0
    %5602 = vmatpush1.bf16.msra.mxu0 0
    %5603 = vmatprep.subr.bf16.mxu0 0
    %5604 = vmatpush1.bf16.msra.mxu0 0
    %5605 = vmatprep.mubr.bf16.mxu0 0
    %5606 = vmatmul.mubr.bf16.gmra.mrb[0].mxu0 %v5571
    %v5607 = vpop.f32.mrb[0].mxu0
    %v5608 = vadd.f32 0.0, %v5607
    %v5609 = vpop.f32.mrb[0].mxu0
    %v5610 = vadd.f32 0.0, %v5609
    %v5611 = vpop.f32.mrb[0].mxu0
    %v5612 = vpop.f32.mrb[0].mxu0
    %5613 = vdwg.mxu0
    %v5614 = vadd.f32 %v5455, %v5608
    %v5615 = vadd.f32 %v5457, %v5610
    %5617 = vrot.lane.b32.xlu0 %v5461, 64
    %v5618 = vpop.permute.xlu0 %5617
    %5620 = vrot.lane.b32.xlu0 %v5462, 64
    %v5621 = vpop.permute.xlu0 %5620
    %v5623 = vsel %vm1009, %v5618, 0
    %v5626 = vsel %vm1009, %v5621, 0
    %5628 = vmatprep.subr.bf16.mxu0 0
    %5629 = vmatpush1.bf16.xpose.msra.mxu0 %v5626
    %5630 = vmatprep.subr.bf16.mxu0 0
    %5631 = vmatpush1.bf16.xpose.msra.mxu0 0
    %5632 = vmatprep.subr.bf16.mxu0 0
    %5633 = vmatpush1.bf16.xpose.msra.mxu0 0
    %5634 = vmatprep.subr.bf16.mxu0 0
    %5635 = vmatpush1.bf16.xpose.msra.mxu0 0
    %5636 = vmatprep.subr.bf16.mxu0 0
    %5637 = vmatpush1.bf16.xpose.msra.mxu0 0
    %5638 = vmatprep.subr.bf16.mxu0 0
    %5639 = vmatpush1.bf16.xpose.msra.mxu0 0
    %5640 = vmatprep.subr.bf16.mxu0 0
    %5641 = vmatpush1.bf16.xpose.msra.mxu0 0
    %5642 = vmatprep.subr.bf16.mxu0 0
    %5643 = vmatpush1.bf16.xpose.msra.mxu0 0
    %5644 = vmatprep.subr.bf16.mxu0 0
    %5645 = vmatpush1.bf16.xpose.msra.mxu0 0
    %5646 = vmatprep.subr.bf16.mxu0 0
    %5647 = vmatpush1.bf16.xpose.msra.mxu0 0
    %5648 = vmatprep.subr.bf16.mxu0 0
    %5649 = vmatpush1.bf16.xpose.msra.mxu0 0
    %5650 = vmatprep.subr.bf16.mxu0 0
    %5651 = vmatpush1.bf16.xpose.msra.mxu0 0
    %5652 = vmatprep.subr.bf16.mxu0 0
    %5653 = vmatpush1.bf16.xpose.msra.mxu0 0
    %5654 = vmatprep.subr.bf16.mxu0 0
    %5655 = vmatpush1.bf16.xpose.msra.mxu0 0
    %5656 = vmatprep.subr.bf16.mxu0 0
    %5657 = vmatpush1.bf16.xpose.msra.mxu0 0
    %5658 = vmatprep.subr.bf16.mxu0 0
    %5659 = vmatpush1.bf16.xpose.msra.mxu0 0
    %5660 = vmatprep.mubr.bf16.mxu0 0
    %5661 = vmatmul.mubr.bf16.gmra.mrb[0].mxu0 %v5623
    %v5662 = vpop.f32.mrb[0].mxu0
    %v5663 = vadd.f32 0.0, %v5662
    %v5664 = vpop.f32.mrb[0].mxu0
    %v5665 = vpop.f32.mrb[0].mxu0
    %v5666 = vpop.f32.mrb[0].mxu0
    %5667 = vdwg.mxu0
    %v5668 = vsel %vm5148, %v5663, -1000000.0
    %v5669 = vsel %vm1057, %v5668, -inf
    %5670 = vmax.xlane.f32.xlu0 %v5669
    %v5671 = vpop.xlane.xlu0 %5670
    %v5672 = vsub.f32 %v5668, %v5671
    %v5673 = vmul.f32 %v5672, 1.442695
    %v5674 = vpow.pop %v5673
    %v5675 = vsel %vm1057, %v5674, 0.0
    %5676 = vadd.xlane.f32.xlu0 %v5675
    %v5677 = vpop.xlane.xlu0 %5676
    %v5678 = vrcp.pop %v5677
    %v5679 = vmul.f32 %v5674, %v5678
    %v5680 = vpack.c.bf16 %v5679, %v5679
    %5682 = vrot.lane.b32.xlu0 %v5522, 64
    %v5683 = vpop.permute.xlu0 %5682
    %v5685 = vsel %vm1057, %v5680, 0
    %v5688 = vsel %vm1074, %v5683, 0
    %5690 = vmatprep.subr.bf16.mxu0 0
    %5691 = vmatpush1.bf16.msra.mxu0 %v5688
    %5692 = vmatprep.subr.bf16.mxu0 0
    %5693 = vmatpush1.bf16.msra.mxu0 0
    %5694 = vmatprep.subr.bf16.mxu0 0
    %5695 = vmatpush1.bf16.msra.mxu0 0
    %5696 = vmatprep.subr.bf16.mxu0 0
    %5697 = vmatpush1.bf16.msra.mxu0 0
    %5698 = vmatprep.subr.bf16.mxu0 0
    %5699 = vmatpush1.bf16.msra.mxu0 0
    %5700 = vmatprep.subr.bf16.mxu0 0
    %5701 = vmatpush1.bf16.msra.mxu0 0
    %5702 = vmatprep.subr.bf16.mxu0 0
    %5703 = vmatpush1.bf16.msra.mxu0 0
    %5704 = vmatprep.subr.bf16.mxu0 0
    %5705 = vmatpush1.bf16.msra.mxu0 0
    %5706 = vmatprep.subr.bf16.mxu0 0
    %5707 = vmatpush1.bf16.msra.mxu0 0
    %5708 = vmatprep.subr.bf16.mxu0 0
    %5709 = vmatpush1.bf16.msra.mxu0 0
    %5710 = vmatprep.subr.bf16.mxu0 0
    %5711 = vmatpush1.bf16.msra.mxu0 0
    %5712 = vmatprep.subr.bf16.mxu0 0
    %5713 = vmatpush1.bf16.msra.mxu0 0
    %5714 = vmatprep.subr.bf16.mxu0 0
    %5715 = vmatpush1.bf16.msra.mxu0 0
    %5716 = vmatprep.subr.bf16.mxu0 0
    %5717 = vmatpush1.bf16.msra.mxu0 0
    %5718 = vmatprep.subr.bf16.mxu0 0
    %5719 = vmatpush1.bf16.msra.mxu0 0
    %5720 = vmatprep.subr.bf16.mxu0 0
    %5721 = vmatpush1.bf16.msra.mxu0 0
    %5722 = vmatprep.mubr.bf16.mxu0 0
    %5723 = vmatmul.mubr.bf16.gmra.mrb[0].mxu0 %v5685
    %v5724 = vpop.f32.mrb[0].mxu0
    %v5725 = vadd.f32 0.0, %v5724
    %v5726 = vpop.f32.mrb[0].mxu0
    %v5727 = vpop.f32.mrb[0].mxu0
    %v5728 = vpop.f32.mrb[0].mxu0
    %5729 = vdwg.mxu0
    %v5730 = vpack.c.bf16 %v5725, %v5725
    %v5732 = vsel %vm1009, %v5730, 0
    %5734 = vmatprep.subr.bf16.mxu0 %v5083
    %5735 = vmatpush1.bf16.msra.mxu0 %v5082
    %5736 = vmatprep.subr.bf16.mxu0 %v5085
    %5737 = vmatpush1.bf16.msra.mxu0 %v5084
    %5738 = vmatprep.subr.bf16.mxu0 %v5087
    %5739 = vmatpush1.bf16.msra.mxu0 %v5086
    %5740 = vmatprep.subr.bf16.mxu0 %v5089
    %5741 = vmatpush1.bf16.msra.mxu0 %v5088
    %5742 = vmatprep.subr.bf16.mxu0 0
    %5743 = vmatpush1.bf16.msra.mxu0 0
    %5744 = vmatprep.subr.bf16.mxu0 0
    %5745 = vmatpush1.bf16.msra.mxu0 0
    %5746 = vmatprep.subr.bf16.mxu0 0
    %5747 = vmatpush1.bf16.msra.mxu0 0
    %5748 = vmatprep.subr.bf16.mxu0 0
    %5749 = vmatpush1.bf16.msra.mxu0 0
    %5750 = vmatprep.subr.bf16.mxu0 0
    %5751 = vmatpush1.bf16.msra.mxu0 0
    %5752 = vmatprep.subr.bf16.mxu0 0
    %5753 = vmatpush1.bf16.msra.mxu0 0
    %5754 = vmatprep.subr.bf16.mxu0 0
    %5755 = vmatpush1.bf16.msra.mxu0 0
    %5756 = vmatprep.subr.bf16.mxu0 0
    %5757 = vmatpush1.bf16.msra.mxu0 0
    %5758 = vmatprep.subr.bf16.mxu0 0
    %5759 = vmatpush1.bf16.msra.mxu0 0
    %5760 = vmatprep.subr.bf16.mxu0 0
    %5761 = vmatpush1.bf16.msra.mxu0 0
    %5762 = vmatprep.subr.bf16.mxu0 0
    %5763 = vmatpush1.bf16.msra.mxu0 0
    %5764 = vmatprep.subr.bf16.mxu0 0
    %5765 = vmatpush1.bf16.msra.mxu0 0
    %5766 = vmatprep.mubr.bf16.mxu0 0
    %5767 = vmatmul.mubr.bf16.gmra.mrb[0].mxu0 %v5732
    %v5768 = vpop.f32.mrb[0].mxu0
    %v5769 = vadd.f32 0.0, %v5768
    %v5770 = vpop.f32.mrb[0].mxu0
    %v5771 = vadd.f32 0.0, %v5770
    %v5772 = vpop.f32.mrb[0].mxu0
    %v5773 = vpop.f32.mrb[0].mxu0
    %5774 = vdwg.mxu0
    %v5775 = vadd.f32 %v5614, %v5769
    %v5776 = vadd.f32 %v5615, %v5771
    %5777 = vst [vmem:[#allocation2 + $0x10] sm:$0xff] %v5775
    %5778 = vst [vmem:[#allocation2 + $0x18] sm:$0xff] %v5776
    %v5779 = vld [vmem:[#allocation2] sm:$0xff]
    %v5780 = vld [vmem:[#allocation2 + $0x8] sm:$0xff]
    %v5781 = vld [vmem:[#allocation2 + $0x10] sm:$0xff]
    %v5782 = vld [vmem:[#allocation2 + $0x18] sm:$0xff]
    %v5783 = vadd.f32 %v3574, %v5779
    %v5784 = vadd.f32 %v3575, %v5780
    %v5785 = vadd.f32 %v3576, %v5781
    %v5786 = vadd.f32 %v3577, %v5782
    %v5787 = vld [vmem:[%s35] sm:$0x3]
    %v5789 = vlaneseq
    %v5790 = vshrl.u32 %v5789, 7
    %v5791 = vsub.s32 0, %v5790
    %v5792 = vrot.slane %v5787, %v5791
    %v5793 = vlaneseq
    %v5794 = vshrl.u32 %v5793, 7
    %v5795 = vsub.s32 1, %v5794
    %v5796 = vrot.slane %v5787, %v5795
    %v5799 = vadd.f32 %v5783, %v5792
    %v5800 = vadd.f32 %v5784, %v5796
    %v5801 = vadd.f32 %v5785, %v5792
    %v5802 = vadd.f32 %v5786, %v5796
    %v5803 = vld [vmem:[%s37] sm:$0x3]
    %v5804 = vld [vmem:[%s39] sm:$0x3]
    %v5805 = vadd.f32 %v5799, %v5800
    %5806 = vadd.xlane.f32.xlu0 %v5805
    %v5807 = vpop.xlane.xlu0 %5806
    %v5808 = vadd.f32 %v5801, %v5802
    %5809 = vadd.xlane.f32.xlu0 %v5808
    %v5810 = vpop.xlane.xlu0 %5809
    %v5811 = vmul.f32 %v5807, %v2465
    %v5812 = vmul.f32 %v5810, %v2465
    %v5813 = vsub.f32 %v5799, %v5811
    %v5814 = vsub.f32 %v5800, %v5811
    %v5815 = vsub.f32 %v5801, %v5812
    %v5816 = vsub.f32 %v5802, %v5812
    %v5817 = vmul.f32 %v5813, %v5813
    %v5818 = vmul.f32 %v5814, %v5814
    %v5819 = vmul.f32 %v5815, %v5815
    %v5820 = vmul.f32 %v5816, %v5816
    %v5821 = vadd.f32 %v5817, %v5818
    %5822 = vadd.xlane.f32.xlu0 %v5821
    %v5823 = vpop.xlane.xlu0 %5822
    %v5824 = vadd.f32 %v5819, %v5820
    %5825 = vadd.xlane.f32.xlu0 %v5824
    %v5826 = vpop.xlane.xlu0 %5825
    %v5827 = vmul.f32 %v5823, %v2465
    %v5828 = vmul.f32 %v5826, %v2465
    %v5829 = vadd.f32 %v5827, 1e-05
    %v5830 = vadd.f32 %v5828, 1e-05
    %v5831 = vrsqrt.pop %v5829
    %v5832 = vrsqrt.pop %v5830
    %v5833 = vmul.f32 %v5813, %v5831
    %v5834 = vmul.f32 %v5814, %v5831
    %v5835 = vmul.f32 %v5815, %v5832
    %v5836 = vmul.f32 %v5816, %v5832
    %v5838 = vlaneseq
    %v5839 = vshrl.u32 %v5838, 7
    %v5840 = vsub.s32 0, %v5839
    %v5841 = vrot.slane %v5803, %v5840
    %v5842 = vlaneseq
    %v5843 = vshrl.u32 %v5842, 7
    %v5844 = vsub.s32 1, %v5843
    %v5845 = vrot.slane %v5803, %v5844
    %v5848 = vmul.f32 %v5833, %v5841
    %v5849 = vmul.f32 %v5834, %v5845
    %v5850 = vmul.f32 %v5835, %v5841
    %v5851 = vmul.f32 %v5836, %v5845
    %v5853 = vlaneseq
    %v5854 = vshrl.u32 %v5853, 7
    %v5855 = vsub.s32 0, %v5854
    %v5856 = vrot.slane %v5804, %v5855
    %v5857 = vlaneseq
    %v5858 = vshrl.u32 %v5857, 7
    %v5859 = vsub.s32 1, %v5858
    %v5860 = vrot.slane %v5804, %v5859
    %v5863 = vadd.f32 %v5848, %v5856
    %v5864 = vadd.f32 %v5849, %v5860
    %v5865 = vadd.f32 %v5850, %v5856
    %v5866 = vadd.f32 %v5851, %v5860
    %v5867 = vld [vmem:[#allocation11] sm:$0xff]
    %v5868 = vld [vmem:[#allocation11 + $0x8] sm:$0xff]
    %v5869 = vld [vmem:[#allocation11 + $0x10] sm:$0xff]
    %v5870 = vld [vmem:[#allocation11 + $0x18] sm:$0xff]
    %v5871 = vld [vmem:[#allocation11 + $0x20] sm:$0xff]
    %v5872 = vld [vmem:[#allocation11 + $0x28] sm:$0xff]
    %v5873 = vld [vmem:[#allocation11 + $0x30] sm:$0xff]
    %v5874 = vld [vmem:[#allocation11 + $0x38] sm:$0xff]
    %v5875 = vld [vmem:[#allocation11 + $0x40] sm:$0xff]
    %v5876 = vld [vmem:[#allocation11 + $0x48] sm:$0xff]
    %v5877 = vld [vmem:[#allocation11 + $0x50] sm:$0xff]
    %v5878 = vld [vmem:[#allocation11 + $0x58] sm:$0xff]
    %v5879 = vld [vmem:[#allocation11 + $0x60] sm:$0xff]
    %v5880 = vld [vmem:[#allocation11 + $0x68] sm:$0xff]
    %v5881 = vld [vmem:[#allocation11 + $0x70] sm:$0xff]
    %v5882 = vld [vmem:[#allocation11 + $0x78] sm:$0xff]
    %v5883 = vld [vmem:[#allocation11 + $0x80] sm:$0xff]
    %v5884 = vld [vmem:[#allocation11 + $0x88] sm:$0xff]
    %v5885 = vld [vmem:[#allocation11 + $0x90] sm:$0xff]
    %v5886 = vld [vmem:[#allocation11 + $0x98] sm:$0xff]
    %v5887 = vld [vmem:[#allocation11 + $0xa0] sm:$0xff]
    %v5888 = vld [vmem:[#allocation11 + $0xa8] sm:$0xff]
    %v5889 = vld [vmem:[#allocation11 + $0xb0] sm:$0xff]
    %v5890 = vld [vmem:[#allocation11 + $0xb8] sm:$0xff]
    %v5891 = vld [vmem:[#allocation11 + $0xc0] sm:$0xff]
    %v5892 = vld [vmem:[#allocation11 + $0xc8] sm:$0xff]
    %v5893 = vld [vmem:[#allocation11 + $0xd0] sm:$0xff]
    %v5894 = vld [vmem:[#allocation11 + $0xd8] sm:$0xff]
    %v5895 = vld [vmem:[#allocation11 + $0xe0] sm:$0xff]
    %v5896 = vld [vmem:[#allocation11 + $0xe8] sm:$0xff]
    %v5897 = vld [vmem:[#allocation11 + $0xf0] sm:$0xff]
    %v5898 = vld [vmem:[#allocation11 + $0xf8] sm:$0xff]
    %v5899 = vld [vmem:[#allocation11 + $0x100] sm:$0xff]
    %v5900 = vld [vmem:[#allocation11 + $0x108] sm:$0xff]
    %v5901 = vld [vmem:[#allocation11 + $0x110] sm:$0xff]
    %v5902 = vld [vmem:[#allocation11 + $0x118] sm:$0xff]
    %v5903 = vld [vmem:[#allocation11 + $0x120] sm:$0xff]
    %v5904 = vld [vmem:[#allocation11 + $0x128] sm:$0xff]
    %v5905 = vld [vmem:[#allocation11 + $0x130] sm:$0xff]
    %v5906 = vld [vmem:[#allocation11 + $0x138] sm:$0xff]
    %v5907 = vld [vmem:[#allocation11 + $0x140] sm:$0xff]
    %v5908 = vld [vmem:[#allocation11 + $0x148] sm:$0xff]
    %v5909 = vld [vmem:[#allocation11 + $0x150] sm:$0xff]
    %v5910 = vld [vmem:[#allocation11 + $0x158] sm:$0xff]
    %v5911 = vld [vmem:[#allocation11 + $0x160] sm:$0xff]
    %v5912 = vld [vmem:[#allocation11 + $0x168] sm:$0xff]
    %v5913 = vld [vmem:[#allocation11 + $0x170] sm:$0xff]
    %v5914 = vld [vmem:[#allocation11 + $0x178] sm:$0xff]
    %v5915 = vld [vmem:[#allocation11 + $0x180] sm:$0xff]
    %v5916 = vld [vmem:[#allocation11 + $0x188] sm:$0xff]
    %v5917 = vld [vmem:[#allocation11 + $0x190] sm:$0xff]
    %v5918 = vld [vmem:[#allocation11 + $0x198] sm:$0xff]
    %v5919 = vld [vmem:[#allocation11 + $0x1a0] sm:$0xff]
    %v5920 = vld [vmem:[#allocation11 + $0x1a8] sm:$0xff]
    %v5921 = vld [vmem:[#allocation11 + $0x1b0] sm:$0xff]
    %v5922 = vld [vmem:[#allocation11 + $0x1b8] sm:$0xff]
    %v5923 = vld [vmem:[#allocation11 + $0x1c0] sm:$0xff]
    %v5924 = vld [vmem:[#allocation11 + $0x1c8] sm:$0xff]
    %v5925 = vld [vmem:[#allocation11 + $0x1d0] sm:$0xff]
    %v5926 = vld [vmem:[#allocation11 + $0x1d8] sm:$0xff]
    %v5927 = vld [vmem:[#allocation11 + $0x1e0] sm:$0xff]
    %v5928 = vld [vmem:[#allocation11 + $0x1e8] sm:$0xff]
    %v5929 = vld [vmem:[#allocation11 + $0x1f0] sm:$0xff]
    %v5930 = vld [vmem:[#allocation11 + $0x1f8] sm:$0xff]
    %v5931 = vpack.c.bf16 %v5865, %v5863
    %v5932 = vpack.c.bf16 %v5866, %v5864
    %v5933 = vld [vmem:[%s43] sm:$0xf]
    %v5935 = vlaneseq
    %v5936 = vshrl.u32 %v5935, 7
    %v5937 = vsub.s32 0, %v5936
    %v5938 = vrot.slane %v5933, %v5937
    %v5939 = vlaneseq
    %v5940 = vshrl.u32 %v5939, 7
    %v5941 = vsub.s32 1, %v5940
    %v5942 = vrot.slane %v5933, %v5941
    %v5943 = vlaneseq
    %v5944 = vshrl.u32 %v5943, 7
    %v5945 = vsub.s32 2, %v5944
    %v5946 = vrot.slane %v5933, %v5945
    %v5947 = vlaneseq
    %v5948 = vshrl.u32 %v5947, 7
    %v5949 = vsub.s32 3, %v5948
    %v5950 = vrot.slane %v5933, %v5949
    %v6019 = vunpack.c.l.b16 %v5867
    %v6020 = vunpack.c.h.b16 %v5867
    %v6021 = vunpack.c.l.b16 %v5868
    %v6022 = vunpack.c.h.b16 %v5868
    %v6023 = vunpack.c.l.b16 %v5869
    %v6024 = vunpack.c.h.b16 %v5869
    %v6025 = vunpack.c.l.b16 %v5870
    %v6026 = vunpack.c.h.b16 %v5870
    %v6027 = vunpack.c.l.b16 %v5871
    %v6028 = vunpack.c.h.b16 %v5871
    %v6029 = vunpack.c.l.b16 %v5872
    %v6030 = vunpack.c.h.b16 %v5872
    %v6031 = vunpack.c.l.b16 %v5873
    %v6032 = vunpack.c.h.b16 %v5873
    %v6033 = vunpack.c.l.b16 %v5874
    %v6034 = vunpack.c.h.b16 %v5874
    %v6035 = vunpack.c.l.b16 %v5875
    %v6036 = vunpack.c.h.b16 %v5875
    %v6037 = vunpack.c.l.b16 %v5876
    %v6038 = vunpack.c.h.b16 %v5876
    %v6039 = vunpack.c.l.b16 %v5877
    %v6040 = vunpack.c.h.b16 %v5877
    %v6041 = vunpack.c.l.b16 %v5878
    %v6042 = vunpack.c.h.b16 %v5878
    %v6043 = vunpack.c.l.b16 %v5879
    %v6044 = vunpack.c.h.b16 %v5879
    %v6045 = vunpack.c.l.b16 %v5880
    %v6046 = vunpack.c.h.b16 %v5880
    %v6047 = vunpack.c.l.b16 %v5881
    %v6048 = vunpack.c.h.b16 %v5881
    %v6049 = vunpack.c.l.b16 %v5882
    %v6050 = vunpack.c.h.b16 %v5882
    %v6051 = vunpack.c.l.b16 %v5883
    %v6052 = vunpack.c.h.b16 %v5883
    %v6053 = vunpack.c.l.b16 %v5884
    %v6054 = vunpack.c.h.b16 %v5884
    %v6055 = vunpack.c.l.b16 %v5885
    %v6056 = vunpack.c.h.b16 %v5885
    %v6057 = vunpack.c.l.b16 %v5886
    %v6058 = vunpack.c.h.b16 %v5886
    %v6059 = vunpack.c.l.b16 %v5887
    %v6060 = vunpack.c.h.b16 %v5887
    %v6061 = vunpack.c.l.b16 %v5888
    %v6062 = vunpack.c.h.b16 %v5888
    %v6063 = vunpack.c.l.b16 %v5889
    %v6064 = vunpack.c.h.b16 %v5889
    %v6065 = vunpack.c.l.b16 %v5890
    %v6066 = vunpack.c.h.b16 %v5890
    %v6067 = vunpack.c.l.b16 %v5891
    %v6068 = vunpack.c.h.b16 %v5891
    %v6069 = vunpack.c.l.b16 %v5892
    %v6070 = vunpack.c.h.b16 %v5892
    %v6071 = vunpack.c.l.b16 %v5893
    %v6072 = vunpack.c.h.b16 %v5893
    %v6073 = vunpack.c.l.b16 %v5894
    %v6074 = vunpack.c.h.b16 %v5894
    %v6075 = vunpack.c.l.b16 %v5895
    %v6076 = vunpack.c.h.b16 %v5895
    %v6077 = vunpack.c.l.b16 %v5896
    %v6078 = vunpack.c.h.b16 %v5896
    %v6079 = vunpack.c.l.b16 %v5897
    %v6080 = vunpack.c.h.b16 %v5897
    %v6081 = vunpack.c.l.b16 %v5898
    %v6082 = vunpack.c.h.b16 %v5898
    %v6083 = vunpack.c.l.b16 %v5899
    %v6084 = vunpack.c.h.b16 %v5899
    %v6085 = vunpack.c.l.b16 %v5900
    %v6086 = vunpack.c.h.b16 %v5900
    %v6087 = vunpack.c.l.b16 %v5901
    %v6088 = vunpack.c.h.b16 %v5901
    %v6089 = vunpack.c.l.b16 %v5902
    %v6090 = vunpack.c.h.b16 %v5902
    %v6091 = vunpack.c.l.b16 %v5903
    %v6092 = vunpack.c.h.b16 %v5903
    %v6093 = vunpack.c.l.b16 %v5904
    %v6094 = vunpack.c.h.b16 %v5904
    %v6095 = vunpack.c.l.b16 %v5905
    %v6096 = vunpack.c.h.b16 %v5905
    %v6097 = vunpack.c.l.b16 %v5906
    %v6098 = vunpack.c.h.b16 %v5906
    %v6099 = vunpack.c.l.b16 %v5907
    %v6100 = vunpack.c.h.b16 %v5907
    %v6101 = vunpack.c.l.b16 %v5908
    %v6102 = vunpack.c.h.b16 %v5908
    %v6103 = vunpack.c.l.b16 %v5909
    %v6104 = vunpack.c.h.b16 %v5909
    %v6105 = vunpack.c.l.b16 %v5910
    %v6106 = vunpack.c.h.b16 %v5910
    %v6107 = vunpack.c.l.b16 %v5911
    %v6108 = vunpack.c.h.b16 %v5911
    %v6109 = vunpack.c.l.b16 %v5912
    %v6110 = vunpack.c.h.b16 %v5912
    %v6111 = vunpack.c.l.b16 %v5913
    %v6112 = vunpack.c.h.b16 %v5913
    %v6113 = vunpack.c.l.b16 %v5914
    %v6114 = vunpack.c.h.b16 %v5914
    %v6115 = vunpack.c.l.b16 %v5915
    %v6116 = vunpack.c.h.b16 %v5915
    %v6117 = vunpack.c.l.b16 %v5916
    %v6118 = vunpack.c.h.b16 %v5916
    %v6119 = vunpack.c.l.b16 %v5917
    %v6120 = vunpack.c.h.b16 %v5917
    %v6121 = vunpack.c.l.b16 %v5918
    %v6122 = vunpack.c.h.b16 %v5918
    %v6123 = vunpack.c.l.b16 %v5919
    %v6124 = vunpack.c.h.b16 %v5919
    %v6125 = vunpack.c.l.b16 %v5920
    %v6126 = vunpack.c.h.b16 %v5920
    %v6127 = vunpack.c.l.b16 %v5921
    %v6128 = vunpack.c.h.b16 %v5921
    %v6129 = vunpack.c.l.b16 %v5922
    %v6130 = vunpack.c.h.b16 %v5922
    %v6131 = vunpack.c.l.b16 %v5923
    %v6132 = vunpack.c.h.b16 %v5923
    %v6133 = vunpack.c.l.b16 %v5924
    %v6134 = vunpack.c.h.b16 %v5924
    %v6135 = vunpack.c.l.b16 %v5925
    %v6136 = vunpack.c.h.b16 %v5925
    %v6137 = vunpack.c.l.b16 %v5926
    %v6138 = vunpack.c.h.b16 %v5926
    %v6139 = vunpack.c.l.b16 %v5927
    %v6140 = vunpack.c.h.b16 %v5927
    %v6141 = vunpack.c.l.b16 %v5928
    %v6142 = vunpack.c.h.b16 %v5928
    %v6143 = vunpack.c.l.b16 %v5929
    %v6144 = vunpack.c.h.b16 %v5929
    %v6145 = vunpack.c.l.b16 %v5930
    %v6146 = vunpack.c.h.b16 %v5930
    %v6147 = vpack.c.b16 %v6023, %v6019
    %v6148 = vpack.c.b16 %v6024, %v6020
    %v6149 = vpack.c.b16 %v6025, %v6021
    %v6150 = vpack.c.b16 %v6026, %v6022
    %v6151 = vpack.c.b16 %v6031, %v6027
    %v6152 = vpack.c.b16 %v6032, %v6028
    %v6153 = vpack.c.b16 %v6033, %v6029
    %v6154 = vpack.c.b16 %v6034, %v6030
    %v6155 = vpack.c.b16 %v6039, %v6035
    %v6156 = vpack.c.b16 %v6040, %v6036
    %v6157 = vpack.c.b16 %v6041, %v6037
    %v6158 = vpack.c.b16 %v6042, %v6038
    %v6159 = vpack.c.b16 %v6047, %v6043
    %v6160 = vpack.c.b16 %v6048, %v6044
    %v6161 = vpack.c.b16 %v6049, %v6045
    %v6162 = vpack.c.b16 %v6050, %v6046
    %v6163 = vpack.c.b16 %v6055, %v6051
    %v6164 = vpack.c.b16 %v6056, %v6052
    %v6165 = vpack.c.b16 %v6057, %v6053
    %v6166 = vpack.c.b16 %v6058, %v6054
    %v6167 = vpack.c.b16 %v6063, %v6059
    %v6168 = vpack.c.b16 %v6064, %v6060
    %v6169 = vpack.c.b16 %v6065, %v6061
    %v6170 = vpack.c.b16 %v6066, %v6062
    %v6171 = vpack.c.b16 %v6071, %v6067
    %v6172 = vpack.c.b16 %v6072, %v6068
    %v6173 = vpack.c.b16 %v6073, %v6069
    %v6174 = vpack.c.b16 %v6074, %v6070
    %v6175 = vpack.c.b16 %v6079, %v6075
    %v6176 = vpack.c.b16 %v6080, %v6076
    %v6177 = vpack.c.b16 %v6081, %v6077
    %v6178 = vpack.c.b16 %v6082, %v6078
    %v6179 = vpack.c.b16 %v6087, %v6083
    %v6180 = vpack.c.b16 %v6088, %v6084
    %v6181 = vpack.c.b16 %v6089, %v6085
    %v6182 = vpack.c.b16 %v6090, %v6086
    %v6183 = vpack.c.b16 %v6095, %v6091
    %v6184 = vpack.c.b16 %v6096, %v6092
    %v6185 = vpack.c.b16 %v6097, %v6093
    %v6186 = vpack.c.b16 %v6098, %v6094
    %v6187 = vpack.c.b16 %v6103, %v6099
    %v6188 = vpack.c.b16 %v6104, %v6100
    %v6189 = vpack.c.b16 %v6105, %v6101
    %v6190 = vpack.c.b16 %v6106, %v6102
    %v6191 = vpack.c.b16 %v6111, %v6107
    %v6192 = vpack.c.b16 %v6112, %v6108
    %v6193 = vpack.c.b16 %v6113, %v6109
    %v6194 = vpack.c.b16 %v6114, %v6110
    %v6195 = vpack.c.b16 %v6119, %v6115
    %v6196 = vpack.c.b16 %v6120, %v6116
    %v6197 = vpack.c.b16 %v6121, %v6117
    %v6198 = vpack.c.b16 %v6122, %v6118
    %v6199 = vpack.c.b16 %v6127, %v6123
    %v6200 = vpack.c.b16 %v6128, %v6124
    %v6201 = vpack.c.b16 %v6129, %v6125
    %v6202 = vpack.c.b16 %v6130, %v6126
    %v6203 = vpack.c.b16 %v6135, %v6131
    %v6204 = vpack.c.b16 %v6136, %v6132
    %v6205 = vpack.c.b16 %v6137, %v6133
    %v6206 = vpack.c.b16 %v6138, %v6134
    %v6207 = vpack.c.b16 %v6143, %v6139
    %v6208 = vpack.c.b16 %v6144, %v6140
    %v6209 = vpack.c.b16 %v6145, %v6141
    %v6210 = vpack.c.b16 %v6146, %v6142
    %6275 = vmatprep.subr.bf16.mxu0 %v6148
    %6276 = vmatpush1.bf16.msra.mxu0 %v6147
    %6277 = vmatprep.subr.bf16.mxu0 %v6152
    %6278 = vmatpush1.bf16.msra.mxu0 %v6151
    %6279 = vmatprep.subr.bf16.mxu0 %v6156
    %6280 = vmatpush1.bf16.msra.mxu0 %v6155
    %6281 = vmatprep.subr.bf16.mxu0 %v6160
    %6282 = vmatpush1.bf16.msra.mxu0 %v6159
    %6283 = vmatprep.subr.bf16.mxu0 %v6164
    %6284 = vmatpush1.bf16.msra.mxu0 %v6163
    %6285 = vmatprep.subr.bf16.mxu0 %v6168
    %6286 = vmatpush1.bf16.msra.mxu0 %v6167
    %6287 = vmatprep.subr.bf16.mxu0 %v6172
    %6288 = vmatpush1.bf16.msra.mxu0 %v6171
    %6289 = vmatprep.subr.bf16.mxu0 %v6176
    %6290 = vmatpush1.bf16.msra.mxu0 %v6175
    %6291 = vmatprep.subr.bf16.mxu0 %v6180
    %6292 = vmatpush1.bf16.msra.mxu0 %v6179
    %6293 = vmatprep.subr.bf16.mxu0 %v6184
    %6294 = vmatpush1.bf16.msra.mxu0 %v6183
    %6295 = vmatprep.subr.bf16.mxu0 %v6188
    %6296 = vmatpush1.bf16.msra.mxu0 %v6187
    %6297 = vmatprep.subr.bf16.mxu0 %v6192
    %6298 = vmatpush1.bf16.msra.mxu0 %v6191
    %6299 = vmatprep.subr.bf16.mxu0 %v6196
    %6300 = vmatpush1.bf16.msra.mxu0 %v6195
    %6301 = vmatprep.subr.bf16.mxu0 %v6200
    %6302 = vmatpush1.bf16.msra.mxu0 %v6199
    %6303 = vmatprep.subr.bf16.mxu0 %v6204
    %6304 = vmatpush1.bf16.msra.mxu0 %v6203
    %6305 = vmatprep.subr.bf16.mxu0 %v6208
    %6306 = vmatpush1.bf16.msra.mxu0 %v6207
    %6307 = vmatprep.mubr.bf16.mxu0 %v5932
    %6308 = vmatmul.mubr.bf16.gmra.mrb[0].mxu0 %v5931
    %v6309 = vpop.f32.mrb[0].mxu0
    %v6310 = vadd.f32 %v5938, %v6309
    %v6311 = vpop.f32.mrb[0].mxu0
    %v6312 = vadd.f32 %v5942, %v6311
    %v6313 = vpop.f32.mrb[0].mxu0
    %v6314 = vadd.f32 %v5938, %v6313
    %v6315 = vpop.f32.mrb[0].mxu0
    %v6316 = vadd.f32 %v5942, %v6315
    %6317 = vdwg.mxu0
    %6318 = vmatprep.subr.bf16.mxu0 %v6150
    %6319 = vmatpush1.bf16.msra.mxu0 %v6149
    %6320 = vmatprep.subr.bf16.mxu0 %v6154
    %6321 = vmatpush1.bf16.msra.mxu0 %v6153
    %6322 = vmatprep.subr.bf16.mxu0 %v6158
    %6323 = vmatpush1.bf16.msra.mxu0 %v6157
    %6324 = vmatprep.subr.bf16.mxu0 %v6162
    %6325 = vmatpush1.bf16.msra.mxu0 %v6161
    %6326 = vmatprep.subr.bf16.mxu0 %v6166
    %6327 = vmatpush1.bf16.msra.mxu0 %v6165
    %6328 = vmatprep.subr.bf16.mxu0 %v6170
    %6329 = vmatpush1.bf16.msra.mxu0 %v6169
    %6330 = vmatprep.subr.bf16.mxu0 %v6174
    %6331 = vmatpush1.bf16.msra.mxu0 %v6173
    %6332 = vmatprep.subr.bf16.mxu0 %v6178
    %6333 = vmatpush1.bf16.msra.mxu0 %v6177
    %6334 = vmatprep.subr.bf16.mxu0 %v6182
    %6335 = vmatpush1.bf16.msra.mxu0 %v6181
    %6336 = vmatprep.subr.bf16.mxu0 %v6186
    %6337 = vmatpush1.bf16.msra.mxu0 %v6185
    %6338 = vmatprep.subr.bf16.mxu0 %v6190
    %6339 = vmatpush1.bf16.msra.mxu0 %v6189
    %6340 = vmatprep.subr.bf16.mxu0 %v6194
    %6341 = vmatpush1.bf16.msra.mxu0 %v6193
    %6342 = vmatprep.subr.bf16.mxu0 %v6198
    %6343 = vmatpush1.bf16.msra.mxu0 %v6197
    %6344 = vmatprep.subr.bf16.mxu0 %v6202
    %6345 = vmatpush1.bf16.msra.mxu0 %v6201
    %6346 = vmatprep.subr.bf16.mxu0 %v6206
    %6347 = vmatpush1.bf16.msra.mxu0 %v6205
    %6348 = vmatprep.subr.bf16.mxu0 %v6210
    %6349 = vmatpush1.bf16.msra.mxu0 %v6209
    %6350 = vmatprep.mubr.bf16.mxu0 %v5932
    %6351 = vmatmul.mubr.bf16.gmra.mrb[0].mxu0 %v5931
    %v6352 = vpop.f32.mrb[0].mxu0
    %v6353 = vadd.f32 %v5946, %v6352
    %v6354 = vpop.f32.mrb[0].mxu0
    %v6355 = vadd.f32 %v5950, %v6354
    %v6356 = vpop.f32.mrb[0].mxu0
    %v6357 = vadd.f32 %v5946, %v6356
    %v6358 = vpop.f32.mrb[0].mxu0
    %v6359 = vadd.f32 %v5950, %v6358
    %6360 = vdwg.mxu0
    %v6361 = vmax.f32 %v6310, 0.0
    %v6362 = vmax.f32 %v6312, 0.0
    %v6363 = vmax.f32 %v6353, 0.0
    %v6364 = vmax.f32 %v6355, 0.0
    %v6365 = vmax.f32 %v6314, 0.0
    %v6366 = vmax.f32 %v6316, 0.0
    %v6367 = vmax.f32 %v6357, 0.0
    %v6368 = vmax.f32 %v6359, 0.0
    %v6369 = vld [vmem:[#allocation13] sm:$0xff]
    %v6370 = vld [vmem:[#allocation13 + $0x8] sm:$0xff]
    %v6371 = vld [vmem:[#allocation13 + $0x10] sm:$0xff]
    %v6372 = vld [vmem:[#allocation13 + $0x18] sm:$0xff]
    %v6373 = vld [vmem:[#allocation13 + $0x20] sm:$0xff]
    %v6374 = vld [vmem:[#allocation13 + $0x28] sm:$0xff]
    %v6375 = vld [vmem:[#allocation13 + $0x30] sm:$0xff]
    %v6376 = vld [vmem:[#allocation13 + $0x38] sm:$0xff]
    %v6377 = vld [vmem:[#allocation13 + $0x40] sm:$0xff]
    %v6378 = vld [vmem:[#allocation13 + $0x48] sm:$0xff]
    %v6379 = vld [vmem:[#allocation13 + $0x50] sm:$0xff]
    %v6380 = vld [vmem:[#allocation13 + $0x58] sm:$0xff]
    %v6381 = vld [vmem:[#allocation13 + $0x60] sm:$0xff]
    %v6382 = vld [vmem:[#allocation13 + $0x68] sm:$0xff]
    %v6383 = vld [vmem:[#allocation13 + $0x70] sm:$0xff]
    %v6384 = vld [vmem:[#allocation13 + $0x78] sm:$0xff]
    %v6385 = vld [vmem:[#allocation13 + $0x80] sm:$0xff]
    %v6386 = vld [vmem:[#allocation13 + $0x88] sm:$0xff]
    %v6387 = vld [vmem:[#allocation13 + $0x90] sm:$0xff]
    %v6388 = vld [vmem:[#allocation13 + $0x98] sm:$0xff]
    %v6389 = vld [vmem:[#allocation13 + $0xa0] sm:$0xff]
    %v6390 = vld [vmem:[#allocation13 + $0xa8] sm:$0xff]
    %v6391 = vld [vmem:[#allocation13 + $0xb0] sm:$0xff]
    %v6392 = vld [vmem:[#allocation13 + $0xb8] sm:$0xff]
    %v6393 = vld [vmem:[#allocation13 + $0xc0] sm:$0xff]
    %v6394 = vld [vmem:[#allocation13 + $0xc8] sm:$0xff]
    %v6395 = vld [vmem:[#allocation13 + $0xd0] sm:$0xff]
    %v6396 = vld [vmem:[#allocation13 + $0xd8] sm:$0xff]
    %v6397 = vld [vmem:[#allocation13 + $0xe0] sm:$0xff]
    %v6398 = vld [vmem:[#allocation13 + $0xe8] sm:$0xff]
    %v6399 = vld [vmem:[#allocation13 + $0xf0] sm:$0xff]
    %v6400 = vld [vmem:[#allocation13 + $0xf8] sm:$0xff]
    %v6401 = vld [vmem:[#allocation13 + $0x100] sm:$0xff]
    %v6402 = vld [vmem:[#allocation13 + $0x108] sm:$0xff]
    %v6403 = vld [vmem:[#allocation13 + $0x110] sm:$0xff]
    %v6404 = vld [vmem:[#allocation13 + $0x118] sm:$0xff]
    %v6405 = vld [vmem:[#allocation13 + $0x120] sm:$0xff]
    %v6406 = vld [vmem:[#allocation13 + $0x128] sm:$0xff]
    %v6407 = vld [vmem:[#allocation13 + $0x130] sm:$0xff]
    %v6408 = vld [vmem:[#allocation13 + $0x138] sm:$0xff]
    %v6409 = vld [vmem:[#allocation13 + $0x140] sm:$0xff]
    %v6410 = vld [vmem:[#allocation13 + $0x148] sm:$0xff]
    %v6411 = vld [vmem:[#allocation13 + $0x150] sm:$0xff]
    %v6412 = vld [vmem:[#allocation13 + $0x158] sm:$0xff]
    %v6413 = vld [vmem:[#allocation13 + $0x160] sm:$0xff]
    %v6414 = vld [vmem:[#allocation13 + $0x168] sm:$0xff]
    %v6415 = vld [vmem:[#allocation13 + $0x170] sm:$0xff]
    %v6416 = vld [vmem:[#allocation13 + $0x178] sm:$0xff]
    %v6417 = vld [vmem:[#allocation13 + $0x180] sm:$0xff]
    %v6418 = vld [vmem:[#allocation13 + $0x188] sm:$0xff]
    %v6419 = vld [vmem:[#allocation13 + $0x190] sm:$0xff]
    %v6420 = vld [vmem:[#allocation13 + $0x198] sm:$0xff]
    %v6421 = vld [vmem:[#allocation13 + $0x1a0] sm:$0xff]
    %v6422 = vld [vmem:[#allocation13 + $0x1a8] sm:$0xff]
    %v6423 = vld [vmem:[#allocation13 + $0x1b0] sm:$0xff]
    %v6424 = vld [vmem:[#allocation13 + $0x1b8] sm:$0xff]
    %v6425 = vld [vmem:[#allocation13 + $0x1c0] sm:$0xff]
    %v6426 = vld [vmem:[#allocation13 + $0x1c8] sm:$0xff]
    %v6427 = vld [vmem:[#allocation13 + $0x1d0] sm:$0xff]
    %v6428 = vld [vmem:[#allocation13 + $0x1d8] sm:$0xff]
    %v6429 = vld [vmem:[#allocation13 + $0x1e0] sm:$0xff]
    %v6430 = vld [vmem:[#allocation13 + $0x1e8] sm:$0xff]
    %v6431 = vld [vmem:[#allocation13 + $0x1f0] sm:$0xff]
    %v6432 = vld [vmem:[#allocation13 + $0x1f8] sm:$0xff]
    %v6433 = vpack.c.bf16 %v6365, %v6361
    %v6434 = vpack.c.bf16 %v6366, %v6362
    %v6435 = vpack.c.bf16 %v6367, %v6363
    %v6436 = vpack.c.bf16 %v6368, %v6364
    %v6437 = vld [vmem:[%s47] sm:$0x3]
    %v6439 = vlaneseq
    %v6440 = vshrl.u32 %v6439, 7
    %v6441 = vsub.s32 0, %v6440
    %v6442 = vrot.slane %v6437, %v6441
    %v6443 = vlaneseq
    %v6444 = vshrl.u32 %v6443, 7
    %v6445 = vsub.s32 1, %v6444
    %v6446 = vrot.slane %v6437, %v6445
    %v6513 = vunpack.c.l.b16 %v6369
    %v6514 = vunpack.c.h.b16 %v6369
    %v6515 = vunpack.c.l.b16 %v6370
    %v6516 = vunpack.c.h.b16 %v6370
    %v6517 = vunpack.c.l.b16 %v6371
    %v6518 = vunpack.c.h.b16 %v6371
    %v6519 = vunpack.c.l.b16 %v6372
    %v6520 = vunpack.c.h.b16 %v6372
    %v6521 = vunpack.c.l.b16 %v6373
    %v6522 = vunpack.c.h.b16 %v6373
    %v6523 = vunpack.c.l.b16 %v6374
    %v6524 = vunpack.c.h.b16 %v6374
    %v6525 = vunpack.c.l.b16 %v6375
    %v6526 = vunpack.c.h.b16 %v6375
    %v6527 = vunpack.c.l.b16 %v6376
    %v6528 = vunpack.c.h.b16 %v6376
    %v6529 = vunpack.c.l.b16 %v6377
    %v6530 = vunpack.c.h.b16 %v6377
    %v6531 = vunpack.c.l.b16 %v6378
    %v6532 = vunpack.c.h.b16 %v6378
    %v6533 = vunpack.c.l.b16 %v6379
    %v6534 = vunpack.c.h.b16 %v6379
    %v6535 = vunpack.c.l.b16 %v6380
    %v6536 = vunpack.c.h.b16 %v6380
    %v6537 = vunpack.c.l.b16 %v6381
    %v6538 = vunpack.c.h.b16 %v6381
    %v6539 = vunpack.c.l.b16 %v6382
    %v6540 = vunpack.c.h.b16 %v6382
    %v6541 = vunpack.c.l.b16 %v6383
    %v6542 = vunpack.c.h.b16 %v6383
    %v6543 = vunpack.c.l.b16 %v6384
    %v6544 = vunpack.c.h.b16 %v6384
    %v6545 = vunpack.c.l.b16 %v6385
    %v6546 = vunpack.c.h.b16 %v6385
    %v6547 = vunpack.c.l.b16 %v6386
    %v6548 = vunpack.c.h.b16 %v6386
    %v6549 = vunpack.c.l.b16 %v6387
    %v6550 = vunpack.c.h.b16 %v6387
    %v6551 = vunpack.c.l.b16 %v6388
    %v6552 = vunpack.c.h.b16 %v6388
    %v6553 = vunpack.c.l.b16 %v6389
    %v6554 = vunpack.c.h.b16 %v6389
    %v6555 = vunpack.c.l.b16 %v6390
    %v6556 = vunpack.c.h.b16 %v6390
    %v6557 = vunpack.c.l.b16 %v6391
    %v6558 = vunpack.c.h.b16 %v6391
    %v6559 = vunpack.c.l.b16 %v6392
    %v6560 = vunpack.c.h.b16 %v6392
    %v6561 = vunpack.c.l.b16 %v6393
    %v6562 = vunpack.c.h.b16 %v6393
    %v6563 = vunpack.c.l.b16 %v6394
    %v6564 = vunpack.c.h.b16 %v6394
    %v6565 = vunpack.c.l.b16 %v6395
    %v6566 = vunpack.c.h.b16 %v6395
    %v6567 = vunpack.c.l.b16 %v6396
    %v6568 = vunpack.c.h.b16 %v6396
    %v6569 = vunpack.c.l.b16 %v6397
    %v6570 = vunpack.c.h.b16 %v6397
    %v6571 = vunpack.c.l.b16 %v6398
    %v6572 = vunpack.c.h.b16 %v6398
    %v6573 = vunpack.c.l.b16 %v6399
    %v6574 = vunpack.c.h.b16 %v6399
    %v6575 = vunpack.c.l.b16 %v6400
    %v6576 = vunpack.c.h.b16 %v6400
    %v6577 = vunpack.c.l.b16 %v6401
    %v6578 = vunpack.c.h.b16 %v6401
    %v6579 = vunpack.c.l.b16 %v6402
    %v6580 = vunpack.c.h.b16 %v6402
    %v6581 = vunpack.c.l.b16 %v6403
    %v6582 = vunpack.c.h.b16 %v6403
    %v6583 = vunpack.c.l.b16 %v6404
    %v6584 = vunpack.c.h.b16 %v6404
    %v6585 = vunpack.c.l.b16 %v6405
    %v6586 = vunpack.c.h.b16 %v6405
    %v6587 = vunpack.c.l.b16 %v6406
    %v6588 = vunpack.c.h.b16 %v6406
    %v6589 = vunpack.c.l.b16 %v6407
    %v6590 = vunpack.c.h.b16 %v6407
    %v6591 = vunpack.c.l.b16 %v6408
    %v6592 = vunpack.c.h.b16 %v6408
    %v6593 = vunpack.c.l.b16 %v6409
    %v6594 = vunpack.c.h.b16 %v6409
    %v6595 = vunpack.c.l.b16 %v6410
    %v6596 = vunpack.c.h.b16 %v6410
    %v6597 = vunpack.c.l.b16 %v6411
    %v6598 = vunpack.c.h.b16 %v6411
    %v6599 = vunpack.c.l.b16 %v6412
    %v6600 = vunpack.c.h.b16 %v6412
    %v6601 = vunpack.c.l.b16 %v6413
    %v6602 = vunpack.c.h.b16 %v6413
    %v6603 = vunpack.c.l.b16 %v6414
    %v6604 = vunpack.c.h.b16 %v6414
    %v6605 = vunpack.c.l.b16 %v6415
    %v6606 = vunpack.c.h.b16 %v6415
    %v6607 = vunpack.c.l.b16 %v6416
    %v6608 = vunpack.c.h.b16 %v6416
    %v6609 = vunpack.c.l.b16 %v6417
    %v6610 = vunpack.c.h.b16 %v6417
    %v6611 = vunpack.c.l.b16 %v6418
    %v6612 = vunpack.c.h.b16 %v6418
    %v6613 = vunpack.c.l.b16 %v6419
    %v6614 = vunpack.c.h.b16 %v6419
    %v6615 = vunpack.c.l.b16 %v6420
    %v6616 = vunpack.c.h.b16 %v6420
    %v6617 = vunpack.c.l.b16 %v6421
    %v6618 = vunpack.c.h.b16 %v6421
    %v6619 = vunpack.c.l.b16 %v6422
    %v6620 = vunpack.c.h.b16 %v6422
    %v6621 = vunpack.c.l.b16 %v6423
    %v6622 = vunpack.c.h.b16 %v6423
    %v6623 = vunpack.c.l.b16 %v6424
    %v6624 = vunpack.c.h.b16 %v6424
    %v6625 = vunpack.c.l.b16 %v6425
    %v6626 = vunpack.c.h.b16 %v6425
    %v6627 = vunpack.c.l.b16 %v6426
    %v6628 = vunpack.c.h.b16 %v6426
    %v6629 = vunpack.c.l.b16 %v6427
    %v6630 = vunpack.c.h.b16 %v6427
    %v6631 = vunpack.c.l.b16 %v6428
    %v6632 = vunpack.c.h.b16 %v6428
    %v6633 = vunpack.c.l.b16 %v6429
    %v6634 = vunpack.c.h.b16 %v6429
    %v6635 = vunpack.c.l.b16 %v6430
    %v6636 = vunpack.c.h.b16 %v6430
    %v6637 = vunpack.c.l.b16 %v6431
    %v6638 = vunpack.c.h.b16 %v6431
    %v6639 = vunpack.c.l.b16 %v6432
    %v6640 = vunpack.c.h.b16 %v6432
    %v6641 = vpack.c.b16 %v6515, %v6513
    %v6642 = vpack.c.b16 %v6516, %v6514
    %v6643 = vpack.c.b16 %v6519, %v6517
    %v6644 = vpack.c.b16 %v6520, %v6518
    %v6645 = vpack.c.b16 %v6523, %v6521
    %v6646 = vpack.c.b16 %v6524, %v6522
    %v6647 = vpack.c.b16 %v6527, %v6525
    %v6648 = vpack.c.b16 %v6528, %v6526
    %v6649 = vpack.c.b16 %v6531, %v6529
    %v6650 = vpack.c.b16 %v6532, %v6530
    %v6651 = vpack.c.b16 %v6535, %v6533
    %v6652 = vpack.c.b16 %v6536, %v6534
    %v6653 = vpack.c.b16 %v6539, %v6537
    %v6654 = vpack.c.b16 %v6540, %v6538
    %v6655 = vpack.c.b16 %v6543, %v6541
    %v6656 = vpack.c.b16 %v6544, %v6542
    %v6657 = vpack.c.b16 %v6547, %v6545
    %v6658 = vpack.c.b16 %v6548, %v6546
    %v6659 = vpack.c.b16 %v6551, %v6549
    %v6660 = vpack.c.b16 %v6552, %v6550
    %v6661 = vpack.c.b16 %v6555, %v6553
    %v6662 = vpack.c.b16 %v6556, %v6554
    %v6663 = vpack.c.b16 %v6559, %v6557
    %v6664 = vpack.c.b16 %v6560, %v6558
    %v6665 = vpack.c.b16 %v6563, %v6561
    %v6666 = vpack.c.b16 %v6564, %v6562
    %v6667 = vpack.c.b16 %v6567, %v6565
    %v6668 = vpack.c.b16 %v6568, %v6566
    %v6669 = vpack.c.b16 %v6571, %v6569
    %v6670 = vpack.c.b16 %v6572, %v6570
    %v6671 = vpack.c.b16 %v6575, %v6573
    %v6672 = vpack.c.b16 %v6576, %v6574
    %v6673 = vpack.c.b16 %v6579, %v6577
    %v6674 = vpack.c.b16 %v6580, %v6578
    %v6675 = vpack.c.b16 %v6583, %v6581
    %v6676 = vpack.c.b16 %v6584, %v6582
    %v6677 = vpack.c.b16 %v6587, %v6585
    %v6678 = vpack.c.b16 %v6588, %v6586
    %v6679 = vpack.c.b16 %v6591, %v6589
    %v6680 = vpack.c.b16 %v6592, %v6590
    %v6681 = vpack.c.b16 %v6595, %v6593
    %v6682 = vpack.c.b16 %v6596, %v6594
    %v6683 = vpack.c.b16 %v6599, %v6597
    %v6684 = vpack.c.b16 %v6600, %v6598
    %v6685 = vpack.c.b16 %v6603, %v6601
    %v6686 = vpack.c.b16 %v6604, %v6602
    %v6687 = vpack.c.b16 %v6607, %v6605
    %v6688 = vpack.c.b16 %v6608, %v6606
    %v6689 = vpack.c.b16 %v6611, %v6609
    %v6690 = vpack.c.b16 %v6612, %v6610
    %v6691 = vpack.c.b16 %v6615, %v6613
    %v6692 = vpack.c.b16 %v6616, %v6614
    %v6693 = vpack.c.b16 %v6619, %v6617
    %v6694 = vpack.c.b16 %v6620, %v6618
    %v6695 = vpack.c.b16 %v6623, %v6621
    %v6696 = vpack.c.b16 %v6624, %v6622
    %v6697 = vpack.c.b16 %v6627, %v6625
    %v6698 = vpack.c.b16 %v6628, %v6626
    %v6699 = vpack.c.b16 %v6631, %v6629
    %v6700 = vpack.c.b16 %v6632, %v6630
    %v6701 = vpack.c.b16 %v6635, %v6633
    %v6702 = vpack.c.b16 %v6636, %v6634
    %v6703 = vpack.c.b16 %v6639, %v6637
    %v6704 = vpack.c.b16 %v6640, %v6638
    %6769 = vmatprep.subr.bf16.mxu0 %v6642
    %6770 = vmatpush1.bf16.msra.mxu0 %v6641
    %6771 = vmatprep.subr.bf16.mxu0 %v6644
    %6772 = vmatpush1.bf16.msra.mxu0 %v6643
    %6773 = vmatprep.subr.bf16.mxu0 %v6646
    %6774 = vmatpush1.bf16.msra.mxu0 %v6645
    %6775 = vmatprep.subr.bf16.mxu0 %v6648
    %6776 = vmatpush1.bf16.msra.mxu0 %v6647
    %6777 = vmatprep.subr.bf16.mxu0 %v6650
    %6778 = vmatpush1.bf16.msra.mxu0 %v6649
    %6779 = vmatprep.subr.bf16.mxu0 %v6652
    %6780 = vmatpush1.bf16.msra.mxu0 %v6651
    %6781 = vmatprep.subr.bf16.mxu0 %v6654
    %6782 = vmatpush1.bf16.msra.mxu0 %v6653
    %6783 = vmatprep.subr.bf16.mxu0 %v6656
    %6784 = vmatpush1.bf16.msra.mxu0 %v6655
    %6785 = vmatprep.subr.bf16.mxu0 %v6658
    %6786 = vmatpush1.bf16.msra.mxu0 %v6657
    %6787 = vmatprep.subr.bf16.mxu0 %v6660
    %6788 = vmatpush1.bf16.msra.mxu0 %v6659
    %6789 = vmatprep.subr.bf16.mxu0 %v6662
    %6790 = vmatpush1.bf16.msra.mxu0 %v6661
    %6791 = vmatprep.subr.bf16.mxu0 %v6664
    %6792 = vmatpush1.bf16.msra.mxu0 %v6663
    %6793 = vmatprep.subr.bf16.mxu0 %v6666
    %6794 = vmatpush1.bf16.msra.mxu0 %v6665
    %6795 = vmatprep.subr.bf16.mxu0 %v6668
    %6796 = vmatpush1.bf16.msra.mxu0 %v6667
    %6797 = vmatprep.subr.bf16.mxu0 %v6670
    %6798 = vmatpush1.bf16.msra.mxu0 %v6669
    %6799 = vmatprep.subr.bf16.mxu0 %v6672
    %6800 = vmatpush1.bf16.msra.mxu0 %v6671
    %6801 = vmatprep.mubr.bf16.mxu0 %v6434
    %6802 = vmatmul.mubr.bf16.gmra.mrb[0].mxu0 %v6433
    %v6803 = vpop.f32.mrb[0].mxu0
    %v6804 = vadd.f32 %v6442, %v6803
    %v6805 = vpop.f32.mrb[0].mxu0
    %v6806 = vadd.f32 %v6446, %v6805
    %v6807 = vpop.f32.mrb[0].mxu0
    %v6808 = vadd.f32 %v6442, %v6807
    %v6809 = vpop.f32.mrb[0].mxu0
    %v6810 = vadd.f32 %v6446, %v6809
    %6811 = vdwg.mxu0
    %6812 = vmatprep.subr.bf16.mxu0 %v6674
    %6813 = vmatpush1.bf16.msra.mxu0 %v6673
    %6814 = vmatprep.subr.bf16.mxu0 %v6676
    %6815 = vmatpush1.bf16.msra.mxu0 %v6675
    %6816 = vmatprep.subr.bf16.mxu0 %v6678
    %6817 = vmatpush1.bf16.msra.mxu0 %v6677
    %6818 = vmatprep.subr.bf16.mxu0 %v6680
    %6819 = vmatpush1.bf16.msra.mxu0 %v6679
    %6820 = vmatprep.subr.bf16.mxu0 %v6682
    %6821 = vmatpush1.bf16.msra.mxu0 %v6681
    %6822 = vmatprep.subr.bf16.mxu0 %v6684
    %6823 = vmatpush1.bf16.msra.mxu0 %v6683
    %6824 = vmatprep.subr.bf16.mxu0 %v6686
    %6825 = vmatpush1.bf16.msra.mxu0 %v6685
    %6826 = vmatprep.subr.bf16.mxu0 %v6688
    %6827 = vmatpush1.bf16.msra.mxu0 %v6687
    %6828 = vmatprep.subr.bf16.mxu0 %v6690
    %6829 = vmatpush1.bf16.msra.mxu0 %v6689
    %6830 = vmatprep.subr.bf16.mxu0 %v6692
    %6831 = vmatpush1.bf16.msra.mxu0 %v6691
    %6832 = vmatprep.subr.bf16.mxu0 %v6694
    %6833 = vmatpush1.bf16.msra.mxu0 %v6693
    %6834 = vmatprep.subr.bf16.mxu0 %v6696
    %6835 = vmatpush1.bf16.msra.mxu0 %v6695
    %6836 = vmatprep.subr.bf16.mxu0 %v6698
    %6837 = vmatpush1.bf16.msra.mxu0 %v6697
    %6838 = vmatprep.subr.bf16.mxu0 %v6700
    %6839 = vmatpush1.bf16.msra.mxu0 %v6699
    %6840 = vmatprep.subr.bf16.mxu0 %v6702
    %6841 = vmatpush1.bf16.msra.mxu0 %v6701
    %6842 = vmatprep.subr.bf16.mxu0 %v6704
    %6843 = vmatpush1.bf16.msra.mxu0 %v6703
    %6844 = vmatprep.mubr.bf16.mxu0 %v6436
    %6845 = vmatmul.mubr.bf16.gmra.mrb[0].mxu0 %v6435
    %v6846 = vpop.f32.mrb[0].mxu0
    %v6847 = vadd.f32 %v6804, %v6846
    %v6848 = vpop.f32.mrb[0].mxu0
    %v6849 = vadd.f32 %v6806, %v6848
    %v6850 = vpop.f32.mrb[0].mxu0
    %v6851 = vadd.f32 %v6808, %v6850
    %v6852 = vpop.f32.mrb[0].mxu0
    %v6853 = vadd.f32 %v6810, %v6852
    %6854 = vdwg.mxu0
    %v6855 = vadd.f32 %v5863, %v6847
    %v6856 = vadd.f32 %v5864, %v6849
    %v6857 = vadd.f32 %v5865, %v6851
    %v6858 = vadd.f32 %v5866, %v6853
    %v6859 = vld [vmem:[%s49] sm:$0x3]
    %v6860 = vld [vmem:[%s51] sm:$0x3]
    %v6861 = vadd.f32 %v6855, %v6856
    %6862 = vadd.xlane.f32.xlu0 %v6861
    %v6863 = vpop.xlane.xlu0 %6862
    %v6864 = vadd.f32 %v6857, %v6858
    %6865 = vadd.xlane.f32.xlu0 %v6864
    %v6866 = vpop.xlane.xlu0 %6865
    %v6867 = vmul.f32 %v6863, %v2465
    %v6868 = vmul.f32 %v6866, %v2465
    %v6869 = vsub.f32 %v6855, %v6867
    %v6870 = vsub.f32 %v6856, %v6867
    %v6871 = vsub.f32 %v6857, %v6868
    %v6872 = vsub.f32 %v6858, %v6868
    %v6873 = vmul.f32 %v6869, %v6869
    %v6874 = vmul.f32 %v6870, %v6870
    %v6875 = vmul.f32 %v6871, %v6871
    %v6876 = vmul.f32 %v6872, %v6872
    %v6877 = vadd.f32 %v6873, %v6874
    %6878 = vadd.xlane.f32.xlu0 %v6877
    %v6879 = vpop.xlane.xlu0 %6878
    %v6880 = vadd.f32 %v6875, %v6876
    %6881 = vadd.xlane.f32.xlu0 %v6880
    %v6882 = vpop.xlane.xlu0 %6881
    %v6883 = vmul.f32 %v6879, %v2465
    %v6884 = vmul.f32 %v6882, %v2465
    %v6885 = vadd.f32 %v6883, 1e-05
    %v6886 = vadd.f32 %v6884, 1e-05
    %v6887 = vrsqrt.pop %v6885
    %v6888 = vrsqrt.pop %v6886
    %v6889 = vmul.f32 %v6869, %v6887
    %v6890 = vmul.f32 %v6870, %v6887
    %v6891 = vmul.f32 %v6871, %v6888
    %v6892 = vmul.f32 %v6872, %v6888
    %v6894 = vlaneseq
    %v6895 = vshrl.u32 %v6894, 7
    %v6896 = vsub.s32 0, %v6895
    %v6897 = vrot.slane %v6859, %v6896
    %v6898 = vlaneseq
    %v6899 = vshrl.u32 %v6898, 7
    %v6900 = vsub.s32 1, %v6899
    %v6901 = vrot.slane %v6859, %v6900
    %v6904 = vmul.f32 %v6889, %v6897
    %v6905 = vmul.f32 %v6890, %v6901
    %v6906 = vmul.f32 %v6891, %v6897
    %v6907 = vmul.f32 %v6892, %v6901
    %v6909 = vlaneseq
    %v6910 = vshrl.u32 %v6909, 7
    %v6911 = vsub.s32 0, %v6910
    %v6912 = vrot.slane %v6860, %v6911
    %v6913 = vlaneseq
    %v6914 = vshrl.u32 %v6913, 7
    %v6915 = vsub.s32 1, %v6914
    %v6916 = vrot.slane %v6860, %v6915
    %v6919 = vadd.f32 %v6904, %v6912
    %v6920 = vadd.f32 %v6905, %v6916
    %v6921 = vadd.f32 %v6906, %v6912
    %v6922 = vadd.f32 %v6907, %v6916
    %v6923 = vld [vmem:[#allocation14] sm:$0xff]
    %v6924 = vld [vmem:[#allocation14 + $0x8] sm:$0xff]
    %v6925 = vld [vmem:[#allocation14 + $0x10] sm:$0xff]
    %v6926 = vld [vmem:[#allocation14 + $0x18] sm:$0xff]
    %v6927 = vld [vmem:[#allocation14 + $0x20] sm:$0xff]
    %v6928 = vld [vmem:[#allocation14 + $0x28] sm:$0xff]
    %v6929 = vld [vmem:[#allocation14 + $0x30] sm:$0xff]
    %v6930 = vld [vmem:[#allocation14 + $0x38] sm:$0xff]
    %v6931 = vld [vmem:[#allocation14 + $0x40] sm:$0xff]
    %v6932 = vld [vmem:[#allocation14 + $0x48] sm:$0xff]
    %v6933 = vld [vmem:[#allocation14 + $0x50] sm:$0xff]
    %v6934 = vld [vmem:[#allocation14 + $0x58] sm:$0xff]
    %v6935 = vld [vmem:[#allocation14 + $0x60] sm:$0xff]
    %v6936 = vld [vmem:[#allocation14 + $0x68] sm:$0xff]
    %v6937 = vld [vmem:[#allocation14 + $0x70] sm:$0xff]
    %v6938 = vld [vmem:[#allocation14 + $0x78] sm:$0xff]
    %v6939 = vld [vmem:[#allocation14 + $0x80] sm:$0xff]
    %v6940 = vld [vmem:[#allocation14 + $0x88] sm:$0xff]
    %v6941 = vld [vmem:[#allocation14 + $0x90] sm:$0xff]
    %v6942 = vld [vmem:[#allocation14 + $0x98] sm:$0xff]
    %v6943 = vld [vmem:[#allocation14 + $0xa0] sm:$0xff]
    %v6944 = vld [vmem:[#allocation14 + $0xa8] sm:$0xff]
    %v6945 = vld [vmem:[#allocation14 + $0xb0] sm:$0xff]
    %v6946 = vld [vmem:[#allocation14 + $0xb8] sm:$0xff]
    %v6947 = vld [vmem:[#allocation14 + $0xc0] sm:$0xff]
    %v6948 = vld [vmem:[#allocation14 + $0xc8] sm:$0xff]
    %v6949 = vld [vmem:[#allocation14 + $0xd0] sm:$0xff]
    %v6950 = vld [vmem:[#allocation14 + $0xd8] sm:$0xff]
    %v6951 = vld [vmem:[#allocation14 + $0xe0] sm:$0xff]
    %v6952 = vld [vmem:[#allocation14 + $0xe8] sm:$0xff]
    %v6953 = vld [vmem:[#allocation14 + $0xf0] sm:$0xff]
    %v6954 = vld [vmem:[#allocation14 + $0xf8] sm:$0xff]
    %v6955 = vld [vmem:[%s55] sm:$0x3]
    %v6956 = vld [vmem:[%s57] sm:$0xf]
    %v6957 = vld [vmem:[%s57 + $0x4] sm:$0xf]
    %v6958 = vld [vmem:[%s57 + $0x8] sm:$0xf]
    %v6959 = vld [vmem:[%s57 + $0xc] sm:$0xf]
    %v6960 = vld [vmem:[%s57 + $0x10] sm:$0xf]
    %v6961 = vld [vmem:[%s57 + $0x14] sm:$0xf]
    %v6962 = vld [vmem:[%s57 + $0x18] sm:$0xf]
    %v6963 = vld [vmem:[%s57 + $0x1c] sm:$0xf]
    %v6964 = vld [vmem:[%s57 + $0x20] sm:$0xf]
    %v6965 = vld [vmem:[%s57 + $0x24] sm:$0xf]
    %v6966 = vld [vmem:[%s57 + $0x28] sm:$0xf]
    %v6967 = vld [vmem:[%s57 + $0x2c] sm:$0xf]
    %v6968 = vld [vmem:[%s57 + $0x30] sm:$0xf]
    %v6969 = vld [vmem:[%s57 + $0x34] sm:$0xf]
    %v6970 = vld [vmem:[%s57 + $0x38] sm:$0xf]
    %v6971 = vld [vmem:[%s57 + $0x3c] sm:$0xf]
    %v6972 = vld [vmem:[%s57 + $0x40] sm:$0xf]
    %v6973 = vld [vmem:[%s57 + $0x44] sm:$0xf]
    %v6974 = vld [vmem:[%s57 + $0x48] sm:$0xf]
    %v6975 = vld [vmem:[%s57 + $0x4c] sm:$0xf]
    %v6976 = vld [vmem:[%s57 + $0x50] sm:$0xf]
    %v6977 = vld [vmem:[%s57 + $0x54] sm:$0xf]
    %v6978 = vld [vmem:[%s57 + $0x58] sm:$0xf]
    %v6979 = vld [vmem:[%s57 + $0x5c] sm:$0xf]
    %v6980 = vld [vmem:[%s57 + $0x60] sm:$0xf]
    %v6981 = vld [vmem:[%s57 + $0x64] sm:$0xf]
    %v6982 = vld [vmem:[%s57 + $0x68] sm:$0xf]
    %v6983 = vld [vmem:[%s57 + $0x6c] sm:$0xf]
    %v6984 = vld [vmem:[%s57 + $0x70] sm:$0xf]
    %v6985 = vld [vmem:[%s57 + $0x74] sm:$0xf]
    %v6986 = vld [vmem:[%s57 + $0x78] sm:$0xf]
    %v6987 = vld [vmem:[%s57 + $0x7c] sm:$0xf]
    %v6988 = vld [vmem:[%s59] sm:$0x1]
    %v6989 = vpack.c.bf16 %v6919, %v6919
    %v6990 = vpack.c.bf16 %v6920, %v6920
    %v7023 = vunpack.c.l.b16 %v6923
    %v7024 = vunpack.c.h.b16 %v6923
    %v7025 = vunpack.c.l.b16 %v6924
    %v7026 = vunpack.c.h.b16 %v6924
    %v7027 = vunpack.c.l.b16 %v6925
    %v7028 = vunpack.c.h.b16 %v6925
    %v7029 = vunpack.c.l.b16 %v6926
    %v7030 = vunpack.c.h.b16 %v6926
    %v7031 = vunpack.c.l.b16 %v6927
    %v7032 = vunpack.c.h.b16 %v6927
    %v7033 = vunpack.c.l.b16 %v6928
    %v7034 = vunpack.c.h.b16 %v6928
    %v7035 = vunpack.c.l.b16 %v6929
    %v7036 = vunpack.c.h.b16 %v6929
    %v7037 = vunpack.c.l.b16 %v6930
    %v7038 = vunpack.c.h.b16 %v6930
    %v7039 = vunpack.c.l.b16 %v6931
    %v7040 = vunpack.c.h.b16 %v6931
    %v7041 = vunpack.c.l.b16 %v6932
    %v7042 = vunpack.c.h.b16 %v6932
    %v7043 = vunpack.c.l.b16 %v6933
    %v7044 = vunpack.c.h.b16 %v6933
    %v7045 = vunpack.c.l.b16 %v6934
    %v7046 = vunpack.c.h.b16 %v6934
    %v7047 = vunpack.c.l.b16 %v6935
    %v7048 = vunpack.c.h.b16 %v6935
    %v7049 = vunpack.c.l.b16 %v6936
    %v7050 = vunpack.c.h.b16 %v6936
    %v7051 = vunpack.c.l.b16 %v6937
    %v7052 = vunpack.c.h.b16 %v6937
    %v7053 = vunpack.c.l.b16 %v6938
    %v7054 = vunpack.c.h.b16 %v6938
    %v7055 = vunpack.c.l.b16 %v6939
    %v7056 = vunpack.c.h.b16 %v6939
    %v7057 = vunpack.c.l.b16 %v6940
    %v7058 = vunpack.c.h.b16 %v6940
    %v7059 = vunpack.c.l.b16 %v6941
    %v7060 = vunpack.c.h.b16 %v6941
    %v7061 = vunpack.c.l.b16 %v6942
    %v7062 = vunpack.c.h.b16 %v6942
    %v7063 = vunpack.c.l.b16 %v6943
    %v7064 = vunpack.c.h.b16 %v6943
    %v7065 = vunpack.c.l.b16 %v6944
    %v7066 = vunpack.c.h.b16 %v6944
    %v7067 = vunpack.c.l.b16 %v6945
    %v7068 = vunpack.c.h.b16 %v6945
    %v7069 = vunpack.c.l.b16 %v6946
    %v7070 = vunpack.c.h.b16 %v6946
    %v7071 = vunpack.c.l.b16 %v6947
    %v7072 = vunpack.c.h.b16 %v6947
    %v7073 = vunpack.c.l.b16 %v6948
    %v7074 = vunpack.c.h.b16 %v6948
    %v7075 = vunpack.c.l.b16 %v6949
    %v7076 = vunpack.c.h.b16 %v6949
    %v7077 = vunpack.c.l.b16 %v6950
    %v7078 = vunpack.c.h.b16 %v6950
    %v7079 = vunpack.c.l.b16 %v6951
    %v7080 = vunpack.c.h.b16 %v6951
    %v7081 = vunpack.c.l.b16 %v6952
    %v7082 = vunpack.c.h.b16 %v6952
    %v7083 = vunpack.c.l.b16 %v6953
    %v7084 = vunpack.c.h.b16 %v6953
    %v7085 = vunpack.c.l.b16 %v6954
    %v7086 = vunpack.c.h.b16 %v6954
    %v7087 = vpack.c.b16 %v7025, %v7023
    %v7088 = vpack.c.b16 %v7026, %v7024
    %v7089 = vpack.c.b16 %v7029, %v7027
    %v7090 = vpack.c.b16 %v7030, %v7028
    %v7091 = vpack.c.b16 %v7033, %v7031
    %v7092 = vpack.c.b16 %v7034, %v7032
    %v7093 = vpack.c.b16 %v7037, %v7035
    %v7094 = vpack.c.b16 %v7038, %v7036
    %v7095 = vpack.c.b16 %v7041, %v7039
    %v7096 = vpack.c.b16 %v7042, %v7040
    %v7097 = vpack.c.b16 %v7045, %v7043
    %v7098 = vpack.c.b16 %v7046, %v7044
    %v7099 = vpack.c.b16 %v7049, %v7047
    %v7100 = vpack.c.b16 %v7050, %v7048
    %v7101 = vpack.c.b16 %v7053, %v7051
    %v7102 = vpack.c.b16 %v7054, %v7052
    %v7103 = vpack.c.b16 %v7057, %v7055
    %v7104 = vpack.c.b16 %v7058, %v7056
    %v7105 = vpack.c.b16 %v7061, %v7059
    %v7106 = vpack.c.b16 %v7062, %v7060
    %v7107 = vpack.c.b16 %v7065, %v7063
    %v7108 = vpack.c.b16 %v7066, %v7064
    %v7109 = vpack.c.b16 %v7069, %v7067
    %v7110 = vpack.c.b16 %v7070, %v7068
    %v7111 = vpack.c.b16 %v7073, %v7071
    %v7112 = vpack.c.b16 %v7074, %v7072
    %v7113 = vpack.c.b16 %v7077, %v7075
    %v7114 = vpack.c.b16 %v7078, %v7076
    %v7115 = vpack.c.b16 %v7081, %v7079
    %v7116 = vpack.c.b16 %v7082, %v7080
    %v7117 = vpack.c.b16 %v7085, %v7083
    %v7118 = vpack.c.b16 %v7086, %v7084
    %v7152 = vlaneseq
    %v7153 = vshrl.u32 %v7152, 7
    %v7154 = vsub.s32 0, %v7153
    %v7155 = vrot.slane %v6955, %v7154
    %v7156 = vlaneseq
    %v7157 = vshrl.u32 %v7156, 7
    %v7158 = vsub.s32 1, %v7157
    %v7159 = vrot.slane %v6955, %v7158
    %7162 = vmatprep.subr.bf16.mxu0 %v7088
    %7163 = vmatpush1.bf16.msra.mxu0 %v7087
    %7164 = vmatprep.subr.bf16.mxu0 %v7090
    %7165 = vmatpush1.bf16.msra.mxu0 %v7089
    %7166 = vmatprep.subr.bf16.mxu0 %v7092
    %7167 = vmatpush1.bf16.msra.mxu0 %v7091
    %7168 = vmatprep.subr.bf16.mxu0 %v7094
    %7169 = vmatpush1.bf16.msra.mxu0 %v7093
    %7170 = vmatprep.subr.bf16.mxu0 %v7096
    %7171 = vmatpush1.bf16.msra.mxu0 %v7095
    %7172 = vmatprep.subr.bf16.mxu0 %v7098
    %7173 = vmatpush1.bf16.msra.mxu0 %v7097
    %7174 = vmatprep.subr.bf16.mxu0 %v7100
    %7175 = vmatpush1.bf16.msra.mxu0 %v7099
    %7176 = vmatprep.subr.bf16.mxu0 %v7102
    %7177 = vmatpush1.bf16.msra.mxu0 %v7101
    %7178 = vmatprep.subr.bf16.mxu0 %v7104
    %7179 = vmatpush1.bf16.msra.mxu0 %v7103
    %7180 = vmatprep.subr.bf16.mxu0 %v7106
    %7181 = vmatpush1.bf16.msra.mxu0 %v7105
    %7182 = vmatprep.subr.bf16.mxu0 %v7108
    %7183 = vmatpush1.bf16.msra.mxu0 %v7107
    %7184 = vmatprep.subr.bf16.mxu0 %v7110
    %7185 = vmatpush1.bf16.msra.mxu0 %v7109
    %7186 = vmatprep.subr.bf16.mxu0 %v7112
    %7187 = vmatpush1.bf16.msra.mxu0 %v7111
    %7188 = vmatprep.subr.bf16.mxu0 %v7114
    %7189 = vmatpush1.bf16.msra.mxu0 %v7113
    %7190 = vmatprep.subr.bf16.mxu0 %v7116
    %7191 = vmatpush1.bf16.msra.mxu0 %v7115
    %7192 = vmatprep.subr.bf16.mxu0 %v7118
    %7193 = vmatpush1.bf16.msra.mxu0 %v7117
    %7194 = vmatprep.mubr.bf16.mxu0 %v6990
    %7195 = vmatmul.mubr.bf16.gmra.mrb[0].mxu0 %v6989
    %v7196 = vpop.f32.mrb[0].mxu0
    %v7197 = vadd.f32 %v7155, %v7196
    %v7198 = vpop.f32.mrb[0].mxu0
    %v7199 = vadd.f32 %v7159, %v7198
    %v7200 = vpop.f32.mrb[0].mxu0
    %v7201 = vpop.f32.mrb[0].mxu0
    %7202 = vdwg.mxu0
    %v7203 = vtanh.pop %v7197
    %v7204 = vtanh.pop %v7199
    %v7205 = vpack.c.bf16 %v7203, %v7203
    %v7206 = vpack.c.bf16 %v7204, %v7204
    %v7239 = vunpack.c.l.b16 %v6956
    %v7240 = vunpack.c.l.b16 %v6957
    %v7241 = vunpack.c.l.b16 %v6958
    %v7242 = vunpack.c.l.b16 %v6959
    %v7243 = vunpack.c.l.b16 %v6960
    %v7244 = vunpack.c.l.b16 %v6961
    %v7245 = vunpack.c.l.b16 %v6962
    %v7246 = vunpack.c.l.b16 %v6963
    %v7247 = vunpack.c.l.b16 %v6964
    %v7248 = vunpack.c.l.b16 %v6965
    %v7249 = vunpack.c.l.b16 %v6966
    %v7250 = vunpack.c.l.b16 %v6967
    %v7251 = vunpack.c.l.b16 %v6968
    %v7252 = vunpack.c.l.b16 %v6969
    %v7253 = vunpack.c.l.b16 %v6970
    %v7254 = vunpack.c.l.b16 %v6971
    %v7255 = vunpack.c.l.b16 %v6972
    %v7256 = vunpack.c.l.b16 %v6973
    %v7257 = vunpack.c.l.b16 %v6974
    %v7258 = vunpack.c.l.b16 %v6975
    %v7259 = vunpack.c.l.b16 %v6976
    %v7260 = vunpack.c.l.b16 %v6977
    %v7261 = vunpack.c.l.b16 %v6978
    %v7262 = vunpack.c.l.b16 %v6979
    %v7263 = vunpack.c.l.b16 %v6980
    %v7264 = vunpack.c.l.b16 %v6981
    %v7265 = vunpack.c.l.b16 %v6982
    %v7266 = vunpack.c.l.b16 %v6983
    %v7267 = vunpack.c.l.b16 %v6984
    %v7268 = vunpack.c.l.b16 %v6985
    %v7269 = vunpack.c.l.b16 %v6986
    %v7270 = vunpack.c.l.b16 %v6987
    %v7271 = vpack.c.b16 %v7240, %v7239
    %v7272 = vpack.c.b16 %v7242, %v7241
    %v7273 = vpack.c.b16 %v7244, %v7243
    %v7274 = vpack.c.b16 %v7246, %v7245
    %v7275 = vpack.c.b16 %v7248, %v7247
    %v7276 = vpack.c.b16 %v7250, %v7249
    %v7277 = vpack.c.b16 %v7252, %v7251
    %v7278 = vpack.c.b16 %v7254, %v7253
    %v7279 = vpack.c.b16 %v7256, %v7255
    %v7280 = vpack.c.b16 %v7258, %v7257
    %v7281 = vpack.c.b16 %v7260, %v7259
    %v7282 = vpack.c.b16 %v7262, %v7261
    %v7283 = vpack.c.b16 %v7264, %v7263
    %v7284 = vpack.c.b16 %v7266, %v7265
    %v7285 = vpack.c.b16 %v7268, %v7267
    %v7286 = vpack.c.b16 %v7270, %v7269
    %7303 = vmatprep.subr.bf16.mxu0 0
    %7304 = vmatpush1.bf16.msra.mxu0 %v7271
    %7305 = vmatprep.subr.bf16.mxu0 0
    %7306 = vmatpush1.bf16.msra.mxu0 %v7272
    %7307 = vmatprep.subr.bf16.mxu0 0
    %7308 = vmatpush1.bf16.msra.mxu0 %v7273
    %7309 = vmatprep.subr.bf16.mxu0 0
    %7310 = vmatpush1.bf16.msra.mxu0 %v7274
    %7311 = vmatprep.subr.bf16.mxu0 0
    %7312 = vmatpush1.bf16.msra.mxu0 %v7275
    %7313 = vmatprep.subr.bf16.mxu0 0
    %7314 = vmatpush1.bf16.msra.mxu0 %v7276
    %7315 = vmatprep.subr.bf16.mxu0 0
    %7316 = vmatpush1.bf16.msra.mxu0 %v7277
    %7317 = vmatprep.subr.bf16.mxu0 0
    %7318 = vmatpush1.bf16.msra.mxu0 %v7278
    %7319 = vmatprep.subr.bf16.mxu0 0
    %7320 = vmatpush1.bf16.msra.mxu0 %v7279
    %7321 = vmatprep.subr.bf16.mxu0 0
    %7322 = vmatpush1.bf16.msra.mxu0 %v7280
    %7323 = vmatprep.subr.bf16.mxu0 0
    %7324 = vmatpush1.bf16.msra.mxu0 %v7281
    %7325 = vmatprep.subr.bf16.mxu0 0
    %7326 = vmatpush1.bf16.msra.mxu0 %v7282
    %7327 = vmatprep.subr.bf16.mxu0 0
    %7328 = vmatpush1.bf16.msra.mxu0 %v7283
    %7329 = vmatprep.subr.bf16.mxu0 0
    %7330 = vmatpush1.bf16.msra.mxu0 %v7284
    %7331 = vmatprep.subr.bf16.mxu0 0
    %7332 = vmatpush1.bf16.msra.mxu0 %v7285
    %7333 = vmatprep.subr.bf16.mxu0 0
    %7334 = vmatpush1.bf16.msra.mxu0 %v7286
    %7335 = vmatprep.mubr.bf16.mxu0 %v7206
    %7336 = vmatmul.mubr.bf16.gmra.mrb[0].mxu0 %v7205
    %v7337 = vpop.f32.mrb[0].mxu0
    %v7338 = vadd.f32 %v6988, %v7337
    %v7339 = vpop.f32.mrb[0].mxu0
    %v7340 = vpop.f32.mrb[0].mxu0
    %v7341 = vpop.f32.mrb[0].mxu0
    %7342 = vdwg.mxu0
    %7343 = vst [vmem:[#allocation16] sm:$0x1] %v7338
    %v7344 = vpack.c.bf16 %v6921, %v6921
    %v7345 = vpack.c.bf16 %v6922, %v6922
    %7346 = vmatprep.subr.bf16.mxu0 %v7088
    %7347 = vmatpush1.bf16.msra.mxu0 %v7087
    %7348 = vmatprep.subr.bf16.mxu0 %v7090
    %7349 = vmatpush1.bf16.msra.mxu0 %v7089
    %7350 = vmatprep.subr.bf16.mxu0 %v7092
    %7351 = vmatpush1.bf16.msra.mxu0 %v7091
    %7352 = vmatprep.subr.bf16.mxu0 %v7094
    %7353 = vmatpush1.bf16.msra.mxu0 %v7093
    %7354 = vmatprep.subr.bf16.mxu0 %v7096
    %7355 = vmatpush1.bf16.msra.mxu0 %v7095
    %7356 = vmatprep.subr.bf16.mxu0 %v7098
    %7357 = vmatpush1.bf16.msra.mxu0 %v7097
    %7358 = vmatprep.subr.bf16.mxu0 %v7100
    %7359 = vmatpush1.bf16.msra.mxu0 %v7099
    %7360 = vmatprep.subr.bf16.mxu0 %v7102
    %7361 = vmatpush1.bf16.msra.mxu0 %v7101
    %7362 = vmatprep.subr.bf16.mxu0 %v7104
    %7363 = vmatpush1.bf16.msra.mxu0 %v7103
    %7364 = vmatprep.subr.bf16.mxu0 %v7106
    %7365 = vmatpush1.bf16.msra.mxu0 %v7105
    %7366 = vmatprep.subr.bf16.mxu0 %v7108
    %7367 = vmatpush1.bf16.msra.mxu0 %v7107
    %7368 = vmatprep.subr.bf16.mxu0 %v7110
    %7369 = vmatpush1.bf16.msra.mxu0 %v7109
    %7370 = vmatprep.subr.bf16.mxu0 %v7112
    %7371 = vmatpush1.bf16.msra.mxu0 %v7111
    %7372 = vmatprep.subr.bf16.mxu0 %v7114
    %7373 = vmatpush1.bf16.msra.mxu0 %v7113
    %7374 = vmatprep.subr.bf16.mxu0 %v7116
    %7375 = vmatpush1.bf16.msra.mxu0 %v7115
    %7376 = vmatprep.subr.bf16.mxu0 %v7118
    %7377 = vmatpush1.bf16.msra.mxu0 %v7117
    %7378 = vmatprep.mubr.bf16.mxu0 %v7345
    %7379 = vmatmul.mubr.bf16.gmra.mrb[0].mxu0 %v7344
    %v7380 = vpop.f32.mrb[0].mxu0
    %v7381 = vadd.f32 %v7155, %v7380
    %v7382 = vpop.f32.mrb[0].mxu0
    %v7383 = vadd.f32 %v7159, %v7382
    %v7384 = vpop.f32.mrb[0].mxu0
    %v7385 = vpop.f32.mrb[0].mxu0
    %7386 = vdwg.mxu0
    %v7387 = vtanh.pop %v7381
    %v7388 = vtanh.pop %v7383
    %v7389 = vpack.c.bf16 %v7387, %v7387
    %v7390 = vpack.c.bf16 %v7388, %v7388
    %7391 = vmatprep.subr.bf16.mxu0 0
    %7392 = vmatpush1.bf16.msra.mxu0 %v7271
    %7393 = vmatprep.subr.bf16.mxu0 0
    %7394 = vmatpush1.bf16.msra.mxu0 %v7272
    %7395 = vmatprep.subr.bf16.mxu0 0
    %7396 = vmatpush1.bf16.msra.mxu0 %v7273
    %7397 = vmatprep.subr.bf16.mxu0 0
    %7398 = vmatpush1.bf16.msra.mxu0 %v7274
    %7399 = vmatprep.subr.bf16.mxu0 0
    %7400 = vmatpush1.bf16.msra.mxu0 %v7275
    %7401 = vmatprep.subr.bf16.mxu0 0
    %7402 = vmatpush1.bf16.msra.mxu0 %v7276
    %7403 = vmatprep.subr.bf16.mxu0 0
    %7404 = vmatpush1.bf16.msra.mxu0 %v7277
    %7405 = vmatprep.subr.bf16.mxu0 0
    %7406 = vmatpush1.bf16.msra.mxu0 %v7278
    %7407 = vmatprep.subr.bf16.mxu0 0
    %7408 = vmatpush1.bf16.msra.mxu0 %v7279
    %7409 = vmatprep.subr.bf16.mxu0 0
    %7410 = vmatpush1.bf16.msra.mxu0 %v7280
    %7411 = vmatprep.subr.bf16.mxu0 0
    %7412 = vmatpush1.bf16.msra.mxu0 %v7281
    %7413 = vmatprep.subr.bf16.mxu0 0
    %7414 = vmatpush1.bf16.msra.mxu0 %v7282
    %7415 = vmatprep.subr.bf16.mxu0 0
    %7416 = vmatpush1.bf16.msra.mxu0 %v7283
    %7417 = vmatprep.subr.bf16.mxu0 0
    %7418 = vmatpush1.bf16.msra.mxu0 %v7284
    %7419 = vmatprep.subr.bf16.mxu0 0
    %7420 = vmatpush1.bf16.msra.mxu0 %v7285
    %7421 = vmatprep.subr.bf16.mxu0 0
    %7422 = vmatpush1.bf16.msra.mxu0 %v7286
    %7423 = vmatprep.mubr.bf16.mxu0 %v7390
    %7424 = vmatmul.mubr.bf16.gmra.mrb[0].mxu0 %v7389
    %v7425 = vpop.f32.mrb[0].mxu0
    %v7426 = vadd.f32 %v6988, %v7425
    %v7427 = vpop.f32.mrb[0].mxu0
    %v7428 = vpop.f32.mrb[0].mxu0
    %v7429 = vpop.f32.mrb[0].mxu0
    %7430 = vdwg.mxu0
    %7431 = vst [vmem:[#allocation16 + $0x1] sm:$0x1] %v7426
    // Predicated region
    $region150: #{bert_classifier_forward.1} parent=1 // pred_check
      _
    $region151: #{bert_classifier_forward.1} parent=1 // pred_check_branch
      %7433 = sbr.rel (0) target = $region153
    $region152: #{bert_classifier_forward.1} parent=1 // pred_region
      %s7435 = ssub.s32 32, 32
      %7436 = vsyncadd [#allocation5], %s7435
      %s7438 = sshll.u32 [#allocation16], 4
      %s7439 = int_to_ptr.vmem [resolvable:$true] %s7438
      %7441 = dma.vmem_to_hbm [thread:$0]  %s7439, 32, %s61, [#allocation5]
    $region153: #{bert_classifier_forward.1} parent=1 // pred_fallthru
      _
    // Predicated region
    $region154: #{bert_classifier_forward.1} parent=1 // pred_check
      _
    $region155: #{bert_classifier_forward.1} parent=1 // pred_check_branch
      %7443 = sbr.rel (0) target = $region157
    $region156: #{bert_classifier_forward.1} parent=1 // pred_region
      %7444 = dma.done [#allocation5], 32
    $region157: #{bert_classifier_forward.1} parent=1 // pred_fallthru
      _
    %7445 = vsyncpa [#allocation4], 1
    %7446 = vsyncpa [#allocation9], 1
    %7447 = vsyncpa [#allocation12], 1
    %7448 = vsyncpa [#allocation15], 1
    %7449 = vsyncpa [#allocation5], 1
    %7450 = vsyncpa [#allocation6], 1

</llo_original>
